<compile_context>
chip_gen: v6e
topology: v6e:2x2x1
jax: 0.10.0
libtpu: 0.0.40
codegen_flags: <defaults>
</compile_context>

<pallas_src>
import jax
import jax.numpy as jnp
from jax import lax
from jax.experimental import pallas as pl
from jax.experimental.pallas import tpu as pltpu


# ----------------------------------------------------------------------------
# Fused forward kernel (one image per grid step).
# ----------------------------------------------------------------------------
def _fused_kernel(cols1_ref, w1_ref, b1_ref, w2_ref, b2_ref,
                  wf1_ref, bf1_ref, wf2_ref, bf2_ref,
                  out_ref, padE_ref, padO_ref):
    f32 = jnp.float32

    # Zero the padded parity-plane scratch buffers (persist across grid steps).
    padE_ref[...] = jnp.zeros_like(padE_ref)
    padO_ref[...] = jnp.zeros_like(padO_ref)

    # ---- conv1 + bias + relu + 2x2 maxpool -------------------------------
    # cols1_ref[0, 4*b + corner] is (98, 9): rows = h1*7 + u  (w1 = 2u + b),
    # the 9 taps of conv1 evaluated at pool corner (i, j) of output (h1, w1).
    # pool = max over the 4 corners; relu/bias commute with the max.
    pooled = []
    for b in range(2):
        m = jnp.dot(cols1_ref[0, 4 * b + 0], w1_ref[...],
                    preferred_element_type=f32)
        for c in range(1, 4):
            m = jnp.maximum(
                m, jnp.dot(cols1_ref[0, 4 * b + c], w1_ref[...],
                           preferred_element_type=f32))
        pooled.append(jnp.maximum(m + b1_ref[...], 0.0))      # (98, 32)
    p_even, p_odd = pooled                                     # w1 even / odd

    # Scatter pool1 into two zero-padded parity planes (flat row = h_pad*8+u):
    #   plane E holds w_pad = 2u   (interior u = 1..7  <- odd  w1 = 2u-1)
    #   plane O holds w_pad = 2u+1 (interior u = 0..6  <- even w1 = 2u)
    for h1 in range(14):
        padO_ref[pl.ds((h1 + 1) * 8, 7), :] = p_even[h1 * 7:(h1 + 1) * 7, :]
        padE_ref[pl.ds((h1 + 1) * 8 + 1, 7), :] = p_odd[h1 * 7:(h1 + 1) * 7, :]

    # ---- conv2 + bias + relu, split by output-column parity ---------------
    # Output rows q = h2*8 + wo (wo column 7 is discarded garbage).  Each tap
    # is one contiguous 112-row slice of a parity plane @ (32, 64) weight.
    def conv2_half(tap_plan):
        acc = None
        for t, (plane_ref, start) in enumerate(tap_plan):
            contrib = jnp.dot(plane_ref[pl.ds(start, 112), :], w2_ref[t],
                              preferred_element_type=f32)
            acc = contrib if acc is None else acc + contrib
        return jnp.maximum(acc + b2_ref[...], 0.0)             # (112, 64)

    plan_even, plan_odd = [], []
    for dh in range(3):
        base = dh * 8
        for dw in range(3):
            if dw == 0:
                plan_even.append((padE_ref, base))
                plan_odd.append((padO_ref, base))
            elif dw == 1:
                plan_even.append((padO_ref, base))
                plan_odd.append((padE_ref, base + 1))
            else:
                plan_even.append((padE_ref, base + 1))
                plan_odd.append((padO_ref, base + 1))
    c_even = conv2_half(plan_even)      # conv2 output at w2 = 2*wo
    c_odd = conv2_half(plan_odd)        # conv2 output at w2 = 2*wo + 1

    # ---- pool2 (2x2 max) + fc1 + relu + fc2 --------------------------------
    mw = jnp.maximum(c_even, c_odd)                            # (112, 64)
    hid = bf1_ref[...]                                         # (1, 128)
    for ho in range(7):
        prow = jnp.maximum(mw[16 * ho:16 * ho + 8, :],
                           mw[16 * ho + 8:16 * ho + 16, :])    # (8, 64)
        for wo in range(7):
            hid = hid + jnp.dot(prow[wo:wo + 1, :], wf1_ref[ho * 7 + wo],
                                preferred_element_type=f32)
    hid = jnp.maximum(hid, 0.0)
    logits = jnp.dot(hid, wf2_ref[...], preferred_element_type=f32) + bf2_ref[...]
    out_ref[0] = logits.astype(out_ref.dtype)                  # (1, 10)


# ----------------------------------------------------------------------------
# Wrapper: input-side im2col / pool-corner arrangement + single pallas_call.
# ----------------------------------------------------------------------------
def digit_classifier_forward(x_nchw, kp):
    n = x_nchw.shape[0]
    x = x_nchw.reshape(n, 28, 28)                      # cin = 1
    xpad = jnp.pad(x, ((0, 0), (1, 1), (1, 1)))        # SAME padding for conv1

    # Tap stack T[n, h, w, t] = xpad[n, h+dh, w+dw], t = 3*dh + dw.
    taps = jnp.stack([xpad[:, dh:dh + 28, dw:dw + 28]
                      for dh in range(3) for dw in range(3)], axis=-1)
    # Group by (w1-parity b, pool corner (i, j)); rows = h1*7 + u, w1 = 2u + b.
    groups = [taps[:, i::2, (2 * b + j)::4, :].reshape(n, 98, 9)
              for b in range(2) for i in range(2) for j in range(2)]
    cols1 = jnp.stack(groups, axis=1)                  # (N, 8, 98, 9)

    out = pl.pallas_call(
        _fused_kernel,
        out_shape=jax.ShapeDtypeStruct((n, 1, 10), jnp.float32),
        grid_spec=pltpu.PrefetchScalarGridSpec(
            num_scalar_prefetch=0,
            grid=(n,),
            in_specs=[
                pl.BlockSpec((1, 8, 98, 9), lambda i: (i, 0, 0, 0)),
                pl.BlockSpec((9, 32), lambda i: (0, 0)),
                pl.BlockSpec((1, 32), lambda i: (0, 0)),
                pl.BlockSpec((9, 32, 64), lambda i: (0, 0, 0)),
                pl.BlockSpec((1, 64), lambda i: (0, 0)),
                pl.BlockSpec((49, 64, 128), lambda i: (0, 0, 0)),
                pl.BlockSpec((1, 128), lambda i: (0, 0)),
                pl.BlockSpec((128, 10), lambda i: (0, 0)),
                pl.BlockSpec((1, 10), lambda i: (0, 0)),
            ],
            out_specs=pl.BlockSpec((1, 1, 10), lambda i: (i, 0, 0)),
            scratch_shapes=[pltpu.VMEM((136, 32), jnp.float32),   # parity plane E
                            pltpu.VMEM((136, 32), jnp.float32)],  # parity plane O
        ),
        compiler_params=pltpu.CompilerParams(dimension_semantics=("parallel",)),
    )(cols1, kp["w1m"], kp["b1"], kp["w2m"], kp["b2"],
      kp["wf1r"], kp["bf1"], kp["wf2"], kp["bf2"])
    return out.reshape(n, 10)


# ----------------------------------------------------------------------------
# Parameters (deterministic, synthetic) + one-time kernel-layout preparation.
# ----------------------------------------------------------------------------
def init_params(key):
    ks = jax.random.split(key, 8)

    def init(k, shape, fan_in):
        return jax.random.normal(k, shape, jnp.float32) / jnp.sqrt(jnp.float32(fan_in))

    return {
        "w1": init(ks[0], (3, 3, 1, 32), 9 * 1),             # conv1 HWIO
        "b1": init(ks[1], (32,), 9 * 1),
        "w2": init(ks[2], (3, 3, 32, 64), 9 * 32),           # conv2 HWIO
        "b2": init(ks[3], (64,), 9 * 32),
        "wf1": init(ks[4], (64 * 7 * 7, 128), 64 * 7 * 7),   # fc1 (in, out), torch row order (c,h,w)
        "bf1": init(ks[5], (128,), 64 * 7 * 7),
        "wf2": init(ks[6], (128, 10), 128),                  # fc2 (in, out)
        "bf2": init(ks[7], (10,), 128),
    }


def prepare_params(p):
    """One-time repack into kernel layouts (folds torch flatten order into fc1)."""
    return {
        "w1m": p["w1"].reshape(9, 32),
        "b1": p["b1"].reshape(1, 32),
        "w2m": p["w2"].reshape(9, 32, 64),
        "b2": p["b2"].reshape(1, 64),
        "wf1r": p["wf1"].reshape(64, 49, 128).transpose(1, 0, 2),  # (p, c, out)
        "bf1": p["bf1"].reshape(1, 128),
        "wf2": p["wf2"],
        "bf2": p["bf2"].reshape(1, 10),
    }


# ----------------------------------------------------------------------------
# Pure-XLA reference for validation.
# ----------------------------------------------------------------------------
def reference_forward(x_nchw, p):
    x = jnp.transpose(x_nchw, (0, 2, 3, 1))

    def conv(x, w, b):
        dn = lax.conv_dimension_numbers(x.shape, w.shape, ("NHWC", "HWIO", "NHWC"))
        return lax.conv_general_dilated(x, w, (1, 1), "SAME",
                                        dimension_numbers=dn) + b

    def pool(x):
        return lax.reduce_window(x, -jnp.inf, lax.max,
                                 (1, 2, 2, 1), (1, 2, 2, 1), "VALID")

    x = pool(jnp.maximum(conv(x, p["w1"], p["b1"]), 0.0))
    x = pool(jnp.maximum(conv(x, p["w2"], p["b2"]), 0.0))
    feat = jnp.transpose(x, (0, 3, 1, 2)).reshape(x.shape[0], -1)  # torch flatten order
    h = jnp.maximum(feat @ p["wf1"] + p["bf1"], 0.0)
    return h @ p["wf2"] + p["bf2"]


if __name__ == "__main__":
    key = jax.random.PRNGKey(0)
    kparam_key, kx = jax.random.split(key)
    params = init_params(kparam_key)
    kparams = prepare_params(params)                 # done once, outside jit
    # Input implied by the module: 1-channel 28x28 (so 2x pooling -> 7x7).
    x = jax.random.normal(kx, (2, 1, 28, 28), jnp.float32)   # NCHW like torch

    out = jax.jit(digit_classifier_forward)(x, kparams)
    out = jax.block_until_ready(out)
    assert out.shape == (2, 10), out.shape

    ref = reference_forward(x, params)
    assert jnp.allclose(out, ref, atol=2e-3, rtol=2e-3), "Pallas vs XLA reference mismatch"

    print("KERNEL_OK")
</pallas_src>

<mosaic_0001>
module attributes {stable_mosaic.version = 11 : i64} {
  func.func @_fused_kernel(%arg0: i32, %arg1: memref<1x8x98x9xf32, #tpu.memory_space<vmem>>, %arg2: memref<9x32xf32, #tpu.memory_space<vmem>>, %arg3: memref<1x32xf32, #tpu.memory_space<vmem>>, %arg4: memref<9x32x64xf32, #tpu.memory_space<vmem>>, %arg5: memref<1x64xf32, #tpu.memory_space<vmem>>, %arg6: memref<49x64x128xf32, #tpu.memory_space<vmem>>, %arg7: memref<1x128xf32, #tpu.memory_space<vmem>>, %arg8: memref<128x10xf32, #tpu.memory_space<vmem>>, %arg9: memref<1x10xf32, #tpu.memory_space<vmem>>, %arg10: memref<1x1x10xf32, #tpu.memory_space<vmem>>, %arg11: memref<136x32xf32, #tpu.memory_space<vmem>>, %arg12: memref<136x32xf32, #tpu.memory_space<vmem>>) attributes {dimension_semantics = [#tpu.dimension_semantics<parallel>], iteration_bounds = array<i64: 2>, scalar_prefetch = 0 : i64, scratch_operands = 2 : i64, tpu.core_type = #tpu.core_type<tc>, window_params = [{transform_indices = @transform_0, window_bounds = array<i64: 1, 8, 98, 9>}, {pipeline_mode = #tpu.pipeline_mode<synchronous>, transform_indices = @transform_1, window_bounds = array<i64: 9, 32>}, {pipeline_mode = #tpu.pipeline_mode<synchronous>, transform_indices = @transform_2, window_bounds = array<i64: 1, 32>}, {pipeline_mode = #tpu.pipeline_mode<synchronous>, transform_indices = @transform_3, window_bounds = array<i64: 9, 32, 64>}, {pipeline_mode = #tpu.pipeline_mode<synchronous>, transform_indices = @transform_4, window_bounds = array<i64: 1, 64>}, {pipeline_mode = #tpu.pipeline_mode<synchronous>, transform_indices = @transform_5, window_bounds = array<i64: 49, 64, 128>}, {pipeline_mode = #tpu.pipeline_mode<synchronous>, transform_indices = @transform_6, window_bounds = array<i64: 1, 128>}, {pipeline_mode = #tpu.pipeline_mode<synchronous>, transform_indices = @transform_7, window_bounds = array<i64: 128, 10>}, {pipeline_mode = #tpu.pipeline_mode<synchronous>, transform_indices = @transform_8, window_bounds = array<i64: 1, 10>}, {transform_indices = @transform_9, window_bounds = array<i64: 1, 1, 10>}]} {
    %cst = arith.constant 0.000000e+00 : f32
    %0 = vector.broadcast %cst : f32 to vector<136x32xf32>
    %c0 = arith.constant 0 : index
    %c0_0 = arith.constant 0 : index
    %1 = vector.load %arg11[%c0, %c0_0] : memref<136x32xf32, #tpu.memory_space<vmem>>, vector<136x32xf32>
    tpu.vector_store %arg11[%c0, %c0_0], %0 {strides = array<i32>} : memref<136x32xf32, #tpu.memory_space<vmem>>, vector<136x32xf32>,
    %cst_1 = arith.constant 0.000000e+00 : f32
    %2 = vector.broadcast %cst_1 : f32 to vector<136x32xf32>
    %c0_2 = arith.constant 0 : index
    %c0_3 = arith.constant 0 : index
    %3 = vector.load %arg12[%c0_2, %c0_3] : memref<136x32xf32, #tpu.memory_space<vmem>>, vector<136x32xf32>
    tpu.vector_store %arg12[%c0_2, %c0_3], %2 {strides = array<i32>} : memref<136x32xf32, #tpu.memory_space<vmem>>, vector<136x32xf32>,
    %c0_4 = arith.constant 0 : index
    %c0_5 = arith.constant 0 : index
    %c0_6 = arith.constant 0 : index
    %c0_7 = arith.constant 0 : index
    %4 = vector.load %arg1[%c0_4, %c0_5, %c0_6, %c0_7] : memref<1x8x98x9xf32, #tpu.memory_space<vmem>>, vector<1x1x98x9xf32>
    %5 = vector.shape_cast %4 : vector<1x1x98x9xf32> to vector<98x9xf32>
    %c0_8 = arith.constant 0 : index
    %c0_9 = arith.constant 0 : index
    %6 = vector.load %arg2[%c0_8, %c0_9] : memref<9x32xf32, #tpu.memory_space<vmem>>, vector<9x32xf32>
    %cst_10 = arith.constant dense<0.000000e+00> : vector<98x32xf32>
    %7 = tpu.matmul %5, %6, %cst_10 {dimension_numbers = #tpu.dot_dimension_numbers<[1], [0], [0], [1], [0, 0, 1, 1], [], []>} : vector<98x9xf32>, vector<9x32xf32>, vector<98x32xf32> -> vector<98x32xf32>
    %c0_11 = arith.constant 0 : index
    %c1 = arith.constant 1 : index
    %c0_12 = arith.constant 0 : index
    %c0_13 = arith.constant 0 : index
    %8 = vector.load %arg1[%c0_11, %c1, %c0_12, %c0_13] : memref<1x8x98x9xf32, #tpu.memory_space<vmem>>, vector<1x1x98x9xf32>
    %9 = vector.shape_cast %8 : vector<1x1x98x9xf32> to vector<98x9xf32>
    %c0_14 = arith.constant 0 : index
    %c0_15 = arith.constant 0 : index
    %10 = vector.load %arg2[%c0_14, %c0_15] : memref<9x32xf32, #tpu.memory_space<vmem>>, vector<9x32xf32>
    %cst_16 = arith.constant dense<0.000000e+00> : vector<98x32xf32>
    %11 = tpu.matmul %9, %10, %cst_16 {dimension_numbers = #tpu.dot_dimension_numbers<[1], [0], [0], [1], [0, 0, 1, 1], [], []>} : vector<98x9xf32>, vector<9x32xf32>, vector<98x32xf32> -> vector<98x32xf32>
    %12 = arith.maximumf %7, %11 : vector<98x32xf32>
    %c0_17 = arith.constant 0 : index
    %c2 = arith.constant 2 : index
    %c0_18 = arith.constant 0 : index
    %c0_19 = arith.constant 0 : index
    %13 = vector.load %arg1[%c0_17, %c2, %c0_18, %c0_19] : memref<1x8x98x9xf32, #tpu.memory_space<vmem>>, vector<1x1x98x9xf32>
    %14 = vector.shape_cast %13 : vector<1x1x98x9xf32> to vector<98x9xf32>
    %c0_20 = arith.constant 0 : index
    %c0_21 = arith.constant 0 : index
    %15 = vector.load %arg2[%c0_20, %c0_21] : memref<9x32xf32, #tpu.memory_space<vmem>>, vector<9x32xf32>
    %cst_22 = arith.constant dense<0.000000e+00> : vector<98x32xf32>
    %16 = tpu.matmul %14, %15, %cst_22 {dimension_numbers = #tpu.dot_dimension_numbers<[1], [0], [0], [1], [0, 0, 1, 1], [], []>} : vector<98x9xf32>, vector<9x32xf32>, vector<98x32xf32> -> vector<98x32xf32>
    %17 = arith.maximumf %12, %16 : vector<98x32xf32>
    %c0_23 = arith.constant 0 : index
    %c3 = arith.constant 3 : index
    %c0_24 = arith.constant 0 : index
    %c0_25 = arith.constant 0 : index
    %18 = vector.load %arg1[%c0_23, %c3, %c0_24, %c0_25] : memref<1x8x98x9xf32, #tpu.memory_space<vmem>>, vector<1x1x98x9xf32>
    %19 = vector.shape_cast %18 : vector<1x1x98x9xf32> to vector<98x9xf32>
    %c0_26 = arith.constant 0 : index
    %c0_27 = arith.constant 0 : index
    %20 = vector.load %arg2[%c0_26, %c0_27] : memref<9x32xf32, #tpu.memory_space<vmem>>, vector<9x32xf32>
    %cst_28 = arith.constant dense<0.000000e+00> : vector<98x32xf32>
    %21 = tpu.matmul %19, %20, %cst_28 {dimension_numbers = #tpu.dot_dimension_numbers<[1], [0], [0], [1], [0, 0, 1, 1], [], []>} : vector<98x9xf32>, vector<9x32xf32>, vector<98x32xf32> -> vector<98x32xf32>
    %22 = arith.maximumf %17, %21 : vector<98x32xf32>
    %c0_29 = arith.constant 0 : index
    %c0_30 = arith.constant 0 : index
    %23 = vector.load %arg3[%c0_29, %c0_30] : memref<1x32xf32, #tpu.memory_space<vmem>>, vector<1x32xf32>
    %24 = vector.broadcast %23 : vector<1x32xf32> to vector<98x32xf32>
    %25 = arith.addf %22, %24 : vector<98x32xf32>
    %cst_31 = arith.constant 0.000000e+00 : f32
    %26 = vector.broadcast %cst_31 : f32 to vector<98x32xf32>
    %27 = arith.maximumf %25, %26 : vector<98x32xf32>
    %c0_32 = arith.constant 0 : index
    %c4 = arith.constant 4 : index
    %c0_33 = arith.constant 0 : index
    %c0_34 = arith.constant 0 : index
    %28 = vector.load %arg1[%c0_32, %c4, %c0_33, %c0_34] : memref<1x8x98x9xf32, #tpu.memory_space<vmem>>, vector<1x1x98x9xf32>
    %29 = vector.shape_cast %28 : vector<1x1x98x9xf32> to vector<98x9xf32>
    %c0_35 = arith.constant 0 : index
    %c0_36 = arith.constant 0 : index
    %30 = vector.load %arg2[%c0_35, %c0_36] : memref<9x32xf32, #tpu.memory_space<vmem>>, vector<9x32xf32>
    %cst_37 = arith.constant dense<0.000000e+00> : vector<98x32xf32>
    %31 = tpu.matmul %29, %30, %cst_37 {dimension_numbers = #tpu.dot_dimension_numbers<[1], [0], [0], [1], [0, 0, 1, 1], [], []>} : vector<98x9xf32>, vector<9x32xf32>, vector<98x32xf32> -> vector<98x32xf32>
    %c0_38 = arith.constant 0 : index
    %c5 = arith.constant 5 : index
    %c0_39 = arith.constant 0 : index
    %c0_40 = arith.constant 0 : index
    %32 = vector.load %arg1[%c0_38, %c5, %c0_39, %c0_40] : memref<1x8x98x9xf32, #tpu.memory_space<vmem>>, vector<1x1x98x9xf32>
    %33 = vector.shape_cast %32 : vector<1x1x98x9xf32> to vector<98x9xf32>
    %c0_41 = arith.constant 0 : index
    %c0_42 = arith.constant 0 : index
    %34 = vector.load %arg2[%c0_41, %c0_42] : memref<9x32xf32, #tpu.memory_space<vmem>>, vector<9x32xf32>
    %cst_43 = arith.constant dense<0.000000e+00> : vector<98x32xf32>
    %35 = tpu.matmul %33, %34, %cst_43 {dimension_numbers = #tpu.dot_dimension_numbers<[1], [0], [0], [1], [0, 0, 1, 1], [], []>} : vector<98x9xf32>, vector<9x32xf32>, vector<98x32xf32> -> vector<98x32xf32>
    %36 = arith.maximumf %31, %35 : vector<98x32xf32>
    %c0_44 = arith.constant 0 : index
    %c6 = arith.constant 6 : index
    %c0_45 = arith.constant 0 : index
    %c0_46 = arith.constant 0 : index
    %37 = vector.load %arg1[%c0_44, %c6, %c0_45, %c0_46] : memref<1x8x98x9xf32, #tpu.memory_space<vmem>>, vector<1x1x98x9xf32>
    %38 = vector.shape_cast %37 : vector<1x1x98x9xf32> to vector<98x9xf32>
    %c0_47 = arith.constant 0 : index
    %c0_48 = arith.constant 0 : index
    %39 = vector.load %arg2[%c0_47, %c0_48] : memref<9x32xf32, #tpu.memory_space<vmem>>, vector<9x32xf32>
    %cst_49 = arith.constant dense<0.000000e+00> : vector<98x32xf32>
    %40 = tpu.matmul %38, %39, %cst_49 {dimension_numbers = #tpu.dot_dimension_numbers<[1], [0], [0], [1], [0, 0, 1, 1], [], []>} : vector<98x9xf32>, vector<9x32xf32>, vector<98x32xf32> -> vector<98x32xf32>
    %41 = arith.maximumf %36, %40 : vector<98x32xf32>
    %c0_50 = arith.constant 0 : index
    %c7 = arith.constant 7 : index
    %c0_51 = arith.constant 0 : index
    %c0_52 = arith.constant 0 : index
    %42 = vector.load %arg1[%c0_50, %c7, %c0_51, %c0_52] : memref<1x8x98x9xf32, #tpu.memory_space<vmem>>, vector<1x1x98x9xf32>
    %43 = vector.shape_cast %42 : vector<1x1x98x9xf32> to vector<98x9xf32>
    %c0_53 = arith.constant 0 : index
    %c0_54 = arith.constant 0 : index
    %44 = vector.load %arg2[%c0_53, %c0_54] : memref<9x32xf32, #tpu.memory_space<vmem>>, vector<9x32xf32>
    %cst_55 = arith.constant dense<0.000000e+00> : vector<98x32xf32>
    %45 = tpu.matmul %43, %44, %cst_55 {dimension_numbers = #tpu.dot_dimension_numbers<[1], [0], [0], [1], [0, 0, 1, 1], [], []>} : vector<98x9xf32>, vector<9x32xf32>, vector<98x32xf32> -> vector<98x32xf32>
    %46 = arith.maximumf %41, %45 : vector<98x32xf32>
    %c0_56 = arith.constant 0 : index
    %c0_57 = arith.constant 0 : index
    %47 = vector.load %arg3[%c0_56, %c0_57] : memref<1x32xf32, #tpu.memory_space<vmem>>, vector<1x32xf32>
    %48 = vector.broadcast %47 : vector<1x32xf32> to vector<98x32xf32>
    %49 = arith.addf %46, %48 : vector<98x32xf32>
    %cst_58 = arith.constant 0.000000e+00 : f32
    %50 = vector.broadcast %cst_58 : f32 to vector<98x32xf32>
    %51 = arith.maximumf %49, %50 : vector<98x32xf32>
    %52 = vector.extract_strided_slice %27 {offsets = [0, 0], sizes = [7, 32], strides = [1, 1]} : vector<98x32xf32> to vector<7x32xf32>
    %c8 = arith.constant 8 : index
    %c0_59 = arith.constant 0 : index
    %53 = vector.load %arg12[%c8, %c0_59] : memref<136x32xf32, #tpu.memory_space<vmem>>, vector<7x32xf32>
    tpu.vector_store %arg12[%c8, %c0_59], %52 {strides = array<i32>} : memref<136x32xf32, #tpu.memory_space<vmem>>, vector<7x32xf32>,
    %54 = vector.extract_strided_slice %51 {offsets = [0, 0], sizes = [7, 32], strides = [1, 1]} : vector<98x32xf32> to vector<7x32xf32>
    %c9 = arith.constant 9 : index
    %c0_60 = arith.constant 0 : index
    %55 = vector.load %arg11[%c9, %c0_60] : memref<136x32xf32, #tpu.memory_space<vmem>>, vector<7x32xf32>
    tpu.vector_store %arg11[%c9, %c0_60], %54 {strides = array<i32>} : memref<136x32xf32, #tpu.memory_space<vmem>>, vector<7x32xf32>,
    %56 = vector.extract_strided_slice %27 {offsets = [7, 0], sizes = [7, 32], strides = [1, 1]} : vector<98x32xf32> to vector<7x32xf32>
    %c16 = arith.constant 16 : index
    %c0_61 = arith.constant 0 : index
    %57 = vector.load %arg12[%c16, %c0_61] : memref<136x32xf32, #tpu.memory_space<vmem>>, vector<7x32xf32>
    tpu.vector_store %arg12[%c16, %c0_61], %56 {strides = array<i32>} : memref<136x32xf32, #tpu.memory_space<vmem>>, vector<7x32xf32>,
    %58 = vector.extract_strided_slice %51 {offsets = [7, 0], sizes = [7, 32], strides = [1, 1]} : vector<98x32xf32> to vector<7x32xf32>
    %c17 = arith.constant 17 : index
    %c0_62 = arith.constant 0 : index
    %59 = vector.load %arg11[%c17, %c0_62] : memref<136x32xf32, #tpu.memory_space<vmem>>, vector<7x32xf32>
    tpu.vector_store %arg11[%c17, %c0_62], %58 {strides = array<i32>} : memref<136x32xf32, #tpu.memory_space<vmem>>, vector<7x32xf32>,
    %60 = vector.extract_strided_slice %27 {offsets = [14, 0], sizes = [7, 32], strides = [1, 1]} : vector<98x32xf32> to vector<7x32xf32>
    %c24 = arith.constant 24 : index
    %c0_63 = arith.constant 0 : index
    %61 = vector.load %arg12[%c24, %c0_63] : memref<136x32xf32, #tpu.memory_space<vmem>>, vector<7x32xf32>
    tpu.vector_store %arg12[%c24, %c0_63], %60 {strides = array<i32>} : memref<136x32xf32, #tpu.memory_space<vmem>>, vector<7x32xf32>,
    %62 = vector.extract_strided_slice %51 {offsets = [14, 0], sizes = [7, 32], strides = [1, 1]} : vector<98x32xf32> to vector<7x32xf32>
    %c25 = arith.constant 25 : index
    %c0_64 = arith.constant 0 : index
    %63 = vector.load %arg11[%c25, %c0_64] : memref<136x32xf32, #tpu.memory_space<vmem>>, vector<7x32xf32>
    tpu.vector_store %arg11[%c25, %c0_64], %62 {strides = array<i32>} : memref<136x32xf32, #tpu.memory_space<vmem>>, vector<7x32xf32>,
    %64 = vector.extract_strided_slice %27 {offsets = [21, 0], sizes = [7, 32], strides = [1, 1]} : vector<98x32xf32> to vector<7x32xf32>
    %c32 = arith.constant 32 : index
    %c0_65 = arith.constant 0 : index
    %65 = vector.load %arg12[%c32, %c0_65] : memref<136x32xf32, #tpu.memory_space<vmem>>, vector<7x32xf32>
    tpu.vector_store %arg12[%c32, %c0_65], %64 {strides = array<i32>} : memref<136x32xf32, #tpu.memory_space<vmem>>, vector<7x32xf32>,
    %66 = vector.extract_strided_slice %51 {offsets = [21, 0], sizes = [7, 32], strides = [1, 1]} : vector<98x32xf32> to vector<7x32xf32>
    %c33 = arith.constant 33 : index
    %c0_66 = arith.constant 0 : index
    %67 = vector.load %arg11[%c33, %c0_66] : memref<136x32xf32, #tpu.memory_space<vmem>>, vector<7x32xf32>
    tpu.vector_store %arg11[%c33, %c0_66], %66 {strides = array<i32>} : memref<136x32xf32, #tpu.memory_space<vmem>>, vector<7x32xf32>,
    %68 = vector.extract_strided_slice %27 {offsets = [28, 0], sizes = [7, 32], strides = [1, 1]} : vector<98x32xf32> to vector<7x32xf32>
    %c40 = arith.constant 40 : index
    %c0_67 = arith.constant 0 : index
    %69 = vector.load %arg12[%c40, %c0_67] : memref<136x32xf32, #tpu.memory_space<vmem>>, vector<7x32xf32>
    tpu.vector_store %arg12[%c40, %c0_67], %68 {strides = array<i32>} : memref<136x32xf32, #tpu.memory_space<vmem>>, vector<7x32xf32>,
    %70 = vector.extract_strided_slice %51 {offsets = [28, 0], sizes = [7, 32], strides = [1, 1]} : vector<98x32xf32> to vector<7x32xf32>
    %c41 = arith.constant 41 : index
    %c0_68 = arith.constant 0 : index
    %71 = vector.load %arg11[%c41, %c0_68] : memref<136x32xf32, #tpu.memory_space<vmem>>, vector<7x32xf32>
    tpu.vector_store %arg11[%c41, %c0_68], %70 {strides = array<i32>} : memref<136x32xf32, #tpu.memory_space<vmem>>, vector<7x32xf32>,
    %72 = vector.extract_strided_slice %27 {offsets = [35, 0], sizes = [7, 32], strides = [1, 1]} : vector<98x32xf32> to vector<7x32xf32>
    %c48 = arith.constant 48 : index
    %c0_69 = arith.constant 0 : index
    %73 = vector.load %arg12[%c48, %c0_69] : memref<136x32xf32, #tpu.memory_space<vmem>>, vector<7x32xf32>
    tpu.vector_store %arg12[%c48, %c0_69], %72 {strides = array<i32>} : memref<136x32xf32, #tpu.memory_space<vmem>>, vector<7x32xf32>,
    %74 = vector.extract_strided_slice %51 {offsets = [35, 0], sizes = [7, 32], strides = [1, 1]} : vector<98x32xf32> to vector<7x32xf32>
    %c49 = arith.constant 49 : index
    %c0_70 = arith.constant 0 : index
    %75 = vector.load %arg11[%c49, %c0_70] : memref<136x32xf32, #tpu.memory_space<vmem>>, vector<7x32xf32>
    tpu.vector_store %arg11[%c49, %c0_70], %74 {strides = array<i32>} : memref<136x32xf32, #tpu.memory_space<vmem>>, vector<7x32xf32>,
    %76 = vector.extract_strided_slice %27 {offsets = [42, 0], sizes = [7, 32], strides = [1, 1]} : vector<98x32xf32> to vector<7x32xf32>
    %c56 = arith.constant 56 : index
    %c0_71 = arith.constant 0 : index
    %77 = vector.load %arg12[%c56, %c0_71] : memref<136x32xf32, #tpu.memory_space<vmem>>, vector<7x32xf32>
    tpu.vector_store %arg12[%c56, %c0_71], %76 {strides = array<i32>} : memref<136x32xf32, #tpu.memory_space<vmem>>, vector<7x32xf32>,
    %78 = vector.extract_strided_slice %51 {offsets = [42, 0], sizes = [7, 32], strides = [1, 1]} : vector<98x32xf32> to vector<7x32xf32>
    %c57 = arith.constant 57 : index
    %c0_72 = arith.constant 0 : index
    %79 = vector.load %arg11[%c57, %c0_72] : memref<136x32xf32, #tpu.memory_space<vmem>>, vector<7x32xf32>
    tpu.vector_store %arg11[%c57, %c0_72], %78 {strides = array<i32>} : memref<136x32xf32, #tpu.memory_space<vmem>>, vector<7x32xf32>,
    %80 = vector.extract_strided_slice %27 {offsets = [49, 0], sizes = [7, 32], strides = [1, 1]} : vector<98x32xf32> to vector<7x32xf32>
    %c64 = arith.constant 64 : index
    %c0_73 = arith.constant 0 : index
    %81 = vector.load %arg12[%c64, %c0_73] : memref<136x32xf32, #tpu.memory_space<vmem>>, vector<7x32xf32>
    tpu.vector_store %arg12[%c64, %c0_73], %80 {strides = array<i32>} : memref<136x32xf32, #tpu.memory_space<vmem>>, vector<7x32xf32>,
    %82 = vector.extract_strided_slice %51 {offsets = [49, 0], sizes = [7, 32], strides = [1, 1]} : vector<98x32xf32> to vector<7x32xf32>
    %c65 = arith.constant 65 : index
    %c0_74 = arith.constant 0 : index
    %83 = vector.load %arg11[%c65, %c0_74] : memref<136x32xf32, #tpu.memory_space<vmem>>, vector<7x32xf32>
    tpu.vector_store %arg11[%c65, %c0_74], %82 {strides = array<i32>} : memref<136x32xf32, #tpu.memory_space<vmem>>, vector<7x32xf32>,
    %84 = vector.extract_strided_slice %27 {offsets = [56, 0], sizes = [7, 32], strides = [1, 1]} : vector<98x32xf32> to vector<7x32xf32>
    %c72 = arith.constant 72 : index
    %c0_75 = arith.constant 0 : index
    %85 = vector.load %arg12[%c72, %c0_75] : memref<136x32xf32, #tpu.memory_space<vmem>>, vector<7x32xf32>
    tpu.vector_store %arg12[%c72, %c0_75], %84 {strides = array<i32>} : memref<136x32xf32, #tpu.memory_space<vmem>>, vector<7x32xf32>,
    %86 = vector.extract_strided_slice %51 {offsets = [56, 0], sizes = [7, 32], strides = [1, 1]} : vector<98x32xf32> to vector<7x32xf32>
    %c73 = arith.constant 73 : index
    %c0_76 = arith.constant 0 : index
    %87 = vector.load %arg11[%c73, %c0_76] : memref<136x32xf32, #tpu.memory_space<vmem>>, vector<7x32xf32>
    tpu.vector_store %arg11[%c73, %c0_76], %86 {strides = array<i32>} : memref<136x32xf32, #tpu.memory_space<vmem>>, vector<7x32xf32>,
    %88 = vector.extract_strided_slice %27 {offsets = [63, 0], sizes = [7, 32], strides = [1, 1]} : vector<98x32xf32> to vector<7x32xf32>
    %c80 = arith.constant 80 : index
    %c0_77 = arith.constant 0 : index
    %89 = vector.load %arg12[%c80, %c0_77] : memref<136x32xf32, #tpu.memory_space<vmem>>, vector<7x32xf32>
    tpu.vector_store %arg12[%c80, %c0_77], %88 {strides = array<i32>} : memref<136x32xf32, #tpu.memory_space<vmem>>, vector<7x32xf32>,
    %90 = vector.extract_strided_slice %51 {offsets = [63, 0], sizes = [7, 32], strides = [1, 1]} : vector<98x32xf32> to vector<7x32xf32>
    %c81 = arith.constant 81 : index
    %c0_78 = arith.constant 0 : index
    %91 = vector.load %arg11[%c81, %c0_78] : memref<136x32xf32, #tpu.memory_space<vmem>>, vector<7x32xf32>
    tpu.vector_store %arg11[%c81, %c0_78], %90 {strides = array<i32>} : memref<136x32xf32, #tpu.memory_space<vmem>>, vector<7x32xf32>,
    %92 = vector.extract_strided_slice %27 {offsets = [70, 0], sizes = [7, 32], strides = [1, 1]} : vector<98x32xf32> to vector<7x32xf32>
    %c88 = arith.constant 88 : index
    %c0_79 = arith.constant 0 : index
    %93 = vector.load %arg12[%c88, %c0_79] : memref<136x32xf32, #tpu.memory_space<vmem>>, vector<7x32xf32>
    tpu.vector_store %arg12[%c88, %c0_79], %92 {strides = array<i32>} : memref<136x32xf32, #tpu.memory_space<vmem>>, vector<7x32xf32>,
    %94 = vector.extract_strided_slice %51 {offsets = [70, 0], sizes = [7, 32], strides = [1, 1]} : vector<98x32xf32> to vector<7x32xf32>
    %c89 = arith.constant 89 : index
    %c0_80 = arith.constant 0 : index
    %95 = vector.load %arg11[%c89, %c0_80] : memref<136x32xf32, #tpu.memory_space<vmem>>, vector<7x32xf32>
    tpu.vector_store %arg11[%c89, %c0_80], %94 {strides = array<i32>} : memref<136x32xf32, #tpu.memory_space<vmem>>, vector<7x32xf32>,
    %96 = vector.extract_strided_slice %27 {offsets = [77, 0], sizes = [7, 32], strides = [1, 1]} : vector<98x32xf32> to vector<7x32xf32>
    %c96 = arith.constant 96 : index
    %c0_81 = arith.constant 0 : index
    %97 = vector.load %arg12[%c96, %c0_81] : memref<136x32xf32, #tpu.memory_space<vmem>>, vector<7x32xf32>
    tpu.vector_store %arg12[%c96, %c0_81], %96 {strides = array<i32>} : memref<136x32xf32, #tpu.memory_space<vmem>>, vector<7x32xf32>,
    %98 = vector.extract_strided_slice %51 {offsets = [77, 0], sizes = [7, 32], strides = [1, 1]} : vector<98x32xf32> to vector<7x32xf32>
    %c97 = arith.constant 97 : index
    %c0_82 = arith.constant 0 : index
    %99 = vector.load %arg11[%c97, %c0_82] : memref<136x32xf32, #tpu.memory_space<vmem>>, vector<7x32xf32>
    tpu.vector_store %arg11[%c97, %c0_82], %98 {strides = array<i32>} : memref<136x32xf32, #tpu.memory_space<vmem>>, vector<7x32xf32>,
    %100 = vector.extract_strided_slice %27 {offsets = [84, 0], sizes = [7, 32], strides = [1, 1]} : vector<98x32xf32> to vector<7x32xf32>
    %c104 = arith.constant 104 : index
    %c0_83 = arith.constant 0 : index
    %101 = vector.load %arg12[%c104, %c0_83] : memref<136x32xf32, #tpu.memory_space<vmem>>, vector<7x32xf32>
    tpu.vector_store %arg12[%c104, %c0_83], %100 {strides = array<i32>} : memref<136x32xf32, #tpu.memory_space<vmem>>, vector<7x32xf32>,
    %102 = vector.extract_strided_slice %51 {offsets = [84, 0], sizes = [7, 32], strides = [1, 1]} : vector<98x32xf32> to vector<7x32xf32>
    %c105 = arith.constant 105 : index
    %c0_84 = arith.constant 0 : index
    %103 = vector.load %arg11[%c105, %c0_84] : memref<136x32xf32, #tpu.memory_space<vmem>>, vector<7x32xf32>
    tpu.vector_store %arg11[%c105, %c0_84], %102 {strides = array<i32>} : memref<136x32xf32, #tpu.memory_space<vmem>>, vector<7x32xf32>,
    %104 = vector.extract_strided_slice %27 {offsets = [91, 0], sizes = [7, 32], strides = [1, 1]} : vector<98x32xf32> to vector<7x32xf32>
    %c112 = arith.constant 112 : index
    %c0_85 = arith.constant 0 : index
    %105 = vector.load %arg12[%c112, %c0_85] : memref<136x32xf32, #tpu.memory_space<vmem>>, vector<7x32xf32>
    tpu.vector_store %arg12[%c112, %c0_85], %104 {strides = array<i32>} : memref<136x32xf32, #tpu.memory_space<vmem>>, vector<7x32xf32>,
    %106 = vector.extract_strided_slice %51 {offsets = [91, 0], sizes = [7, 32], strides = [1, 1]} : vector<98x32xf32> to vector<7x32xf32>
    %c113 = arith.constant 113 : index
    %c0_86 = arith.constant 0 : index
    %107 = vector.load %arg11[%c113, %c0_86] : memref<136x32xf32, #tpu.memory_space<vmem>>, vector<7x32xf32>
    tpu.vector_store %arg11[%c113, %c0_86], %106 {strides = array<i32>} : memref<136x32xf32, #tpu.memory_space<vmem>>, vector<7x32xf32>,
    %c0_87 = arith.constant 0 : index
    %c0_88 = arith.constant 0 : index
    %108 = vector.load %arg11[%c0_87, %c0_88] : memref<136x32xf32, #tpu.memory_space<vmem>>, vector<112x32xf32>
    %c0_89 = arith.constant 0 : index
    %c0_90 = arith.constant 0 : index
    %c0_91 = arith.constant 0 : index
    %109 = vector.load %arg4[%c0_89, %c0_90, %c0_91] : memref<9x32x64xf32, #tpu.memory_space<vmem>>, vector<1x32x64xf32>
    %110 = vector.shape_cast %109 : vector<1x32x64xf32> to vector<32x64xf32>
    %cst_92 = arith.constant dense<0.000000e+00> : vector<112x64xf32>
    %111 = tpu.matmul %108, %110, %cst_92 {dimension_numbers = #tpu.dot_dimension_numbers<[1], [0], [0], [1], [0, 0, 1, 1], [], []>} : vector<112x32xf32>, vector<32x64xf32>, vector<112x64xf32> -> vector<112x64xf32>
    %c0_93 = arith.constant 0 : index
    %c0_94 = arith.constant 0 : index
    %112 = vector.load %arg12[%c0_93, %c0_94] : memref<136x32xf32, #tpu.memory_space<vmem>>, vector<112x32xf32>
    %c1_95 = arith.constant 1 : index
    %c0_96 = arith.constant 0 : index
    %c0_97 = arith.constant 0 : index
    %113 = vector.load %arg4[%c1_95, %c0_96, %c0_97] : memref<9x32x64xf32, #tpu.memory_space<vmem>>, vector<1x32x64xf32>
    %114 = vector.shape_cast %113 : vector<1x32x64xf32> to vector<32x64xf32>
    %cst_98 = arith.constant dense<0.000000e+00> : vector<112x64xf32>
    %115 = tpu.matmul %112, %114, %cst_98 {dimension_numbers = #tpu.dot_dimension_numbers<[1], [0], [0], [1], [0, 0, 1, 1], [], []>} : vector<112x32xf32>, vector<32x64xf32>, vector<112x64xf32> -> vector<112x64xf32>
    %116 = arith.addf %111, %115 : vector<112x64xf32>
    %c1_99 = arith.constant 1 : index
    %c0_100 = arith.constant 0 : index
    %117 = vector.load %arg11[%c1_99, %c0_100] : memref<136x32xf32, #tpu.memory_space<vmem>>, vector<112x32xf32>
    %c2_101 = arith.constant 2 : index
    %c0_102 = arith.constant 0 : index
    %c0_103 = arith.constant 0 : index
    %118 = vector.load %arg4[%c2_101, %c0_102, %c0_103] : memref<9x32x64xf32, #tpu.memory_space<vmem>>, vector<1x32x64xf32>
    %119 = vector.shape_cast %118 : vector<1x32x64xf32> to vector<32x64xf32>
    %cst_104 = arith.constant dense<0.000000e+00> : vector<112x64xf32>
    %120 = tpu.matmul %117, %119, %cst_104 {dimension_numbers = #tpu.dot_dimension_numbers<[1], [0], [0], [1], [0, 0, 1, 1], [], []>} : vector<112x32xf32>, vector<32x64xf32>, vector<112x64xf32> -> vector<112x64xf32>
    %121 = arith.addf %116, %120 : vector<112x64xf32>
    %c8_105 = arith.constant 8 : index
    %c0_106 = arith.constant 0 : index
    %122 = vector.load %arg11[%c8_105, %c0_106] : memref<136x32xf32, #tpu.memory_space<vmem>>, vector<112x32xf32>
    %c3_107 = arith.constant 3 : index
    %c0_108 = arith.constant 0 : index
    %c0_109 = arith.constant 0 : index
    %123 = vector.load %arg4[%c3_107, %c0_108, %c0_109] : memref<9x32x64xf32, #tpu.memory_space<vmem>>, vector<1x32x64xf32>
    %124 = vector.shape_cast %123 : vector<1x32x64xf32> to vector<32x64xf32>
    %cst_110 = arith.constant dense<0.000000e+00> : vector<112x64xf32>
    %125 = tpu.matmul %122, %124, %cst_110 {dimension_numbers = #tpu.dot_dimension_numbers<[1], [0], [0], [1], [0, 0, 1, 1], [], []>} : vector<112x32xf32>, vector<32x64xf32>, vector<112x64xf32> -> vector<112x64xf32>
    %126 = arith.addf %121, %125 : vector<112x64xf32>
    %c8_111 = arith.constant 8 : index
    %c0_112 = arith.constant 0 : index
    %127 = vector.load %arg12[%c8_111, %c0_112] : memref<136x32xf32, #tpu.memory_space<vmem>>, vector<112x32xf32>
    %c4_113 = arith.constant 4 : index
    %c0_114 = arith.constant 0 : index
    %c0_115 = arith.constant 0 : index
    %128 = vector.load %arg4[%c4_113, %c0_114, %c0_115] : memref<9x32x64xf32, #tpu.memory_space<vmem>>, vector<1x32x64xf32>
    %129 = vector.shape_cast %128 : vector<1x32x64xf32> to vector<32x64xf32>
    %cst_116 = arith.constant dense<0.000000e+00> : vector<112x64xf32>
    %130 = tpu.matmul %127, %129, %cst_116 {dimension_numbers = #tpu.dot_dimension_numbers<[1], [0], [0], [1], [0, 0, 1, 1], [], []>} : vector<112x32xf32>, vector<32x64xf32>, vector<112x64xf32> -> vector<112x64xf32>
    %131 = arith.addf %126, %130 : vector<112x64xf32>
    %c9_117 = arith.constant 9 : index
    %c0_118 = arith.constant 0 : index
    %132 = vector.load %arg11[%c9_117, %c0_118] : memref<136x32xf32, #tpu.memory_space<vmem>>, vector<112x32xf32>
    %c5_119 = arith.constant 5 : index
    %c0_120 = arith.constant 0 : index
    %c0_121 = arith.constant 0 : index
    %133 = vector.load %arg4[%c5_119, %c0_120, %c0_121] : memref<9x32x64xf32, #tpu.memory_space<vmem>>, vector<1x32x64xf32>
    %134 = vector.shape_cast %133 : vector<1x32x64xf32> to vector<32x64xf32>
    %cst_122 = arith.constant dense<0.000000e+00> : vector<112x64xf32>
    %135 = tpu.matmul %132, %134, %cst_122 {dimension_numbers = #tpu.dot_dimension_numbers<[1], [0], [0], [1], [0, 0, 1, 1], [], []>} : vector<112x32xf32>, vector<32x64xf32>, vector<112x64xf32> -> vector<112x64xf32>
    %136 = arith.addf %131, %135 : vector<112x64xf32>
    %c16_123 = arith.constant 16 : index
    %c0_124 = arith.constant 0 : index
    %137 = vector.load %arg11[%c16_123, %c0_124] : memref<136x32xf32, #tpu.memory_space<vmem>>, vector<112x32xf32>
    %c6_125 = arith.constant 6 : index
    %c0_126 = arith.constant 0 : index
    %c0_127 = arith.constant 0 : index
    %138 = vector.load %arg4[%c6_125, %c0_126, %c0_127] : memref<9x32x64xf32, #tpu.memory_space<vmem>>, vector<1x32x64xf32>
    %139 = vector.shape_cast %138 : vector<1x32x64xf32> to vector<32x64xf32>
    %cst_128 = arith.constant dense<0.000000e+00> : vector<112x64xf32>
    %140 = tpu.matmul %137, %139, %cst_128 {dimension_numbers = #tpu.dot_dimension_numbers<[1], [0], [0], [1], [0, 0, 1, 1], [], []>} : vector<112x32xf32>, vector<32x64xf32>, vector<112x64xf32> -> vector<112x64xf32>
    %141 = arith.addf %136, %140 : vector<112x64xf32>
    %c16_129 = arith.constant 16 : index
    %c0_130 = arith.constant 0 : index
    %142 = vector.load %arg12[%c16_129, %c0_130] : memref<136x32xf32, #tpu.memory_space<vmem>>, vector<112x32xf32>
    %c7_131 = arith.constant 7 : index
    %c0_132 = arith.constant 0 : index
    %c0_133 = arith.constant 0 : index
    %143 = vector.load %arg4[%c7_131, %c0_132, %c0_133] : memref<9x32x64xf32, #tpu.memory_space<vmem>>, vector<1x32x64xf32>
    %144 = vector.shape_cast %143 : vector<1x32x64xf32> to vector<32x64xf32>
    %cst_134 = arith.constant dense<0.000000e+00> : vector<112x64xf32>
    %145 = tpu.matmul %142, %144, %cst_134 {dimension_numbers = #tpu.dot_dimension_numbers<[1], [0], [0], [1], [0, 0, 1, 1], [], []>} : vector<112x32xf32>, vector<32x64xf32>, vector<112x64xf32> -> vector<112x64xf32>
    %146 = arith.addf %141, %145 : vector<112x64xf32>
    %c17_135 = arith.constant 17 : index
    %c0_136 = arith.constant 0 : index
    %147 = vector.load %arg11[%c17_135, %c0_136] : memref<136x32xf32, #tpu.memory_space<vmem>>, vector<112x32xf32>
    %c8_137 = arith.constant 8 : index
    %c0_138 = arith.constant 0 : index
    %c0_139 = arith.constant 0 : index
    %148 = vector.load %arg4[%c8_137, %c0_138, %c0_139] : memref<9x32x64xf32, #tpu.memory_space<vmem>>, vector<1x32x64xf32>
    %149 = vector.shape_cast %148 : vector<1x32x64xf32> to vector<32x64xf32>
    %cst_140 = arith.constant dense<0.000000e+00> : vector<112x64xf32>
    %150 = tpu.matmul %147, %149, %cst_140 {dimension_numbers = #tpu.dot_dimension_numbers<[1], [0], [0], [1], [0, 0, 1, 1], [], []>} : vector<112x32xf32>, vector<32x64xf32>, vector<112x64xf32> -> vector<112x64xf32>
    %151 = arith.addf %146, %150 : vector<112x64xf32>
    %c0_141 = arith.constant 0 : index
    %c0_142 = arith.constant 0 : index
    %152 = vector.load %arg5[%c0_141, %c0_142] : memref<1x64xf32, #tpu.memory_space<vmem>>, vector<1x64xf32>
    %153 = vector.broadcast %152 : vector<1x64xf32> to vector<112x64xf32>
    %154 = arith.addf %151, %153 : vector<112x64xf32>
    %cst_143 = arith.constant 0.000000e+00 : f32
    %155 = vector.broadcast %cst_143 : f32 to vector<112x64xf32>
    %156 = arith.maximumf %154, %155 : vector<112x64xf32>
    %c0_144 = arith.constant 0 : index
    %c0_145 = arith.constant 0 : index
    %157 = vector.load %arg12[%c0_144, %c0_145] : memref<136x32xf32, #tpu.memory_space<vmem>>, vector<112x32xf32>
    %c0_146 = arith.constant 0 : index
    %c0_147 = arith.constant 0 : index
    %c0_148 = arith.constant 0 : index
    %158 = vector.load %arg4[%c0_146, %c0_147, %c0_148] : memref<9x32x64xf32, #tpu.memory_space<vmem>>, vector<1x32x64xf32>
    %159 = vector.shape_cast %158 : vector<1x32x64xf32> to vector<32x64xf32>
    %cst_149 = arith.constant dense<0.000000e+00> : vector<112x64xf32>
    %160 = tpu.matmul %157, %159, %cst_149 {dimension_numbers = #tpu.dot_dimension_numbers<[1], [0], [0], [1], [0, 0, 1, 1], [], []>} : vector<112x32xf32>, vector<32x64xf32>, vector<112x64xf32> -> vector<112x64xf32>
    %c1_150 = arith.constant 1 : index
    %c0_151 = arith.constant 0 : index
    %161 = vector.load %arg11[%c1_150, %c0_151] : memref<136x32xf32, #tpu.memory_space<vmem>>, vector<112x32xf32>
    %c1_152 = arith.constant 1 : index
    %c0_153 = arith.constant 0 : index
    %c0_154 = arith.constant 0 : index
    %162 = vector.load %arg4[%c1_152, %c0_153, %c0_154] : memref<9x32x64xf32, #tpu.memory_space<vmem>>, vector<1x32x64xf32>
    %163 = vector.shape_cast %162 : vector<1x32x64xf32> to vector<32x64xf32>
    %cst_155 = arith.constant dense<0.000000e+00> : vector<112x64xf32>
    %164 = tpu.matmul %161, %163, %cst_155 {dimension_numbers = #tpu.dot_dimension_numbers<[1], [0], [0], [1], [0, 0, 1, 1], [], []>} : vector<112x32xf32>, vector<32x64xf32>, vector<112x64xf32> -> vector<112x64xf32>
    %165 = arith.addf %160, %164 : vector<112x64xf32>
    %c1_156 = arith.constant 1 : index
    %c0_157 = arith.constant 0 : index
    %166 = vector.load %arg12[%c1_156, %c0_157] : memref<136x32xf32, #tpu.memory_space<vmem>>, vector<112x32xf32>
    %c2_158 = arith.constant 2 : index
    %c0_159 = arith.constant 0 : index
    %c0_160 = arith.constant 0 : index
    %167 = vector.load %arg4[%c2_158, %c0_159, %c0_160] : memref<9x32x64xf32, #tpu.memory_space<vmem>>, vector<1x32x64xf32>
    %168 = vector.shape_cast %167 : vector<1x32x64xf32> to vector<32x64xf32>
    %cst_161 = arith.constant dense<0.000000e+00> : vector<112x64xf32>
    %169 = tpu.matmul %166, %168, %cst_161 {dimension_numbers = #tpu.dot_dimension_numbers<[1], [0], [0], [1], [0, 0, 1, 1], [], []>} : vector<112x32xf32>, vector<32x64xf32>, vector<112x64xf32> -> vector<112x64xf32>
    %170 = arith.addf %165, %169 : vector<112x64xf32>
    %c8_162 = arith.constant 8 : index
    %c0_163 = arith.constant 0 : index
    %171 = vector.load %arg12[%c8_162, %c0_163] : memref<136x32xf32, #tpu.memory_space<vmem>>, vector<112x32xf32>
    %c3_164 = arith.constant 3 : index
    %c0_165 = arith.constant 0 : index
    %c0_166 = arith.constant 0 : index
    %172 = vector.load %arg4[%c3_164, %c0_165, %c0_166] : memref<9x32x64xf32, #tpu.memory_space<vmem>>, vector<1x32x64xf32>
    %173 = vector.shape_cast %172 : vector<1x32x64xf32> to vector<32x64xf32>
    %cst_167 = arith.constant dense<0.000000e+00> : vector<112x64xf32>
    %174 = tpu.matmul %171, %173, %cst_167 {dimension_numbers = #tpu.dot_dimension_numbers<[1], [0], [0], [1], [0, 0, 1, 1], [], []>} : vector<112x32xf32>, vector<32x64xf32>, vector<112x64xf32> -> vector<112x64xf32>
    %175 = arith.addf %170, %174 : vector<112x64xf32>
    %c9_168 = arith.constant 9 : index
    %c0_169 = arith.constant 0 : index
    %176 = vector.load %arg11[%c9_168, %c0_169] : memref<136x32xf32, #tpu.memory_space<vmem>>, vector<112x32xf32>
    %c4_170 = arith.constant 4 : index
    %c0_171 = arith.constant 0 : index
    %c0_172 = arith.constant 0 : index
    %177 = vector.load %arg4[%c4_170, %c0_171, %c0_172] : memref<9x32x64xf32, #tpu.memory_space<vmem>>, vector<1x32x64xf32>
    %178 = vector.shape_cast %177 : vector<1x32x64xf32> to vector<32x64xf32>
    %cst_173 = arith.constant dense<0.000000e+00> : vector<112x64xf32>
    %179 = tpu.matmul %176, %178, %cst_173 {dimension_numbers = #tpu.dot_dimension_numbers<[1], [0], [0], [1], [0, 0, 1, 1], [], []>} : vector<112x32xf32>, vector<32x64xf32>, vector<112x64xf32> -> vector<112x64xf32>
    %180 = arith.addf %175, %179 : vector<112x64xf32>
    %c9_174 = arith.constant 9 : index
    %c0_175 = arith.constant 0 : index
    %181 = vector.load %arg12[%c9_174, %c0_175] : memref<136x32xf32, #tpu.memory_space<vmem>>, vector<112x32xf32>
    %c5_176 = arith.constant 5 : index
    %c0_177 = arith.constant 0 : index
    %c0_178 = arith.constant 0 : index
    %182 = vector.load %arg4[%c5_176, %c0_177, %c0_178] : memref<9x32x64xf32, #tpu.memory_space<vmem>>, vector<1x32x64xf32>
    %183 = vector.shape_cast %182 : vector<1x32x64xf32> to vector<32x64xf32>
    %cst_179 = arith.constant dense<0.000000e+00> : vector<112x64xf32>
    %184 = tpu.matmul %181, %183, %cst_179 {dimension_numbers = #tpu.dot_dimension_numbers<[1], [0], [0], [1], [0, 0, 1, 1], [], []>} : vector<112x32xf32>, vector<32x64xf32>, vector<112x64xf32> -> vector<112x64xf32>
    %185 = arith.addf %180, %184 : vector<112x64xf32>
    %c16_180 = arith.constant 16 : index
    %c0_181 = arith.constant 0 : index
    %186 = vector.load %arg12[%c16_180, %c0_181] : memref<136x32xf32, #tpu.memory_space<vmem>>, vector<112x32xf32>
    %c6_182 = arith.constant 6 : index
    %c0_183 = arith.constant 0 : index
    %c0_184 = arith.constant 0 : index
    %187 = vector.load %arg4[%c6_182, %c0_183, %c0_184] : memref<9x32x64xf32, #tpu.memory_space<vmem>>, vector<1x32x64xf32>
    %188 = vector.shape_cast %187 : vector<1x32x64xf32> to vector<32x64xf32>
    %cst_185 = arith.constant dense<0.000000e+00> : vector<112x64xf32>
    %189 = tpu.matmul %186, %188, %cst_185 {dimension_numbers = #tpu.dot_dimension_numbers<[1], [0], [0], [1], [0, 0, 1, 1], [], []>} : vector<112x32xf32>, vector<32x64xf32>, vector<112x64xf32> -> vector<112x64xf32>
    %190 = arith.addf %185, %189 : vector<112x64xf32>
    %c17_186 = arith.constant 17 : index
    %c0_187 = arith.constant 0 : index
    %191 = vector.load %arg11[%c17_186, %c0_187] : memref<136x32xf32, #tpu.memory_space<vmem>>, vector<112x32xf32>
    %c7_188 = arith.constant 7 : index
    %c0_189 = arith.constant 0 : index
    %c0_190 = arith.constant 0 : index
    %192 = vector.load %arg4[%c7_188, %c0_189, %c0_190] : memref<9x32x64xf32, #tpu.memory_space<vmem>>, vector<1x32x64xf32>
    %193 = vector.shape_cast %192 : vector<1x32x64xf32> to vector<32x64xf32>
    %cst_191 = arith.constant dense<0.000000e+00> : vector<112x64xf32>
    %194 = tpu.matmul %191, %193, %cst_191 {dimension_numbers = #tpu.dot_dimension_numbers<[1], [0], [0], [1], [0, 0, 1, 1], [], []>} : vector<112x32xf32>, vector<32x64xf32>, vector<112x64xf32> -> vector<112x64xf32>
    %195 = arith.addf %190, %194 : vector<112x64xf32>
    %c17_192 = arith.constant 17 : index
    %c0_193 = arith.constant 0 : index
    %196 = vector.load %arg12[%c17_192, %c0_193] : memref<136x32xf32, #tpu.memory_space<vmem>>, vector<112x32xf32>
    %c8_194 = arith.constant 8 : index
    %c0_195 = arith.constant 0 : index
    %c0_196 = arith.constant 0 : index
    %197 = vector.load %arg4[%c8_194, %c0_195, %c0_196] : memref<9x32x64xf32, #tpu.memory_space<vmem>>, vector<1x32x64xf32>
    %198 = vector.shape_cast %197 : vector<1x32x64xf32> to vector<32x64xf32>
    %cst_197 = arith.constant dense<0.000000e+00> : vector<112x64xf32>
    %199 = tpu.matmul %196, %198, %cst_197 {dimension_numbers = #tpu.dot_dimension_numbers<[1], [0], [0], [1], [0, 0, 1, 1], [], []>} : vector<112x32xf32>, vector<32x64xf32>, vector<112x64xf32> -> vector<112x64xf32>
    %200 = arith.addf %195, %199 : vector<112x64xf32>
    %c0_198 = arith.constant 0 : index
    %c0_199 = arith.constant 0 : index
    %201 = vector.load %arg5[%c0_198, %c0_199] : memref<1x64xf32, #tpu.memory_space<vmem>>, vector<1x64xf32>
    %202 = vector.broadcast %201 : vector<1x64xf32> to vector<112x64xf32>
    %203 = arith.addf %200, %202 : vector<112x64xf32>
    %cst_200 = arith.constant 0.000000e+00 : f32
    %204 = vector.broadcast %cst_200 : f32 to vector<112x64xf32>
    %205 = arith.maximumf %203, %204 : vector<112x64xf32>
    %206 = arith.maximumf %156, %205 : vector<112x64xf32>
    %c0_201 = arith.constant 0 : index
    %c0_202 = arith.constant 0 : index
    %207 = vector.load %arg7[%c0_201, %c0_202] : memref<1x128xf32, #tpu.memory_space<vmem>>, vector<1x128xf32>
    %208 = vector.extract_strided_slice %206 {offsets = [0, 0], sizes = [8, 64], strides = [1, 1]} : vector<112x64xf32> to vector<8x64xf32>
    %209 = vector.extract_strided_slice %206 {offsets = [8, 0], sizes = [8, 64], strides = [1, 1]} : vector<112x64xf32> to vector<8x64xf32>
    %210 = arith.maximumf %208, %209 : vector<8x64xf32>
    %211 = vector.extract_strided_slice %210 {offsets = [0, 0], sizes = [1, 64], strides = [1, 1]} : vector<8x64xf32> to vector<1x64xf32>
    %c0_203 = arith.constant 0 : index
    %c0_204 = arith.constant 0 : index
    %c0_205 = arith.constant 0 : index
    %212 = vector.load %arg6[%c0_203, %c0_204, %c0_205] : memref<49x64x128xf32, #tpu.memory_space<vmem>>, vector<1x64x128xf32>
    %213 = vector.shape_cast %212 : vector<1x64x128xf32> to vector<64x128xf32>
    %cst_206 = arith.constant dense<0.000000e+00> : vector<1x128xf32>
    %214 = tpu.matmul %211, %213, %cst_206 {dimension_numbers = #tpu.dot_dimension_numbers<[1], [0], [0], [1], [0, 0, 1, 1], [], []>} : vector<1x64xf32>, vector<64x128xf32>, vector<1x128xf32> -> vector<1x128xf32>
    %215 = arith.addf %207, %214 : vector<1x128xf32>
    %216 = vector.extract_strided_slice %210 {offsets = [1, 0], sizes = [1, 64], strides = [1, 1]} : vector<8x64xf32> to vector<1x64xf32>
    %c1_207 = arith.constant 1 : index
    %c0_208 = arith.constant 0 : index
    %c0_209 = arith.constant 0 : index
    %217 = vector.load %arg6[%c1_207, %c0_208, %c0_209] : memref<49x64x128xf32, #tpu.memory_space<vmem>>, vector<1x64x128xf32>
    %218 = vector.shape_cast %217 : vector<1x64x128xf32> to vector<64x128xf32>
    %cst_210 = arith.constant dense<0.000000e+00> : vector<1x128xf32>
    %219 = tpu.matmul %216, %218, %cst_210 {dimension_numbers = #tpu.dot_dimension_numbers<[1], [0], [0], [1], [0, 0, 1, 1], [], []>} : vector<1x64xf32>, vector<64x128xf32>, vector<1x128xf32> -> vector<1x128xf32>
    %220 = arith.addf %215, %219 : vector<1x128xf32>
    %221 = vector.extract_strided_slice %210 {offsets = [2, 0], sizes = [1, 64], strides = [1, 1]} : vector<8x64xf32> to vector<1x64xf32>
    %c2_211 = arith.constant 2 : index
    %c0_212 = arith.constant 0 : index
    %c0_213 = arith.constant 0 : index
    %222 = vector.load %arg6[%c2_211, %c0_212, %c0_213] : memref<49x64x128xf32, #tpu.memory_space<vmem>>, vector<1x64x128xf32>
    %223 = vector.shape_cast %222 : vector<1x64x128xf32> to vector<64x128xf32>
    %cst_214 = arith.constant dense<0.000000e+00> : vector<1x128xf32>
    %224 = tpu.matmul %221, %223, %cst_214 {dimension_numbers = #tpu.dot_dimension_numbers<[1], [0], [0], [1], [0, 0, 1, 1], [], []>} : vector<1x64xf32>, vector<64x128xf32>, vector<1x128xf32> -> vector<1x128xf32>
    %225 = arith.addf %220, %224 : vector<1x128xf32>
    %226 = vector.extract_strided_slice %210 {offsets = [3, 0], sizes = [1, 64], strides = [1, 1]} : vector<8x64xf32> to vector<1x64xf32>
    %c3_215 = arith.constant 3 : index
    %c0_216 = arith.constant 0 : index
    %c0_217 = arith.constant 0 : index
    %227 = vector.load %arg6[%c3_215, %c0_216, %c0_217] : memref<49x64x128xf32, #tpu.memory_space<vmem>>, vector<1x64x128xf32>
    %228 = vector.shape_cast %227 : vector<1x64x128xf32> to vector<64x128xf32>
    %cst_218 = arith.constant dense<0.000000e+00> : vector<1x128xf32>
    %229 = tpu.matmul %226, %228, %cst_218 {dimension_numbers = #tpu.dot_dimension_numbers<[1], [0], [0], [1], [0, 0, 1, 1], [], []>} : vector<1x64xf32>, vector<64x128xf32>, vector<1x128xf32> -> vector<1x128xf32>
    %230 = arith.addf %225, %229 : vector<1x128xf32>
    %231 = vector.extract_strided_slice %210 {offsets = [4, 0], sizes = [1, 64], strides = [1, 1]} : vector<8x64xf32> to vector<1x64xf32>
    %c4_219 = arith.constant 4 : index
    %c0_220 = arith.constant 0 : index
    %c0_221 = arith.constant 0 : index
    %232 = vector.load %arg6[%c4_219, %c0_220, %c0_221] : memref<49x64x128xf32, #tpu.memory_space<vmem>>, vector<1x64x128xf32>
    %233 = vector.shape_cast %232 : vector<1x64x128xf32> to vector<64x128xf32>
    %cst_222 = arith.constant dense<0.000000e+00> : vector<1x128xf32>
    %234 = tpu.matmul %231, %233, %cst_222 {dimension_numbers = #tpu.dot_dimension_numbers<[1], [0], [0], [1], [0, 0, 1, 1], [], []>} : vector<1x64xf32>, vector<64x128xf32>, vector<1x128xf32> -> vector<1x128xf32>
    %235 = arith.addf %230, %234 : vector<1x128xf32>
    %236 = vector.extract_strided_slice %210 {offsets = [5, 0], sizes = [1, 64], strides = [1, 1]} : vector<8x64xf32> to vector<1x64xf32>
    %c5_223 = arith.constant 5 : index
    %c0_224 = arith.constant 0 : index
    %c0_225 = arith.constant 0 : index
    %237 = vector.load %arg6[%c5_223, %c0_224, %c0_225] : memref<49x64x128xf32, #tpu.memory_space<vmem>>, vector<1x64x128xf32>
    %238 = vector.shape_cast %237 : vector<1x64x128xf32> to vector<64x128xf32>
    %cst_226 = arith.constant dense<0.000000e+00> : vector<1x128xf32>
    %239 = tpu.matmul %236, %238, %cst_226 {dimension_numbers = #tpu.dot_dimension_numbers<[1], [0], [0], [1], [0, 0, 1, 1], [], []>} : vector<1x64xf32>, vector<64x128xf32>, vector<1x128xf32> -> vector<1x128xf32>
    %240 = arith.addf %235, %239 : vector<1x128xf32>
    %241 = vector.extract_strided_slice %210 {offsets = [6, 0], sizes = [1, 64], strides = [1, 1]} : vector<8x64xf32> to vector<1x64xf32>
    %c6_227 = arith.constant 6 : index
    %c0_228 = arith.constant 0 : index
    %c0_229 = arith.constant 0 : index
    %242 = vector.load %arg6[%c6_227, %c0_228, %c0_229] : memref<49x64x128xf32, #tpu.memory_space<vmem>>, vector<1x64x128xf32>
    %243 = vector.shape_cast %242 : vector<1x64x128xf32> to vector<64x128xf32>
    %cst_230 = arith.constant dense<0.000000e+00> : vector<1x128xf32>
    %244 = tpu.matmul %241, %243, %cst_230 {dimension_numbers = #tpu.dot_dimension_numbers<[1], [0], [0], [1], [0, 0, 1, 1], [], []>} : vector<1x64xf32>, vector<64x128xf32>, vector<1x128xf32> -> vector<1x128xf32>
    %245 = arith.addf %240, %244 : vector<1x128xf32>
    %246 = vector.extract_strided_slice %206 {offsets = [16, 0], sizes = [8, 64], strides = [1, 1]} : vector<112x64xf32> to vector<8x64xf32>
    %247 = vector.extract_strided_slice %206 {offsets = [24, 0], sizes = [8, 64], strides = [1, 1]} : vector<112x64xf32> to vector<8x64xf32>
    %248 = arith.maximumf %246, %247 : vector<8x64xf32>
    %249 = vector.extract_strided_slice %248 {offsets = [0, 0], sizes = [1, 64], strides = [1, 1]} : vector<8x64xf32> to vector<1x64xf32>
    %c7_231 = arith.constant 7 : index
    %c0_232 = arith.constant 0 : index
    %c0_233 = arith.constant 0 : index
    %250 = vector.load %arg6[%c7_231, %c0_232, %c0_233] : memref<49x64x128xf32, #tpu.memory_space<vmem>>, vector<1x64x128xf32>
    %251 = vector.shape_cast %250 : vector<1x64x128xf32> to vector<64x128xf32>
    %cst_234 = arith.constant dense<0.000000e+00> : vector<1x128xf32>
    %252 = tpu.matmul %249, %251, %cst_234 {dimension_numbers = #tpu.dot_dimension_numbers<[1], [0], [0], [1], [0, 0, 1, 1], [], []>} : vector<1x64xf32>, vector<64x128xf32>, vector<1x128xf32> -> vector<1x128xf32>
    %253 = arith.addf %245, %252 : vector<1x128xf32>
    %254 = vector.extract_strided_slice %248 {offsets = [1, 0], sizes = [1, 64], strides = [1, 1]} : vector<8x64xf32> to vector<1x64xf32>
    %c8_235 = arith.constant 8 : index
    %c0_236 = arith.constant 0 : index
    %c0_237 = arith.constant 0 : index
    %255 = vector.load %arg6[%c8_235, %c0_236, %c0_237] : memref<49x64x128xf32, #tpu.memory_space<vmem>>, vector<1x64x128xf32>
    %256 = vector.shape_cast %255 : vector<1x64x128xf32> to vector<64x128xf32>
    %cst_238 = arith.constant dense<0.000000e+00> : vector<1x128xf32>
    %257 = tpu.matmul %254, %256, %cst_238 {dimension_numbers = #tpu.dot_dimension_numbers<[1], [0], [0], [1], [0, 0, 1, 1], [], []>} : vector<1x64xf32>, vector<64x128xf32>, vector<1x128xf32> -> vector<1x128xf32>
    %258 = arith.addf %253, %257 : vector<1x128xf32>
    %259 = vector.extract_strided_slice %248 {offsets = [2, 0], sizes = [1, 64], strides = [1, 1]} : vector<8x64xf32> to vector<1x64xf32>
    %c9_239 = arith.constant 9 : index
    %c0_240 = arith.constant 0 : index
    %c0_241 = arith.constant 0 : index
    %260 = vector.load %arg6[%c9_239, %c0_240, %c0_241] : memref<49x64x128xf32, #tpu.memory_space<vmem>>, vector<1x64x128xf32>
    %261 = vector.shape_cast %260 : vector<1x64x128xf32> to vector<64x128xf32>
    %cst_242 = arith.constant dense<0.000000e+00> : vector<1x128xf32>
    %262 = tpu.matmul %259, %261, %cst_242 {dimension_numbers = #tpu.dot_dimension_numbers<[1], [0], [0], [1], [0, 0, 1, 1], [], []>} : vector<1x64xf32>, vector<64x128xf32>, vector<1x128xf32> -> vector<1x128xf32>
    %263 = arith.addf %258, %262 : vector<1x128xf32>
    %264 = vector.extract_strided_slice %248 {offsets = [3, 0], sizes = [1, 64], strides = [1, 1]} : vector<8x64xf32> to vector<1x64xf32>
    %c10 = arith.constant 10 : index
    %c0_243 = arith.constant 0 : index
    %c0_244 = arith.constant 0 : index
    %265 = vector.load %arg6[%c10, %c0_243, %c0_244] : memref<49x64x128xf32, #tpu.memory_space<vmem>>, vector<1x64x128xf32>
    %266 = vector.shape_cast %265 : vector<1x64x128xf32> to vector<64x128xf32>
    %cst_245 = arith.constant dense<0.000000e+00> : vector<1x128xf32>
    %267 = tpu.matmul %264, %266, %cst_245 {dimension_numbers = #tpu.dot_dimension_numbers<[1], [0], [0], [1], [0, 0, 1, 1], [], []>} : vector<1x64xf32>, vector<64x128xf32>, vector<1x128xf32> -> vector<1x128xf32>
    %268 = arith.addf %263, %267 : vector<1x128xf32>
    %269 = vector.extract_strided_slice %248 {offsets = [4, 0], sizes = [1, 64], strides = [1, 1]} : vector<8x64xf32> to vector<1x64xf32>
    %c11 = arith.constant 11 : index
    %c0_246 = arith.constant 0 : index
    %c0_247 = arith.constant 0 : index
    %270 = vector.load %arg6[%c11, %c0_246, %c0_247] : memref<49x64x128xf32, #tpu.memory_space<vmem>>, vector<1x64x128xf32>
    %271 = vector.shape_cast %270 : vector<1x64x128xf32> to vector<64x128xf32>
    %cst_248 = arith.constant dense<0.000000e+00> : vector<1x128xf32>
    %272 = tpu.matmul %269, %271, %cst_248 {dimension_numbers = #tpu.dot_dimension_numbers<[1], [0], [0], [1], [0, 0, 1, 1], [], []>} : vector<1x64xf32>, vector<64x128xf32>, vector<1x128xf32> -> vector<1x128xf32>
    %273 = arith.addf %268, %272 : vector<1x128xf32>
    %274 = vector.extract_strided_slice %248 {offsets = [5, 0], sizes = [1, 64], strides = [1, 1]} : vector<8x64xf32> to vector<1x64xf32>
    %c12 = arith.constant 12 : index
    %c0_249 = arith.constant 0 : index
    %c0_250 = arith.constant 0 : index
    %275 = vector.load %arg6[%c12, %c0_249, %c0_250] : memref<49x64x128xf32, #tpu.memory_space<vmem>>, vector<1x64x128xf32>
    %276 = vector.shape_cast %275 : vector<1x64x128xf32> to vector<64x128xf32>
    %cst_251 = arith.constant dense<0.000000e+00> : vector<1x128xf32>
    %277 = tpu.matmul %274, %276, %cst_251 {dimension_numbers = #tpu.dot_dimension_numbers<[1], [0], [0], [1], [0, 0, 1, 1], [], []>} : vector<1x64xf32>, vector<64x128xf32>, vector<1x128xf32> -> vector<1x128xf32>
    %278 = arith.addf %273, %277 : vector<1x128xf32>
    %279 = vector.extract_strided_slice %248 {offsets = [6, 0], sizes = [1, 64], strides = [1, 1]} : vector<8x64xf32> to vector<1x64xf32>
    %c13 = arith.constant 13 : index
    %c0_252 = arith.constant 0 : index
    %c0_253 = arith.constant 0 : index
    %280 = vector.load %arg6[%c13, %c0_252, %c0_253] : memref<49x64x128xf32, #tpu.memory_space<vmem>>, vector<1x64x128xf32>
    %281 = vector.shape_cast %280 : vector<1x64x128xf32> to vector<64x128xf32>
    %cst_254 = arith.constant dense<0.000000e+00> : vector<1x128xf32>
    %282 = tpu.matmul %279, %281, %cst_254 {dimension_numbers = #tpu.dot_dimension_numbers<[1], [0], [0], [1], [0, 0, 1, 1], [], []>} : vector<1x64xf32>, vector<64x128xf32>, vector<1x128xf32> -> vector<1x128xf32>
    %283 = arith.addf %278, %282 : vector<1x128xf32>
    %284 = vector.extract_strided_slice %206 {offsets = [32, 0], sizes = [8, 64], strides = [1, 1]} : vector<112x64xf32> to vector<8x64xf32>
    %285 = vector.extract_strided_slice %206 {offsets = [40, 0], sizes = [8, 64], strides = [1, 1]} : vector<112x64xf32> to vector<8x64xf32>
    %286 = arith.maximumf %284, %285 : vector<8x64xf32>
    %287 = vector.extract_strided_slice %286 {offsets = [0, 0], sizes = [1, 64], strides = [1, 1]} : vector<8x64xf32> to vector<1x64xf32>
    %c14 = arith.constant 14 : index
    %c0_255 = arith.constant 0 : index
    %c0_256 = arith.constant 0 : index
    %288 = vector.load %arg6[%c14, %c0_255, %c0_256] : memref<49x64x128xf32, #tpu.memory_space<vmem>>, vector<1x64x128xf32>
    %289 = vector.shape_cast %288 : vector<1x64x128xf32> to vector<64x128xf32>
    %cst_257 = arith.constant dense<0.000000e+00> : vector<1x128xf32>
    %290 = tpu.matmul %287, %289, %cst_257 {dimension_numbers = #tpu.dot_dimension_numbers<[1], [0], [0], [1], [0, 0, 1, 1], [], []>} : vector<1x64xf32>, vector<64x128xf32>, vector<1x128xf32> -> vector<1x128xf32>
    %291 = arith.addf %283, %290 : vector<1x128xf32>
    %292 = vector.extract_strided_slice %286 {offsets = [1, 0], sizes = [1, 64], strides = [1, 1]} : vector<8x64xf32> to vector<1x64xf32>
    %c15 = arith.constant 15 : index
    %c0_258 = arith.constant 0 : index
    %c0_259 = arith.constant 0 : index
    %293 = vector.load %arg6[%c15, %c0_258, %c0_259] : memref<49x64x128xf32, #tpu.memory_space<vmem>>, vector<1x64x128xf32>
    %294 = vector.shape_cast %293 : vector<1x64x128xf32> to vector<64x128xf32>
    %cst_260 = arith.constant dense<0.000000e+00> : vector<1x128xf32>
    %295 = tpu.matmul %292, %294, %cst_260 {dimension_numbers = #tpu.dot_dimension_numbers<[1], [0], [0], [1], [0, 0, 1, 1], [], []>} : vector<1x64xf32>, vector<64x128xf32>, vector<1x128xf32> -> vector<1x128xf32>
    %296 = arith.addf %291, %295 : vector<1x128xf32>
    %297 = vector.extract_strided_slice %286 {offsets = [2, 0], sizes = [1, 64], strides = [1, 1]} : vector<8x64xf32> to vector<1x64xf32>
    %c16_261 = arith.constant 16 : index
    %c0_262 = arith.constant 0 : index
    %c0_263 = arith.constant 0 : index
    %298 = vector.load %arg6[%c16_261, %c0_262, %c0_263] : memref<49x64x128xf32, #tpu.memory_space<vmem>>, vector<1x64x128xf32>
    %299 = vector.shape_cast %298 : vector<1x64x128xf32> to vector<64x128xf32>
    %cst_264 = arith.constant dense<0.000000e+00> : vector<1x128xf32>
    %300 = tpu.matmul %297, %299, %cst_264 {dimension_numbers = #tpu.dot_dimension_numbers<[1], [0], [0], [1], [0, 0, 1, 1], [], []>} : vector<1x64xf32>, vector<64x128xf32>, vector<1x128xf32> -> vector<1x128xf32>
    %301 = arith.addf %296, %300 : vector<1x128xf32>
    %302 = vector.extract_strided_slice %286 {offsets = [3, 0], sizes = [1, 64], strides = [1, 1]} : vector<8x64xf32> to vector<1x64xf32>
    %c17_265 = arith.constant 17 : index
    %c0_266 = arith.constant 0 : index
    %c0_267 = arith.constant 0 : index
    %303 = vector.load %arg6[%c17_265, %c0_266, %c0_267] : memref<49x64x128xf32, #tpu.memory_space<vmem>>, vector<1x64x128xf32>
    %304 = vector.shape_cast %303 : vector<1x64x128xf32> to vector<64x128xf32>
    %cst_268 = arith.constant dense<0.000000e+00> : vector<1x128xf32>
    %305 = tpu.matmul %302, %304, %cst_268 {dimension_numbers = #tpu.dot_dimension_numbers<[1], [0], [0], [1], [0, 0, 1, 1], [], []>} : vector<1x64xf32>, vector<64x128xf32>, vector<1x128xf32> -> vector<1x128xf32>
    %306 = arith.addf %301, %305 : vector<1x128xf32>
    %307 = vector.extract_strided_slice %286 {offsets = [4, 0], sizes = [1, 64], strides = [1, 1]} : vector<8x64xf32> to vector<1x64xf32>
    %c18 = arith.constant 18 : index
    %c0_269 = arith.constant 0 : index
    %c0_270 = arith.constant 0 : index
    %308 = vector.load %arg6[%c18, %c0_269, %c0_270] : memref<49x64x128xf32, #tpu.memory_space<vmem>>, vector<1x64x128xf32>
    %309 = vector.shape_cast %308 : vector<1x64x128xf32> to vector<64x128xf32>
    %cst_271 = arith.constant dense<0.000000e+00> : vector<1x128xf32>
    %310 = tpu.matmul %307, %309, %cst_271 {dimension_numbers = #tpu.dot_dimension_numbers<[1], [0], [0], [1], [0, 0, 1, 1], [], []>} : vector<1x64xf32>, vector<64x128xf32>, vector<1x128xf32> -> vector<1x128xf32>
    %311 = arith.addf %306, %310 : vector<1x128xf32>
    %312 = vector.extract_strided_slice %286 {offsets = [5, 0], sizes = [1, 64], strides = [1, 1]} : vector<8x64xf32> to vector<1x64xf32>
    %c19 = arith.constant 19 : index
    %c0_272 = arith.constant 0 : index
    %c0_273 = arith.constant 0 : index
    %313 = vector.load %arg6[%c19, %c0_272, %c0_273] : memref<49x64x128xf32, #tpu.memory_space<vmem>>, vector<1x64x128xf32>
    %314 = vector.shape_cast %313 : vector<1x64x128xf32> to vector<64x128xf32>
    %cst_274 = arith.constant dense<0.000000e+00> : vector<1x128xf32>
    %315 = tpu.matmul %312, %314, %cst_274 {dimension_numbers = #tpu.dot_dimension_numbers<[1], [0], [0], [1], [0, 0, 1, 1], [], []>} : vector<1x64xf32>, vector<64x128xf32>, vector<1x128xf32> -> vector<1x128xf32>
    %316 = arith.addf %311, %315 : vector<1x128xf32>
    %317 = vector.extract_strided_slice %286 {offsets = [6, 0], sizes = [1, 64], strides = [1, 1]} : vector<8x64xf32> to vector<1x64xf32>
    %c20 = arith.constant 20 : index
    %c0_275 = arith.constant 0 : index
    %c0_276 = arith.constant 0 : index
    %318 = vector.load %arg6[%c20, %c0_275, %c0_276] : memref<49x64x128xf32, #tpu.memory_space<vmem>>, vector<1x64x128xf32>
    %319 = vector.shape_cast %318 : vector<1x64x128xf32> to vector<64x128xf32>
    %cst_277 = arith.constant dense<0.000000e+00> : vector<1x128xf32>
    %320 = tpu.matmul %317, %319, %cst_277 {dimension_numbers = #tpu.dot_dimension_numbers<[1], [0], [0], [1], [0, 0, 1, 1], [], []>} : vector<1x64xf32>, vector<64x128xf32>, vector<1x128xf32> -> vector<1x128xf32>
    %321 = arith.addf %316, %320 : vector<1x128xf32>
    %322 = vector.extract_strided_slice %206 {offsets = [48, 0], sizes = [8, 64], strides = [1, 1]} : vector<112x64xf32> to vector<8x64xf32>
    %323 = vector.extract_strided_slice %206 {offsets = [56, 0], sizes = [8, 64], strides = [1, 1]} : vector<112x64xf32> to vector<8x64xf32>
    %324 = arith.maximumf %322, %323 : vector<8x64xf32>
    %325 = vector.extract_strided_slice %324 {offsets = [0, 0], sizes = [1, 64], strides = [1, 1]} : vector<8x64xf32> to vector<1x64xf32>
    %c21 = arith.constant 21 : index
    %c0_278 = arith.constant 0 : index
    %c0_279 = arith.constant 0 : index
    %326 = vector.load %arg6[%c21, %c0_278, %c0_279] : memref<49x64x128xf32, #tpu.memory_space<vmem>>, vector<1x64x128xf32>
    %327 = vector.shape_cast %326 : vector<1x64x128xf32> to vector<64x128xf32>
    %cst_280 = arith.constant dense<0.000000e+00> : vector<1x128xf32>
    %328 = tpu.matmul %325, %327, %cst_280 {dimension_numbers = #tpu.dot_dimension_numbers<[1], [0], [0], [1], [0, 0, 1, 1], [], []>} : vector<1x64xf32>, vector<64x128xf32>, vector<1x128xf32> -> vector<1x128xf32>
    %329 = arith.addf %321, %328 : vector<1x128xf32>
    %330 = vector.extract_strided_slice %324 {offsets = [1, 0], sizes = [1, 64], strides = [1, 1]} : vector<8x64xf32> to vector<1x64xf32>
    %c22 = arith.constant 22 : index
    %c0_281 = arith.constant 0 : index
    %c0_282 = arith.constant 0 : index
    %331 = vector.load %arg6[%c22, %c0_281, %c0_282] : memref<49x64x128xf32, #tpu.memory_space<vmem>>, vector<1x64x128xf32>
    %332 = vector.shape_cast %331 : vector<1x64x128xf32> to vector<64x128xf32>
    %cst_283 = arith.constant dense<0.000000e+00> : vector<1x128xf32>
    %333 = tpu.matmul %330, %332, %cst_283 {dimension_numbers = #tpu.dot_dimension_numbers<[1], [0], [0], [1], [0, 0, 1, 1], [], []>} : vector<1x64xf32>, vector<64x128xf32>, vector<1x128xf32> -> vector<1x128xf32>
    %334 = arith.addf %329, %333 : vector<1x128xf32>
    %335 = vector.extract_strided_slice %324 {offsets = [2, 0], sizes = [1, 64], strides = [1, 1]} : vector<8x64xf32> to vector<1x64xf32>
    %c23 = arith.constant 23 : index
    %c0_284 = arith.constant 0 : index
    %c0_285 = arith.constant 0 : index
    %336 = vector.load %arg6[%c23, %c0_284, %c0_285] : memref<49x64x128xf32, #tpu.memory_space<vmem>>, vector<1x64x128xf32>
    %337 = vector.shape_cast %336 : vector<1x64x128xf32> to vector<64x128xf32>
    %cst_286 = arith.constant dense<0.000000e+00> : vector<1x128xf32>
    %338 = tpu.matmul %335, %337, %cst_286 {dimension_numbers = #tpu.dot_dimension_numbers<[1], [0], [0], [1], [0, 0, 1, 1], [], []>} : vector<1x64xf32>, vector<64x128xf32>, vector<1x128xf32> -> vector<1x128xf32>
    %339 = arith.addf %334, %338 : vector<1x128xf32>
    %340 = vector.extract_strided_slice %324 {offsets = [3, 0], sizes = [1, 64], strides = [1, 1]} : vector<8x64xf32> to vector<1x64xf32>
    %c24_287 = arith.constant 24 : index
    %c0_288 = arith.constant 0 : index
    %c0_289 = arith.constant 0 : index
    %341 = vector.load %arg6[%c24_287, %c0_288, %c0_289] : memref<49x64x128xf32, #tpu.memory_space<vmem>>, vector<1x64x128xf32>
    %342 = vector.shape_cast %341 : vector<1x64x128xf32> to vector<64x128xf32>
    %cst_290 = arith.constant dense<0.000000e+00> : vector<1x128xf32>
    %343 = tpu.matmul %340, %342, %cst_290 {dimension_numbers = #tpu.dot_dimension_numbers<[1], [0], [0], [1], [0, 0, 1, 1], [], []>} : vector<1x64xf32>, vector<64x128xf32>, vector<1x128xf32> -> vector<1x128xf32>
    %344 = arith.addf %339, %343 : vector<1x128xf32>
    %345 = vector.extract_strided_slice %324 {offsets = [4, 0], sizes = [1, 64], strides = [1, 1]} : vector<8x64xf32> to vector<1x64xf32>
    %c25_291 = arith.constant 25 : index
    %c0_292 = arith.constant 0 : index
    %c0_293 = arith.constant 0 : index
    %346 = vector.load %arg6[%c25_291, %c0_292, %c0_293] : memref<49x64x128xf32, #tpu.memory_space<vmem>>, vector<1x64x128xf32>
    %347 = vector.shape_cast %346 : vector<1x64x128xf32> to vector<64x128xf32>
    %cst_294 = arith.constant dense<0.000000e+00> : vector<1x128xf32>
    %348 = tpu.matmul %345, %347, %cst_294 {dimension_numbers = #tpu.dot_dimension_numbers<[1], [0], [0], [1], [0, 0, 1, 1], [], []>} : vector<1x64xf32>, vector<64x128xf32>, vector<1x128xf32> -> vector<1x128xf32>
    %349 = arith.addf %344, %348 : vector<1x128xf32>
    %350 = vector.extract_strided_slice %324 {offsets = [5, 0], sizes = [1, 64], strides = [1, 1]} : vector<8x64xf32> to vector<1x64xf32>
    %c26 = arith.constant 26 : index
    %c0_295 = arith.constant 0 : index
    %c0_296 = arith.constant 0 : index
    %351 = vector.load %arg6[%c26, %c0_295, %c0_296] : memref<49x64x128xf32, #tpu.memory_space<vmem>>, vector<1x64x128xf32>
    %352 = vector.shape_cast %351 : vector<1x64x128xf32> to vector<64x128xf32>
    %cst_297 = arith.constant dense<0.000000e+00> : vector<1x128xf32>
    %353 = tpu.matmul %350, %352, %cst_297 {dimension_numbers = #tpu.dot_dimension_numbers<[1], [0], [0], [1], [0, 0, 1, 1], [], []>} : vector<1x64xf32>, vector<64x128xf32>, vector<1x128xf32> -> vector<1x128xf32>
    %354 = arith.addf %349, %353 : vector<1x128xf32>
    %355 = vector.extract_strided_slice %324 {offsets = [6, 0], sizes = [1, 64], strides = [1, 1]} : vector<8x64xf32> to vector<1x64xf32>
    %c27 = arith.constant 27 : index
    %c0_298 = arith.constant 0 : index
    %c0_299 = arith.constant 0 : index
    %356 = vector.load %arg6[%c27, %c0_298, %c0_299] : memref<49x64x128xf32, #tpu.memory_space<vmem>>, vector<1x64x128xf32>
    %357 = vector.shape_cast %356 : vector<1x64x128xf32> to vector<64x128xf32>
    %cst_300 = arith.constant dense<0.000000e+00> : vector<1x128xf32>
    %358 = tpu.matmul %355, %357, %cst_300 {dimension_numbers = #tpu.dot_dimension_numbers<[1], [0], [0], [1], [0, 0, 1, 1], [], []>} : vector<1x64xf32>, vector<64x128xf32>, vector<1x128xf32> -> vector<1x128xf32>
    %359 = arith.addf %354, %358 : vector<1x128xf32>
    %360 = vector.extract_strided_slice %206 {offsets = [64, 0], sizes = [8, 64], strides = [1, 1]} : vector<112x64xf32> to vector<8x64xf32>
    %361 = vector.extract_strided_slice %206 {offsets = [72, 0], sizes = [8, 64], strides = [1, 1]} : vector<112x64xf32> to vector<8x64xf32>
    %362 = arith.maximumf %360, %361 : vector<8x64xf32>
    %363 = vector.extract_strided_slice %362 {offsets = [0, 0], sizes = [1, 64], strides = [1, 1]} : vector<8x64xf32> to vector<1x64xf32>
    %c28 = arith.constant 28 : index
    %c0_301 = arith.constant 0 : index
    %c0_302 = arith.constant 0 : index
    %364 = vector.load %arg6[%c28, %c0_301, %c0_302] : memref<49x64x128xf32, #tpu.memory_space<vmem>>, vector<1x64x128xf32>
    %365 = vector.shape_cast %364 : vector<1x64x128xf32> to vector<64x128xf32>
    %cst_303 = arith.constant dense<0.000000e+00> : vector<1x128xf32>
    %366 = tpu.matmul %363, %365, %cst_303 {dimension_numbers = #tpu.dot_dimension_numbers<[1], [0], [0], [1], [0, 0, 1, 1], [], []>} : vector<1x64xf32>, vector<64x128xf32>, vector<1x128xf32> -> vector<1x128xf32>
    %367 = arith.addf %359, %366 : vector<1x128xf32>
    %368 = vector.extract_strided_slice %362 {offsets = [1, 0], sizes = [1, 64], strides = [1, 1]} : vector<8x64xf32> to vector<1x64xf32>
    %c29 = arith.constant 29 : index
    %c0_304 = arith.constant 0 : index
    %c0_305 = arith.constant 0 : index
    %369 = vector.load %arg6[%c29, %c0_304, %c0_305] : memref<49x64x128xf32, #tpu.memory_space<vmem>>, vector<1x64x128xf32>
    %370 = vector.shape_cast %369 : vector<1x64x128xf32> to vector<64x128xf32>
    %cst_306 = arith.constant dense<0.000000e+00> : vector<1x128xf32>
    %371 = tpu.matmul %368, %370, %cst_306 {dimension_numbers = #tpu.dot_dimension_numbers<[1], [0], [0], [1], [0, 0, 1, 1], [], []>} : vector<1x64xf32>, vector<64x128xf32>, vector<1x128xf32> -> vector<1x128xf32>
    %372 = arith.addf %367, %371 : vector<1x128xf32>
    %373 = vector.extract_strided_slice %362 {offsets = [2, 0], sizes = [1, 64], strides = [1, 1]} : vector<8x64xf32> to vector<1x64xf32>
    %c30 = arith.constant 30 : index
    %c0_307 = arith.constant 0 : index
    %c0_308 = arith.constant 0 : index
    %374 = vector.load %arg6[%c30, %c0_307, %c0_308] : memref<49x64x128xf32, #tpu.memory_space<vmem>>, vector<1x64x128xf32>
    %375 = vector.shape_cast %374 : vector<1x64x128xf32> to vector<64x128xf32>
    %cst_309 = arith.constant dense<0.000000e+00> : vector<1x128xf32>
    %376 = tpu.matmul %373, %375, %cst_309 {dimension_numbers = #tpu.dot_dimension_numbers<[1], [0], [0], [1], [0, 0, 1, 1], [], []>} : vector<1x64xf32>, vector<64x128xf32>, vector<1x128xf32> -> vector<1x128xf32>
    %377 = arith.addf %372, %376 : vector<1x128xf32>
    %378 = vector.extract_strided_slice %362 {offsets = [3, 0], sizes = [1, 64], strides = [1, 1]} : vector<8x64xf32> to vector<1x64xf32>
    %c31 = arith.constant 31 : index
    %c0_310 = arith.constant 0 : index
    %c0_311 = arith.constant 0 : index
    %379 = vector.load %arg6[%c31, %c0_310, %c0_311] : memref<49x64x128xf32, #tpu.memory_space<vmem>>, vector<1x64x128xf32>
    %380 = vector.shape_cast %379 : vector<1x64x128xf32> to vector<64x128xf32>
    %cst_312 = arith.constant dense<0.000000e+00> : vector<1x128xf32>
    %381 = tpu.matmul %378, %380, %cst_312 {dimension_numbers = #tpu.dot_dimension_numbers<[1], [0], [0], [1], [0, 0, 1, 1], [], []>} : vector<1x64xf32>, vector<64x128xf32>, vector<1x128xf32> -> vector<1x128xf32>
    %382 = arith.addf %377, %381 : vector<1x128xf32>
    %383 = vector.extract_strided_slice %362 {offsets = [4, 0], sizes = [1, 64], strides = [1, 1]} : vector<8x64xf32> to vector<1x64xf32>
    %c32_313 = arith.constant 32 : index
    %c0_314 = arith.constant 0 : index
    %c0_315 = arith.constant 0 : index
    %384 = vector.load %arg6[%c32_313, %c0_314, %c0_315] : memref<49x64x128xf32, #tpu.memory_space<vmem>>, vector<1x64x128xf32>
    %385 = vector.shape_cast %384 : vector<1x64x128xf32> to vector<64x128xf32>
    %cst_316 = arith.constant dense<0.000000e+00> : vector<1x128xf32>
    %386 = tpu.matmul %383, %385, %cst_316 {dimension_numbers = #tpu.dot_dimension_numbers<[1], [0], [0], [1], [0, 0, 1, 1], [], []>} : vector<1x64xf32>, vector<64x128xf32>, vector<1x128xf32> -> vector<1x128xf32>
    %387 = arith.addf %382, %386 : vector<1x128xf32>
    %388 = vector.extract_strided_slice %362 {offsets = [5, 0], sizes = [1, 64], strides = [1, 1]} : vector<8x64xf32> to vector<1x64xf32>
    %c33_317 = arith.constant 33 : index
    %c0_318 = arith.constant 0 : index
    %c0_319 = arith.constant 0 : index
    %389 = vector.load %arg6[%c33_317, %c0_318, %c0_319] : memref<49x64x128xf32, #tpu.memory_space<vmem>>, vector<1x64x128xf32>
    %390 = vector.shape_cast %389 : vector<1x64x128xf32> to vector<64x128xf32>
    %cst_320 = arith.constant dense<0.000000e+00> : vector<1x128xf32>
    %391 = tpu.matmul %388, %390, %cst_320 {dimension_numbers = #tpu.dot_dimension_numbers<[1], [0], [0], [1], [0, 0, 1, 1], [], []>} : vector<1x64xf32>, vector<64x128xf32>, vector<1x128xf32> -> vector<1x128xf32>
    %392 = arith.addf %387, %391 : vector<1x128xf32>
    %393 = vector.extract_strided_slice %362 {offsets = [6, 0], sizes = [1, 64], strides = [1, 1]} : vector<8x64xf32> to vector<1x64xf32>
    %c34 = arith.constant 34 : index
    %c0_321 = arith.constant 0 : index
    %c0_322 = arith.constant 0 : index
    %394 = vector.load %arg6[%c34, %c0_321, %c0_322] : memref<49x64x128xf32, #tpu.memory_space<vmem>>, vector<1x64x128xf32>
    %395 = vector.shape_cast %394 : vector<1x64x128xf32> to vector<64x128xf32>
    %cst_323 = arith.constant dense<0.000000e+00> : vector<1x128xf32>
    %396 = tpu.matmul %393, %395, %cst_323 {dimension_numbers = #tpu.dot_dimension_numbers<[1], [0], [0], [1], [0, 0, 1, 1], [], []>} : vector<1x64xf32>, vector<64x128xf32>, vector<1x128xf32> -> vector<1x128xf32>
    %397 = arith.addf %392, %396 : vector<1x128xf32>
    %398 = vector.extract_strided_slice %206 {offsets = [80, 0], sizes = [8, 64], strides = [1, 1]} : vector<112x64xf32> to vector<8x64xf32>
    %399 = vector.extract_strided_slice %206 {offsets = [88, 0], sizes = [8, 64], strides = [1, 1]} : vector<112x64xf32> to vector<8x64xf32>
    %400 = arith.maximumf %398, %399 : vector<8x64xf32>
    %401 = vector.extract_strided_slice %400 {offsets = [0, 0], sizes = [1, 64], strides = [1, 1]} : vector<8x64xf32> to vector<1x64xf32>
    %c35 = arith.constant 35 : index
    %c0_324 = arith.constant 0 : index
    %c0_325 = arith.constant 0 : index
    %402 = vector.load %arg6[%c35, %c0_324, %c0_325] : memref<49x64x128xf32, #tpu.memory_space<vmem>>, vector<1x64x128xf32>
    %403 = vector.shape_cast %402 : vector<1x64x128xf32> to vector<64x128xf32>
    %cst_326 = arith.constant dense<0.000000e+00> : vector<1x128xf32>
    %404 = tpu.matmul %401, %403, %cst_326 {dimension_numbers = #tpu.dot_dimension_numbers<[1], [0], [0], [1], [0, 0, 1, 1], [], []>} : vector<1x64xf32>, vector<64x128xf32>, vector<1x128xf32> -> vector<1x128xf32>
    %405 = arith.addf %397, %404 : vector<1x128xf32>
    %406 = vector.extract_strided_slice %400 {offsets = [1, 0], sizes = [1, 64], strides = [1, 1]} : vector<8x64xf32> to vector<1x64xf32>
    %c36 = arith.constant 36 : index
    %c0_327 = arith.constant 0 : index
    %c0_328 = arith.constant 0 : index
    %407 = vector.load %arg6[%c36, %c0_327, %c0_328] : memref<49x64x128xf32, #tpu.memory_space<vmem>>, vector<1x64x128xf32>
    %408 = vector.shape_cast %407 : vector<1x64x128xf32> to vector<64x128xf32>
    %cst_329 = arith.constant dense<0.000000e+00> : vector<1x128xf32>
    %409 = tpu.matmul %406, %408, %cst_329 {dimension_numbers = #tpu.dot_dimension_numbers<[1], [0], [0], [1], [0, 0, 1, 1], [], []>} : vector<1x64xf32>, vector<64x128xf32>, vector<1x128xf32> -> vector<1x128xf32>
    %410 = arith.addf %405, %409 : vector<1x128xf32>
    %411 = vector.extract_strided_slice %400 {offsets = [2, 0], sizes = [1, 64], strides = [1, 1]} : vector<8x64xf32> to vector<1x64xf32>
    %c37 = arith.constant 37 : index
    %c0_330 = arith.constant 0 : index
    %c0_331 = arith.constant 0 : index
    %412 = vector.load %arg6[%c37, %c0_330, %c0_331] : memref<49x64x128xf32, #tpu.memory_space<vmem>>, vector<1x64x128xf32>
    %413 = vector.shape_cast %412 : vector<1x64x128xf32> to vector<64x128xf32>
    %cst_332 = arith.constant dense<0.000000e+00> : vector<1x128xf32>
    %414 = tpu.matmul %411, %413, %cst_332 {dimension_numbers = #tpu.dot_dimension_numbers<[1], [0], [0], [1], [0, 0, 1, 1], [], []>} : vector<1x64xf32>, vector<64x128xf32>, vector<1x128xf32> -> vector<1x128xf32>
    %415 = arith.addf %410, %414 : vector<1x128xf32>
    %416 = vector.extract_strided_slice %400 {offsets = [3, 0], sizes = [1, 64], strides = [1, 1]} : vector<8x64xf32> to vector<1x64xf32>
    %c38 = arith.constant 38 : index
    %c0_333 = arith.constant 0 : index
    %c0_334 = arith.constant 0 : index
    %417 = vector.load %arg6[%c38, %c0_333, %c0_334] : memref<49x64x128xf32, #tpu.memory_space<vmem>>, vector<1x64x128xf32>
    %418 = vector.shape_cast %417 : vector<1x64x128xf32> to vector<64x128xf32>
    %cst_335 = arith.constant dense<0.000000e+00> : vector<1x128xf32>
    %419 = tpu.matmul %416, %418, %cst_335 {dimension_numbers = #tpu.dot_dimension_numbers<[1], [0], [0], [1], [0, 0, 1, 1], [], []>} : vector<1x64xf32>, vector<64x128xf32>, vector<1x128xf32> -> vector<1x128xf32>
    %420 = arith.addf %415, %419 : vector<1x128xf32>
    %421 = vector.extract_strided_slice %400 {offsets = [4, 0], sizes = [1, 64], strides = [1, 1]} : vector<8x64xf32> to vector<1x64xf32>
    %c39 = arith.constant 39 : index
    %c0_336 = arith.constant 0 : index
    %c0_337 = arith.constant 0 : index
    %422 = vector.load %arg6[%c39, %c0_336, %c0_337] : memref<49x64x128xf32, #tpu.memory_space<vmem>>, vector<1x64x128xf32>
    %423 = vector.shape_cast %422 : vector<1x64x128xf32> to vector<64x128xf32>
    %cst_338 = arith.constant dense<0.000000e+00> : vector<1x128xf32>
    %424 = tpu.matmul %421, %423, %cst_338 {dimension_numbers = #tpu.dot_dimension_numbers<[1], [0], [0], [1], [0, 0, 1, 1], [], []>} : vector<1x64xf32>, vector<64x128xf32>, vector<1x128xf32> -> vector<1x128xf32>
    %425 = arith.addf %420, %424 : vector<1x128xf32>
    %426 = vector.extract_strided_slice %400 {offsets = [5, 0], sizes = [1, 64], strides = [1, 1]} : vector<8x64xf32> to vector<1x64xf32>
    %c40_339 = arith.constant 40 : index
    %c0_340 = arith.constant 0 : index
    %c0_341 = arith.constant 0 : index
    %427 = vector.load %arg6[%c40_339, %c0_340, %c0_341] : memref<49x64x128xf32, #tpu.memory_space<vmem>>, vector<1x64x128xf32>
    %428 = vector.shape_cast %427 : vector<1x64x128xf32> to vector<64x128xf32>
    %cst_342 = arith.constant dense<0.000000e+00> : vector<1x128xf32>
    %429 = tpu.matmul %426, %428, %cst_342 {dimension_numbers = #tpu.dot_dimension_numbers<[1], [0], [0], [1], [0, 0, 1, 1], [], []>} : vector<1x64xf32>, vector<64x128xf32>, vector<1x128xf32> -> vector<1x128xf32>
    %430 = arith.addf %425, %429 : vector<1x128xf32>
    %431 = vector.extract_strided_slice %400 {offsets = [6, 0], sizes = [1, 64], strides = [1, 1]} : vector<8x64xf32> to vector<1x64xf32>
    %c41_343 = arith.constant 41 : index
    %c0_344 = arith.constant 0 : index
    %c0_345 = arith.constant 0 : index
    %432 = vector.load %arg6[%c41_343, %c0_344, %c0_345] : memref<49x64x128xf32, #tpu.memory_space<vmem>>, vector<1x64x128xf32>
    %433 = vector.shape_cast %432 : vector<1x64x128xf32> to vector<64x128xf32>
    %cst_346 = arith.constant dense<0.000000e+00> : vector<1x128xf32>
    %434 = tpu.matmul %431, %433, %cst_346 {dimension_numbers = #tpu.dot_dimension_numbers<[1], [0], [0], [1], [0, 0, 1, 1], [], []>} : vector<1x64xf32>, vector<64x128xf32>, vector<1x128xf32> -> vector<1x128xf32>
    %435 = arith.addf %430, %434 : vector<1x128xf32>
    %436 = vector.extract_strided_slice %206 {offsets = [96, 0], sizes = [8, 64], strides = [1, 1]} : vector<112x64xf32> to vector<8x64xf32>
    %437 = vector.extract_strided_slice %206 {offsets = [104, 0], sizes = [8, 64], strides = [1, 1]} : vector<112x64xf32> to vector<8x64xf32>
    %438 = arith.maximumf %436, %437 : vector<8x64xf32>
    %439 = vector.extract_strided_slice %438 {offsets = [0, 0], sizes = [1, 64], strides = [1, 1]} : vector<8x64xf32> to vector<1x64xf32>
    %c42 = arith.constant 42 : index
    %c0_347 = arith.constant 0 : index
    %c0_348 = arith.constant 0 : index
    %440 = vector.load %arg6[%c42, %c0_347, %c0_348] : memref<49x64x128xf32, #tpu.memory_space<vmem>>, vector<1x64x128xf32>
    %441 = vector.shape_cast %440 : vector<1x64x128xf32> to vector<64x128xf32>
    %cst_349 = arith.constant dense<0.000000e+00> : vector<1x128xf32>
    %442 = tpu.matmul %439, %441, %cst_349 {dimension_numbers = #tpu.dot_dimension_numbers<[1], [0], [0], [1], [0, 0, 1, 1], [], []>} : vector<1x64xf32>, vector<64x128xf32>, vector<1x128xf32> -> vector<1x128xf32>
    %443 = arith.addf %435, %442 : vector<1x128xf32>
    %444 = vector.extract_strided_slice %438 {offsets = [1, 0], sizes = [1, 64], strides = [1, 1]} : vector<8x64xf32> to vector<1x64xf32>
    %c43 = arith.constant 43 : index
    %c0_350 = arith.constant 0 : index
    %c0_351 = arith.constant 0 : index
    %445 = vector.load %arg6[%c43, %c0_350, %c0_351] : memref<49x64x128xf32, #tpu.memory_space<vmem>>, vector<1x64x128xf32>
    %446 = vector.shape_cast %445 : vector<1x64x128xf32> to vector<64x128xf32>
    %cst_352 = arith.constant dense<0.000000e+00> : vector<1x128xf32>
    %447 = tpu.matmul %444, %446, %cst_352 {dimension_numbers = #tpu.dot_dimension_numbers<[1], [0], [0], [1], [0, 0, 1, 1], [], []>} : vector<1x64xf32>, vector<64x128xf32>, vector<1x128xf32> -> vector<1x128xf32>
    %448 = arith.addf %443, %447 : vector<1x128xf32>
    %449 = vector.extract_strided_slice %438 {offsets = [2, 0], sizes = [1, 64], strides = [1, 1]} : vector<8x64xf32> to vector<1x64xf32>
    %c44 = arith.constant 44 : index
    %c0_353 = arith.constant 0 : index
    %c0_354 = arith.constant 0 : index
    %450 = vector.load %arg6[%c44, %c0_353, %c0_354] : memref<49x64x128xf32, #tpu.memory_space<vmem>>, vector<1x64x128xf32>
    %451 = vector.shape_cast %450 : vector<1x64x128xf32> to vector<64x128xf32>
    %cst_355 = arith.constant dense<0.000000e+00> : vector<1x128xf32>
    %452 = tpu.matmul %449, %451, %cst_355 {dimension_numbers = #tpu.dot_dimension_numbers<[1], [0], [0], [1], [0, 0, 1, 1], [], []>} : vector<1x64xf32>, vector<64x128xf32>, vector<1x128xf32> -> vector<1x128xf32>
    %453 = arith.addf %448, %452 : vector<1x128xf32>
    %454 = vector.extract_strided_slice %438 {offsets = [3, 0], sizes = [1, 64], strides = [1, 1]} : vector<8x64xf32> to vector<1x64xf32>
    %c45 = arith.constant 45 : index
    %c0_356 = arith.constant 0 : index
    %c0_357 = arith.constant 0 : index
    %455 = vector.load %arg6[%c45, %c0_356, %c0_357] : memref<49x64x128xf32, #tpu.memory_space<vmem>>, vector<1x64x128xf32>
    %456 = vector.shape_cast %455 : vector<1x64x128xf32> to vector<64x128xf32>
    %cst_358 = arith.constant dense<0.000000e+00> : vector<1x128xf32>
    %457 = tpu.matmul %454, %456, %cst_358 {dimension_numbers = #tpu.dot_dimension_numbers<[1], [0], [0], [1], [0, 0, 1, 1], [], []>} : vector<1x64xf32>, vector<64x128xf32>, vector<1x128xf32> -> vector<1x128xf32>
    %458 = arith.addf %453, %457 : vector<1x128xf32>
    %459 = vector.extract_strided_slice %438 {offsets = [4, 0], sizes = [1, 64], strides = [1, 1]} : vector<8x64xf32> to vector<1x64xf32>
    %c46 = arith.constant 46 : index
    %c0_359 = arith.constant 0 : index
    %c0_360 = arith.constant 0 : index
    %460 = vector.load %arg6[%c46, %c0_359, %c0_360] : memref<49x64x128xf32, #tpu.memory_space<vmem>>, vector<1x64x128xf32>
    %461 = vector.shape_cast %460 : vector<1x64x128xf32> to vector<64x128xf32>
    %cst_361 = arith.constant dense<0.000000e+00> : vector<1x128xf32>
    %462 = tpu.matmul %459, %461, %cst_361 {dimension_numbers = #tpu.dot_dimension_numbers<[1], [0], [0], [1], [0, 0, 1, 1], [], []>} : vector<1x64xf32>, vector<64x128xf32>, vector<1x128xf32> -> vector<1x128xf32>
    %463 = arith.addf %458, %462 : vector<1x128xf32>
    %464 = vector.extract_strided_slice %438 {offsets = [5, 0], sizes = [1, 64], strides = [1, 1]} : vector<8x64xf32> to vector<1x64xf32>
    %c47 = arith.constant 47 : index
    %c0_362 = arith.constant 0 : index
    %c0_363 = arith.constant 0 : index
    %465 = vector.load %arg6[%c47, %c0_362, %c0_363] : memref<49x64x128xf32, #tpu.memory_space<vmem>>, vector<1x64x128xf32>
    %466 = vector.shape_cast %465 : vector<1x64x128xf32> to vector<64x128xf32>
    %cst_364 = arith.constant dense<0.000000e+00> : vector<1x128xf32>
    %467 = tpu.matmul %464, %466, %cst_364 {dimension_numbers = #tpu.dot_dimension_numbers<[1], [0], [0], [1], [0, 0, 1, 1], [], []>} : vector<1x64xf32>, vector<64x128xf32>, vector<1x128xf32> -> vector<1x128xf32>
    %468 = arith.addf %463, %467 : vector<1x128xf32>
    %469 = vector.extract_strided_slice %438 {offsets = [6, 0], sizes = [1, 64], strides = [1, 1]} : vector<8x64xf32> to vector<1x64xf32>
    %c48_365 = arith.constant 48 : index
    %c0_366 = arith.constant 0 : index
    %c0_367 = arith.constant 0 : index
    %470 = vector.load %arg6[%c48_365, %c0_366, %c0_367] : memref<49x64x128xf32, #tpu.memory_space<vmem>>, vector<1x64x128xf32>
    %471 = vector.shape_cast %470 : vector<1x64x128xf32> to vector<64x128xf32>
    %cst_368 = arith.constant dense<0.000000e+00> : vector<1x128xf32>
    %472 = tpu.matmul %469, %471, %cst_368 {dimension_numbers = #tpu.dot_dimension_numbers<[1], [0], [0], [1], [0, 0, 1, 1], [], []>} : vector<1x64xf32>, vector<64x128xf32>, vector<1x128xf32> -> vector<1x128xf32>
    %473 = arith.addf %468, %472 : vector<1x128xf32>
    %cst_369 = arith.constant 0.000000e+00 : f32
    %474 = vector.broadcast %cst_369 : f32 to vector<1x128xf32>
    %475 = arith.maximumf %473, %474 : vector<1x128xf32>
    %c0_370 = arith.constant 0 : index
    %c0_371 = arith.constant 0 : index
    %476 = vector.load %arg8[%c0_370, %c0_371] : memref<128x10xf32, #tpu.memory_space<vmem>>, vector<128x10xf32>
    %cst_372 = arith.constant dense<0.000000e+00> : vector<1x10xf32>
    %477 = tpu.matmul %475, %476, %cst_372 {dimension_numbers = #tpu.dot_dimension_numbers<[1], [0], [0], [1], [0, 0, 1, 1], [], []>} : vector<1x128xf32>, vector<128x10xf32>, vector<1x10xf32> -> vector<1x10xf32>
    %c0_373 = arith.constant 0 : index
    %c0_374 = arith.constant 0 : index
    %478 = vector.load %arg9[%c0_373, %c0_374] : memref<1x10xf32, #tpu.memory_space<vmem>>, vector<1x10xf32>
    %479 = arith.addf %477, %478 : vector<1x10xf32>
    %c0_375 = arith.constant 0 : index
    %c0_376 = arith.constant 0 : index
    %c0_377 = arith.constant 0 : index
    %480 = vector.load %arg10[%c0_375, %c0_376, %c0_377] : memref<1x1x10xf32, #tpu.memory_space<vmem>>, vector<1x1x10xf32>
    %481 = vector.shape_cast %480 : vector<1x1x10xf32> to vector<1x10xf32>
    %482 = vector.shape_cast %479 : vector<1x10xf32> to vector<1x1x10xf32>
    tpu.vector_store %arg10[%c0_375, %c0_376, %c0_377], %482 {strides = array<i32>} : memref<1x1x10xf32, #tpu.memory_space<vmem>>, vector<1x1x10xf32>,
    return
  }
  func.func @transform_0(%arg0: i32) -> (i32, i32, i32, i32) {
    %c0_i32 = arith.constant 0 : i32
    %c0_i32_0 = arith.constant 0 : i32
    %c0_i32_1 = arith.constant 0 : i32
    %c0_i32_2 = arith.constant 0 : i32
    return %arg0, %c0_i32, %c0_i32_0, %c0_i32_1 : i32, i32, i32, i32
  }
  func.func @transform_1(%arg0: i32) -> (i32, i32) {
    %c0_i32 = arith.constant 0 : i32
    %c0_i32_0 = arith.constant 0 : i32
    %c0_i32_1 = arith.constant 0 : i32
    return %c0_i32, %c0_i32_0 : i32, i32
  }
  func.func @transform_2(%arg0: i32) -> (i32, i32) {
    %c0_i32 = arith.constant 0 : i32
    %c0_i32_0 = arith.constant 0 : i32
    %c0_i32_1 = arith.constant 0 : i32
    return %c0_i32, %c0_i32_0 : i32, i32
  }
  func.func @transform_3(%arg0: i32) -> (i32, i32, i32) {
    %c0_i32 = arith.constant 0 : i32
    %c0_i32_0 = arith.constant 0 : i32
    %c0_i32_1 = arith.constant 0 : i32
    %c0_i32_2 = arith.constant 0 : i32
    return %c0_i32, %c0_i32_0, %c0_i32_1 : i32, i32, i32
  }
  func.func @transform_4(%arg0: i32) -> (i32, i32) {
    %c0_i32 = arith.constant 0 : i32
    %c0_i32_0 = arith.constant 0 : i32
    %c0_i32_1 = arith.constant 0 : i32
    return %c0_i32, %c0_i32_0 : i32, i32
  }
  func.func @transform_5(%arg0: i32) -> (i32, i32, i32) {
    %c0_i32 = arith.constant 0 : i32
    %c0_i32_0 = arith.constant 0 : i32
    %c0_i32_1 = arith.constant 0 : i32
    %c0_i32_2 = arith.constant 0 : i32
    return %c0_i32, %c0_i32_0, %c0_i32_1 : i32, i32, i32
  }
  func.func @transform_6(%arg0: i32) -> (i32, i32) {
    %c0_i32 = arith.constant 0 : i32
    %c0_i32_0 = arith.constant 0 : i32
    %c0_i32_1 = arith.constant 0 : i32
    return %c0_i32, %c0_i32_0 : i32, i32
  }
  func.func @transform_7(%arg0: i32) -> (i32, i32) {
    %c0_i32 = arith.constant 0 : i32
    %c0_i32_0 = arith.constant 0 : i32
    %c0_i32_1 = arith.constant 0 : i32
    return %c0_i32, %c0_i32_0 : i32, i32
  }
  func.func @transform_8(%arg0: i32) -> (i32, i32) {
    %c0_i32 = arith.constant 0 : i32
    %c0_i32_0 = arith.constant 0 : i32
    %c0_i32_1 = arith.constant 0 : i32
    return %c0_i32, %c0_i32_0 : i32, i32
  }
  func.func @transform_9(%arg0: i32) -> (i32, i32, i32) {
    %c0_i32 = arith.constant 0 : i32
    %c0_i32_0 = arith.constant 0 : i32
    %c0_i32_1 = arith.constant 0 : i32
    return %arg0, %c0_i32, %c0_i32_0 : i32, i32, i32
  }
}

</mosaic_0001>

<llo_original>
// kernel: digit_classifier_forward.1
$region0: #{digit_classifier_forward.1}
  #allocation0 [shape = 'u32[]', space=smem, size = 0x4, offset = 0x4, fixed_abs, tag = 'smem constant byte address 0x4 - core index']
  #allocation1 [shape = 'u32[144,128]{1,0:T(1,128)}', space=vmem, size = 0x12000, scoped, tag = 'internal scratch']
  #allocation2 [shape = 'f32[136,32]{1,0:T(8,128)}', space=vmem, size = 0x11000, scoped, tag = 'scratch operand']
  #allocation3 [shape = 'f32[136,32]{1,0:T(8,128)}', space=vmem, size = 0x11000, scoped, tag = 'scratch operand']
  %s0 = inlined_call_operand.vmem [shape: f32[2,8,98,9], index: 0, kind: input, shape index: {}]
  %s1 = inlined_call_operand.vmem [shape: f32[9,32], index: 1, kind: input, shape index: {}]
  %s2 = inlined_call_operand.vmem [shape: f32[1,32], index: 2, kind: input, shape index: {}]
  %s3 = inlined_call_operand.vmem [shape: f32[9,32,64], index: 3, kind: input, shape index: {}]
  %s4 = inlined_call_operand.vmem [shape: f32[1,64], index: 4, kind: input, shape index: {}]
  %s5 = inlined_call_operand.vmem [shape: f32[49,64,128], index: 5, kind: input, shape index: {}]
  %s6 = inlined_call_operand.vmem [shape: f32[1,128], index: 6, kind: input, shape index: {}]
  %s7 = inlined_call_operand.vmem [shape: f32[128,10], index: 7, kind: input, shape index: {}]
  %s8 = inlined_call_operand.vmem [shape: f32[1,10], index: 8, kind: input, shape index: {}]
  %s9 = inlined_call_operand.hbm [shape: f32[2,1,10], index: 9, kind: output, shape index: {}]
  %s10 = sld [smem:[#allocation0]]
  $region69: #{digit_classifier_forward.1} parent=0
    _
  %s12 = ssub.s32 1, %s10
  %s13 = scalar_select 0, %s12, %s10
  $region1: #{digit_classifier_forward.1} parent=0
    #allocation4 [shape = 'u8[1024]{0}', space=vmem, size = 0x400, scoped, tag = 'output window, operand 0']
    #allocation5 [shape = 's32[2]{0}', space=sflag, size = 0x8, scoped, tag = 'scoped memory for digit_classifier_forward.1']
    %14 = vsyncpa [#allocation5], 0
    %s15 = scalar_lea.sflag [#allocation5], 1
    %16 = vsyncpa %s15, 0
    loop: start=0, step=1, limit=4
    $region2: #{digit_classifier_forward.1} parent=1 // loop_pre_header
      _
    $region3: #{digit_classifier_forward.1} parent=1 // loop_header
      %s18 = sphi 0, %s22
      %p19 = scmp.ge.s32.totalorder %s18, 4
      %s28 = sphi 0, %s30
      %s31 = sphi 0, %s28
      %s32 = sphi 0, %s31
      %s48 = sphi 0, %s32
      %s52 = sphi 0, %s52
      %s54 = sphi 0, %s52
      %s55 = sphi 0, %s54
      %s69 = sphi 0, %s55
      %s73 = sphi 0, %s73
      %s75 = sphi 0, %s73
      %s76 = sphi 0, %s75
      %s90 = sphi 0, %s76
      %s94 = sphi 0, %s94
      %s96 = sphi 0, %s94
      %s97 = sphi 0, %s96
      %s111 = sphi 0, %s97
      %s115 = sphi 0, %s115
      %s117 = sphi 0, %s115
      %s118 = sphi 0, %s117
      %s132 = sphi 0, %s118
      %s136 = sphi 0, %s136
      %s138 = sphi 0, %s136
      %s139 = sphi 0, %s138
      %s153 = sphi 0, %s139
      %s157 = sphi 0, %s157
      %s159 = sphi 0, %s157
      %s160 = sphi 0, %s159
      %s174 = sphi 0, %s160
      %s178 = sphi 0, %s178
      %s180 = sphi 0, %s178
      %s181 = sphi 0, %s180
      %s195 = sphi 0, %s181
      %s199 = sphi 0, %s199
      %s201 = sphi 0, %s199
      %s202 = sphi 0, %s201
      %s216 = sphi 0, %s202
      %s222 = sphi 0, %s224
      %s225 = sphi 0, %s222
      %s226 = sphi 0, %s225
      %s242 = sphi 0, %s226
    $region4: #{digit_classifier_forward.1} parent=1 // loop_header_branch
      %21 = sbr.rel (%p19) target = $region8
    $region5: #{digit_classifier_forward.1} parent=1 // loop_body
      %s23 = ssub.s32 %s18, 1
      %s24 = ssub.s32 %s18, 2
      %s25 = sadd.s32 %s18, 1
      %s26 = ssub.s32 %s18, %s25
      %p27 = scmp.eq.s32.totalorder %s26, 0
      %s29 = sadd.s32 %s28, 1
      %s30 = scalar_select %p27, %s28, %s29
      %p33 = pneg %p27
      %p34 = scmp.eq.s32.totalorder %s18, 1
      %p35 = por %p33, %p34
      %p36 = scmp.ne.s32.totalorder %s28, %s31
      %p37 = scmp.eq.s32.totalorder %s18, 0
      %p38 = por %p36, %p37
      %p39 = scmp.ne.s32.totalorder %s28, %s31
      %p40 = scmp.eq.s32.totalorder %s23, 1
      %p41 = por %p39, %p40
      %p42 = scmp.ne.s32.totalorder %s31, %s32
      %p43 = scmp.eq.s32.totalorder %s23, 0
      %p44 = por %p42, %p43
      %p45 = scmp.ne.s32.totalorder %s31, %s32
      %p46 = scmp.eq.s32.totalorder %s24, 1
      %p47 = por %p45, %p46
      %p49 = scmp.ne.s32.totalorder %s32, %s48
      %p50 = scmp.eq.s32.totalorder %s24, 0
      %p51 = por %p49, %p50
      %s53 = sadd.s32 %s52, 1
      %p56 = scmp.eq.s32.totalorder %s18, 1
      %p57 = scmp.ne.s32.totalorder %s52, %s54
      %p58 = scmp.eq.s32.totalorder %s18, 0
      %p59 = por %p57, %p58
      %p60 = scmp.ne.s32.totalorder %s52, %s54
      %p61 = scmp.eq.s32.totalorder %s23, 1
      %p62 = por %p60, %p61
      %p63 = scmp.ne.s32.totalorder %s54, %s55
      %p64 = scmp.eq.s32.totalorder %s23, 0
      %p65 = por %p63, %p64
      %p66 = scmp.ne.s32.totalorder %s54, %s55
      %p67 = scmp.eq.s32.totalorder %s24, 1
      %p68 = por %p66, %p67
      %p70 = scmp.ne.s32.totalorder %s55, %s69
      %p71 = scmp.eq.s32.totalorder %s24, 0
      %p72 = por %p70, %p71
      %s74 = sadd.s32 %s73, 1
      %p77 = scmp.eq.s32.totalorder %s18, 1
      %p78 = scmp.ne.s32.totalorder %s73, %s75
      %p79 = scmp.eq.s32.totalorder %s18, 0
      %p80 = por %p78, %p79
      %p81 = scmp.ne.s32.totalorder %s73, %s75
      %p82 = scmp.eq.s32.totalorder %s23, 1
      %p83 = por %p81, %p82
      %p84 = scmp.ne.s32.totalorder %s75, %s76
      %p85 = scmp.eq.s32.totalorder %s23, 0
      %p86 = por %p84, %p85
      %p87 = scmp.ne.s32.totalorder %s75, %s76
      %p88 = scmp.eq.s32.totalorder %s24, 1
      %p89 = por %p87, %p88
      %p91 = scmp.ne.s32.totalorder %s76, %s90
      %p92 = scmp.eq.s32.totalorder %s24, 0
      %p93 = por %p91, %p92
      %s95 = sadd.s32 %s94, 1
      %p98 = scmp.eq.s32.totalorder %s18, 1
      %p99 = scmp.ne.s32.totalorder %s94, %s96
      %p100 = scmp.eq.s32.totalorder %s18, 0
      %p101 = por %p99, %p100
      %p102 = scmp.ne.s32.totalorder %s94, %s96
      %p103 = scmp.eq.s32.totalorder %s23, 1
      %p104 = por %p102, %p103
      %p105 = scmp.ne.s32.totalorder %s96, %s97
      %p106 = scmp.eq.s32.totalorder %s23, 0
      %p107 = por %p105, %p106
      %p108 = scmp.ne.s32.totalorder %s96, %s97
      %p109 = scmp.eq.s32.totalorder %s24, 1
      %p110 = por %p108, %p109
      %p112 = scmp.ne.s32.totalorder %s97, %s111
      %p113 = scmp.eq.s32.totalorder %s24, 0
      %p114 = por %p112, %p113
      %s116 = sadd.s32 %s115, 1
      %p119 = scmp.eq.s32.totalorder %s18, 1
      %p120 = scmp.ne.s32.totalorder %s115, %s117
      %p121 = scmp.eq.s32.totalorder %s18, 0
      %p122 = por %p120, %p121
      %p123 = scmp.ne.s32.totalorder %s115, %s117
      %p124 = scmp.eq.s32.totalorder %s23, 1
      %p125 = por %p123, %p124
      %p126 = scmp.ne.s32.totalorder %s117, %s118
      %p127 = scmp.eq.s32.totalorder %s23, 0
      %p128 = por %p126, %p127
      %p129 = scmp.ne.s32.totalorder %s117, %s118
      %p130 = scmp.eq.s32.totalorder %s24, 1
      %p131 = por %p129, %p130
      %p133 = scmp.ne.s32.totalorder %s118, %s132
      %p134 = scmp.eq.s32.totalorder %s24, 0
      %p135 = por %p133, %p134
      %s137 = sadd.s32 %s136, 1
      %p140 = scmp.eq.s32.totalorder %s18, 1
      %p141 = scmp.ne.s32.totalorder %s136, %s138
      %p142 = scmp.eq.s32.totalorder %s18, 0
      %p143 = por %p141, %p142
      %p144 = scmp.ne.s32.totalorder %s136, %s138
      %p145 = scmp.eq.s32.totalorder %s23, 1
      %p146 = por %p144, %p145
      %p147 = scmp.ne.s32.totalorder %s138, %s139
      %p148 = scmp.eq.s32.totalorder %s23, 0
      %p149 = por %p147, %p148
      %p150 = scmp.ne.s32.totalorder %s138, %s139
      %p151 = scmp.eq.s32.totalorder %s24, 1
      %p152 = por %p150, %p151
      %p154 = scmp.ne.s32.totalorder %s139, %s153
      %p155 = scmp.eq.s32.totalorder %s24, 0
      %p156 = por %p154, %p155
      %s158 = sadd.s32 %s157, 1
      %p161 = scmp.eq.s32.totalorder %s18, 1
      %p162 = scmp.ne.s32.totalorder %s157, %s159
      %p163 = scmp.eq.s32.totalorder %s18, 0
      %p164 = por %p162, %p163
      %p165 = scmp.ne.s32.totalorder %s157, %s159
      %p166 = scmp.eq.s32.totalorder %s23, 1
      %p167 = por %p165, %p166
      %p168 = scmp.ne.s32.totalorder %s159, %s160
      %p169 = scmp.eq.s32.totalorder %s23, 0
      %p170 = por %p168, %p169
      %p171 = scmp.ne.s32.totalorder %s159, %s160
      %p172 = scmp.eq.s32.totalorder %s24, 1
      %p173 = por %p171, %p172
      %p175 = scmp.ne.s32.totalorder %s160, %s174
      %p176 = scmp.eq.s32.totalorder %s24, 0
      %p177 = por %p175, %p176
      %s179 = sadd.s32 %s178, 1
      %p182 = scmp.eq.s32.totalorder %s18, 1
      %p183 = scmp.ne.s32.totalorder %s178, %s180
      %p184 = scmp.eq.s32.totalorder %s18, 0
      %p185 = por %p183, %p184
      %p186 = scmp.ne.s32.totalorder %s178, %s180
      %p187 = scmp.eq.s32.totalorder %s23, 1
      %p188 = por %p186, %p187
      %p189 = scmp.ne.s32.totalorder %s180, %s181
      %p190 = scmp.eq.s32.totalorder %s23, 0
      %p191 = por %p189, %p190
      %p192 = scmp.ne.s32.totalorder %s180, %s181
      %p193 = scmp.eq.s32.totalorder %s24, 1
      %p194 = por %p192, %p193
      %p196 = scmp.ne.s32.totalorder %s181, %s195
      %p197 = scmp.eq.s32.totalorder %s24, 0
      %p198 = por %p196, %p197
      %s200 = sadd.s32 %s199, 1
      %p203 = scmp.eq.s32.totalorder %s18, 1
      %p204 = scmp.ne.s32.totalorder %s199, %s201
      %p205 = scmp.eq.s32.totalorder %s18, 0
      %p206 = por %p204, %p205
      %p207 = scmp.ne.s32.totalorder %s199, %s201
      %p208 = scmp.eq.s32.totalorder %s23, 1
      %p209 = por %p207, %p208
      %p210 = scmp.ne.s32.totalorder %s201, %s202
      %p211 = scmp.eq.s32.totalorder %s23, 0
      %p212 = por %p210, %p211
      %p213 = scmp.ne.s32.totalorder %s201, %s202
      %p214 = scmp.eq.s32.totalorder %s24, 1
      %p215 = por %p213, %p214
      %p217 = scmp.ne.s32.totalorder %s202, %s216
      %p218 = scmp.eq.s32.totalorder %s24, 0
      %p219 = por %p217, %p218
      %s220 = ssub.s32 %s18, %s25
      %p221 = scmp.eq.s32.totalorder %s220, 0
      %s223 = sadd.s32 %s222, 1
      %s224 = scalar_select %p221, %s222, %s223
      %p227 = pneg %p221
      %p228 = scmp.eq.s32.totalorder %s18, 1
      %p229 = por %p227, %p228
      %p230 = scmp.ne.s32.totalorder %s222, %s225
      %p231 = scmp.eq.s32.totalorder %s18, 0
      %p232 = por %p230, %p231
      %p233 = scmp.ne.s32.totalorder %s222, %s225
      %p234 = scmp.eq.s32.totalorder %s23, 1
      %p235 = por %p233, %p234
      %p236 = scmp.ne.s32.totalorder %s225, %s226
      %p237 = scmp.eq.s32.totalorder %s23, 0
      %p238 = por %p236, %p237
      %p239 = scmp.ne.s32.totalorder %s225, %s226
      %p240 = scmp.eq.s32.totalorder %s24, 1
      %p241 = por %p239, %p240
      %p243 = scmp.ne.s32.totalorder %s226, %s242
      %p244 = scmp.eq.s32.totalorder %s24, 0
      %p245 = por %p243, %p244
      %p246 = scmp.le.s32.totalorder 1, %s18
      %p247 = scmp.lt.s32.totalorder %s18, 3
      %p248 = pnand %p246, %p247
      %p249 = pneg %p248
      // Predicated region
      $region9: #{digit_classifier_forward.1} parent=5 // pred_check
        _
      $region10: #{digit_classifier_forward.1} parent=5 // pred_check_branch
        %251 = sbr.rel (%p248) target = $region12
      $region11: #{digit_classifier_forward.1} parent=5 // pred_region
        %s252 = ssub.s32 %s18, 1
        // Predicated region
        $region13: #{digit_classifier_forward.1} parent=11 // pred_check
          %p253 = pneg %p65
        $region14: #{digit_classifier_forward.1} parent=11 // pred_check_branch
          %255 = sbr.rel (%p253) target = $region16
        $region15: #{digit_classifier_forward.1} parent=11 // pred_region
          _
        $region16: #{digit_classifier_forward.1} parent=11 // pred_fallthru
          _
        // Predicated region
        $region17: #{digit_classifier_forward.1} parent=11 // pred_check
          %p256 = pneg %p86
        $region18: #{digit_classifier_forward.1} parent=11 // pred_check_branch
          %258 = sbr.rel (%p256) target = $region20
        $region19: #{digit_classifier_forward.1} parent=11 // pred_region
          _
        $region20: #{digit_classifier_forward.1} parent=11 // pred_fallthru
          _
        // Predicated region
        $region21: #{digit_classifier_forward.1} parent=11 // pred_check
          %p259 = pneg %p107
        $region22: #{digit_classifier_forward.1} parent=11 // pred_check_branch
          %261 = sbr.rel (%p259) target = $region24
        $region23: #{digit_classifier_forward.1} parent=11 // pred_region
          _
        $region24: #{digit_classifier_forward.1} parent=11 // pred_fallthru
          _
        // Predicated region
        $region25: #{digit_classifier_forward.1} parent=11 // pred_check
          %p262 = pneg %p128
        $region26: #{digit_classifier_forward.1} parent=11 // pred_check_branch
          %264 = sbr.rel (%p262) target = $region28
        $region27: #{digit_classifier_forward.1} parent=11 // pred_region
          _
        $region28: #{digit_classifier_forward.1} parent=11 // pred_fallthru
          _
        // Predicated region
        $region29: #{digit_classifier_forward.1} parent=11 // pred_check
          %p265 = pneg %p149
        $region30: #{digit_classifier_forward.1} parent=11 // pred_check_branch
          %267 = sbr.rel (%p265) target = $region32
        $region31: #{digit_classifier_forward.1} parent=11 // pred_region
          _
        $region32: #{digit_classifier_forward.1} parent=11 // pred_fallthru
          _
        // Predicated region
        $region33: #{digit_classifier_forward.1} parent=11 // pred_check
          %p268 = pneg %p170
        $region34: #{digit_classifier_forward.1} parent=11 // pred_check_branch
          %270 = sbr.rel (%p268) target = $region36
        $region35: #{digit_classifier_forward.1} parent=11 // pred_region
          _
        $region36: #{digit_classifier_forward.1} parent=11 // pred_fallthru
          _
        // Predicated region
        $region37: #{digit_classifier_forward.1} parent=11 // pred_check
          %p271 = pneg %p191
        $region38: #{digit_classifier_forward.1} parent=11 // pred_check_branch
          %273 = sbr.rel (%p271) target = $region40
        $region39: #{digit_classifier_forward.1} parent=11 // pred_region
          _
        $region40: #{digit_classifier_forward.1} parent=11 // pred_fallthru
          _
        // Predicated region
        $region41: #{digit_classifier_forward.1} parent=11 // pred_check
          %p274 = pneg %p212
        $region42: #{digit_classifier_forward.1} parent=11 // pred_check_branch
          %276 = sbr.rel (%p274) target = $region44
        $region43: #{digit_classifier_forward.1} parent=11 // pred_region
          _
        $region44: #{digit_classifier_forward.1} parent=11 // pred_fallthru
          _
      $region12: #{digit_classifier_forward.1} parent=5 // pred_fallthru
        _
      %p277 = scmp.lt.s32.totalorder %s18, 2
      // Predicated region
      $region45: #{digit_classifier_forward.1} parent=5 // pred_check
        %p278 = pneg %p277
      $region46: #{digit_classifier_forward.1} parent=5 // pred_check_branch
        %280 = sbr.rel (%p278) target = $region48
      $region47: #{digit_classifier_forward.1} parent=5 // pred_region
        // Predicated region
        $region49: #{digit_classifier_forward.1} parent=47 // pred_check
          %p281 = pneg %p38
        $region50: #{digit_classifier_forward.1} parent=47 // pred_check_branch
          %283 = sbr.rel (%p281) target = $region52
        $region51: #{digit_classifier_forward.1} parent=47 // pred_region
          %p284 = scmp.lt.s32.totalorder %s18, 1
          %s285 = scalar_select %p284, %s18, 1
          %s286 = smul.addr %s285, 104
          %s287 = smul.addr %s286, 8
          %s288 = scalar_lea.vmem %s0, %s287
        $region52: #{digit_classifier_forward.1} parent=47 // pred_fallthru
          _
      $region48: #{digit_classifier_forward.1} parent=5 // pred_fallthru
        _
      %p289 = scmp.le.s32.totalorder 1, %s18
      %p290 = scmp.lt.s32.totalorder %s18, 3
      %p291 = pnand %p289, %p290
      %p292 = pneg %p291
      // Predicated region
      $region53: #{digit_classifier_forward.1} parent=5 // pred_check
        _
      $region54: #{digit_classifier_forward.1} parent=5 // pred_check_branch
        %294 = sbr.rel (%p291) target = $region56
      $region55: #{digit_classifier_forward.1} parent=5 // pred_region
        %s295 = ssub.s32 %s18, 1
        %p296 = scmp.lt.s32.totalorder %s23, 1
        %s297 = scalar_select %p296, %s23, 1
        %s298 = smul.addr %s297, 104
        %s299 = smul.addr %s298, 8
        %s300 = scalar_lea.vmem %s0, %s299
        %p301 = pneg %p44
        %p302 = pneg %p41
        %p303 = pneg %p65
        %p304 = pneg %p62
        %p305 = pneg %p86
        %p306 = pneg %p83
        %p307 = pneg %p107
        %p308 = pneg %p104
        %p309 = pneg %p128
        %p310 = pneg %p125
        %p311 = pneg %p149
        %p312 = pneg %p146
        %p313 = pneg %p170
        %p314 = pneg %p167
        %p315 = pneg %p191
        %p316 = pneg %p188
        %p317 = pneg %p212
        %p318 = pneg %p209
        %p319 = pneg %p238
        %p320 = pneg %p235
        %s321 = sand.u32 %s225, 1
        %s322 = scalar_lea.sflag [#allocation5], %s321
        %s323 = sand.u32 %s225, 1
        %s324 = scalar_lea.vmem [#allocation4], %s323
        %p325 = scmp.lt.s32.totalorder %s23, 1
        %s326 = scalar_select %p325, %s23, 1
        %s327 = smul.addr %s326, 104
        %s328 = smul.addr %s327, 8
        %s329 = scalar_lea.vmem %s0, %s328
        %vm330 = vcmask 261120
        %331 = vst.msk [vmem:[#allocation2] sm:$0xff] %vm330, 0.0
        %332 = vst.msk [vmem:[#allocation2 + $0x8] sm:$0xff] %vm330, 0.0
        %333 = vst.msk [vmem:[#allocation2 + $0x10] sm:$0xff] %vm330, 0.0
        %334 = vst.msk [vmem:[#allocation2 + $0x18] sm:$0xff] %vm330, 0.0
        %335 = vst.msk [vmem:[#allocation2 + $0x20] sm:$0xff] %vm330, 0.0
        %336 = vst.msk [vmem:[#allocation2 + $0x28] sm:$0xff] %vm330, 0.0
        %337 = vst.msk [vmem:[#allocation2 + $0x30] sm:$0xff] %vm330, 0.0
        %338 = vst.msk [vmem:[#allocation2 + $0x38] sm:$0xff] %vm330, 0.0
        %339 = vst.msk [vmem:[#allocation2 + $0x40] sm:$0xff] %vm330, 0.0
        %340 = vst.msk [vmem:[#allocation2 + $0x48] sm:$0xff] %vm330, 0.0
        %341 = vst.msk [vmem:[#allocation2 + $0x50] sm:$0xff] %vm330, 0.0
        %342 = vst.msk [vmem:[#allocation2 + $0x58] sm:$0xff] %vm330, 0.0
        %343 = vst.msk [vmem:[#allocation2 + $0x60] sm:$0xff] %vm330, 0.0
        %344 = vst.msk [vmem:[#allocation2 + $0x68] sm:$0xff] %vm330, 0.0
        %345 = vst.msk [vmem:[#allocation2 + $0x70] sm:$0xff] %vm330, 0.0
        %346 = vst.msk [vmem:[#allocation2 + $0x78] sm:$0xff] %vm330, 0.0
        %347 = vst.msk [vmem:[#allocation2 + $0x80] sm:$0xff] %vm330, 0.0
        %348 = vst.msk [vmem:[#allocation3] sm:$0xff] %vm330, 0.0
        %349 = vst.msk [vmem:[#allocation3 + $0x8] sm:$0xff] %vm330, 0.0
        %350 = vst.msk [vmem:[#allocation3 + $0x10] sm:$0xff] %vm330, 0.0
        %351 = vst.msk [vmem:[#allocation3 + $0x18] sm:$0xff] %vm330, 0.0
        %352 = vst.msk [vmem:[#allocation3 + $0x20] sm:$0xff] %vm330, 0.0
        %353 = vst.msk [vmem:[#allocation3 + $0x28] sm:$0xff] %vm330, 0.0
        %354 = vst.msk [vmem:[#allocation3 + $0x30] sm:$0xff] %vm330, 0.0
        %355 = vst.msk [vmem:[#allocation3 + $0x38] sm:$0xff] %vm330, 0.0
        %356 = vst.msk [vmem:[#allocation3 + $0x40] sm:$0xff] %vm330, 0.0
        %357 = vst.msk [vmem:[#allocation3 + $0x48] sm:$0xff] %vm330, 0.0
        %358 = vst.msk [vmem:[#allocation3 + $0x50] sm:$0xff] %vm330, 0.0
        %359 = vst.msk [vmem:[#allocation3 + $0x58] sm:$0xff] %vm330, 0.0
        %360 = vst.msk [vmem:[#allocation3 + $0x60] sm:$0xff] %vm330, 0.0
        %361 = vst.msk [vmem:[#allocation3 + $0x68] sm:$0xff] %vm330, 0.0
        %362 = vst.msk [vmem:[#allocation3 + $0x70] sm:$0xff] %vm330, 0.0
        %363 = vst.msk [vmem:[#allocation3 + $0x78] sm:$0xff] %vm330, 0.0
        %364 = vst.msk [vmem:[#allocation3 + $0x80] sm:$0xff] %vm330, 0.0
        %v365 = vld [vmem:[%s329] sm:$0xff]
        %v366 = vld [vmem:[%s329 + $0x8] sm:$0xff]
        %v367 = vld [vmem:[%s329 + $0x10] sm:$0xff]
        %v368 = vld [vmem:[%s329 + $0x18] sm:$0xff]
        %v369 = vld [vmem:[%s329 + $0x20] sm:$0xff]
        %v370 = vld [vmem:[%s329 + $0x28] sm:$0xff]
        %v371 = vld [vmem:[%s329 + $0x30] sm:$0xff]
        %v372 = vld [vmem:[%s329 + $0x38] sm:$0xff]
        %v373 = vld [vmem:[%s329 + $0x40] sm:$0xff]
        %v374 = vld [vmem:[%s329 + $0x48] sm:$0xff]
        %v375 = vld [vmem:[%s329 + $0x50] sm:$0xff]
        %v376 = vld [vmem:[%s329 + $0x58] sm:$0xff]
        %v377 = vld [vmem:[%s329 + $0x60] sm:$0x3]
        %v378 = vld [vmem:[%s1] sm:$0xff]
        %v379 = vld [vmem:[%s1 + $0x8] sm:$0x1]
        %vm380 = vcmask 72704
        %v382 = vsel %vm380, %v365, 0
        %v385 = vsel %vm380, %v366, 0
        %v388 = vsel %vm380, %v367, 0
        %v391 = vsel %vm380, %v368, 0
        %v394 = vsel %vm380, %v369, 0
        %v397 = vsel %vm380, %v370, 0
        %v400 = vsel %vm380, %v371, 0
        %v403 = vsel %vm380, %v372, 0
        %v406 = vsel %vm380, %v373, 0
        %v409 = vsel %vm380, %v374, 0
        %v412 = vsel %vm380, %v375, 0
        %v415 = vsel %vm380, %v376, 0
        %v418 = vsel %vm380, %v377, 0
        %vm420 = vcmask 1040384
        %v422 = vsel %vm420, %v379, 0
        %424 = vmatprep.subr.mxu0 0.0
        %425 = vmatpush1.msra.mxu0 0.0
        %426 = vmatprep.subr.mxu0 0.0
        %427 = vmatpush1.msra.mxu0 0.0
        %428 = vmatprep.subr.mxu0 0.0
        %429 = vmatpush1.msra.mxu0 0.0
        %430 = vmatprep.subr.mxu0 0.0
        %431 = vmatpush1.msra.mxu0 0.0
        %432 = vmatprep.subr.mxu0 0.0
        %433 = vmatpush1.msra.mxu0 0.0
        %434 = vmatprep.subr.mxu0 0.0
        %435 = vmatpush1.msra.mxu0 0.0
        %436 = vmatprep.subr.mxu0 0.0
        %437 = vmatpush1.msra.mxu0 0.0
        %438 = vmatprep.subr.mxu0 0.0
        %439 = vmatpush1.msra.mxu0 0.0
        %440 = vmatprep.subr.mxu0 0.0
        %441 = vmatpush1.msra.mxu0 0.0
        %442 = vmatprep.subr.mxu0 0.0
        %443 = vmatpush1.msra.mxu0 0.0
        %444 = vmatprep.subr.mxu0 0.0
        %445 = vmatpush1.msra.mxu0 0.0
        %446 = vmatprep.subr.mxu0 0.0
        %447 = vmatpush1.msra.mxu0 0.0
        %448 = vmatprep.subr.mxu0 0.0
        %449 = vmatpush1.msra.mxu0 0.0
        %450 = vmatprep.subr.mxu0 0.0
        %451 = vmatpush1.msra.mxu0 0.0
        %452 = vmatprep.subr.mxu0 0.0
        %453 = vmatpush1.msra.mxu0 %v422
        %454 = vmatprep.subr.mxu0 0.0
        %455 = vmatpush1.msra.mxu0 %v378
        %456 = vmatprep.subr.mxu0 0.0
        %457 = vmatpush2.msra.mxu0 0.0
        %458 = vmatprep.subr.mxu0 0.0
        %459 = vmatpush2.msra.mxu0 0.0
        %460 = vmatprep.subr.mxu0 0.0
        %461 = vmatpush2.msra.mxu0 0.0
        %462 = vmatprep.subr.mxu0 0.0
        %463 = vmatpush2.msra.mxu0 0.0
        %464 = vmatprep.subr.mxu0 0.0
        %465 = vmatpush2.msra.mxu0 0.0
        %466 = vmatprep.subr.mxu0 0.0
        %467 = vmatpush2.msra.mxu0 0.0
        %468 = vmatprep.subr.mxu0 0.0
        %469 = vmatpush2.msra.mxu0 0.0
        %470 = vmatprep.subr.mxu0 0.0
        %471 = vmatpush2.msra.mxu0 0.0
        %472 = vmatprep.subr.mxu0 0.0
        %473 = vmatpush2.msra.mxu0 0.0
        %474 = vmatprep.subr.mxu0 0.0
        %475 = vmatpush2.msra.mxu0 0.0
        %476 = vmatprep.subr.mxu0 0.0
        %477 = vmatpush2.msra.mxu0 0.0
        %478 = vmatprep.subr.mxu0 0.0
        %479 = vmatpush2.msra.mxu0 0.0
        %480 = vmatprep.subr.mxu0 0.0
        %481 = vmatpush2.msra.mxu0 0.0
        %482 = vmatprep.subr.mxu0 0.0
        %483 = vmatpush2.msra.mxu0 0.0
        %484 = vmatprep.subr.mxu0 0.0
        %485 = vmatpush2.msra.mxu0 0.0
        %486 = vmatprep.subr.mxu0 0.0
        %487 = vmatpush2.msra.mxu0 0.0
        %488 = vmatprep.mubr.f32.mxu0 0.0
        %489 = vmatmul.mubr.f32.gmra.mxu0 %v382
        %v490 = vpop.f32.mrf.mxu0
        %v491 = vadd.f32 0.0, %v490
        %v492 = vpop.f32.mrf.mxu0
        %493 = vmatprep.mubr.f32.mxu0 0.0
        %494 = vmatmul.mubr.f32.gmra.mxu0 %v385
        %v495 = vpop.f32.mrf.mxu0
        %v496 = vadd.f32 0.0, %v495
        %v497 = vpop.f32.mrf.mxu0
        %498 = vmatprep.mubr.f32.mxu0 0.0
        %499 = vmatmul.mubr.f32.gmra.mxu0 %v388
        %v500 = vpop.f32.mrf.mxu0
        %v501 = vadd.f32 0.0, %v500
        %v502 = vpop.f32.mrf.mxu0
        %503 = vmatprep.mubr.f32.mxu0 0.0
        %504 = vmatmul.mubr.f32.gmra.mxu0 %v391
        %v505 = vpop.f32.mrf.mxu0
        %v506 = vadd.f32 0.0, %v505
        %v507 = vpop.f32.mrf.mxu0
        %508 = vmatprep.mubr.f32.mxu0 0.0
        %509 = vmatmul.mubr.f32.gmra.mxu0 %v394
        %v510 = vpop.f32.mrf.mxu0
        %v511 = vadd.f32 0.0, %v510
        %v512 = vpop.f32.mrf.mxu0
        %513 = vmatprep.mubr.f32.mxu0 0.0
        %514 = vmatmul.mubr.f32.gmra.mxu0 %v397
        %v515 = vpop.f32.mrf.mxu0
        %v516 = vadd.f32 0.0, %v515
        %v517 = vpop.f32.mrf.mxu0
        %518 = vmatprep.mubr.f32.mxu0 0.0
        %519 = vmatmul.mubr.f32.gmra.mxu0 %v400
        %v520 = vpop.f32.mrf.mxu0
        %v521 = vadd.f32 0.0, %v520
        %v522 = vpop.f32.mrf.mxu0
        %523 = vmatprep.mubr.f32.mxu0 0.0
        %524 = vmatmul.mubr.f32.gmra.mxu0 %v403
        %v525 = vpop.f32.mrf.mxu0
        %v526 = vadd.f32 0.0, %v525
        %v527 = vpop.f32.mrf.mxu0
        %528 = vmatprep.mubr.f32.mxu0 0.0
        %529 = vmatmul.mubr.f32.gmra.mxu0 %v406
        %v530 = vpop.f32.mrf.mxu0
        %v531 = vadd.f32 0.0, %v530
        %v532 = vpop.f32.mrf.mxu0
        %533 = vmatprep.mubr.f32.mxu0 0.0
        %534 = vmatmul.mubr.f32.gmra.mxu0 %v409
        %v535 = vpop.f32.mrf.mxu0
        %v536 = vadd.f32 0.0, %v535
        %v537 = vpop.f32.mrf.mxu0
        %538 = vmatprep.mubr.f32.mxu0 0.0
        %539 = vmatmul.mubr.f32.gmra.mxu0 %v412
        %v540 = vpop.f32.mrf.mxu0
        %v541 = vadd.f32 0.0, %v540
        %v542 = vpop.f32.mrf.mxu0
        %543 = vmatprep.mubr.f32.mxu0 0.0
        %544 = vmatmul.mubr.f32.gmra.mxu0 %v415
        %v545 = vpop.f32.mrf.mxu0
        %v546 = vadd.f32 0.0, %v545
        %v547 = vpop.f32.mrf.mxu0
        %548 = vmatprep.mubr.f32.mxu0 0.0
        %549 = vmatmul.mubr.f32.gmra.mxu0 %v418
        %v550 = vpop.f32.mrf.mxu0
        %v551 = vadd.f32 0.0, %v550
        %v552 = vpop.f32.mrf.mxu0
        %553 = vdwg.mxu0
        %s554 = scalar_lea.vmem %s329, 104
        %v555 = vld [vmem:[%s554] sm:$0xff]
        %v556 = vld [vmem:[%s554 + $0x8] sm:$0xff]
        %v557 = vld [vmem:[%s554 + $0x10] sm:$0xff]
        %v558 = vld [vmem:[%s554 + $0x18] sm:$0xff]
        %v559 = vld [vmem:[%s554 + $0x20] sm:$0xff]
        %v560 = vld [vmem:[%s554 + $0x28] sm:$0xff]
        %v561 = vld [vmem:[%s554 + $0x30] sm:$0xff]
        %v562 = vld [vmem:[%s554 + $0x38] sm:$0xff]
        %v563 = vld [vmem:[%s554 + $0x40] sm:$0xff]
        %v564 = vld [vmem:[%s554 + $0x48] sm:$0xff]
        %v565 = vld [vmem:[%s554 + $0x50] sm:$0xff]
        %v566 = vld [vmem:[%s554 + $0x58] sm:$0xff]
        %v567 = vld [vmem:[%s554 + $0x60] sm:$0x3]
        %v569 = vsel %vm380, %v555, 0
        %v572 = vsel %vm380, %v556, 0
        %v575 = vsel %vm380, %v557, 0
        %v578 = vsel %vm380, %v558, 0
        %v581 = vsel %vm380, %v559, 0
        %v584 = vsel %vm380, %v560, 0
        %v587 = vsel %vm380, %v561, 0
        %v590 = vsel %vm380, %v562, 0
        %v593 = vsel %vm380, %v563, 0
        %v596 = vsel %vm380, %v564, 0
        %v599 = vsel %vm380, %v565, 0
        %v602 = vsel %vm380, %v566, 0
        %v605 = vsel %vm380, %v567, 0
        %607 = vmatprep.subr.mxu0 0.0
        %608 = vmatpush1.msra.mxu0 0.0
        %609 = vmatprep.subr.mxu0 0.0
        %610 = vmatpush1.msra.mxu0 0.0
        %611 = vmatprep.subr.mxu0 0.0
        %612 = vmatpush1.msra.mxu0 0.0
        %613 = vmatprep.subr.mxu0 0.0
        %614 = vmatpush1.msra.mxu0 0.0
        %615 = vmatprep.subr.mxu0 0.0
        %616 = vmatpush1.msra.mxu0 0.0
        %617 = vmatprep.subr.mxu0 0.0
        %618 = vmatpush1.msra.mxu0 0.0
        %619 = vmatprep.subr.mxu0 0.0
        %620 = vmatpush1.msra.mxu0 0.0
        %621 = vmatprep.subr.mxu0 0.0
        %622 = vmatpush1.msra.mxu0 0.0
        %623 = vmatprep.subr.mxu0 0.0
        %624 = vmatpush1.msra.mxu0 0.0
        %625 = vmatprep.subr.mxu0 0.0
        %626 = vmatpush1.msra.mxu0 0.0
        %627 = vmatprep.subr.mxu0 0.0
        %628 = vmatpush1.msra.mxu0 0.0
        %629 = vmatprep.subr.mxu0 0.0
        %630 = vmatpush1.msra.mxu0 0.0
        %631 = vmatprep.subr.mxu0 0.0
        %632 = vmatpush1.msra.mxu0 0.0
        %633 = vmatprep.subr.mxu0 0.0
        %634 = vmatpush1.msra.mxu0 0.0
        %635 = vmatprep.subr.mxu0 0.0
        %636 = vmatpush1.msra.mxu0 %v422
        %637 = vmatprep.subr.mxu0 0.0
        %638 = vmatpush1.msra.mxu0 %v378
        %639 = vmatprep.subr.mxu0 0.0
        %640 = vmatpush2.msra.mxu0 0.0
        %641 = vmatprep.subr.mxu0 0.0
        %642 = vmatpush2.msra.mxu0 0.0
        %643 = vmatprep.subr.mxu0 0.0
        %644 = vmatpush2.msra.mxu0 0.0
        %645 = vmatprep.subr.mxu0 0.0
        %646 = vmatpush2.msra.mxu0 0.0
        %647 = vmatprep.subr.mxu0 0.0
        %648 = vmatpush2.msra.mxu0 0.0
        %649 = vmatprep.subr.mxu0 0.0
        %650 = vmatpush2.msra.mxu0 0.0
        %651 = vmatprep.subr.mxu0 0.0
        %652 = vmatpush2.msra.mxu0 0.0
        %653 = vmatprep.subr.mxu0 0.0
        %654 = vmatpush2.msra.mxu0 0.0
        %655 = vmatprep.subr.mxu0 0.0
        %656 = vmatpush2.msra.mxu0 0.0
        %657 = vmatprep.subr.mxu0 0.0
        %658 = vmatpush2.msra.mxu0 0.0
        %659 = vmatprep.subr.mxu0 0.0
        %660 = vmatpush2.msra.mxu0 0.0
        %661 = vmatprep.subr.mxu0 0.0
        %662 = vmatpush2.msra.mxu0 0.0
        %663 = vmatprep.subr.mxu0 0.0
        %664 = vmatpush2.msra.mxu0 0.0
        %665 = vmatprep.subr.mxu0 0.0
        %666 = vmatpush2.msra.mxu0 0.0
        %667 = vmatprep.subr.mxu0 0.0
        %668 = vmatpush2.msra.mxu0 0.0
        %669 = vmatprep.subr.mxu0 0.0
        %670 = vmatpush2.msra.mxu0 0.0
        %671 = vmatprep.mubr.f32.mxu0 0.0
        %672 = vmatmul.mubr.f32.gmra.mxu0 %v569
        %v673 = vpop.f32.mrf.mxu0
        %v674 = vadd.f32 0.0, %v673
        %v675 = vpop.f32.mrf.mxu0
        %676 = vmatprep.mubr.f32.mxu0 0.0
        %677 = vmatmul.mubr.f32.gmra.mxu0 %v572
        %v678 = vpop.f32.mrf.mxu0
        %v679 = vadd.f32 0.0, %v678
        %v680 = vpop.f32.mrf.mxu0
        %681 = vmatprep.mubr.f32.mxu0 0.0
        %682 = vmatmul.mubr.f32.gmra.mxu0 %v575
        %v683 = vpop.f32.mrf.mxu0
        %v684 = vadd.f32 0.0, %v683
        %v685 = vpop.f32.mrf.mxu0
        %686 = vmatprep.mubr.f32.mxu0 0.0
        %687 = vmatmul.mubr.f32.gmra.mxu0 %v578
        %v688 = vpop.f32.mrf.mxu0
        %v689 = vadd.f32 0.0, %v688
        %v690 = vpop.f32.mrf.mxu0
        %691 = vmatprep.mubr.f32.mxu0 0.0
        %692 = vmatmul.mubr.f32.gmra.mxu0 %v581
        %v693 = vpop.f32.mrf.mxu0
        %v694 = vadd.f32 0.0, %v693
        %v695 = vpop.f32.mrf.mxu0
        %696 = vmatprep.mubr.f32.mxu0 0.0
        %697 = vmatmul.mubr.f32.gmra.mxu0 %v584
        %v698 = vpop.f32.mrf.mxu0
        %v699 = vadd.f32 0.0, %v698
        %v700 = vpop.f32.mrf.mxu0
        %701 = vmatprep.mubr.f32.mxu0 0.0
        %702 = vmatmul.mubr.f32.gmra.mxu0 %v587
        %v703 = vpop.f32.mrf.mxu0
        %v704 = vadd.f32 0.0, %v703
        %v705 = vpop.f32.mrf.mxu0
        %706 = vmatprep.mubr.f32.mxu0 0.0
        %707 = vmatmul.mubr.f32.gmra.mxu0 %v590
        %v708 = vpop.f32.mrf.mxu0
        %v709 = vadd.f32 0.0, %v708
        %v710 = vpop.f32.mrf.mxu0
        %711 = vmatprep.mubr.f32.mxu0 0.0
        %712 = vmatmul.mubr.f32.gmra.mxu0 %v593
        %v713 = vpop.f32.mrf.mxu0
        %v714 = vadd.f32 0.0, %v713
        %v715 = vpop.f32.mrf.mxu0
        %716 = vmatprep.mubr.f32.mxu0 0.0
        %717 = vmatmul.mubr.f32.gmra.mxu0 %v596
        %v718 = vpop.f32.mrf.mxu0
        %v719 = vadd.f32 0.0, %v718
        %v720 = vpop.f32.mrf.mxu0
        %721 = vmatprep.mubr.f32.mxu0 0.0
        %722 = vmatmul.mubr.f32.gmra.mxu0 %v599
        %v723 = vpop.f32.mrf.mxu0
        %v724 = vadd.f32 0.0, %v723
        %v725 = vpop.f32.mrf.mxu0
        %726 = vmatprep.mubr.f32.mxu0 0.0
        %727 = vmatmul.mubr.f32.gmra.mxu0 %v602
        %v728 = vpop.f32.mrf.mxu0
        %v729 = vadd.f32 0.0, %v728
        %v730 = vpop.f32.mrf.mxu0
        %731 = vmatprep.mubr.f32.mxu0 0.0
        %732 = vmatmul.mubr.f32.gmra.mxu0 %v605
        %v733 = vpop.f32.mrf.mxu0
        %v734 = vadd.f32 0.0, %v733
        %v735 = vpop.f32.mrf.mxu0
        %736 = vdwg.mxu0
        %v737 = vmax.f32 %v491, %v674
        %v738 = vmax.f32 %v496, %v679
        %v739 = vmax.f32 %v501, %v684
        %v740 = vmax.f32 %v506, %v689
        %v741 = vmax.f32 %v511, %v694
        %v742 = vmax.f32 %v516, %v699
        %v743 = vmax.f32 %v521, %v704
        %v744 = vmax.f32 %v526, %v709
        %v745 = vmax.f32 %v531, %v714
        %v746 = vmax.f32 %v536, %v719
        %v747 = vmax.f32 %v541, %v724
        %v748 = vmax.f32 %v546, %v729
        %v749 = vmax.f32 %v551, %v734
        %s750 = scalar_lea.vmem %s329, 208
        %v751 = vld [vmem:[%s750] sm:$0xff]
        %v752 = vld [vmem:[%s750 + $0x8] sm:$0xff]
        %v753 = vld [vmem:[%s750 + $0x10] sm:$0xff]
        %v754 = vld [vmem:[%s750 + $0x18] sm:$0xff]
        %v755 = vld [vmem:[%s750 + $0x20] sm:$0xff]
        %v756 = vld [vmem:[%s750 + $0x28] sm:$0xff]
        %v757 = vld [vmem:[%s750 + $0x30] sm:$0xff]
        %v758 = vld [vmem:[%s750 + $0x38] sm:$0xff]
        %v759 = vld [vmem:[%s750 + $0x40] sm:$0xff]
        %v760 = vld [vmem:[%s750 + $0x48] sm:$0xff]
        %v761 = vld [vmem:[%s750 + $0x50] sm:$0xff]
        %v762 = vld [vmem:[%s750 + $0x58] sm:$0xff]
        %v763 = vld [vmem:[%s750 + $0x60] sm:$0x3]
        %v765 = vsel %vm380, %v751, 0
        %v768 = vsel %vm380, %v752, 0
        %v771 = vsel %vm380, %v753, 0
        %v774 = vsel %vm380, %v754, 0
        %v777 = vsel %vm380, %v755, 0
        %v780 = vsel %vm380, %v756, 0
        %v783 = vsel %vm380, %v757, 0
        %v786 = vsel %vm380, %v758, 0
        %v789 = vsel %vm380, %v759, 0
        %v792 = vsel %vm380, %v760, 0
        %v795 = vsel %vm380, %v761, 0
        %v798 = vsel %vm380, %v762, 0
        %v801 = vsel %vm380, %v763, 0
        %803 = vmatprep.subr.mxu0 0.0
        %804 = vmatpush1.msra.mxu0 0.0
        %805 = vmatprep.subr.mxu0 0.0
        %806 = vmatpush1.msra.mxu0 0.0
        %807 = vmatprep.subr.mxu0 0.0
        %808 = vmatpush1.msra.mxu0 0.0
        %809 = vmatprep.subr.mxu0 0.0
        %810 = vmatpush1.msra.mxu0 0.0
        %811 = vmatprep.subr.mxu0 0.0
        %812 = vmatpush1.msra.mxu0 0.0
        %813 = vmatprep.subr.mxu0 0.0
        %814 = vmatpush1.msra.mxu0 0.0
        %815 = vmatprep.subr.mxu0 0.0
        %816 = vmatpush1.msra.mxu0 0.0
        %817 = vmatprep.subr.mxu0 0.0
        %818 = vmatpush1.msra.mxu0 0.0
        %819 = vmatprep.subr.mxu0 0.0
        %820 = vmatpush1.msra.mxu0 0.0
        %821 = vmatprep.subr.mxu0 0.0
        %822 = vmatpush1.msra.mxu0 0.0
        %823 = vmatprep.subr.mxu0 0.0
        %824 = vmatpush1.msra.mxu0 0.0
        %825 = vmatprep.subr.mxu0 0.0
        %826 = vmatpush1.msra.mxu0 0.0
        %827 = vmatprep.subr.mxu0 0.0
        %828 = vmatpush1.msra.mxu0 0.0
        %829 = vmatprep.subr.mxu0 0.0
        %830 = vmatpush1.msra.mxu0 0.0
        %831 = vmatprep.subr.mxu0 0.0
        %832 = vmatpush1.msra.mxu0 %v422
        %833 = vmatprep.subr.mxu0 0.0
        %834 = vmatpush1.msra.mxu0 %v378
        %835 = vmatprep.subr.mxu0 0.0
        %836 = vmatpush2.msra.mxu0 0.0
        %837 = vmatprep.subr.mxu0 0.0
        %838 = vmatpush2.msra.mxu0 0.0
        %839 = vmatprep.subr.mxu0 0.0
        %840 = vmatpush2.msra.mxu0 0.0
        %841 = vmatprep.subr.mxu0 0.0
        %842 = vmatpush2.msra.mxu0 0.0
        %843 = vmatprep.subr.mxu0 0.0
        %844 = vmatpush2.msra.mxu0 0.0
        %845 = vmatprep.subr.mxu0 0.0
        %846 = vmatpush2.msra.mxu0 0.0
        %847 = vmatprep.subr.mxu0 0.0
        %848 = vmatpush2.msra.mxu0 0.0
        %849 = vmatprep.subr.mxu0 0.0
        %850 = vmatpush2.msra.mxu0 0.0
        %851 = vmatprep.subr.mxu0 0.0
        %852 = vmatpush2.msra.mxu0 0.0
        %853 = vmatprep.subr.mxu0 0.0
        %854 = vmatpush2.msra.mxu0 0.0
        %855 = vmatprep.subr.mxu0 0.0
        %856 = vmatpush2.msra.mxu0 0.0
        %857 = vmatprep.subr.mxu0 0.0
        %858 = vmatpush2.msra.mxu0 0.0
        %859 = vmatprep.subr.mxu0 0.0
        %860 = vmatpush2.msra.mxu0 0.0
        %861 = vmatprep.subr.mxu0 0.0
        %862 = vmatpush2.msra.mxu0 0.0
        %863 = vmatprep.subr.mxu0 0.0
        %864 = vmatpush2.msra.mxu0 0.0
        %865 = vmatprep.subr.mxu0 0.0
        %866 = vmatpush2.msra.mxu0 0.0
        %867 = vmatprep.mubr.f32.mxu0 0.0
        %868 = vmatmul.mubr.f32.gmra.mxu0 %v765
        %v869 = vpop.f32.mrf.mxu0
        %v870 = vadd.f32 0.0, %v869
        %v871 = vpop.f32.mrf.mxu0
        %872 = vmatprep.mubr.f32.mxu0 0.0
        %873 = vmatmul.mubr.f32.gmra.mxu0 %v768
        %v874 = vpop.f32.mrf.mxu0
        %v875 = vadd.f32 0.0, %v874
        %v876 = vpop.f32.mrf.mxu0
        %877 = vmatprep.mubr.f32.mxu0 0.0
        %878 = vmatmul.mubr.f32.gmra.mxu0 %v771
        %v879 = vpop.f32.mrf.mxu0
        %v880 = vadd.f32 0.0, %v879
        %v881 = vpop.f32.mrf.mxu0
        %882 = vmatprep.mubr.f32.mxu0 0.0
        %883 = vmatmul.mubr.f32.gmra.mxu0 %v774
        %v884 = vpop.f32.mrf.mxu0
        %v885 = vadd.f32 0.0, %v884
        %v886 = vpop.f32.mrf.mxu0
        %887 = vmatprep.mubr.f32.mxu0 0.0
        %888 = vmatmul.mubr.f32.gmra.mxu0 %v777
        %v889 = vpop.f32.mrf.mxu0
        %v890 = vadd.f32 0.0, %v889
        %v891 = vpop.f32.mrf.mxu0
        %892 = vmatprep.mubr.f32.mxu0 0.0
        %893 = vmatmul.mubr.f32.gmra.mxu0 %v780
        %v894 = vpop.f32.mrf.mxu0
        %v895 = vadd.f32 0.0, %v894
        %v896 = vpop.f32.mrf.mxu0
        %897 = vmatprep.mubr.f32.mxu0 0.0
        %898 = vmatmul.mubr.f32.gmra.mxu0 %v783
        %v899 = vpop.f32.mrf.mxu0
        %v900 = vadd.f32 0.0, %v899
        %v901 = vpop.f32.mrf.mxu0
        %902 = vmatprep.mubr.f32.mxu0 0.0
        %903 = vmatmul.mubr.f32.gmra.mxu0 %v786
        %v904 = vpop.f32.mrf.mxu0
        %v905 = vadd.f32 0.0, %v904
        %v906 = vpop.f32.mrf.mxu0
        %907 = vmatprep.mubr.f32.mxu0 0.0
        %908 = vmatmul.mubr.f32.gmra.mxu0 %v789
        %v909 = vpop.f32.mrf.mxu0
        %v910 = vadd.f32 0.0, %v909
        %v911 = vpop.f32.mrf.mxu0
        %912 = vmatprep.mubr.f32.mxu0 0.0
        %913 = vmatmul.mubr.f32.gmra.mxu0 %v792
        %v914 = vpop.f32.mrf.mxu0
        %v915 = vadd.f32 0.0, %v914
        %v916 = vpop.f32.mrf.mxu0
        %917 = vmatprep.mubr.f32.mxu0 0.0
        %918 = vmatmul.mubr.f32.gmra.mxu0 %v795
        %v919 = vpop.f32.mrf.mxu0
        %v920 = vadd.f32 0.0, %v919
        %v921 = vpop.f32.mrf.mxu0
        %922 = vmatprep.mubr.f32.mxu0 0.0
        %923 = vmatmul.mubr.f32.gmra.mxu0 %v798
        %v924 = vpop.f32.mrf.mxu0
        %v925 = vadd.f32 0.0, %v924
        %v926 = vpop.f32.mrf.mxu0
        %927 = vmatprep.mubr.f32.mxu0 0.0
        %928 = vmatmul.mubr.f32.gmra.mxu0 %v801
        %v929 = vpop.f32.mrf.mxu0
        %v930 = vadd.f32 0.0, %v929
        %v931 = vpop.f32.mrf.mxu0
        %932 = vdwg.mxu0
        %v933 = vmax.f32 %v737, %v870
        %v934 = vmax.f32 %v738, %v875
        %v935 = vmax.f32 %v739, %v880
        %v936 = vmax.f32 %v740, %v885
        %v937 = vmax.f32 %v741, %v890
        %v938 = vmax.f32 %v742, %v895
        %v939 = vmax.f32 %v743, %v900
        %v940 = vmax.f32 %v744, %v905
        %v941 = vmax.f32 %v745, %v910
        %v942 = vmax.f32 %v746, %v915
        %v943 = vmax.f32 %v747, %v920
        %v944 = vmax.f32 %v748, %v925
        %v945 = vmax.f32 %v749, %v930
        %s946 = scalar_lea.vmem %s329, 312
        %v947 = vld [vmem:[%s946] sm:$0xff]
        %v948 = vld [vmem:[%s946 + $0x8] sm:$0xff]
        %v949 = vld [vmem:[%s946 + $0x10] sm:$0xff]
        %v950 = vld [vmem:[%s946 + $0x18] sm:$0xff]
        %v951 = vld [vmem:[%s946 + $0x20] sm:$0xff]
        %v952 = vld [vmem:[%s946 + $0x28] sm:$0xff]
        %v953 = vld [vmem:[%s946 + $0x30] sm:$0xff]
        %v954 = vld [vmem:[%s946 + $0x38] sm:$0xff]
        %v955 = vld [vmem:[%s946 + $0x40] sm:$0xff]
        %v956 = vld [vmem:[%s946 + $0x48] sm:$0xff]
        %v957 = vld [vmem:[%s946 + $0x50] sm:$0xff]
        %v958 = vld [vmem:[%s946 + $0x58] sm:$0xff]
        %v959 = vld [vmem:[%s946 + $0x60] sm:$0x3]
        %v961 = vsel %vm380, %v947, 0
        %v964 = vsel %vm380, %v948, 0
        %v967 = vsel %vm380, %v949, 0
        %v970 = vsel %vm380, %v950, 0
        %v973 = vsel %vm380, %v951, 0
        %v976 = vsel %vm380, %v952, 0
        %v979 = vsel %vm380, %v953, 0
        %v982 = vsel %vm380, %v954, 0
        %v985 = vsel %vm380, %v955, 0
        %v988 = vsel %vm380, %v956, 0
        %v991 = vsel %vm380, %v957, 0
        %v994 = vsel %vm380, %v958, 0
        %v997 = vsel %vm380, %v959, 0
        %999 = vmatprep.subr.mxu0 0.0
        %1000 = vmatpush1.msra.mxu0 0.0
        %1001 = vmatprep.subr.mxu0 0.0
        %1002 = vmatpush1.msra.mxu0 0.0
        %1003 = vmatprep.subr.mxu0 0.0
        %1004 = vmatpush1.msra.mxu0 0.0
        %1005 = vmatprep.subr.mxu0 0.0
        %1006 = vmatpush1.msra.mxu0 0.0
        %1007 = vmatprep.subr.mxu0 0.0
        %1008 = vmatpush1.msra.mxu0 0.0
        %1009 = vmatprep.subr.mxu0 0.0
        %1010 = vmatpush1.msra.mxu0 0.0
        %1011 = vmatprep.subr.mxu0 0.0
        %1012 = vmatpush1.msra.mxu0 0.0
        %1013 = vmatprep.subr.mxu0 0.0
        %1014 = vmatpush1.msra.mxu0 0.0
        %1015 = vmatprep.subr.mxu0 0.0
        %1016 = vmatpush1.msra.mxu0 0.0
        %1017 = vmatprep.subr.mxu0 0.0
        %1018 = vmatpush1.msra.mxu0 0.0
        %1019 = vmatprep.subr.mxu0 0.0
        %1020 = vmatpush1.msra.mxu0 0.0
        %1021 = vmatprep.subr.mxu0 0.0
        %1022 = vmatpush1.msra.mxu0 0.0
        %1023 = vmatprep.subr.mxu0 0.0
        %1024 = vmatpush1.msra.mxu0 0.0
        %1025 = vmatprep.subr.mxu0 0.0
        %1026 = vmatpush1.msra.mxu0 0.0
        %1027 = vmatprep.subr.mxu0 0.0
        %1028 = vmatpush1.msra.mxu0 %v422
        %1029 = vmatprep.subr.mxu0 0.0
        %1030 = vmatpush1.msra.mxu0 %v378
        %1031 = vmatprep.subr.mxu0 0.0
        %1032 = vmatpush2.msra.mxu0 0.0
        %1033 = vmatprep.subr.mxu0 0.0
        %1034 = vmatpush2.msra.mxu0 0.0
        %1035 = vmatprep.subr.mxu0 0.0
        %1036 = vmatpush2.msra.mxu0 0.0
        %1037 = vmatprep.subr.mxu0 0.0
        %1038 = vmatpush2.msra.mxu0 0.0
        %1039 = vmatprep.subr.mxu0 0.0
        %1040 = vmatpush2.msra.mxu0 0.0
        %1041 = vmatprep.subr.mxu0 0.0
        %1042 = vmatpush2.msra.mxu0 0.0
        %1043 = vmatprep.subr.mxu0 0.0
        %1044 = vmatpush2.msra.mxu0 0.0
        %1045 = vmatprep.subr.mxu0 0.0
        %1046 = vmatpush2.msra.mxu0 0.0
        %1047 = vmatprep.subr.mxu0 0.0
        %1048 = vmatpush2.msra.mxu0 0.0
        %1049 = vmatprep.subr.mxu0 0.0
        %1050 = vmatpush2.msra.mxu0 0.0
        %1051 = vmatprep.subr.mxu0 0.0
        %1052 = vmatpush2.msra.mxu0 0.0
        %1053 = vmatprep.subr.mxu0 0.0
        %1054 = vmatpush2.msra.mxu0 0.0
        %1055 = vmatprep.subr.mxu0 0.0
        %1056 = vmatpush2.msra.mxu0 0.0
        %1057 = vmatprep.subr.mxu0 0.0
        %1058 = vmatpush2.msra.mxu0 0.0
        %1059 = vmatprep.subr.mxu0 0.0
        %1060 = vmatpush2.msra.mxu0 0.0
        %1061 = vmatprep.subr.mxu0 0.0
        %1062 = vmatpush2.msra.mxu0 0.0
        %1063 = vmatprep.mubr.f32.mxu0 0.0
        %1064 = vmatmul.mubr.f32.gmra.mxu0 %v961
        %v1065 = vpop.f32.mrf.mxu0
        %v1066 = vadd.f32 0.0, %v1065
        %v1067 = vpop.f32.mrf.mxu0
        %1068 = vmatprep.mubr.f32.mxu0 0.0
        %1069 = vmatmul.mubr.f32.gmra.mxu0 %v964
        %v1070 = vpop.f32.mrf.mxu0
        %v1071 = vadd.f32 0.0, %v1070
        %v1072 = vpop.f32.mrf.mxu0
        %1073 = vmatprep.mubr.f32.mxu0 0.0
        %1074 = vmatmul.mubr.f32.gmra.mxu0 %v967
        %v1075 = vpop.f32.mrf.mxu0
        %v1076 = vadd.f32 0.0, %v1075
        %v1077 = vpop.f32.mrf.mxu0
        %1078 = vmatprep.mubr.f32.mxu0 0.0
        %1079 = vmatmul.mubr.f32.gmra.mxu0 %v970
        %v1080 = vpop.f32.mrf.mxu0
        %v1081 = vadd.f32 0.0, %v1080
        %v1082 = vpop.f32.mrf.mxu0
        %1083 = vmatprep.mubr.f32.mxu0 0.0
        %1084 = vmatmul.mubr.f32.gmra.mxu0 %v973
        %v1085 = vpop.f32.mrf.mxu0
        %v1086 = vadd.f32 0.0, %v1085
        %v1087 = vpop.f32.mrf.mxu0
        %1088 = vmatprep.mubr.f32.mxu0 0.0
        %1089 = vmatmul.mubr.f32.gmra.mxu0 %v976
        %v1090 = vpop.f32.mrf.mxu0
        %v1091 = vadd.f32 0.0, %v1090
        %v1092 = vpop.f32.mrf.mxu0
        %1093 = vmatprep.mubr.f32.mxu0 0.0
        %1094 = vmatmul.mubr.f32.gmra.mxu0 %v979
        %v1095 = vpop.f32.mrf.mxu0
        %v1096 = vadd.f32 0.0, %v1095
        %v1097 = vpop.f32.mrf.mxu0
        %1098 = vmatprep.mubr.f32.mxu0 0.0
        %1099 = vmatmul.mubr.f32.gmra.mxu0 %v982
        %v1100 = vpop.f32.mrf.mxu0
        %v1101 = vadd.f32 0.0, %v1100
        %v1102 = vpop.f32.mrf.mxu0
        %1103 = vmatprep.mubr.f32.mxu0 0.0
        %1104 = vmatmul.mubr.f32.gmra.mxu0 %v985
        %v1105 = vpop.f32.mrf.mxu0
        %v1106 = vadd.f32 0.0, %v1105
        %v1107 = vpop.f32.mrf.mxu0
        %1108 = vmatprep.mubr.f32.mxu0 0.0
        %1109 = vmatmul.mubr.f32.gmra.mxu0 %v988
        %v1110 = vpop.f32.mrf.mxu0
        %v1111 = vadd.f32 0.0, %v1110
        %v1112 = vpop.f32.mrf.mxu0
        %1113 = vmatprep.mubr.f32.mxu0 0.0
        %1114 = vmatmul.mubr.f32.gmra.mxu0 %v991
        %v1115 = vpop.f32.mrf.mxu0
        %v1116 = vadd.f32 0.0, %v1115
        %v1117 = vpop.f32.mrf.mxu0
        %1118 = vmatprep.mubr.f32.mxu0 0.0
        %1119 = vmatmul.mubr.f32.gmra.mxu0 %v994
        %v1120 = vpop.f32.mrf.mxu0
        %v1121 = vadd.f32 0.0, %v1120
        %v1122 = vpop.f32.mrf.mxu0
        %1123 = vmatprep.mubr.f32.mxu0 0.0
        %1124 = vmatmul.mubr.f32.gmra.mxu0 %v997
        %v1125 = vpop.f32.mrf.mxu0
        %v1126 = vadd.f32 0.0, %v1125
        %v1127 = vpop.f32.mrf.mxu0
        %1128 = vdwg.mxu0
        %v1129 = vmax.f32 %v933, %v1066
        %v1130 = vmax.f32 %v934, %v1071
        %v1131 = vmax.f32 %v935, %v1076
        %v1132 = vmax.f32 %v936, %v1081
        %v1133 = vmax.f32 %v937, %v1086
        %v1134 = vmax.f32 %v938, %v1091
        %v1135 = vmax.f32 %v939, %v1096
        %v1136 = vmax.f32 %v940, %v1101
        %v1137 = vmax.f32 %v941, %v1106
        %v1138 = vmax.f32 %v942, %v1111
        %v1139 = vmax.f32 %v943, %v1116
        %v1140 = vmax.f32 %v944, %v1121
        %v1141 = vmax.f32 %v945, %v1126
        %v1142 = vld [vmem:[%s2] sm:$0x1]
        %v1144 = vlaneseq
        %v1145 = vshrl.u32 %v1144, 7
        %v1146 = vsub.s32 0, %v1145
        %v1147 = vrot.slane %v1142, %v1146
        %v1149 = vadd.f32 %v1129, %v1147
        %v1150 = vadd.f32 %v1130, %v1147
        %v1151 = vadd.f32 %v1131, %v1147
        %v1152 = vadd.f32 %v1132, %v1147
        %v1153 = vadd.f32 %v1133, %v1147
        %v1154 = vadd.f32 %v1134, %v1147
        %v1155 = vadd.f32 %v1135, %v1147
        %v1156 = vadd.f32 %v1136, %v1147
        %v1157 = vadd.f32 %v1137, %v1147
        %v1158 = vadd.f32 %v1138, %v1147
        %v1159 = vadd.f32 %v1139, %v1147
        %v1160 = vadd.f32 %v1140, %v1147
        %v1161 = vadd.f32 %v1141, %v1147
        %v1162 = vmax.f32 %v1149, 0.0
        %v1163 = vmax.f32 %v1150, 0.0
        %v1164 = vmax.f32 %v1151, 0.0
        %v1165 = vmax.f32 %v1152, 0.0
        %v1166 = vmax.f32 %v1153, 0.0
        %v1167 = vmax.f32 %v1154, 0.0
        %v1168 = vmax.f32 %v1155, 0.0
        %v1169 = vmax.f32 %v1156, 0.0
        %v1170 = vmax.f32 %v1157, 0.0
        %v1171 = vmax.f32 %v1158, 0.0
        %v1172 = vmax.f32 %v1159, 0.0
        %v1173 = vmax.f32 %v1160, 0.0
        %v1174 = vmax.f32 %v1161, 0.0
        %s1175 = scalar_lea.vmem %s329, 416
        %v1176 = vld [vmem:[%s1175] sm:$0xff]
        %v1177 = vld [vmem:[%s1175 + $0x8] sm:$0xff]
        %v1178 = vld [vmem:[%s1175 + $0x10] sm:$0xff]
        %v1179 = vld [vmem:[%s1175 + $0x18] sm:$0xff]
        %v1180 = vld [vmem:[%s1175 + $0x20] sm:$0xff]
        %v1181 = vld [vmem:[%s1175 + $0x28] sm:$0xff]
        %v1182 = vld [vmem:[%s1175 + $0x30] sm:$0xff]
        %v1183 = vld [vmem:[%s1175 + $0x38] sm:$0xff]
        %v1184 = vld [vmem:[%s1175 + $0x40] sm:$0xff]
        %v1185 = vld [vmem:[%s1175 + $0x48] sm:$0xff]
        %v1186 = vld [vmem:[%s1175 + $0x50] sm:$0xff]
        %v1187 = vld [vmem:[%s1175 + $0x58] sm:$0xff]
        %v1188 = vld [vmem:[%s1175 + $0x60] sm:$0x3]
        %v1190 = vsel %vm380, %v1176, 0
        %v1193 = vsel %vm380, %v1177, 0
        %v1196 = vsel %vm380, %v1178, 0
        %v1199 = vsel %vm380, %v1179, 0
        %v1202 = vsel %vm380, %v1180, 0
        %v1205 = vsel %vm380, %v1181, 0
        %v1208 = vsel %vm380, %v1182, 0
        %v1211 = vsel %vm380, %v1183, 0
        %v1214 = vsel %vm380, %v1184, 0
        %v1217 = vsel %vm380, %v1185, 0
        %v1220 = vsel %vm380, %v1186, 0
        %v1223 = vsel %vm380, %v1187, 0
        %v1226 = vsel %vm380, %v1188, 0
        %1228 = vmatprep.subr.mxu0 0.0
        %1229 = vmatpush1.msra.mxu0 0.0
        %1230 = vmatprep.subr.mxu0 0.0
        %1231 = vmatpush1.msra.mxu0 0.0
        %1232 = vmatprep.subr.mxu0 0.0
        %1233 = vmatpush1.msra.mxu0 0.0
        %1234 = vmatprep.subr.mxu0 0.0
        %1235 = vmatpush1.msra.mxu0 0.0
        %1236 = vmatprep.subr.mxu0 0.0
        %1237 = vmatpush1.msra.mxu0 0.0
        %1238 = vmatprep.subr.mxu0 0.0
        %1239 = vmatpush1.msra.mxu0 0.0
        %1240 = vmatprep.subr.mxu0 0.0
        %1241 = vmatpush1.msra.mxu0 0.0
        %1242 = vmatprep.subr.mxu0 0.0
        %1243 = vmatpush1.msra.mxu0 0.0
        %1244 = vmatprep.subr.mxu0 0.0
        %1245 = vmatpush1.msra.mxu0 0.0
        %1246 = vmatprep.subr.mxu0 0.0
        %1247 = vmatpush1.msra.mxu0 0.0
        %1248 = vmatprep.subr.mxu0 0.0
        %1249 = vmatpush1.msra.mxu0 0.0
        %1250 = vmatprep.subr.mxu0 0.0
        %1251 = vmatpush1.msra.mxu0 0.0
        %1252 = vmatprep.subr.mxu0 0.0
        %1253 = vmatpush1.msra.mxu0 0.0
        %1254 = vmatprep.subr.mxu0 0.0
        %1255 = vmatpush1.msra.mxu0 0.0
        %1256 = vmatprep.subr.mxu0 0.0
        %1257 = vmatpush1.msra.mxu0 %v422
        %1258 = vmatprep.subr.mxu0 0.0
        %1259 = vmatpush1.msra.mxu0 %v378
        %1260 = vmatprep.subr.mxu0 0.0
        %1261 = vmatpush2.msra.mxu0 0.0
        %1262 = vmatprep.subr.mxu0 0.0
        %1263 = vmatpush2.msra.mxu0 0.0
        %1264 = vmatprep.subr.mxu0 0.0
        %1265 = vmatpush2.msra.mxu0 0.0
        %1266 = vmatprep.subr.mxu0 0.0
        %1267 = vmatpush2.msra.mxu0 0.0
        %1268 = vmatprep.subr.mxu0 0.0
        %1269 = vmatpush2.msra.mxu0 0.0
        %1270 = vmatprep.subr.mxu0 0.0
        %1271 = vmatpush2.msra.mxu0 0.0
        %1272 = vmatprep.subr.mxu0 0.0
        %1273 = vmatpush2.msra.mxu0 0.0
        %1274 = vmatprep.subr.mxu0 0.0
        %1275 = vmatpush2.msra.mxu0 0.0
        %1276 = vmatprep.subr.mxu0 0.0
        %1277 = vmatpush2.msra.mxu0 0.0
        %1278 = vmatprep.subr.mxu0 0.0
        %1279 = vmatpush2.msra.mxu0 0.0
        %1280 = vmatprep.subr.mxu0 0.0
        %1281 = vmatpush2.msra.mxu0 0.0
        %1282 = vmatprep.subr.mxu0 0.0
        %1283 = vmatpush2.msra.mxu0 0.0
        %1284 = vmatprep.subr.mxu0 0.0
        %1285 = vmatpush2.msra.mxu0 0.0
        %1286 = vmatprep.subr.mxu0 0.0
        %1287 = vmatpush2.msra.mxu0 0.0
        %1288 = vmatprep.subr.mxu0 0.0
        %1289 = vmatpush2.msra.mxu0 0.0
        %1290 = vmatprep.subr.mxu0 0.0
        %1291 = vmatpush2.msra.mxu0 0.0
        %1292 = vmatprep.mubr.f32.mxu0 0.0
        %1293 = vmatmul.mubr.f32.gmra.mxu0 %v1190
        %v1294 = vpop.f32.mrf.mxu0
        %v1295 = vadd.f32 0.0, %v1294
        %v1296 = vpop.f32.mrf.mxu0
        %1297 = vmatprep.mubr.f32.mxu0 0.0
        %1298 = vmatmul.mubr.f32.gmra.mxu0 %v1193
        %v1299 = vpop.f32.mrf.mxu0
        %v1300 = vadd.f32 0.0, %v1299
        %v1301 = vpop.f32.mrf.mxu0
        %1302 = vmatprep.mubr.f32.mxu0 0.0
        %1303 = vmatmul.mubr.f32.gmra.mxu0 %v1196
        %v1304 = vpop.f32.mrf.mxu0
        %v1305 = vadd.f32 0.0, %v1304
        %v1306 = vpop.f32.mrf.mxu0
        %1307 = vmatprep.mubr.f32.mxu0 0.0
        %1308 = vmatmul.mubr.f32.gmra.mxu0 %v1199
        %v1309 = vpop.f32.mrf.mxu0
        %v1310 = vadd.f32 0.0, %v1309
        %v1311 = vpop.f32.mrf.mxu0
        %1312 = vmatprep.mubr.f32.mxu0 0.0
        %1313 = vmatmul.mubr.f32.gmra.mxu0 %v1202
        %v1314 = vpop.f32.mrf.mxu0
        %v1315 = vadd.f32 0.0, %v1314
        %v1316 = vpop.f32.mrf.mxu0
        %1317 = vmatprep.mubr.f32.mxu0 0.0
        %1318 = vmatmul.mubr.f32.gmra.mxu0 %v1205
        %v1319 = vpop.f32.mrf.mxu0
        %v1320 = vadd.f32 0.0, %v1319
        %v1321 = vpop.f32.mrf.mxu0
        %1322 = vmatprep.mubr.f32.mxu0 0.0
        %1323 = vmatmul.mubr.f32.gmra.mxu0 %v1208
        %v1324 = vpop.f32.mrf.mxu0
        %v1325 = vadd.f32 0.0, %v1324
        %v1326 = vpop.f32.mrf.mxu0
        %1327 = vmatprep.mubr.f32.mxu0 0.0
        %1328 = vmatmul.mubr.f32.gmra.mxu0 %v1211
        %v1329 = vpop.f32.mrf.mxu0
        %v1330 = vadd.f32 0.0, %v1329
        %v1331 = vpop.f32.mrf.mxu0
        %1332 = vmatprep.mubr.f32.mxu0 0.0
        %1333 = vmatmul.mubr.f32.gmra.mxu0 %v1214
        %v1334 = vpop.f32.mrf.mxu0
        %v1335 = vadd.f32 0.0, %v1334
        %v1336 = vpop.f32.mrf.mxu0
        %1337 = vmatprep.mubr.f32.mxu0 0.0
        %1338 = vmatmul.mubr.f32.gmra.mxu0 %v1217
        %v1339 = vpop.f32.mrf.mxu0
        %v1340 = vadd.f32 0.0, %v1339
        %v1341 = vpop.f32.mrf.mxu0
        %1342 = vmatprep.mubr.f32.mxu0 0.0
        %1343 = vmatmul.mubr.f32.gmra.mxu0 %v1220
        %v1344 = vpop.f32.mrf.mxu0
        %v1345 = vadd.f32 0.0, %v1344
        %v1346 = vpop.f32.mrf.mxu0
        %1347 = vmatprep.mubr.f32.mxu0 0.0
        %1348 = vmatmul.mubr.f32.gmra.mxu0 %v1223
        %v1349 = vpop.f32.mrf.mxu0
        %v1350 = vadd.f32 0.0, %v1349
        %v1351 = vpop.f32.mrf.mxu0
        %1352 = vmatprep.mubr.f32.mxu0 0.0
        %1353 = vmatmul.mubr.f32.gmra.mxu0 %v1226
        %v1354 = vpop.f32.mrf.mxu0
        %v1355 = vadd.f32 0.0, %v1354
        %v1356 = vpop.f32.mrf.mxu0
        %1357 = vdwg.mxu0
        %s1358 = scalar_lea.vmem %s329, 520
        %v1359 = vld [vmem:[%s1358] sm:$0xff]
        %v1360 = vld [vmem:[%s1358 + $0x8] sm:$0xff]
        %v1361 = vld [vmem:[%s1358 + $0x10] sm:$0xff]
        %v1362 = vld [vmem:[%s1358 + $0x18] sm:$0xff]
        %v1363 = vld [vmem:[%s1358 + $0x20] sm:$0xff]
        %v1364 = vld [vmem:[%s1358 + $0x28] sm:$0xff]
        %v1365 = vld [vmem:[%s1358 + $0x30] sm:$0xff]
        %v1366 = vld [vmem:[%s1358 + $0x38] sm:$0xff]
        %v1367 = vld [vmem:[%s1358 + $0x40] sm:$0xff]
        %v1368 = vld [vmem:[%s1358 + $0x48] sm:$0xff]
        %v1369 = vld [vmem:[%s1358 + $0x50] sm:$0xff]
        %v1370 = vld [vmem:[%s1358 + $0x58] sm:$0xff]
        %v1371 = vld [vmem:[%s1358 + $0x60] sm:$0x3]
        %v1373 = vsel %vm380, %v1359, 0
        %v1376 = vsel %vm380, %v1360, 0
        %v1379 = vsel %vm380, %v1361, 0
        %v1382 = vsel %vm380, %v1362, 0
        %v1385 = vsel %vm380, %v1363, 0
        %v1388 = vsel %vm380, %v1364, 0
        %v1391 = vsel %vm380, %v1365, 0
        %v1394 = vsel %vm380, %v1366, 0
        %v1397 = vsel %vm380, %v1367, 0
        %v1400 = vsel %vm380, %v1368, 0
        %v1403 = vsel %vm380, %v1369, 0
        %v1406 = vsel %vm380, %v1370, 0
        %v1409 = vsel %vm380, %v1371, 0
        %1411 = vmatprep.subr.mxu0 0.0
        %1412 = vmatpush1.msra.mxu0 0.0
        %1413 = vmatprep.subr.mxu0 0.0
        %1414 = vmatpush1.msra.mxu0 0.0
        %1415 = vmatprep.subr.mxu0 0.0
        %1416 = vmatpush1.msra.mxu0 0.0
        %1417 = vmatprep.subr.mxu0 0.0
        %1418 = vmatpush1.msra.mxu0 0.0
        %1419 = vmatprep.subr.mxu0 0.0
        %1420 = vmatpush1.msra.mxu0 0.0
        %1421 = vmatprep.subr.mxu0 0.0
        %1422 = vmatpush1.msra.mxu0 0.0
        %1423 = vmatprep.subr.mxu0 0.0
        %1424 = vmatpush1.msra.mxu0 0.0
        %1425 = vmatprep.subr.mxu0 0.0
        %1426 = vmatpush1.msra.mxu0 0.0
        %1427 = vmatprep.subr.mxu0 0.0
        %1428 = vmatpush1.msra.mxu0 0.0
        %1429 = vmatprep.subr.mxu0 0.0
        %1430 = vmatpush1.msra.mxu0 0.0
        %1431 = vmatprep.subr.mxu0 0.0
        %1432 = vmatpush1.msra.mxu0 0.0
        %1433 = vmatprep.subr.mxu0 0.0
        %1434 = vmatpush1.msra.mxu0 0.0
        %1435 = vmatprep.subr.mxu0 0.0
        %1436 = vmatpush1.msra.mxu0 0.0
        %1437 = vmatprep.subr.mxu0 0.0
        %1438 = vmatpush1.msra.mxu0 0.0
        %1439 = vmatprep.subr.mxu0 0.0
        %1440 = vmatpush1.msra.mxu0 %v422
        %1441 = vmatprep.subr.mxu0 0.0
        %1442 = vmatpush1.msra.mxu0 %v378
        %1443 = vmatprep.subr.mxu0 0.0
        %1444 = vmatpush2.msra.mxu0 0.0
        %1445 = vmatprep.subr.mxu0 0.0
        %1446 = vmatpush2.msra.mxu0 0.0
        %1447 = vmatprep.subr.mxu0 0.0
        %1448 = vmatpush2.msra.mxu0 0.0
        %1449 = vmatprep.subr.mxu0 0.0
        %1450 = vmatpush2.msra.mxu0 0.0
        %1451 = vmatprep.subr.mxu0 0.0
        %1452 = vmatpush2.msra.mxu0 0.0
        %1453 = vmatprep.subr.mxu0 0.0
        %1454 = vmatpush2.msra.mxu0 0.0
        %1455 = vmatprep.subr.mxu0 0.0
        %1456 = vmatpush2.msra.mxu0 0.0
        %1457 = vmatprep.subr.mxu0 0.0
        %1458 = vmatpush2.msra.mxu0 0.0
        %1459 = vmatprep.subr.mxu0 0.0
        %1460 = vmatpush2.msra.mxu0 0.0
        %1461 = vmatprep.subr.mxu0 0.0
        %1462 = vmatpush2.msra.mxu0 0.0
        %1463 = vmatprep.subr.mxu0 0.0
        %1464 = vmatpush2.msra.mxu0 0.0
        %1465 = vmatprep.subr.mxu0 0.0
        %1466 = vmatpush2.msra.mxu0 0.0
        %1467 = vmatprep.subr.mxu0 0.0
        %1468 = vmatpush2.msra.mxu0 0.0
        %1469 = vmatprep.subr.mxu0 0.0
        %1470 = vmatpush2.msra.mxu0 0.0
        %1471 = vmatprep.subr.mxu0 0.0
        %1472 = vmatpush2.msra.mxu0 0.0
        %1473 = vmatprep.subr.mxu0 0.0
        %1474 = vmatpush2.msra.mxu0 0.0
        %1475 = vmatprep.mubr.f32.mxu0 0.0
        %1476 = vmatmul.mubr.f32.gmra.mxu0 %v1373
        %v1477 = vpop.f32.mrf.mxu0
        %v1478 = vadd.f32 0.0, %v1477
        %v1479 = vpop.f32.mrf.mxu0
        %1480 = vmatprep.mubr.f32.mxu0 0.0
        %1481 = vmatmul.mubr.f32.gmra.mxu0 %v1376
        %v1482 = vpop.f32.mrf.mxu0
        %v1483 = vadd.f32 0.0, %v1482
        %v1484 = vpop.f32.mrf.mxu0
        %1485 = vmatprep.mubr.f32.mxu0 0.0
        %1486 = vmatmul.mubr.f32.gmra.mxu0 %v1379
        %v1487 = vpop.f32.mrf.mxu0
        %v1488 = vadd.f32 0.0, %v1487
        %v1489 = vpop.f32.mrf.mxu0
        %1490 = vmatprep.mubr.f32.mxu0 0.0
        %1491 = vmatmul.mubr.f32.gmra.mxu0 %v1382
        %v1492 = vpop.f32.mrf.mxu0
        %v1493 = vadd.f32 0.0, %v1492
        %v1494 = vpop.f32.mrf.mxu0
        %1495 = vmatprep.mubr.f32.mxu0 0.0
        %1496 = vmatmul.mubr.f32.gmra.mxu0 %v1385
        %v1497 = vpop.f32.mrf.mxu0
        %v1498 = vadd.f32 0.0, %v1497
        %v1499 = vpop.f32.mrf.mxu0
        %1500 = vmatprep.mubr.f32.mxu0 0.0
        %1501 = vmatmul.mubr.f32.gmra.mxu0 %v1388
        %v1502 = vpop.f32.mrf.mxu0
        %v1503 = vadd.f32 0.0, %v1502
        %v1504 = vpop.f32.mrf.mxu0
        %1505 = vmatprep.mubr.f32.mxu0 0.0
        %1506 = vmatmul.mubr.f32.gmra.mxu0 %v1391
        %v1507 = vpop.f32.mrf.mxu0
        %v1508 = vadd.f32 0.0, %v1507
        %v1509 = vpop.f32.mrf.mxu0
        %1510 = vmatprep.mubr.f32.mxu0 0.0
        %1511 = vmatmul.mubr.f32.gmra.mxu0 %v1394
        %v1512 = vpop.f32.mrf.mxu0
        %v1513 = vadd.f32 0.0, %v1512
        %v1514 = vpop.f32.mrf.mxu0
        %1515 = vmatprep.mubr.f32.mxu0 0.0
        %1516 = vmatmul.mubr.f32.gmra.mxu0 %v1397
        %v1517 = vpop.f32.mrf.mxu0
        %v1518 = vadd.f32 0.0, %v1517
        %v1519 = vpop.f32.mrf.mxu0
        %1520 = vmatprep.mubr.f32.mxu0 0.0
        %1521 = vmatmul.mubr.f32.gmra.mxu0 %v1400
        %v1522 = vpop.f32.mrf.mxu0
        %v1523 = vadd.f32 0.0, %v1522
        %v1524 = vpop.f32.mrf.mxu0
        %1525 = vmatprep.mubr.f32.mxu0 0.0
        %1526 = vmatmul.mubr.f32.gmra.mxu0 %v1403
        %v1527 = vpop.f32.mrf.mxu0
        %v1528 = vadd.f32 0.0, %v1527
        %v1529 = vpop.f32.mrf.mxu0
        %1530 = vmatprep.mubr.f32.mxu0 0.0
        %1531 = vmatmul.mubr.f32.gmra.mxu0 %v1406
        %v1532 = vpop.f32.mrf.mxu0
        %v1533 = vadd.f32 0.0, %v1532
        %v1534 = vpop.f32.mrf.mxu0
        %1535 = vmatprep.mubr.f32.mxu0 0.0
        %1536 = vmatmul.mubr.f32.gmra.mxu0 %v1409
        %v1537 = vpop.f32.mrf.mxu0
        %v1538 = vadd.f32 0.0, %v1537
        %v1539 = vpop.f32.mrf.mxu0
        %1540 = vdwg.mxu0
        %v1541 = vmax.f32 %v1295, %v1478
        %v1542 = vmax.f32 %v1300, %v1483
        %v1543 = vmax.f32 %v1305, %v1488
        %v1544 = vmax.f32 %v1310, %v1493
        %v1545 = vmax.f32 %v1315, %v1498
        %v1546 = vmax.f32 %v1320, %v1503
        %v1547 = vmax.f32 %v1325, %v1508
        %v1548 = vmax.f32 %v1330, %v1513
        %v1549 = vmax.f32 %v1335, %v1518
        %v1550 = vmax.f32 %v1340, %v1523
        %v1551 = vmax.f32 %v1345, %v1528
        %v1552 = vmax.f32 %v1350, %v1533
        %v1553 = vmax.f32 %v1355, %v1538
        %s1554 = scalar_lea.vmem %s329, 624
        %v1555 = vld [vmem:[%s1554] sm:$0xff]
        %v1556 = vld [vmem:[%s1554 + $0x8] sm:$0xff]
        %v1557 = vld [vmem:[%s1554 + $0x10] sm:$0xff]
        %v1558 = vld [vmem:[%s1554 + $0x18] sm:$0xff]
        %v1559 = vld [vmem:[%s1554 + $0x20] sm:$0xff]
        %v1560 = vld [vmem:[%s1554 + $0x28] sm:$0xff]
        %v1561 = vld [vmem:[%s1554 + $0x30] sm:$0xff]
        %v1562 = vld [vmem:[%s1554 + $0x38] sm:$0xff]
        %v1563 = vld [vmem:[%s1554 + $0x40] sm:$0xff]
        %v1564 = vld [vmem:[%s1554 + $0x48] sm:$0xff]
        %v1565 = vld [vmem:[%s1554 + $0x50] sm:$0xff]
        %v1566 = vld [vmem:[%s1554 + $0x58] sm:$0xff]
        %v1567 = vld [vmem:[%s1554 + $0x60] sm:$0x3]
        %v1569 = vsel %vm380, %v1555, 0
        %v1572 = vsel %vm380, %v1556, 0
        %v1575 = vsel %vm380, %v1557, 0
        %v1578 = vsel %vm380, %v1558, 0
        %v1581 = vsel %vm380, %v1559, 0
        %v1584 = vsel %vm380, %v1560, 0
        %v1587 = vsel %vm380, %v1561, 0
        %v1590 = vsel %vm380, %v1562, 0
        %v1593 = vsel %vm380, %v1563, 0
        %v1596 = vsel %vm380, %v1564, 0
        %v1599 = vsel %vm380, %v1565, 0
        %v1602 = vsel %vm380, %v1566, 0
        %v1605 = vsel %vm380, %v1567, 0
        %1607 = vmatprep.subr.mxu0 0.0
        %1608 = vmatpush1.msra.mxu0 0.0
        %1609 = vmatprep.subr.mxu0 0.0
        %1610 = vmatpush1.msra.mxu0 0.0
        %1611 = vmatprep.subr.mxu0 0.0
        %1612 = vmatpush1.msra.mxu0 0.0
        %1613 = vmatprep.subr.mxu0 0.0
        %1614 = vmatpush1.msra.mxu0 0.0
        %1615 = vmatprep.subr.mxu0 0.0
        %1616 = vmatpush1.msra.mxu0 0.0
        %1617 = vmatprep.subr.mxu0 0.0
        %1618 = vmatpush1.msra.mxu0 0.0
        %1619 = vmatprep.subr.mxu0 0.0
        %1620 = vmatpush1.msra.mxu0 0.0
        %1621 = vmatprep.subr.mxu0 0.0
        %1622 = vmatpush1.msra.mxu0 0.0
        %1623 = vmatprep.subr.mxu0 0.0
        %1624 = vmatpush1.msra.mxu0 0.0
        %1625 = vmatprep.subr.mxu0 0.0
        %1626 = vmatpush1.msra.mxu0 0.0
        %1627 = vmatprep.subr.mxu0 0.0
        %1628 = vmatpush1.msra.mxu0 0.0
        %1629 = vmatprep.subr.mxu0 0.0
        %1630 = vmatpush1.msra.mxu0 0.0
        %1631 = vmatprep.subr.mxu0 0.0
        %1632 = vmatpush1.msra.mxu0 0.0
        %1633 = vmatprep.subr.mxu0 0.0
        %1634 = vmatpush1.msra.mxu0 0.0
        %1635 = vmatprep.subr.mxu0 0.0
        %1636 = vmatpush1.msra.mxu0 %v422
        %1637 = vmatprep.subr.mxu0 0.0
        %1638 = vmatpush1.msra.mxu0 %v378
        %1639 = vmatprep.subr.mxu0 0.0
        %1640 = vmatpush2.msra.mxu0 0.0
        %1641 = vmatprep.subr.mxu0 0.0
        %1642 = vmatpush2.msra.mxu0 0.0
        %1643 = vmatprep.subr.mxu0 0.0
        %1644 = vmatpush2.msra.mxu0 0.0
        %1645 = vmatprep.subr.mxu0 0.0
        %1646 = vmatpush2.msra.mxu0 0.0
        %1647 = vmatprep.subr.mxu0 0.0
        %1648 = vmatpush2.msra.mxu0 0.0
        %1649 = vmatprep.subr.mxu0 0.0
        %1650 = vmatpush2.msra.mxu0 0.0
        %1651 = vmatprep.subr.mxu0 0.0
        %1652 = vmatpush2.msra.mxu0 0.0
        %1653 = vmatprep.subr.mxu0 0.0
        %1654 = vmatpush2.msra.mxu0 0.0
        %1655 = vmatprep.subr.mxu0 0.0
        %1656 = vmatpush2.msra.mxu0 0.0
        %1657 = vmatprep.subr.mxu0 0.0
        %1658 = vmatpush2.msra.mxu0 0.0
        %1659 = vmatprep.subr.mxu0 0.0
        %1660 = vmatpush2.msra.mxu0 0.0
        %1661 = vmatprep.subr.mxu0 0.0
        %1662 = vmatpush2.msra.mxu0 0.0
        %1663 = vmatprep.subr.mxu0 0.0
        %1664 = vmatpush2.msra.mxu0 0.0
        %1665 = vmatprep.subr.mxu0 0.0
        %1666 = vmatpush2.msra.mxu0 0.0
        %1667 = vmatprep.subr.mxu0 0.0
        %1668 = vmatpush2.msra.mxu0 0.0
        %1669 = vmatprep.subr.mxu0 0.0
        %1670 = vmatpush2.msra.mxu0 0.0
        %1671 = vmatprep.mubr.f32.mxu0 0.0
        %1672 = vmatmul.mubr.f32.gmra.mxu0 %v1569
        %v1673 = vpop.f32.mrf.mxu0
        %v1674 = vadd.f32 0.0, %v1673
        %v1675 = vpop.f32.mrf.mxu0
        %1676 = vmatprep.mubr.f32.mxu0 0.0
        %1677 = vmatmul.mubr.f32.gmra.mxu0 %v1572
        %v1678 = vpop.f32.mrf.mxu0
        %v1679 = vadd.f32 0.0, %v1678
        %v1680 = vpop.f32.mrf.mxu0
        %1681 = vmatprep.mubr.f32.mxu0 0.0
        %1682 = vmatmul.mubr.f32.gmra.mxu0 %v1575
        %v1683 = vpop.f32.mrf.mxu0
        %v1684 = vadd.f32 0.0, %v1683
        %v1685 = vpop.f32.mrf.mxu0
        %1686 = vmatprep.mubr.f32.mxu0 0.0
        %1687 = vmatmul.mubr.f32.gmra.mxu0 %v1578
        %v1688 = vpop.f32.mrf.mxu0
        %v1689 = vadd.f32 0.0, %v1688
        %v1690 = vpop.f32.mrf.mxu0
        %1691 = vmatprep.mubr.f32.mxu0 0.0
        %1692 = vmatmul.mubr.f32.gmra.mxu0 %v1581
        %v1693 = vpop.f32.mrf.mxu0
        %v1694 = vadd.f32 0.0, %v1693
        %v1695 = vpop.f32.mrf.mxu0
        %1696 = vmatprep.mubr.f32.mxu0 0.0
        %1697 = vmatmul.mubr.f32.gmra.mxu0 %v1584
        %v1698 = vpop.f32.mrf.mxu0
        %v1699 = vadd.f32 0.0, %v1698
        %v1700 = vpop.f32.mrf.mxu0
        %1701 = vmatprep.mubr.f32.mxu0 0.0
        %1702 = vmatmul.mubr.f32.gmra.mxu0 %v1587
        %v1703 = vpop.f32.mrf.mxu0
        %v1704 = vadd.f32 0.0, %v1703
        %v1705 = vpop.f32.mrf.mxu0
        %1706 = vmatprep.mubr.f32.mxu0 0.0
        %1707 = vmatmul.mubr.f32.gmra.mxu0 %v1590
        %v1708 = vpop.f32.mrf.mxu0
        %v1709 = vadd.f32 0.0, %v1708
        %v1710 = vpop.f32.mrf.mxu0
        %1711 = vmatprep.mubr.f32.mxu0 0.0
        %1712 = vmatmul.mubr.f32.gmra.mxu0 %v1593
        %v1713 = vpop.f32.mrf.mxu0
        %v1714 = vadd.f32 0.0, %v1713
        %v1715 = vpop.f32.mrf.mxu0
        %1716 = vmatprep.mubr.f32.mxu0 0.0
        %1717 = vmatmul.mubr.f32.gmra.mxu0 %v1596
        %v1718 = vpop.f32.mrf.mxu0
        %v1719 = vadd.f32 0.0, %v1718
        %v1720 = vpop.f32.mrf.mxu0
        %1721 = vmatprep.mubr.f32.mxu0 0.0
        %1722 = vmatmul.mubr.f32.gmra.mxu0 %v1599
        %v1723 = vpop.f32.mrf.mxu0
        %v1724 = vadd.f32 0.0, %v1723
        %v1725 = vpop.f32.mrf.mxu0
        %1726 = vmatprep.mubr.f32.mxu0 0.0
        %1727 = vmatmul.mubr.f32.gmra.mxu0 %v1602
        %v1728 = vpop.f32.mrf.mxu0
        %v1729 = vadd.f32 0.0, %v1728
        %v1730 = vpop.f32.mrf.mxu0
        %1731 = vmatprep.mubr.f32.mxu0 0.0
        %1732 = vmatmul.mubr.f32.gmra.mxu0 %v1605
        %v1733 = vpop.f32.mrf.mxu0
        %v1734 = vadd.f32 0.0, %v1733
        %v1735 = vpop.f32.mrf.mxu0
        %1736 = vdwg.mxu0
        %v1737 = vmax.f32 %v1541, %v1674
        %v1738 = vmax.f32 %v1542, %v1679
        %v1739 = vmax.f32 %v1543, %v1684
        %v1740 = vmax.f32 %v1544, %v1689
        %v1741 = vmax.f32 %v1545, %v1694
        %v1742 = vmax.f32 %v1546, %v1699
        %v1743 = vmax.f32 %v1547, %v1704
        %v1744 = vmax.f32 %v1548, %v1709
        %v1745 = vmax.f32 %v1549, %v1714
        %v1746 = vmax.f32 %v1550, %v1719
        %v1747 = vmax.f32 %v1551, %v1724
        %v1748 = vmax.f32 %v1552, %v1729
        %v1749 = vmax.f32 %v1553, %v1734
        %s1750 = scalar_lea.vmem %s329, 728
        %v1751 = vld [vmem:[%s1750] sm:$0xff]
        %v1752 = vld [vmem:[%s1750 + $0x8] sm:$0xff]
        %v1753 = vld [vmem:[%s1750 + $0x10] sm:$0xff]
        %v1754 = vld [vmem:[%s1750 + $0x18] sm:$0xff]
        %v1755 = vld [vmem:[%s1750 + $0x20] sm:$0xff]
        %v1756 = vld [vmem:[%s1750 + $0x28] sm:$0xff]
        %v1757 = vld [vmem:[%s1750 + $0x30] sm:$0xff]
        %v1758 = vld [vmem:[%s1750 + $0x38] sm:$0xff]
        %v1759 = vld [vmem:[%s1750 + $0x40] sm:$0xff]
        %v1760 = vld [vmem:[%s1750 + $0x48] sm:$0xff]
        %v1761 = vld [vmem:[%s1750 + $0x50] sm:$0xff]
        %v1762 = vld [vmem:[%s1750 + $0x58] sm:$0xff]
        %v1763 = vld [vmem:[%s1750 + $0x60] sm:$0x3]
        %v1765 = vsel %vm380, %v1751, 0
        %v1768 = vsel %vm380, %v1752, 0
        %v1771 = vsel %vm380, %v1753, 0
        %v1774 = vsel %vm380, %v1754, 0
        %v1777 = vsel %vm380, %v1755, 0
        %v1780 = vsel %vm380, %v1756, 0
        %v1783 = vsel %vm380, %v1757, 0
        %v1786 = vsel %vm380, %v1758, 0
        %v1789 = vsel %vm380, %v1759, 0
        %v1792 = vsel %vm380, %v1760, 0
        %v1795 = vsel %vm380, %v1761, 0
        %v1798 = vsel %vm380, %v1762, 0
        %v1801 = vsel %vm380, %v1763, 0
        %1803 = vmatprep.subr.mxu0 0.0
        %1804 = vmatpush1.msra.mxu0 0.0
        %1805 = vmatprep.subr.mxu0 0.0
        %1806 = vmatpush1.msra.mxu0 0.0
        %1807 = vmatprep.subr.mxu0 0.0
        %1808 = vmatpush1.msra.mxu0 0.0
        %1809 = vmatprep.subr.mxu0 0.0
        %1810 = vmatpush1.msra.mxu0 0.0
        %1811 = vmatprep.subr.mxu0 0.0
        %1812 = vmatpush1.msra.mxu0 0.0
        %1813 = vmatprep.subr.mxu0 0.0
        %1814 = vmatpush1.msra.mxu0 0.0
        %1815 = vmatprep.subr.mxu0 0.0
        %1816 = vmatpush1.msra.mxu0 0.0
        %1817 = vmatprep.subr.mxu0 0.0
        %1818 = vmatpush1.msra.mxu0 0.0
        %1819 = vmatprep.subr.mxu0 0.0
        %1820 = vmatpush1.msra.mxu0 0.0
        %1821 = vmatprep.subr.mxu0 0.0
        %1822 = vmatpush1.msra.mxu0 0.0
        %1823 = vmatprep.subr.mxu0 0.0
        %1824 = vmatpush1.msra.mxu0 0.0
        %1825 = vmatprep.subr.mxu0 0.0
        %1826 = vmatpush1.msra.mxu0 0.0
        %1827 = vmatprep.subr.mxu0 0.0
        %1828 = vmatpush1.msra.mxu0 0.0
        %1829 = vmatprep.subr.mxu0 0.0
        %1830 = vmatpush1.msra.mxu0 0.0
        %1831 = vmatprep.subr.mxu0 0.0
        %1832 = vmatpush1.msra.mxu0 %v422
        %1833 = vmatprep.subr.mxu0 0.0
        %1834 = vmatpush1.msra.mxu0 %v378
        %1835 = vmatprep.subr.mxu0 0.0
        %1836 = vmatpush2.msra.mxu0 0.0
        %1837 = vmatprep.subr.mxu0 0.0
        %1838 = vmatpush2.msra.mxu0 0.0
        %1839 = vmatprep.subr.mxu0 0.0
        %1840 = vmatpush2.msra.mxu0 0.0
        %1841 = vmatprep.subr.mxu0 0.0
        %1842 = vmatpush2.msra.mxu0 0.0
        %1843 = vmatprep.subr.mxu0 0.0
        %1844 = vmatpush2.msra.mxu0 0.0
        %1845 = vmatprep.subr.mxu0 0.0
        %1846 = vmatpush2.msra.mxu0 0.0
        %1847 = vmatprep.subr.mxu0 0.0
        %1848 = vmatpush2.msra.mxu0 0.0
        %1849 = vmatprep.subr.mxu0 0.0
        %1850 = vmatpush2.msra.mxu0 0.0
        %1851 = vmatprep.subr.mxu0 0.0
        %1852 = vmatpush2.msra.mxu0 0.0
        %1853 = vmatprep.subr.mxu0 0.0
        %1854 = vmatpush2.msra.mxu0 0.0
        %1855 = vmatprep.subr.mxu0 0.0
        %1856 = vmatpush2.msra.mxu0 0.0
        %1857 = vmatprep.subr.mxu0 0.0
        %1858 = vmatpush2.msra.mxu0 0.0
        %1859 = vmatprep.subr.mxu0 0.0
        %1860 = vmatpush2.msra.mxu0 0.0
        %1861 = vmatprep.subr.mxu0 0.0
        %1862 = vmatpush2.msra.mxu0 0.0
        %1863 = vmatprep.subr.mxu0 0.0
        %1864 = vmatpush2.msra.mxu0 0.0
        %1865 = vmatprep.subr.mxu0 0.0
        %1866 = vmatpush2.msra.mxu0 0.0
        %1867 = vmatprep.mubr.f32.mxu0 0.0
        %1868 = vmatmul.mubr.f32.gmra.mxu0 %v1765
        %v1869 = vpop.f32.mrf.mxu0
        %v1870 = vadd.f32 0.0, %v1869
        %v1871 = vpop.f32.mrf.mxu0
        %1872 = vmatprep.mubr.f32.mxu0 0.0
        %1873 = vmatmul.mubr.f32.gmra.mxu0 %v1768
        %v1874 = vpop.f32.mrf.mxu0
        %v1875 = vadd.f32 0.0, %v1874
        %v1876 = vpop.f32.mrf.mxu0
        %1877 = vmatprep.mubr.f32.mxu0 0.0
        %1878 = vmatmul.mubr.f32.gmra.mxu0 %v1771
        %v1879 = vpop.f32.mrf.mxu0
        %v1880 = vadd.f32 0.0, %v1879
        %v1881 = vpop.f32.mrf.mxu0
        %1882 = vmatprep.mubr.f32.mxu0 0.0
        %1883 = vmatmul.mubr.f32.gmra.mxu0 %v1774
        %v1884 = vpop.f32.mrf.mxu0
        %v1885 = vadd.f32 0.0, %v1884
        %v1886 = vpop.f32.mrf.mxu0
        %1887 = vmatprep.mubr.f32.mxu0 0.0
        %1888 = vmatmul.mubr.f32.gmra.mxu0 %v1777
        %v1889 = vpop.f32.mrf.mxu0
        %v1890 = vadd.f32 0.0, %v1889
        %v1891 = vpop.f32.mrf.mxu0
        %1892 = vmatprep.mubr.f32.mxu0 0.0
        %1893 = vmatmul.mubr.f32.gmra.mxu0 %v1780
        %v1894 = vpop.f32.mrf.mxu0
        %v1895 = vadd.f32 0.0, %v1894
        %v1896 = vpop.f32.mrf.mxu0
        %1897 = vmatprep.mubr.f32.mxu0 0.0
        %1898 = vmatmul.mubr.f32.gmra.mxu0 %v1783
        %v1899 = vpop.f32.mrf.mxu0
        %v1900 = vadd.f32 0.0, %v1899
        %v1901 = vpop.f32.mrf.mxu0
        %1902 = vmatprep.mubr.f32.mxu0 0.0
        %1903 = vmatmul.mubr.f32.gmra.mxu0 %v1786
        %v1904 = vpop.f32.mrf.mxu0
        %v1905 = vadd.f32 0.0, %v1904
        %v1906 = vpop.f32.mrf.mxu0
        %1907 = vmatprep.mubr.f32.mxu0 0.0
        %1908 = vmatmul.mubr.f32.gmra.mxu0 %v1789
        %v1909 = vpop.f32.mrf.mxu0
        %v1910 = vadd.f32 0.0, %v1909
        %v1911 = vpop.f32.mrf.mxu0
        %1912 = vmatprep.mubr.f32.mxu0 0.0
        %1913 = vmatmul.mubr.f32.gmra.mxu0 %v1792
        %v1914 = vpop.f32.mrf.mxu0
        %v1915 = vadd.f32 0.0, %v1914
        %v1916 = vpop.f32.mrf.mxu0
        %1917 = vmatprep.mubr.f32.mxu0 0.0
        %1918 = vmatmul.mubr.f32.gmra.mxu0 %v1795
        %v1919 = vpop.f32.mrf.mxu0
        %v1920 = vadd.f32 0.0, %v1919
        %v1921 = vpop.f32.mrf.mxu0
        %1922 = vmatprep.mubr.f32.mxu0 0.0
        %1923 = vmatmul.mubr.f32.gmra.mxu0 %v1798
        %v1924 = vpop.f32.mrf.mxu0
        %v1925 = vadd.f32 0.0, %v1924
        %v1926 = vpop.f32.mrf.mxu0
        %1927 = vmatprep.mubr.f32.mxu0 0.0
        %1928 = vmatmul.mubr.f32.gmra.mxu0 %v1801
        %v1929 = vpop.f32.mrf.mxu0
        %v1930 = vadd.f32 0.0, %v1929
        %v1931 = vpop.f32.mrf.mxu0
        %1932 = vdwg.mxu0
        %v1933 = vmax.f32 %v1737, %v1870
        %v1934 = vmax.f32 %v1738, %v1875
        %v1935 = vmax.f32 %v1739, %v1880
        %v1936 = vmax.f32 %v1740, %v1885
        %v1937 = vmax.f32 %v1741, %v1890
        %v1938 = vmax.f32 %v1742, %v1895
        %v1939 = vmax.f32 %v1743, %v1900
        %v1940 = vmax.f32 %v1744, %v1905
        %v1941 = vmax.f32 %v1745, %v1910
        %v1942 = vmax.f32 %v1746, %v1915
        %v1943 = vmax.f32 %v1747, %v1920
        %v1944 = vmax.f32 %v1748, %v1925
        %v1945 = vmax.f32 %v1749, %v1930
        %v1946 = vadd.f32 %v1933, %v1147
        %v1947 = vadd.f32 %v1934, %v1147
        %v1948 = vadd.f32 %v1935, %v1147
        %v1949 = vadd.f32 %v1936, %v1147
        %v1950 = vadd.f32 %v1937, %v1147
        %v1951 = vadd.f32 %v1938, %v1147
        %v1952 = vadd.f32 %v1939, %v1147
        %v1953 = vadd.f32 %v1940, %v1147
        %v1954 = vadd.f32 %v1941, %v1147
        %v1955 = vadd.f32 %v1942, %v1147
        %v1956 = vadd.f32 %v1943, %v1147
        %v1957 = vadd.f32 %v1944, %v1147
        %v1958 = vadd.f32 %v1945, %v1147
        %v1959 = vmax.f32 %v1946, 0.0
        %v1960 = vmax.f32 %v1947, 0.0
        %v1961 = vmax.f32 %v1948, 0.0
        %v1962 = vmax.f32 %v1949, 0.0
        %v1963 = vmax.f32 %v1950, 0.0
        %v1964 = vmax.f32 %v1951, 0.0
        %v1965 = vmax.f32 %v1952, 0.0
        %v1966 = vmax.f32 %v1953, 0.0
        %v1967 = vmax.f32 %v1954, 0.0
        %v1968 = vmax.f32 %v1955, 0.0
        %v1969 = vmax.f32 %v1956, 0.0
        %v1970 = vmax.f32 %v1957, 0.0
        %v1971 = vmax.f32 %v1958, 0.0
        %vm1972 = vcmask 260096
        %1973 = vst.msk [vmem:[#allocation3 + $0x8] sm:$0x7f] %vm1972, %v1162
        %1974 = vst.msk [vmem:[#allocation2 + $0x9] sm:$0x7f] %vm1972, %v1959
        %vm1975 = vcmask 261127
        %1976 = vst.msk [vmem:[#allocation3 + $0x9] sm:$0x80] %vm1975, %v1162
        %vm1977 = vcmask 259072
        %1978 = vst.msk [vmem:[#allocation3 + $0x11] sm:$0x3f] %vm1977, %v1163
        %1979 = vst.msk [vmem:[#allocation2 + $0xa] sm:$0x80] %vm1975, %v1959
        %1980 = vst.msk [vmem:[#allocation2 + $0x12] sm:$0x3f] %vm1977, %v1960
        %vm1981 = vcmask 261126
        %1982 = vst.msk [vmem:[#allocation3 + $0x12] sm:$0xc0] %vm1981, %v1163
        %vm1983 = vcmask 258048
        %1984 = vst.msk [vmem:[#allocation3 + $0x1a] sm:$0x1f] %vm1983, %v1164
        %1985 = vst.msk [vmem:[#allocation2 + $0x13] sm:$0xc0] %vm1981, %v1960
        %1986 = vst.msk [vmem:[#allocation2 + $0x1b] sm:$0x1f] %vm1983, %v1961
        %vm1987 = vcmask 261125
        %1988 = vst.msk [vmem:[#allocation3 + $0x1b] sm:$0xe0] %vm1987, %v1164
        %vm1989 = vcmask 257024
        %1990 = vst.msk [vmem:[#allocation3 + $0x23] sm:$0xf] %vm1989, %v1165
        %1991 = vst.msk [vmem:[#allocation2 + $0x1c] sm:$0xe0] %vm1987, %v1961
        %1992 = vst.msk [vmem:[#allocation2 + $0x24] sm:$0xf] %vm1989, %v1962
        %vm1993 = vcmask 261124
        %1994 = vst.msk [vmem:[#allocation3 + $0x24] sm:$0xf0] %vm1993, %v1165
        %vm1995 = vcmask 256000
        %1996 = vst.msk [vmem:[#allocation3 + $0x2c] sm:$0x7] %vm1995, %v1166
        %1997 = vst.msk [vmem:[#allocation2 + $0x25] sm:$0xf0] %vm1993, %v1962
        %1998 = vst.msk [vmem:[#allocation2 + $0x2d] sm:$0x7] %vm1995, %v1963
        %vm1999 = vcmask 261123
        %2000 = vst.msk [vmem:[#allocation3 + $0x2d] sm:$0xf8] %vm1999, %v1166
        %vm2001 = vcmask 254976
        %2002 = vst.msk [vmem:[#allocation3 + $0x35] sm:$0x3] %vm2001, %v1167
        %2003 = vst.msk [vmem:[#allocation2 + $0x2e] sm:$0xf8] %vm1999, %v1963
        %2004 = vst.msk [vmem:[#allocation2 + $0x36] sm:$0x3] %vm2001, %v1964
        %vm2005 = vcmask 261122
        %2006 = vst.msk [vmem:[#allocation3 + $0x36] sm:$0xfc] %vm2005, %v1167
        %vm2007 = vcmask 253952
        %2008 = vst.msk [vmem:[#allocation3 + $0x3e] sm:$0x1] %vm2007, %v1168
        %2009 = vst.msk [vmem:[#allocation2 + $0x37] sm:$0xfc] %vm2005, %v1964
        %2010 = vst.msk [vmem:[#allocation2 + $0x3f] sm:$0x1] %vm2007, %v1965
        %vm2011 = vcmask 261121
        %2012 = vst.msk [vmem:[#allocation3 + $0x3f] sm:$0xfe] %vm2011, %v1168
        %2013 = vst.msk [vmem:[#allocation2 + $0x40] sm:$0xfe] %vm2011, %v1965
        %2014 = vst.msk [vmem:[#allocation3 + $0x48] sm:$0x7f] %vm1972, %v1169
        %2015 = vst.msk [vmem:[#allocation2 + $0x49] sm:$0x7f] %vm1972, %v1966
        %2016 = vst.msk [vmem:[#allocation3 + $0x49] sm:$0x80] %vm1975, %v1169
        %2017 = vst.msk [vmem:[#allocation3 + $0x51] sm:$0x3f] %vm1977, %v1170
        %2018 = vst.msk [vmem:[#allocation2 + $0x4a] sm:$0x80] %vm1975, %v1966
        %2019 = vst.msk [vmem:[#allocation2 + $0x52] sm:$0x3f] %vm1977, %v1967
        %2020 = vst.msk [vmem:[#allocation3 + $0x52] sm:$0xc0] %vm1981, %v1170
        %2021 = vst.msk [vmem:[#allocation3 + $0x5a] sm:$0x1f] %vm1983, %v1171
        %2022 = vst.msk [vmem:[#allocation2 + $0x53] sm:$0xc0] %vm1981, %v1967
        %2023 = vst.msk [vmem:[#allocation2 + $0x5b] sm:$0x1f] %vm1983, %v1968
        %2024 = vst.msk [vmem:[#allocation3 + $0x5b] sm:$0xe0] %vm1987, %v1171
        %2025 = vst.msk [vmem:[#allocation3 + $0x63] sm:$0xf] %vm1989, %v1172
        %2026 = vst.msk [vmem:[#allocation2 + $0x5c] sm:$0xe0] %vm1987, %v1968
        %2027 = vst.msk [vmem:[#allocation2 + $0x64] sm:$0xf] %vm1989, %v1969
        %2028 = vst.msk [vmem:[#allocation3 + $0x64] sm:$0xf0] %vm1993, %v1172
        %2029 = vst.msk [vmem:[#allocation3 + $0x6c] sm:$0x7] %vm1995, %v1173
        %2030 = vst.msk [vmem:[#allocation2 + $0x65] sm:$0xf0] %vm1993, %v1969
        %2031 = vst.msk [vmem:[#allocation2 + $0x6d] sm:$0x7] %vm1995, %v1970
        %2032 = vst.msk [vmem:[#allocation3 + $0x6d] sm:$0xf8] %vm1999, %v1173
        %2033 = vst.msk [vmem:[#allocation3 + $0x75] sm:$0x3] %vm2001, %v1174
        %2034 = vst.msk [vmem:[#allocation2 + $0x6e] sm:$0xf8] %vm1999, %v1970
        %2035 = vst.msk [vmem:[#allocation2 + $0x76] sm:$0x3] %vm2001, %v1971
        %v2036 = vld [vmem:[#allocation2] sm:$0xff]
        %v2037 = vld [vmem:[#allocation2 + $0x8] sm:$0xff]
        %v2038 = vld [vmem:[#allocation2 + $0x10] sm:$0xff]
        %v2039 = vld [vmem:[#allocation2 + $0x18] sm:$0xff]
        %v2040 = vld [vmem:[#allocation2 + $0x20] sm:$0xff]
        %v2041 = vld [vmem:[#allocation2 + $0x28] sm:$0xff]
        %v2042 = vld [vmem:[#allocation2 + $0x30] sm:$0xff]
        %v2043 = vld [vmem:[#allocation2 + $0x38] sm:$0xff]
        %v2044 = vld [vmem:[#allocation2 + $0x40] sm:$0xff]
        %v2045 = vld [vmem:[#allocation2 + $0x48] sm:$0xff]
        %v2046 = vld [vmem:[#allocation2 + $0x50] sm:$0xff]
        %v2047 = vld [vmem:[#allocation2 + $0x58] sm:$0xff]
        %v2048 = vld [vmem:[#allocation2 + $0x60] sm:$0xff]
        %v2049 = vld [vmem:[#allocation2 + $0x68] sm:$0xff]
        %v2050 = vld [vmem:[%s3] sm:$0xff]
        %v2051 = vld [vmem:[%s3 + $0x8] sm:$0xff]
        %v2052 = vld [vmem:[%s3 + $0x10] sm:$0xff]
        %v2053 = vld [vmem:[%s3 + $0x18] sm:$0xff]
        %v2054 = vld [vmem:[#allocation3] sm:$0xff]
        %v2055 = vld [vmem:[#allocation3 + $0x8] sm:$0xff]
        %v2056 = vld [vmem:[#allocation3 + $0x10] sm:$0xff]
        %v2057 = vld [vmem:[#allocation3 + $0x18] sm:$0xff]
        %v2058 = vld [vmem:[#allocation3 + $0x20] sm:$0xff]
        %v2059 = vld [vmem:[#allocation3 + $0x28] sm:$0xff]
        %v2060 = vld [vmem:[#allocation3 + $0x30] sm:$0xff]
        %v2061 = vld [vmem:[#allocation3 + $0x38] sm:$0xff]
        %v2062 = vld [vmem:[#allocation3 + $0x40] sm:$0xff]
        %v2063 = vld [vmem:[#allocation3 + $0x48] sm:$0xff]
        %v2064 = vld [vmem:[#allocation3 + $0x50] sm:$0xff]
        %v2065 = vld [vmem:[#allocation3 + $0x58] sm:$0xff]
        %v2066 = vld [vmem:[#allocation3 + $0x60] sm:$0xff]
        %v2067 = vld [vmem:[#allocation3 + $0x68] sm:$0xff]
        %s2068 = scalar_lea.vmem %s3, 32
        %v2069 = vld [vmem:[%s2068] sm:$0xff]
        %v2070 = vld [vmem:[%s2068 + $0x8] sm:$0xff]
        %v2071 = vld [vmem:[%s2068 + $0x10] sm:$0xff]
        %v2072 = vld [vmem:[%s2068 + $0x18] sm:$0xff]
        %v2074 = vsel %vm330, %v2054, 0
        %v2077 = vsel %vm330, %v2055, 0
        %v2080 = vsel %vm330, %v2056, 0
        %v2083 = vsel %vm330, %v2057, 0
        %v2086 = vsel %vm330, %v2058, 0
        %v2089 = vsel %vm330, %v2059, 0
        %v2092 = vsel %vm330, %v2060, 0
        %v2095 = vsel %vm330, %v2061, 0
        %v2098 = vsel %vm330, %v2062, 0
        %v2101 = vsel %vm330, %v2063, 0
        %v2104 = vsel %vm330, %v2064, 0
        %v2107 = vsel %vm330, %v2065, 0
        %v2110 = vsel %vm330, %v2066, 0
        %v2113 = vsel %vm330, %v2067, 0
        %2115 = vmatprep.subr.mxu0 0.0
        %2116 = vmatpush1.msra.mxu0 0.0
        %2117 = vmatprep.subr.mxu0 0.0
        %2118 = vmatpush1.msra.mxu0 0.0
        %2119 = vmatprep.subr.mxu0 0.0
        %2120 = vmatpush1.msra.mxu0 0.0
        %2121 = vmatprep.subr.mxu0 0.0
        %2122 = vmatpush1.msra.mxu0 0.0
        %2123 = vmatprep.subr.mxu0 0.0
        %2124 = vmatpush1.msra.mxu0 0.0
        %2125 = vmatprep.subr.mxu0 0.0
        %2126 = vmatpush1.msra.mxu0 0.0
        %2127 = vmatprep.subr.mxu0 0.0
        %2128 = vmatpush1.msra.mxu0 0.0
        %2129 = vmatprep.subr.mxu0 0.0
        %2130 = vmatpush1.msra.mxu0 0.0
        %2131 = vmatprep.subr.mxu0 0.0
        %2132 = vmatpush1.msra.mxu0 0.0
        %2133 = vmatprep.subr.mxu0 0.0
        %2134 = vmatpush1.msra.mxu0 0.0
        %2135 = vmatprep.subr.mxu0 0.0
        %2136 = vmatpush1.msra.mxu0 0.0
        %2137 = vmatprep.subr.mxu0 0.0
        %2138 = vmatpush1.msra.mxu0 0.0
        %2139 = vmatprep.subr.mxu0 0.0
        %2140 = vmatpush1.msra.mxu0 %v2072
        %2141 = vmatprep.subr.mxu0 0.0
        %2142 = vmatpush1.msra.mxu0 %v2071
        %2143 = vmatprep.subr.mxu0 0.0
        %2144 = vmatpush1.msra.mxu0 %v2070
        %2145 = vmatprep.subr.mxu0 0.0
        %2146 = vmatpush1.msra.mxu0 %v2069
        %2147 = vmatprep.subr.mxu0 0.0
        %2148 = vmatpush2.msra.mxu0 0.0
        %2149 = vmatprep.subr.mxu0 0.0
        %2150 = vmatpush2.msra.mxu0 0.0
        %2151 = vmatprep.subr.mxu0 0.0
        %2152 = vmatpush2.msra.mxu0 0.0
        %2153 = vmatprep.subr.mxu0 0.0
        %2154 = vmatpush2.msra.mxu0 0.0
        %2155 = vmatprep.subr.mxu0 0.0
        %2156 = vmatpush2.msra.mxu0 0.0
        %2157 = vmatprep.subr.mxu0 0.0
        %2158 = vmatpush2.msra.mxu0 0.0
        %2159 = vmatprep.subr.mxu0 0.0
        %2160 = vmatpush2.msra.mxu0 0.0
        %2161 = vmatprep.subr.mxu0 0.0
        %2162 = vmatpush2.msra.mxu0 0.0
        %2163 = vmatprep.subr.mxu0 0.0
        %2164 = vmatpush2.msra.mxu0 0.0
        %2165 = vmatprep.subr.mxu0 0.0
        %2166 = vmatpush2.msra.mxu0 0.0
        %2167 = vmatprep.subr.mxu0 0.0
        %2168 = vmatpush2.msra.mxu0 0.0
        %2169 = vmatprep.subr.mxu0 0.0
        %2170 = vmatpush2.msra.mxu0 0.0
        %2171 = vmatprep.subr.mxu0 0.0
        %2172 = vmatpush2.msra.mxu0 0.0
        %2173 = vmatprep.subr.mxu0 0.0
        %2174 = vmatpush2.msra.mxu0 0.0
        %2175 = vmatprep.subr.mxu0 0.0
        %2176 = vmatpush2.msra.mxu0 0.0
        %2177 = vmatprep.subr.mxu0 0.0
        %2178 = vmatpush2.msra.mxu0 0.0
        %2179 = vmatprep.mubr.f32.mxu0 0.0
        %2180 = vmatmul.mubr.f32.gmra.mxu0 %v2074
        %v2181 = vpop.f32.mrf.mxu0
        %v2182 = vadd.f32 0.0, %v2181
        %v2183 = vpop.f32.mrf.mxu0
        %2184 = vmatprep.mubr.f32.mxu0 0.0
        %2185 = vmatmul.mubr.f32.gmra.mxu0 %v2077
        %v2186 = vpop.f32.mrf.mxu0
        %v2187 = vadd.f32 0.0, %v2186
        %v2188 = vpop.f32.mrf.mxu0
        %2189 = vmatprep.mubr.f32.mxu0 0.0
        %2190 = vmatmul.mubr.f32.gmra.mxu0 %v2080
        %v2191 = vpop.f32.mrf.mxu0
        %v2192 = vadd.f32 0.0, %v2191
        %v2193 = vpop.f32.mrf.mxu0
        %2194 = vmatprep.mubr.f32.mxu0 0.0
        %2195 = vmatmul.mubr.f32.gmra.mxu0 %v2083
        %v2196 = vpop.f32.mrf.mxu0
        %v2197 = vadd.f32 0.0, %v2196
        %v2198 = vpop.f32.mrf.mxu0
        %2199 = vmatprep.mubr.f32.mxu0 0.0
        %2200 = vmatmul.mubr.f32.gmra.mxu0 %v2086
        %v2201 = vpop.f32.mrf.mxu0
        %v2202 = vadd.f32 0.0, %v2201
        %v2203 = vpop.f32.mrf.mxu0
        %2204 = vmatprep.mubr.f32.mxu0 0.0
        %2205 = vmatmul.mubr.f32.gmra.mxu0 %v2089
        %v2206 = vpop.f32.mrf.mxu0
        %v2207 = vadd.f32 0.0, %v2206
        %v2208 = vpop.f32.mrf.mxu0
        %2209 = vmatprep.mubr.f32.mxu0 0.0
        %2210 = vmatmul.mubr.f32.gmra.mxu0 %v2092
        %v2211 = vpop.f32.mrf.mxu0
        %v2212 = vadd.f32 0.0, %v2211
        %v2213 = vpop.f32.mrf.mxu0
        %2214 = vmatprep.mubr.f32.mxu0 0.0
        %2215 = vmatmul.mubr.f32.gmra.mxu0 %v2095
        %v2216 = vpop.f32.mrf.mxu0
        %v2217 = vadd.f32 0.0, %v2216
        %v2218 = vpop.f32.mrf.mxu0
        %2219 = vmatprep.mubr.f32.mxu0 0.0
        %2220 = vmatmul.mubr.f32.gmra.mxu0 %v2098
        %v2221 = vpop.f32.mrf.mxu0
        %v2222 = vadd.f32 0.0, %v2221
        %v2223 = vpop.f32.mrf.mxu0
        %2224 = vmatprep.mubr.f32.mxu0 0.0
        %2225 = vmatmul.mubr.f32.gmra.mxu0 %v2101
        %v2226 = vpop.f32.mrf.mxu0
        %v2227 = vadd.f32 0.0, %v2226
        %v2228 = vpop.f32.mrf.mxu0
        %2229 = vmatprep.mubr.f32.mxu0 0.0
        %2230 = vmatmul.mubr.f32.gmra.mxu0 %v2104
        %v2231 = vpop.f32.mrf.mxu0
        %v2232 = vadd.f32 0.0, %v2231
        %v2233 = vpop.f32.mrf.mxu0
        %2234 = vmatprep.mubr.f32.mxu0 0.0
        %2235 = vmatmul.mubr.f32.gmra.mxu0 %v2107
        %v2236 = vpop.f32.mrf.mxu0
        %v2237 = vadd.f32 0.0, %v2236
        %v2238 = vpop.f32.mrf.mxu0
        %2239 = vmatprep.mubr.f32.mxu0 0.0
        %2240 = vmatmul.mubr.f32.gmra.mxu0 %v2110
        %v2241 = vpop.f32.mrf.mxu0
        %v2242 = vadd.f32 0.0, %v2241
        %v2243 = vpop.f32.mrf.mxu0
        %2244 = vmatprep.mubr.f32.mxu0 0.0
        %2245 = vmatmul.mubr.f32.gmra.mxu0 %v2113
        %v2246 = vpop.f32.mrf.mxu0
        %v2247 = vadd.f32 0.0, %v2246
        %v2248 = vpop.f32.mrf.mxu0
        %2249 = vdwg.mxu0
        %v2251 = vsel %vm330, %v2036, 0
        %v2254 = vsel %vm330, %v2037, 0
        %v2257 = vsel %vm330, %v2038, 0
        %v2260 = vsel %vm330, %v2039, 0
        %v2263 = vsel %vm330, %v2040, 0
        %v2266 = vsel %vm330, %v2041, 0
        %v2269 = vsel %vm330, %v2042, 0
        %v2272 = vsel %vm330, %v2043, 0
        %v2275 = vsel %vm330, %v2044, 0
        %v2278 = vsel %vm330, %v2045, 0
        %v2281 = vsel %vm330, %v2046, 0
        %v2284 = vsel %vm330, %v2047, 0
        %v2287 = vsel %vm330, %v2048, 0
        %v2290 = vsel %vm330, %v2049, 0
        %2292 = vmatprep.subr.mxu0 0.0
        %2293 = vmatpush1.msra.mxu0 0.0
        %2294 = vmatprep.subr.mxu0 0.0
        %2295 = vmatpush1.msra.mxu0 0.0
        %2296 = vmatprep.subr.mxu0 0.0
        %2297 = vmatpush1.msra.mxu0 0.0
        %2298 = vmatprep.subr.mxu0 0.0
        %2299 = vmatpush1.msra.mxu0 0.0
        %2300 = vmatprep.subr.mxu0 0.0
        %2301 = vmatpush1.msra.mxu0 0.0
        %2302 = vmatprep.subr.mxu0 0.0
        %2303 = vmatpush1.msra.mxu0 0.0
        %2304 = vmatprep.subr.mxu0 0.0
        %2305 = vmatpush1.msra.mxu0 0.0
        %2306 = vmatprep.subr.mxu0 0.0
        %2307 = vmatpush1.msra.mxu0 0.0
        %2308 = vmatprep.subr.mxu0 0.0
        %2309 = vmatpush1.msra.mxu0 0.0
        %2310 = vmatprep.subr.mxu0 0.0
        %2311 = vmatpush1.msra.mxu0 0.0
        %2312 = vmatprep.subr.mxu0 0.0
        %2313 = vmatpush1.msra.mxu0 0.0
        %2314 = vmatprep.subr.mxu0 0.0
        %2315 = vmatpush1.msra.mxu0 0.0
        %2316 = vmatprep.subr.mxu0 0.0
        %2317 = vmatpush1.msra.mxu0 %v2053
        %2318 = vmatprep.subr.mxu0 0.0
        %2319 = vmatpush1.msra.mxu0 %v2052
        %2320 = vmatprep.subr.mxu0 0.0
        %2321 = vmatpush1.msra.mxu0 %v2051
        %2322 = vmatprep.subr.mxu0 0.0
        %2323 = vmatpush1.msra.mxu0 %v2050
        %2324 = vmatprep.subr.mxu0 0.0
        %2325 = vmatpush2.msra.mxu0 0.0
        %2326 = vmatprep.subr.mxu0 0.0
        %2327 = vmatpush2.msra.mxu0 0.0
        %2328 = vmatprep.subr.mxu0 0.0
        %2329 = vmatpush2.msra.mxu0 0.0
        %2330 = vmatprep.subr.mxu0 0.0
        %2331 = vmatpush2.msra.mxu0 0.0
        %2332 = vmatprep.subr.mxu0 0.0
        %2333 = vmatpush2.msra.mxu0 0.0
        %2334 = vmatprep.subr.mxu0 0.0
        %2335 = vmatpush2.msra.mxu0 0.0
        %2336 = vmatprep.subr.mxu0 0.0
        %2337 = vmatpush2.msra.mxu0 0.0
        %2338 = vmatprep.subr.mxu0 0.0
        %2339 = vmatpush2.msra.mxu0 0.0
        %2340 = vmatprep.subr.mxu0 0.0
        %2341 = vmatpush2.msra.mxu0 0.0
        %2342 = vmatprep.subr.mxu0 0.0
        %2343 = vmatpush2.msra.mxu0 0.0
        %2344 = vmatprep.subr.mxu0 0.0
        %2345 = vmatpush2.msra.mxu0 0.0
        %2346 = vmatprep.subr.mxu0 0.0
        %2347 = vmatpush2.msra.mxu0 0.0
        %2348 = vmatprep.subr.mxu0 0.0
        %2349 = vmatpush2.msra.mxu0 0.0
        %2350 = vmatprep.subr.mxu0 0.0
        %2351 = vmatpush2.msra.mxu0 0.0
        %2352 = vmatprep.subr.mxu0 0.0
        %2353 = vmatpush2.msra.mxu0 0.0
        %2354 = vmatprep.subr.mxu0 0.0
        %2355 = vmatpush2.msra.mxu0 0.0
        %2356 = vmatprep.mubr.f32.mxu0 0.0
        %2357 = vmatmul.mubr.f32.gmra.mxu0 %v2251
        %v2358 = vpop.f32.mrf.mxu0
        %v2359 = vadd.f32 %v2182, %v2358
        %v2360 = vpop.f32.mrf.mxu0
        %2361 = vmatprep.mubr.f32.mxu0 0.0
        %2362 = vmatmul.mubr.f32.gmra.mxu0 %v2254
        %v2363 = vpop.f32.mrf.mxu0
        %v2364 = vadd.f32 %v2187, %v2363
        %v2365 = vpop.f32.mrf.mxu0
        %2366 = vmatprep.mubr.f32.mxu0 0.0
        %2367 = vmatmul.mubr.f32.gmra.mxu0 %v2257
        %v2368 = vpop.f32.mrf.mxu0
        %v2369 = vadd.f32 %v2192, %v2368
        %v2370 = vpop.f32.mrf.mxu0
        %2371 = vmatprep.mubr.f32.mxu0 0.0
        %2372 = vmatmul.mubr.f32.gmra.mxu0 %v2260
        %v2373 = vpop.f32.mrf.mxu0
        %v2374 = vadd.f32 %v2197, %v2373
        %v2375 = vpop.f32.mrf.mxu0
        %2376 = vmatprep.mubr.f32.mxu0 0.0
        %2377 = vmatmul.mubr.f32.gmra.mxu0 %v2263
        %v2378 = vpop.f32.mrf.mxu0
        %v2379 = vadd.f32 %v2202, %v2378
        %v2380 = vpop.f32.mrf.mxu0
        %2381 = vmatprep.mubr.f32.mxu0 0.0
        %2382 = vmatmul.mubr.f32.gmra.mxu0 %v2266
        %v2383 = vpop.f32.mrf.mxu0
        %v2384 = vadd.f32 %v2207, %v2383
        %v2385 = vpop.f32.mrf.mxu0
        %2386 = vmatprep.mubr.f32.mxu0 0.0
        %2387 = vmatmul.mubr.f32.gmra.mxu0 %v2269
        %v2388 = vpop.f32.mrf.mxu0
        %v2389 = vadd.f32 %v2212, %v2388
        %v2390 = vpop.f32.mrf.mxu0
        %2391 = vmatprep.mubr.f32.mxu0 0.0
        %2392 = vmatmul.mubr.f32.gmra.mxu0 %v2272
        %v2393 = vpop.f32.mrf.mxu0
        %v2394 = vadd.f32 %v2217, %v2393
        %v2395 = vpop.f32.mrf.mxu0
        %2396 = vmatprep.mubr.f32.mxu0 0.0
        %2397 = vmatmul.mubr.f32.gmra.mxu0 %v2275
        %v2398 = vpop.f32.mrf.mxu0
        %v2399 = vadd.f32 %v2222, %v2398
        %v2400 = vpop.f32.mrf.mxu0
        %2401 = vmatprep.mubr.f32.mxu0 0.0
        %2402 = vmatmul.mubr.f32.gmra.mxu0 %v2278
        %v2403 = vpop.f32.mrf.mxu0
        %v2404 = vadd.f32 %v2227, %v2403
        %v2405 = vpop.f32.mrf.mxu0
        %2406 = vmatprep.mubr.f32.mxu0 0.0
        %2407 = vmatmul.mubr.f32.gmra.mxu0 %v2281
        %v2408 = vpop.f32.mrf.mxu0
        %v2409 = vadd.f32 %v2232, %v2408
        %v2410 = vpop.f32.mrf.mxu0
        %2411 = vmatprep.mubr.f32.mxu0 0.0
        %2412 = vmatmul.mubr.f32.gmra.mxu0 %v2284
        %v2413 = vpop.f32.mrf.mxu0
        %v2414 = vadd.f32 %v2237, %v2413
        %v2415 = vpop.f32.mrf.mxu0
        %2416 = vmatprep.mubr.f32.mxu0 0.0
        %2417 = vmatmul.mubr.f32.gmra.mxu0 %v2287
        %v2418 = vpop.f32.mrf.mxu0
        %v2419 = vadd.f32 %v2242, %v2418
        %v2420 = vpop.f32.mrf.mxu0
        %2421 = vmatprep.mubr.f32.mxu0 0.0
        %2422 = vmatmul.mubr.f32.gmra.mxu0 %v2290
        %v2423 = vpop.f32.mrf.mxu0
        %v2424 = vadd.f32 %v2247, %v2423
        %v2425 = vpop.f32.mrf.mxu0
        %2426 = vdwg.mxu0
        %v2427 = vld [vmem:[#allocation2 + $0x1] sm:$0xff]
        %v2428 = vld [vmem:[#allocation2 + $0x9] sm:$0xff]
        %v2429 = vld [vmem:[#allocation2 + $0x11] sm:$0xff]
        %v2430 = vld [vmem:[#allocation2 + $0x19] sm:$0xff]
        %v2431 = vld [vmem:[#allocation2 + $0x21] sm:$0xff]
        %v2432 = vld [vmem:[#allocation2 + $0x29] sm:$0xff]
        %v2433 = vld [vmem:[#allocation2 + $0x31] sm:$0xff]
        %v2434 = vld [vmem:[#allocation2 + $0x39] sm:$0xff]
        %v2435 = vld [vmem:[#allocation2 + $0x41] sm:$0xff]
        %v2436 = vld [vmem:[#allocation2 + $0x49] sm:$0xff]
        %v2437 = vld [vmem:[#allocation2 + $0x51] sm:$0xff]
        %v2438 = vld [vmem:[#allocation2 + $0x59] sm:$0xff]
        %v2439 = vld [vmem:[#allocation2 + $0x61] sm:$0xff]
        %v2440 = vld [vmem:[#allocation2 + $0x69] sm:$0xff]
        %s2441 = scalar_lea.vmem %s3, 64
        %v2442 = vld [vmem:[%s2441] sm:$0xff]
        %v2443 = vld [vmem:[%s2441 + $0x8] sm:$0xff]
        %v2444 = vld [vmem:[%s2441 + $0x10] sm:$0xff]
        %v2445 = vld [vmem:[%s2441 + $0x18] sm:$0xff]
        %v2447 = vsel %vm330, %v2427, 0
        %v2450 = vsel %vm330, %v2428, 0
        %v2453 = vsel %vm330, %v2429, 0
        %v2456 = vsel %vm330, %v2430, 0
        %v2459 = vsel %vm330, %v2431, 0
        %v2462 = vsel %vm330, %v2432, 0
        %v2465 = vsel %vm330, %v2433, 0
        %v2468 = vsel %vm330, %v2434, 0
        %v2471 = vsel %vm330, %v2435, 0
        %v2474 = vsel %vm330, %v2436, 0
        %v2477 = vsel %vm330, %v2437, 0
        %v2480 = vsel %vm330, %v2438, 0
        %v2483 = vsel %vm330, %v2439, 0
        %v2486 = vsel %vm330, %v2440, 0
        %2488 = vmatprep.subr.mxu0 0.0
        %2489 = vmatpush1.msra.mxu0 0.0
        %2490 = vmatprep.subr.mxu0 0.0
        %2491 = vmatpush1.msra.mxu0 0.0
        %2492 = vmatprep.subr.mxu0 0.0
        %2493 = vmatpush1.msra.mxu0 0.0
        %2494 = vmatprep.subr.mxu0 0.0
        %2495 = vmatpush1.msra.mxu0 0.0
        %2496 = vmatprep.subr.mxu0 0.0
        %2497 = vmatpush1.msra.mxu0 0.0
        %2498 = vmatprep.subr.mxu0 0.0
        %2499 = vmatpush1.msra.mxu0 0.0
        %2500 = vmatprep.subr.mxu0 0.0
        %2501 = vmatpush1.msra.mxu0 0.0
        %2502 = vmatprep.subr.mxu0 0.0
        %2503 = vmatpush1.msra.mxu0 0.0
        %2504 = vmatprep.subr.mxu0 0.0
        %2505 = vmatpush1.msra.mxu0 0.0
        %2506 = vmatprep.subr.mxu0 0.0
        %2507 = vmatpush1.msra.mxu0 0.0
        %2508 = vmatprep.subr.mxu0 0.0
        %2509 = vmatpush1.msra.mxu0 0.0
        %2510 = vmatprep.subr.mxu0 0.0
        %2511 = vmatpush1.msra.mxu0 0.0
        %2512 = vmatprep.subr.mxu0 0.0
        %2513 = vmatpush1.msra.mxu0 %v2445
        %2514 = vmatprep.subr.mxu0 0.0
        %2515 = vmatpush1.msra.mxu0 %v2444
        %2516 = vmatprep.subr.mxu0 0.0
        %2517 = vmatpush1.msra.mxu0 %v2443
        %2518 = vmatprep.subr.mxu0 0.0
        %2519 = vmatpush1.msra.mxu0 %v2442
        %2520 = vmatprep.subr.mxu0 0.0
        %2521 = vmatpush2.msra.mxu0 0.0
        %2522 = vmatprep.subr.mxu0 0.0
        %2523 = vmatpush2.msra.mxu0 0.0
        %2524 = vmatprep.subr.mxu0 0.0
        %2525 = vmatpush2.msra.mxu0 0.0
        %2526 = vmatprep.subr.mxu0 0.0
        %2527 = vmatpush2.msra.mxu0 0.0
        %2528 = vmatprep.subr.mxu0 0.0
        %2529 = vmatpush2.msra.mxu0 0.0
        %2530 = vmatprep.subr.mxu0 0.0
        %2531 = vmatpush2.msra.mxu0 0.0
        %2532 = vmatprep.subr.mxu0 0.0
        %2533 = vmatpush2.msra.mxu0 0.0
        %2534 = vmatprep.subr.mxu0 0.0
        %2535 = vmatpush2.msra.mxu0 0.0
        %2536 = vmatprep.subr.mxu0 0.0
        %2537 = vmatpush2.msra.mxu0 0.0
        %2538 = vmatprep.subr.mxu0 0.0
        %2539 = vmatpush2.msra.mxu0 0.0
        %2540 = vmatprep.subr.mxu0 0.0
        %2541 = vmatpush2.msra.mxu0 0.0
        %2542 = vmatprep.subr.mxu0 0.0
        %2543 = vmatpush2.msra.mxu0 0.0
        %2544 = vmatprep.subr.mxu0 0.0
        %2545 = vmatpush2.msra.mxu0 0.0
        %2546 = vmatprep.subr.mxu0 0.0
        %2547 = vmatpush2.msra.mxu0 0.0
        %2548 = vmatprep.subr.mxu0 0.0
        %2549 = vmatpush2.msra.mxu0 0.0
        %2550 = vmatprep.subr.mxu0 0.0
        %2551 = vmatpush2.msra.mxu0 0.0
        %2552 = vmatprep.mubr.f32.mxu0 0.0
        %2553 = vmatmul.mubr.f32.gmra.mxu0 %v2447
        %v2554 = vpop.f32.mrf.mxu0
        %v2555 = vadd.f32 0.0, %v2554
        %v2556 = vpop.f32.mrf.mxu0
        %2557 = vmatprep.mubr.f32.mxu0 0.0
        %2558 = vmatmul.mubr.f32.gmra.mxu0 %v2450
        %v2559 = vpop.f32.mrf.mxu0
        %v2560 = vadd.f32 0.0, %v2559
        %v2561 = vpop.f32.mrf.mxu0
        %2562 = vmatprep.mubr.f32.mxu0 0.0
        %2563 = vmatmul.mubr.f32.gmra.mxu0 %v2453
        %v2564 = vpop.f32.mrf.mxu0
        %v2565 = vadd.f32 0.0, %v2564
        %v2566 = vpop.f32.mrf.mxu0
        %2567 = vmatprep.mubr.f32.mxu0 0.0
        %2568 = vmatmul.mubr.f32.gmra.mxu0 %v2456
        %v2569 = vpop.f32.mrf.mxu0
        %v2570 = vadd.f32 0.0, %v2569
        %v2571 = vpop.f32.mrf.mxu0
        %2572 = vmatprep.mubr.f32.mxu0 0.0
        %2573 = vmatmul.mubr.f32.gmra.mxu0 %v2459
        %v2574 = vpop.f32.mrf.mxu0
        %v2575 = vadd.f32 0.0, %v2574
        %v2576 = vpop.f32.mrf.mxu0
        %2577 = vmatprep.mubr.f32.mxu0 0.0
        %2578 = vmatmul.mubr.f32.gmra.mxu0 %v2462
        %v2579 = vpop.f32.mrf.mxu0
        %v2580 = vadd.f32 0.0, %v2579
        %v2581 = vpop.f32.mrf.mxu0
        %2582 = vmatprep.mubr.f32.mxu0 0.0
        %2583 = vmatmul.mubr.f32.gmra.mxu0 %v2465
        %v2584 = vpop.f32.mrf.mxu0
        %v2585 = vadd.f32 0.0, %v2584
        %v2586 = vpop.f32.mrf.mxu0
        %2587 = vmatprep.mubr.f32.mxu0 0.0
        %2588 = vmatmul.mubr.f32.gmra.mxu0 %v2468
        %v2589 = vpop.f32.mrf.mxu0
        %v2590 = vadd.f32 0.0, %v2589
        %v2591 = vpop.f32.mrf.mxu0
        %2592 = vmatprep.mubr.f32.mxu0 0.0
        %2593 = vmatmul.mubr.f32.gmra.mxu0 %v2471
        %v2594 = vpop.f32.mrf.mxu0
        %v2595 = vadd.f32 0.0, %v2594
        %v2596 = vpop.f32.mrf.mxu0
        %2597 = vmatprep.mubr.f32.mxu0 0.0
        %2598 = vmatmul.mubr.f32.gmra.mxu0 %v2474
        %v2599 = vpop.f32.mrf.mxu0
        %v2600 = vadd.f32 0.0, %v2599
        %v2601 = vpop.f32.mrf.mxu0
        %2602 = vmatprep.mubr.f32.mxu0 0.0
        %2603 = vmatmul.mubr.f32.gmra.mxu0 %v2477
        %v2604 = vpop.f32.mrf.mxu0
        %v2605 = vadd.f32 0.0, %v2604
        %v2606 = vpop.f32.mrf.mxu0
        %2607 = vmatprep.mubr.f32.mxu0 0.0
        %2608 = vmatmul.mubr.f32.gmra.mxu0 %v2480
        %v2609 = vpop.f32.mrf.mxu0
        %v2610 = vadd.f32 0.0, %v2609
        %v2611 = vpop.f32.mrf.mxu0
        %2612 = vmatprep.mubr.f32.mxu0 0.0
        %2613 = vmatmul.mubr.f32.gmra.mxu0 %v2483
        %v2614 = vpop.f32.mrf.mxu0
        %v2615 = vadd.f32 0.0, %v2614
        %v2616 = vpop.f32.mrf.mxu0
        %2617 = vmatprep.mubr.f32.mxu0 0.0
        %2618 = vmatmul.mubr.f32.gmra.mxu0 %v2486
        %v2619 = vpop.f32.mrf.mxu0
        %v2620 = vadd.f32 0.0, %v2619
        %v2621 = vpop.f32.mrf.mxu0
        %2622 = vdwg.mxu0
        %v2623 = vadd.f32 %v2359, %v2555
        %v2624 = vadd.f32 %v2364, %v2560
        %v2625 = vadd.f32 %v2369, %v2565
        %v2626 = vadd.f32 %v2374, %v2570
        %v2627 = vadd.f32 %v2379, %v2575
        %v2628 = vadd.f32 %v2384, %v2580
        %v2629 = vadd.f32 %v2389, %v2585
        %v2630 = vadd.f32 %v2394, %v2590
        %v2631 = vadd.f32 %v2399, %v2595
        %v2632 = vadd.f32 %v2404, %v2600
        %v2633 = vadd.f32 %v2409, %v2605
        %v2634 = vadd.f32 %v2414, %v2610
        %v2635 = vadd.f32 %v2419, %v2615
        %v2636 = vadd.f32 %v2424, %v2620
        %v2637 = vld [vmem:[#allocation2 + $0x8] sm:$0xff]
        %v2638 = vld [vmem:[#allocation2 + $0x10] sm:$0xff]
        %v2639 = vld [vmem:[#allocation2 + $0x18] sm:$0xff]
        %v2640 = vld [vmem:[#allocation2 + $0x20] sm:$0xff]
        %v2641 = vld [vmem:[#allocation2 + $0x28] sm:$0xff]
        %v2642 = vld [vmem:[#allocation2 + $0x30] sm:$0xff]
        %v2643 = vld [vmem:[#allocation2 + $0x38] sm:$0xff]
        %v2644 = vld [vmem:[#allocation2 + $0x40] sm:$0xff]
        %v2645 = vld [vmem:[#allocation2 + $0x48] sm:$0xff]
        %v2646 = vld [vmem:[#allocation2 + $0x50] sm:$0xff]
        %v2647 = vld [vmem:[#allocation2 + $0x58] sm:$0xff]
        %v2648 = vld [vmem:[#allocation2 + $0x60] sm:$0xff]
        %v2649 = vld [vmem:[#allocation2 + $0x68] sm:$0xff]
        %v2650 = vld [vmem:[#allocation2 + $0x70] sm:$0xff]
        %s2651 = scalar_lea.vmem %s3, 96
        %v2652 = vld [vmem:[%s2651] sm:$0xff]
        %v2653 = vld [vmem:[%s2651 + $0x8] sm:$0xff]
        %v2654 = vld [vmem:[%s2651 + $0x10] sm:$0xff]
        %v2655 = vld [vmem:[%s2651 + $0x18] sm:$0xff]
        %v2657 = vsel %vm330, %v2637, 0
        %v2660 = vsel %vm330, %v2638, 0
        %v2663 = vsel %vm330, %v2639, 0
        %v2666 = vsel %vm330, %v2640, 0
        %v2669 = vsel %vm330, %v2641, 0
        %v2672 = vsel %vm330, %v2642, 0
        %v2675 = vsel %vm330, %v2643, 0
        %v2678 = vsel %vm330, %v2644, 0
        %v2681 = vsel %vm330, %v2645, 0
        %v2684 = vsel %vm330, %v2646, 0
        %v2687 = vsel %vm330, %v2647, 0
        %v2690 = vsel %vm330, %v2648, 0
        %v2693 = vsel %vm330, %v2649, 0
        %v2696 = vsel %vm330, %v2650, 0
        %2698 = vmatprep.subr.mxu0 0.0
        %2699 = vmatpush1.msra.mxu0 0.0
        %2700 = vmatprep.subr.mxu0 0.0
        %2701 = vmatpush1.msra.mxu0 0.0
        %2702 = vmatprep.subr.mxu0 0.0
        %2703 = vmatpush1.msra.mxu0 0.0
        %2704 = vmatprep.subr.mxu0 0.0
        %2705 = vmatpush1.msra.mxu0 0.0
        %2706 = vmatprep.subr.mxu0 0.0
        %2707 = vmatpush1.msra.mxu0 0.0
        %2708 = vmatprep.subr.mxu0 0.0
        %2709 = vmatpush1.msra.mxu0 0.0
        %2710 = vmatprep.subr.mxu0 0.0
        %2711 = vmatpush1.msra.mxu0 0.0
        %2712 = vmatprep.subr.mxu0 0.0
        %2713 = vmatpush1.msra.mxu0 0.0
        %2714 = vmatprep.subr.mxu0 0.0
        %2715 = vmatpush1.msra.mxu0 0.0
        %2716 = vmatprep.subr.mxu0 0.0
        %2717 = vmatpush1.msra.mxu0 0.0
        %2718 = vmatprep.subr.mxu0 0.0
        %2719 = vmatpush1.msra.mxu0 0.0
        %2720 = vmatprep.subr.mxu0 0.0
        %2721 = vmatpush1.msra.mxu0 0.0
        %2722 = vmatprep.subr.mxu0 0.0
        %2723 = vmatpush1.msra.mxu0 %v2655
        %2724 = vmatprep.subr.mxu0 0.0
        %2725 = vmatpush1.msra.mxu0 %v2654
        %2726 = vmatprep.subr.mxu0 0.0
        %2727 = vmatpush1.msra.mxu0 %v2653
        %2728 = vmatprep.subr.mxu0 0.0
        %2729 = vmatpush1.msra.mxu0 %v2652
        %2730 = vmatprep.subr.mxu0 0.0
        %2731 = vmatpush2.msra.mxu0 0.0
        %2732 = vmatprep.subr.mxu0 0.0
        %2733 = vmatpush2.msra.mxu0 0.0
        %2734 = vmatprep.subr.mxu0 0.0
        %2735 = vmatpush2.msra.mxu0 0.0
        %2736 = vmatprep.subr.mxu0 0.0
        %2737 = vmatpush2.msra.mxu0 0.0
        %2738 = vmatprep.subr.mxu0 0.0
        %2739 = vmatpush2.msra.mxu0 0.0
        %2740 = vmatprep.subr.mxu0 0.0
        %2741 = vmatpush2.msra.mxu0 0.0
        %2742 = vmatprep.subr.mxu0 0.0
        %2743 = vmatpush2.msra.mxu0 0.0
        %2744 = vmatprep.subr.mxu0 0.0
        %2745 = vmatpush2.msra.mxu0 0.0
        %2746 = vmatprep.subr.mxu0 0.0
        %2747 = vmatpush2.msra.mxu0 0.0
        %2748 = vmatprep.subr.mxu0 0.0
        %2749 = vmatpush2.msra.mxu0 0.0
        %2750 = vmatprep.subr.mxu0 0.0
        %2751 = vmatpush2.msra.mxu0 0.0
        %2752 = vmatprep.subr.mxu0 0.0
        %2753 = vmatpush2.msra.mxu0 0.0
        %2754 = vmatprep.subr.mxu0 0.0
        %2755 = vmatpush2.msra.mxu0 0.0
        %2756 = vmatprep.subr.mxu0 0.0
        %2757 = vmatpush2.msra.mxu0 0.0
        %2758 = vmatprep.subr.mxu0 0.0
        %2759 = vmatpush2.msra.mxu0 0.0
        %2760 = vmatprep.subr.mxu0 0.0
        %2761 = vmatpush2.msra.mxu0 0.0
        %2762 = vmatprep.mubr.f32.mxu0 0.0
        %2763 = vmatmul.mubr.f32.gmra.mxu0 %v2657
        %v2764 = vpop.f32.mrf.mxu0
        %v2765 = vadd.f32 0.0, %v2764
        %v2766 = vpop.f32.mrf.mxu0
        %2767 = vmatprep.mubr.f32.mxu0 0.0
        %2768 = vmatmul.mubr.f32.gmra.mxu0 %v2660
        %v2769 = vpop.f32.mrf.mxu0
        %v2770 = vadd.f32 0.0, %v2769
        %v2771 = vpop.f32.mrf.mxu0
        %2772 = vmatprep.mubr.f32.mxu0 0.0
        %2773 = vmatmul.mubr.f32.gmra.mxu0 %v2663
        %v2774 = vpop.f32.mrf.mxu0
        %v2775 = vadd.f32 0.0, %v2774
        %v2776 = vpop.f32.mrf.mxu0
        %2777 = vmatprep.mubr.f32.mxu0 0.0
        %2778 = vmatmul.mubr.f32.gmra.mxu0 %v2666
        %v2779 = vpop.f32.mrf.mxu0
        %v2780 = vadd.f32 0.0, %v2779
        %v2781 = vpop.f32.mrf.mxu0
        %2782 = vmatprep.mubr.f32.mxu0 0.0
        %2783 = vmatmul.mubr.f32.gmra.mxu0 %v2669
        %v2784 = vpop.f32.mrf.mxu0
        %v2785 = vadd.f32 0.0, %v2784
        %v2786 = vpop.f32.mrf.mxu0
        %2787 = vmatprep.mubr.f32.mxu0 0.0
        %2788 = vmatmul.mubr.f32.gmra.mxu0 %v2672
        %v2789 = vpop.f32.mrf.mxu0
        %v2790 = vadd.f32 0.0, %v2789
        %v2791 = vpop.f32.mrf.mxu0
        %2792 = vmatprep.mubr.f32.mxu0 0.0
        %2793 = vmatmul.mubr.f32.gmra.mxu0 %v2675
        %v2794 = vpop.f32.mrf.mxu0
        %v2795 = vadd.f32 0.0, %v2794
        %v2796 = vpop.f32.mrf.mxu0
        %2797 = vmatprep.mubr.f32.mxu0 0.0
        %2798 = vmatmul.mubr.f32.gmra.mxu0 %v2678
        %v2799 = vpop.f32.mrf.mxu0
        %v2800 = vadd.f32 0.0, %v2799
        %v2801 = vpop.f32.mrf.mxu0
        %2802 = vmatprep.mubr.f32.mxu0 0.0
        %2803 = vmatmul.mubr.f32.gmra.mxu0 %v2681
        %v2804 = vpop.f32.mrf.mxu0
        %v2805 = vadd.f32 0.0, %v2804
        %v2806 = vpop.f32.mrf.mxu0
        %2807 = vmatprep.mubr.f32.mxu0 0.0
        %2808 = vmatmul.mubr.f32.gmra.mxu0 %v2684
        %v2809 = vpop.f32.mrf.mxu0
        %v2810 = vadd.f32 0.0, %v2809
        %v2811 = vpop.f32.mrf.mxu0
        %2812 = vmatprep.mubr.f32.mxu0 0.0
        %2813 = vmatmul.mubr.f32.gmra.mxu0 %v2687
        %v2814 = vpop.f32.mrf.mxu0
        %v2815 = vadd.f32 0.0, %v2814
        %v2816 = vpop.f32.mrf.mxu0
        %2817 = vmatprep.mubr.f32.mxu0 0.0
        %2818 = vmatmul.mubr.f32.gmra.mxu0 %v2690
        %v2819 = vpop.f32.mrf.mxu0
        %v2820 = vadd.f32 0.0, %v2819
        %v2821 = vpop.f32.mrf.mxu0
        %2822 = vmatprep.mubr.f32.mxu0 0.0
        %2823 = vmatmul.mubr.f32.gmra.mxu0 %v2693
        %v2824 = vpop.f32.mrf.mxu0
        %v2825 = vadd.f32 0.0, %v2824
        %v2826 = vpop.f32.mrf.mxu0
        %2827 = vmatprep.mubr.f32.mxu0 0.0
        %2828 = vmatmul.mubr.f32.gmra.mxu0 %v2696
        %v2829 = vpop.f32.mrf.mxu0
        %v2830 = vadd.f32 0.0, %v2829
        %v2831 = vpop.f32.mrf.mxu0
        %2832 = vdwg.mxu0
        %v2833 = vadd.f32 %v2623, %v2765
        %v2834 = vadd.f32 %v2624, %v2770
        %v2835 = vadd.f32 %v2625, %v2775
        %v2836 = vadd.f32 %v2626, %v2780
        %v2837 = vadd.f32 %v2627, %v2785
        %v2838 = vadd.f32 %v2628, %v2790
        %v2839 = vadd.f32 %v2629, %v2795
        %v2840 = vadd.f32 %v2630, %v2800
        %v2841 = vadd.f32 %v2631, %v2805
        %v2842 = vadd.f32 %v2632, %v2810
        %v2843 = vadd.f32 %v2633, %v2815
        %v2844 = vadd.f32 %v2634, %v2820
        %v2845 = vadd.f32 %v2635, %v2825
        %v2846 = vadd.f32 %v2636, %v2830
        %v2847 = vld [vmem:[#allocation3 + $0x8] sm:$0xff]
        %v2848 = vld [vmem:[#allocation3 + $0x10] sm:$0xff]
        %v2849 = vld [vmem:[#allocation3 + $0x18] sm:$0xff]
        %v2850 = vld [vmem:[#allocation3 + $0x20] sm:$0xff]
        %v2851 = vld [vmem:[#allocation3 + $0x28] sm:$0xff]
        %v2852 = vld [vmem:[#allocation3 + $0x30] sm:$0xff]
        %v2853 = vld [vmem:[#allocation3 + $0x38] sm:$0xff]
        %v2854 = vld [vmem:[#allocation3 + $0x40] sm:$0xff]
        %v2855 = vld [vmem:[#allocation3 + $0x48] sm:$0xff]
        %v2856 = vld [vmem:[#allocation3 + $0x50] sm:$0xff]
        %v2857 = vld [vmem:[#allocation3 + $0x58] sm:$0xff]
        %v2858 = vld [vmem:[#allocation3 + $0x60] sm:$0xff]
        %v2859 = vld [vmem:[#allocation3 + $0x68] sm:$0xff]
        %v2860 = vld [vmem:[#allocation3 + $0x70] sm:$0xff]
        %s2861 = scalar_lea.vmem %s3, 128
        %v2862 = vld [vmem:[%s2861] sm:$0xff]
        %v2863 = vld [vmem:[%s2861 + $0x8] sm:$0xff]
        %v2864 = vld [vmem:[%s2861 + $0x10] sm:$0xff]
        %v2865 = vld [vmem:[%s2861 + $0x18] sm:$0xff]
        %v2867 = vsel %vm330, %v2847, 0
        %v2870 = vsel %vm330, %v2848, 0
        %v2873 = vsel %vm330, %v2849, 0
        %v2876 = vsel %vm330, %v2850, 0
        %v2879 = vsel %vm330, %v2851, 0
        %v2882 = vsel %vm330, %v2852, 0
        %v2885 = vsel %vm330, %v2853, 0
        %v2888 = vsel %vm330, %v2854, 0
        %v2891 = vsel %vm330, %v2855, 0
        %v2894 = vsel %vm330, %v2856, 0
        %v2897 = vsel %vm330, %v2857, 0
        %v2900 = vsel %vm330, %v2858, 0
        %v2903 = vsel %vm330, %v2859, 0
        %v2906 = vsel %vm330, %v2860, 0
        %2908 = vmatprep.subr.mxu0 0.0
        %2909 = vmatpush1.msra.mxu0 0.0
        %2910 = vmatprep.subr.mxu0 0.0
        %2911 = vmatpush1.msra.mxu0 0.0
        %2912 = vmatprep.subr.mxu0 0.0
        %2913 = vmatpush1.msra.mxu0 0.0
        %2914 = vmatprep.subr.mxu0 0.0
        %2915 = vmatpush1.msra.mxu0 0.0
        %2916 = vmatprep.subr.mxu0 0.0
        %2917 = vmatpush1.msra.mxu0 0.0
        %2918 = vmatprep.subr.mxu0 0.0
        %2919 = vmatpush1.msra.mxu0 0.0
        %2920 = vmatprep.subr.mxu0 0.0
        %2921 = vmatpush1.msra.mxu0 0.0
        %2922 = vmatprep.subr.mxu0 0.0
        %2923 = vmatpush1.msra.mxu0 0.0
        %2924 = vmatprep.subr.mxu0 0.0
        %2925 = vmatpush1.msra.mxu0 0.0
        %2926 = vmatprep.subr.mxu0 0.0
        %2927 = vmatpush1.msra.mxu0 0.0
        %2928 = vmatprep.subr.mxu0 0.0
        %2929 = vmatpush1.msra.mxu0 0.0
        %2930 = vmatprep.subr.mxu0 0.0
        %2931 = vmatpush1.msra.mxu0 0.0
        %2932 = vmatprep.subr.mxu0 0.0
        %2933 = vmatpush1.msra.mxu0 %v2865
        %2934 = vmatprep.subr.mxu0 0.0
        %2935 = vmatpush1.msra.mxu0 %v2864
        %2936 = vmatprep.subr.mxu0 0.0
        %2937 = vmatpush1.msra.mxu0 %v2863
        %2938 = vmatprep.subr.mxu0 0.0
        %2939 = vmatpush1.msra.mxu0 %v2862
        %2940 = vmatprep.subr.mxu0 0.0
        %2941 = vmatpush2.msra.mxu0 0.0
        %2942 = vmatprep.subr.mxu0 0.0
        %2943 = vmatpush2.msra.mxu0 0.0
        %2944 = vmatprep.subr.mxu0 0.0
        %2945 = vmatpush2.msra.mxu0 0.0
        %2946 = vmatprep.subr.mxu0 0.0
        %2947 = vmatpush2.msra.mxu0 0.0
        %2948 = vmatprep.subr.mxu0 0.0
        %2949 = vmatpush2.msra.mxu0 0.0
        %2950 = vmatprep.subr.mxu0 0.0
        %2951 = vmatpush2.msra.mxu0 0.0
        %2952 = vmatprep.subr.mxu0 0.0
        %2953 = vmatpush2.msra.mxu0 0.0
        %2954 = vmatprep.subr.mxu0 0.0
        %2955 = vmatpush2.msra.mxu0 0.0
        %2956 = vmatprep.subr.mxu0 0.0
        %2957 = vmatpush2.msra.mxu0 0.0
        %2958 = vmatprep.subr.mxu0 0.0
        %2959 = vmatpush2.msra.mxu0 0.0
        %2960 = vmatprep.subr.mxu0 0.0
        %2961 = vmatpush2.msra.mxu0 0.0
        %2962 = vmatprep.subr.mxu0 0.0
        %2963 = vmatpush2.msra.mxu0 0.0
        %2964 = vmatprep.subr.mxu0 0.0
        %2965 = vmatpush2.msra.mxu0 0.0
        %2966 = vmatprep.subr.mxu0 0.0
        %2967 = vmatpush2.msra.mxu0 0.0
        %2968 = vmatprep.subr.mxu0 0.0
        %2969 = vmatpush2.msra.mxu0 0.0
        %2970 = vmatprep.subr.mxu0 0.0
        %2971 = vmatpush2.msra.mxu0 0.0
        %2972 = vmatprep.mubr.f32.mxu0 0.0
        %2973 = vmatmul.mubr.f32.gmra.mxu0 %v2867
        %v2974 = vpop.f32.mrf.mxu0
        %v2975 = vadd.f32 0.0, %v2974
        %v2976 = vpop.f32.mrf.mxu0
        %2977 = vmatprep.mubr.f32.mxu0 0.0
        %2978 = vmatmul.mubr.f32.gmra.mxu0 %v2870
        %v2979 = vpop.f32.mrf.mxu0
        %v2980 = vadd.f32 0.0, %v2979
        %v2981 = vpop.f32.mrf.mxu0
        %2982 = vmatprep.mubr.f32.mxu0 0.0
        %2983 = vmatmul.mubr.f32.gmra.mxu0 %v2873
        %v2984 = vpop.f32.mrf.mxu0
        %v2985 = vadd.f32 0.0, %v2984
        %v2986 = vpop.f32.mrf.mxu0
        %2987 = vmatprep.mubr.f32.mxu0 0.0
        %2988 = vmatmul.mubr.f32.gmra.mxu0 %v2876
        %v2989 = vpop.f32.mrf.mxu0
        %v2990 = vadd.f32 0.0, %v2989
        %v2991 = vpop.f32.mrf.mxu0
        %2992 = vmatprep.mubr.f32.mxu0 0.0
        %2993 = vmatmul.mubr.f32.gmra.mxu0 %v2879
        %v2994 = vpop.f32.mrf.mxu0
        %v2995 = vadd.f32 0.0, %v2994
        %v2996 = vpop.f32.mrf.mxu0
        %2997 = vmatprep.mubr.f32.mxu0 0.0
        %2998 = vmatmul.mubr.f32.gmra.mxu0 %v2882
        %v2999 = vpop.f32.mrf.mxu0
        %v3000 = vadd.f32 0.0, %v2999
        %v3001 = vpop.f32.mrf.mxu0
        %3002 = vmatprep.mubr.f32.mxu0 0.0
        %3003 = vmatmul.mubr.f32.gmra.mxu0 %v2885
        %v3004 = vpop.f32.mrf.mxu0
        %v3005 = vadd.f32 0.0, %v3004
        %v3006 = vpop.f32.mrf.mxu0
        %3007 = vmatprep.mubr.f32.mxu0 0.0
        %3008 = vmatmul.mubr.f32.gmra.mxu0 %v2888
        %v3009 = vpop.f32.mrf.mxu0
        %v3010 = vadd.f32 0.0, %v3009
        %v3011 = vpop.f32.mrf.mxu0
        %3012 = vmatprep.mubr.f32.mxu0 0.0
        %3013 = vmatmul.mubr.f32.gmra.mxu0 %v2891
        %v3014 = vpop.f32.mrf.mxu0
        %v3015 = vadd.f32 0.0, %v3014
        %v3016 = vpop.f32.mrf.mxu0
        %3017 = vmatprep.mubr.f32.mxu0 0.0
        %3018 = vmatmul.mubr.f32.gmra.mxu0 %v2894
        %v3019 = vpop.f32.mrf.mxu0
        %v3020 = vadd.f32 0.0, %v3019
        %v3021 = vpop.f32.mrf.mxu0
        %3022 = vmatprep.mubr.f32.mxu0 0.0
        %3023 = vmatmul.mubr.f32.gmra.mxu0 %v2897
        %v3024 = vpop.f32.mrf.mxu0
        %v3025 = vadd.f32 0.0, %v3024
        %v3026 = vpop.f32.mrf.mxu0
        %3027 = vmatprep.mubr.f32.mxu0 0.0
        %3028 = vmatmul.mubr.f32.gmra.mxu0 %v2900
        %v3029 = vpop.f32.mrf.mxu0
        %v3030 = vadd.f32 0.0, %v3029
        %v3031 = vpop.f32.mrf.mxu0
        %3032 = vmatprep.mubr.f32.mxu0 0.0
        %3033 = vmatmul.mubr.f32.gmra.mxu0 %v2903
        %v3034 = vpop.f32.mrf.mxu0
        %v3035 = vadd.f32 0.0, %v3034
        %v3036 = vpop.f32.mrf.mxu0
        %3037 = vmatprep.mubr.f32.mxu0 0.0
        %3038 = vmatmul.mubr.f32.gmra.mxu0 %v2906
        %v3039 = vpop.f32.mrf.mxu0
        %v3040 = vadd.f32 0.0, %v3039
        %v3041 = vpop.f32.mrf.mxu0
        %3042 = vdwg.mxu0
        %v3043 = vadd.f32 %v2833, %v2975
        %v3044 = vadd.f32 %v2834, %v2980
        %v3045 = vadd.f32 %v2835, %v2985
        %v3046 = vadd.f32 %v2836, %v2990
        %v3047 = vadd.f32 %v2837, %v2995
        %v3048 = vadd.f32 %v2838, %v3000
        %v3049 = vadd.f32 %v2839, %v3005
        %v3050 = vadd.f32 %v2840, %v3010
        %v3051 = vadd.f32 %v2841, %v3015
        %v3052 = vadd.f32 %v2842, %v3020
        %v3053 = vadd.f32 %v2843, %v3025
        %v3054 = vadd.f32 %v2844, %v3030
        %v3055 = vadd.f32 %v2845, %v3035
        %v3056 = vadd.f32 %v2846, %v3040
        %v3057 = vld [vmem:[#allocation2 + $0x9] sm:$0xff]
        %v3058 = vld [vmem:[#allocation2 + $0x11] sm:$0xff]
        %v3059 = vld [vmem:[#allocation2 + $0x19] sm:$0xff]
        %v3060 = vld [vmem:[#allocation2 + $0x21] sm:$0xff]
        %v3061 = vld [vmem:[#allocation2 + $0x29] sm:$0xff]
        %v3062 = vld [vmem:[#allocation2 + $0x31] sm:$0xff]
        %v3063 = vld [vmem:[#allocation2 + $0x39] sm:$0xff]
        %v3064 = vld [vmem:[#allocation2 + $0x41] sm:$0xff]
        %v3065 = vld [vmem:[#allocation2 + $0x49] sm:$0xff]
        %v3066 = vld [vmem:[#allocation2 + $0x51] sm:$0xff]
        %v3067 = vld [vmem:[#allocation2 + $0x59] sm:$0xff]
        %v3068 = vld [vmem:[#allocation2 + $0x61] sm:$0xff]
        %v3069 = vld [vmem:[#allocation2 + $0x69] sm:$0xff]
        %v3070 = vld [vmem:[#allocation2 + $0x71] sm:$0xff]
        %s3071 = scalar_lea.vmem %s3, 160
        %v3072 = vld [vmem:[%s3071] sm:$0xff]
        %v3073 = vld [vmem:[%s3071 + $0x8] sm:$0xff]
        %v3074 = vld [vmem:[%s3071 + $0x10] sm:$0xff]
        %v3075 = vld [vmem:[%s3071 + $0x18] sm:$0xff]
        %v3077 = vsel %vm330, %v3057, 0
        %v3080 = vsel %vm330, %v3058, 0
        %v3083 = vsel %vm330, %v3059, 0
        %v3086 = vsel %vm330, %v3060, 0
        %v3089 = vsel %vm330, %v3061, 0
        %v3092 = vsel %vm330, %v3062, 0
        %v3095 = vsel %vm330, %v3063, 0
        %v3098 = vsel %vm330, %v3064, 0
        %v3101 = vsel %vm330, %v3065, 0
        %v3104 = vsel %vm330, %v3066, 0
        %v3107 = vsel %vm330, %v3067, 0
        %v3110 = vsel %vm330, %v3068, 0
        %v3113 = vsel %vm330, %v3069, 0
        %v3116 = vsel %vm330, %v3070, 0
        %3118 = vmatprep.subr.mxu0 0.0
        %3119 = vmatpush1.msra.mxu0 0.0
        %3120 = vmatprep.subr.mxu0 0.0
        %3121 = vmatpush1.msra.mxu0 0.0
        %3122 = vmatprep.subr.mxu0 0.0
        %3123 = vmatpush1.msra.mxu0 0.0
        %3124 = vmatprep.subr.mxu0 0.0
        %3125 = vmatpush1.msra.mxu0 0.0
        %3126 = vmatprep.subr.mxu0 0.0
        %3127 = vmatpush1.msra.mxu0 0.0
        %3128 = vmatprep.subr.mxu0 0.0
        %3129 = vmatpush1.msra.mxu0 0.0
        %3130 = vmatprep.subr.mxu0 0.0
        %3131 = vmatpush1.msra.mxu0 0.0
        %3132 = vmatprep.subr.mxu0 0.0
        %3133 = vmatpush1.msra.mxu0 0.0
        %3134 = vmatprep.subr.mxu0 0.0
        %3135 = vmatpush1.msra.mxu0 0.0
        %3136 = vmatprep.subr.mxu0 0.0
        %3137 = vmatpush1.msra.mxu0 0.0
        %3138 = vmatprep.subr.mxu0 0.0
        %3139 = vmatpush1.msra.mxu0 0.0
        %3140 = vmatprep.subr.mxu0 0.0
        %3141 = vmatpush1.msra.mxu0 0.0
        %3142 = vmatprep.subr.mxu0 0.0
        %3143 = vmatpush1.msra.mxu0 %v3075
        %3144 = vmatprep.subr.mxu0 0.0
        %3145 = vmatpush1.msra.mxu0 %v3074
        %3146 = vmatprep.subr.mxu0 0.0
        %3147 = vmatpush1.msra.mxu0 %v3073
        %3148 = vmatprep.subr.mxu0 0.0
        %3149 = vmatpush1.msra.mxu0 %v3072
        %3150 = vmatprep.subr.mxu0 0.0
        %3151 = vmatpush2.msra.mxu0 0.0
        %3152 = vmatprep.subr.mxu0 0.0
        %3153 = vmatpush2.msra.mxu0 0.0
        %3154 = vmatprep.subr.mxu0 0.0
        %3155 = vmatpush2.msra.mxu0 0.0
        %3156 = vmatprep.subr.mxu0 0.0
        %3157 = vmatpush2.msra.mxu0 0.0
        %3158 = vmatprep.subr.mxu0 0.0
        %3159 = vmatpush2.msra.mxu0 0.0
        %3160 = vmatprep.subr.mxu0 0.0
        %3161 = vmatpush2.msra.mxu0 0.0
        %3162 = vmatprep.subr.mxu0 0.0
        %3163 = vmatpush2.msra.mxu0 0.0
        %3164 = vmatprep.subr.mxu0 0.0
        %3165 = vmatpush2.msra.mxu0 0.0
        %3166 = vmatprep.subr.mxu0 0.0
        %3167 = vmatpush2.msra.mxu0 0.0
        %3168 = vmatprep.subr.mxu0 0.0
        %3169 = vmatpush2.msra.mxu0 0.0
        %3170 = vmatprep.subr.mxu0 0.0
        %3171 = vmatpush2.msra.mxu0 0.0
        %3172 = vmatprep.subr.mxu0 0.0
        %3173 = vmatpush2.msra.mxu0 0.0
        %3174 = vmatprep.subr.mxu0 0.0
        %3175 = vmatpush2.msra.mxu0 0.0
        %3176 = vmatprep.subr.mxu0 0.0
        %3177 = vmatpush2.msra.mxu0 0.0
        %3178 = vmatprep.subr.mxu0 0.0
        %3179 = vmatpush2.msra.mxu0 0.0
        %3180 = vmatprep.subr.mxu0 0.0
        %3181 = vmatpush2.msra.mxu0 0.0
        %3182 = vmatprep.mubr.f32.mxu0 0.0
        %3183 = vmatmul.mubr.f32.gmra.mxu0 %v3077
        %v3184 = vpop.f32.mrf.mxu0
        %v3185 = vadd.f32 0.0, %v3184
        %v3186 = vpop.f32.mrf.mxu0
        %3187 = vmatprep.mubr.f32.mxu0 0.0
        %3188 = vmatmul.mubr.f32.gmra.mxu0 %v3080
        %v3189 = vpop.f32.mrf.mxu0
        %v3190 = vadd.f32 0.0, %v3189
        %v3191 = vpop.f32.mrf.mxu0
        %3192 = vmatprep.mubr.f32.mxu0 0.0
        %3193 = vmatmul.mubr.f32.gmra.mxu0 %v3083
        %v3194 = vpop.f32.mrf.mxu0
        %v3195 = vadd.f32 0.0, %v3194
        %v3196 = vpop.f32.mrf.mxu0
        %3197 = vmatprep.mubr.f32.mxu0 0.0
        %3198 = vmatmul.mubr.f32.gmra.mxu0 %v3086
        %v3199 = vpop.f32.mrf.mxu0
        %v3200 = vadd.f32 0.0, %v3199
        %v3201 = vpop.f32.mrf.mxu0
        %3202 = vmatprep.mubr.f32.mxu0 0.0
        %3203 = vmatmul.mubr.f32.gmra.mxu0 %v3089
        %v3204 = vpop.f32.mrf.mxu0
        %v3205 = vadd.f32 0.0, %v3204
        %v3206 = vpop.f32.mrf.mxu0
        %3207 = vmatprep.mubr.f32.mxu0 0.0
        %3208 = vmatmul.mubr.f32.gmra.mxu0 %v3092
        %v3209 = vpop.f32.mrf.mxu0
        %v3210 = vadd.f32 0.0, %v3209
        %v3211 = vpop.f32.mrf.mxu0
        %3212 = vmatprep.mubr.f32.mxu0 0.0
        %3213 = vmatmul.mubr.f32.gmra.mxu0 %v3095
        %v3214 = vpop.f32.mrf.mxu0
        %v3215 = vadd.f32 0.0, %v3214
        %v3216 = vpop.f32.mrf.mxu0
        %3217 = vmatprep.mubr.f32.mxu0 0.0
        %3218 = vmatmul.mubr.f32.gmra.mxu0 %v3098
        %v3219 = vpop.f32.mrf.mxu0
        %v3220 = vadd.f32 0.0, %v3219
        %v3221 = vpop.f32.mrf.mxu0
        %3222 = vmatprep.mubr.f32.mxu0 0.0
        %3223 = vmatmul.mubr.f32.gmra.mxu0 %v3101
        %v3224 = vpop.f32.mrf.mxu0
        %v3225 = vadd.f32 0.0, %v3224
        %v3226 = vpop.f32.mrf.mxu0
        %3227 = vmatprep.mubr.f32.mxu0 0.0
        %3228 = vmatmul.mubr.f32.gmra.mxu0 %v3104
        %v3229 = vpop.f32.mrf.mxu0
        %v3230 = vadd.f32 0.0, %v3229
        %v3231 = vpop.f32.mrf.mxu0
        %3232 = vmatprep.mubr.f32.mxu0 0.0
        %3233 = vmatmul.mubr.f32.gmra.mxu0 %v3107
        %v3234 = vpop.f32.mrf.mxu0
        %v3235 = vadd.f32 0.0, %v3234
        %v3236 = vpop.f32.mrf.mxu0
        %3237 = vmatprep.mubr.f32.mxu0 0.0
        %3238 = vmatmul.mubr.f32.gmra.mxu0 %v3110
        %v3239 = vpop.f32.mrf.mxu0
        %v3240 = vadd.f32 0.0, %v3239
        %v3241 = vpop.f32.mrf.mxu0
        %3242 = vmatprep.mubr.f32.mxu0 0.0
        %3243 = vmatmul.mubr.f32.gmra.mxu0 %v3113
        %v3244 = vpop.f32.mrf.mxu0
        %v3245 = vadd.f32 0.0, %v3244
        %v3246 = vpop.f32.mrf.mxu0
        %3247 = vmatprep.mubr.f32.mxu0 0.0
        %3248 = vmatmul.mubr.f32.gmra.mxu0 %v3116
        %v3249 = vpop.f32.mrf.mxu0
        %v3250 = vadd.f32 0.0, %v3249
        %v3251 = vpop.f32.mrf.mxu0
        %3252 = vdwg.mxu0
        %v3253 = vadd.f32 %v3043, %v3185
        %v3254 = vadd.f32 %v3044, %v3190
        %v3255 = vadd.f32 %v3045, %v3195
        %v3256 = vadd.f32 %v3046, %v3200
        %v3257 = vadd.f32 %v3047, %v3205
        %v3258 = vadd.f32 %v3048, %v3210
        %v3259 = vadd.f32 %v3049, %v3215
        %v3260 = vadd.f32 %v3050, %v3220
        %v3261 = vadd.f32 %v3051, %v3225
        %v3262 = vadd.f32 %v3052, %v3230
        %v3263 = vadd.f32 %v3053, %v3235
        %v3264 = vadd.f32 %v3054, %v3240
        %v3265 = vadd.f32 %v3055, %v3245
        %v3266 = vadd.f32 %v3056, %v3250
        %v3267 = vld [vmem:[#allocation2 + $0x10] sm:$0xff]
        %v3268 = vld [vmem:[#allocation2 + $0x18] sm:$0xff]
        %v3269 = vld [vmem:[#allocation2 + $0x20] sm:$0xff]
        %v3270 = vld [vmem:[#allocation2 + $0x28] sm:$0xff]
        %v3271 = vld [vmem:[#allocation2 + $0x30] sm:$0xff]
        %v3272 = vld [vmem:[#allocation2 + $0x38] sm:$0xff]
        %v3273 = vld [vmem:[#allocation2 + $0x40] sm:$0xff]
        %v3274 = vld [vmem:[#allocation2 + $0x48] sm:$0xff]
        %v3275 = vld [vmem:[#allocation2 + $0x50] sm:$0xff]
        %v3276 = vld [vmem:[#allocation2 + $0x58] sm:$0xff]
        %v3277 = vld [vmem:[#allocation2 + $0x60] sm:$0xff]
        %v3278 = vld [vmem:[#allocation2 + $0x68] sm:$0xff]
        %v3279 = vld [vmem:[#allocation2 + $0x70] sm:$0xff]
        %v3280 = vld [vmem:[#allocation2 + $0x78] sm:$0xff]
        %s3281 = scalar_lea.vmem %s3, 192
        %v3282 = vld [vmem:[%s3281] sm:$0xff]
        %v3283 = vld [vmem:[%s3281 + $0x8] sm:$0xff]
        %v3284 = vld [vmem:[%s3281 + $0x10] sm:$0xff]
        %v3285 = vld [vmem:[%s3281 + $0x18] sm:$0xff]
        %v3287 = vsel %vm330, %v3267, 0
        %v3290 = vsel %vm330, %v3268, 0
        %v3293 = vsel %vm330, %v3269, 0
        %v3296 = vsel %vm330, %v3270, 0
        %v3299 = vsel %vm330, %v3271, 0
        %v3302 = vsel %vm330, %v3272, 0
        %v3305 = vsel %vm330, %v3273, 0
        %v3308 = vsel %vm330, %v3274, 0
        %v3311 = vsel %vm330, %v3275, 0
        %v3314 = vsel %vm330, %v3276, 0
        %v3317 = vsel %vm330, %v3277, 0
        %v3320 = vsel %vm330, %v3278, 0
        %v3323 = vsel %vm330, %v3279, 0
        %v3326 = vsel %vm330, %v3280, 0
        %3328 = vmatprep.subr.mxu0 0.0
        %3329 = vmatpush1.msra.mxu0 0.0
        %3330 = vmatprep.subr.mxu0 0.0
        %3331 = vmatpush1.msra.mxu0 0.0
        %3332 = vmatprep.subr.mxu0 0.0
        %3333 = vmatpush1.msra.mxu0 0.0
        %3334 = vmatprep.subr.mxu0 0.0
        %3335 = vmatpush1.msra.mxu0 0.0
        %3336 = vmatprep.subr.mxu0 0.0
        %3337 = vmatpush1.msra.mxu0 0.0
        %3338 = vmatprep.subr.mxu0 0.0
        %3339 = vmatpush1.msra.mxu0 0.0
        %3340 = vmatprep.subr.mxu0 0.0
        %3341 = vmatpush1.msra.mxu0 0.0
        %3342 = vmatprep.subr.mxu0 0.0
        %3343 = vmatpush1.msra.mxu0 0.0
        %3344 = vmatprep.subr.mxu0 0.0
        %3345 = vmatpush1.msra.mxu0 0.0
        %3346 = vmatprep.subr.mxu0 0.0
        %3347 = vmatpush1.msra.mxu0 0.0
        %3348 = vmatprep.subr.mxu0 0.0
        %3349 = vmatpush1.msra.mxu0 0.0
        %3350 = vmatprep.subr.mxu0 0.0
        %3351 = vmatpush1.msra.mxu0 0.0
        %3352 = vmatprep.subr.mxu0 0.0
        %3353 = vmatpush1.msra.mxu0 %v3285
        %3354 = vmatprep.subr.mxu0 0.0
        %3355 = vmatpush1.msra.mxu0 %v3284
        %3356 = vmatprep.subr.mxu0 0.0
        %3357 = vmatpush1.msra.mxu0 %v3283
        %3358 = vmatprep.subr.mxu0 0.0
        %3359 = vmatpush1.msra.mxu0 %v3282
        %3360 = vmatprep.subr.mxu0 0.0
        %3361 = vmatpush2.msra.mxu0 0.0
        %3362 = vmatprep.subr.mxu0 0.0
        %3363 = vmatpush2.msra.mxu0 0.0
        %3364 = vmatprep.subr.mxu0 0.0
        %3365 = vmatpush2.msra.mxu0 0.0
        %3366 = vmatprep.subr.mxu0 0.0
        %3367 = vmatpush2.msra.mxu0 0.0
        %3368 = vmatprep.subr.mxu0 0.0
        %3369 = vmatpush2.msra.mxu0 0.0
        %3370 = vmatprep.subr.mxu0 0.0
        %3371 = vmatpush2.msra.mxu0 0.0
        %3372 = vmatprep.subr.mxu0 0.0
        %3373 = vmatpush2.msra.mxu0 0.0
        %3374 = vmatprep.subr.mxu0 0.0
        %3375 = vmatpush2.msra.mxu0 0.0
        %3376 = vmatprep.subr.mxu0 0.0
        %3377 = vmatpush2.msra.mxu0 0.0
        %3378 = vmatprep.subr.mxu0 0.0
        %3379 = vmatpush2.msra.mxu0 0.0
        %3380 = vmatprep.subr.mxu0 0.0
        %3381 = vmatpush2.msra.mxu0 0.0
        %3382 = vmatprep.subr.mxu0 0.0
        %3383 = vmatpush2.msra.mxu0 0.0
        %3384 = vmatprep.subr.mxu0 0.0
        %3385 = vmatpush2.msra.mxu0 0.0
        %3386 = vmatprep.subr.mxu0 0.0
        %3387 = vmatpush2.msra.mxu0 0.0
        %3388 = vmatprep.subr.mxu0 0.0
        %3389 = vmatpush2.msra.mxu0 0.0
        %3390 = vmatprep.subr.mxu0 0.0
        %3391 = vmatpush2.msra.mxu0 0.0
        %3392 = vmatprep.mubr.f32.mxu0 0.0
        %3393 = vmatmul.mubr.f32.gmra.mxu0 %v3287
        %v3394 = vpop.f32.mrf.mxu0
        %v3395 = vadd.f32 0.0, %v3394
        %v3396 = vpop.f32.mrf.mxu0
        %3397 = vmatprep.mubr.f32.mxu0 0.0
        %3398 = vmatmul.mubr.f32.gmra.mxu0 %v3290
        %v3399 = vpop.f32.mrf.mxu0
        %v3400 = vadd.f32 0.0, %v3399
        %v3401 = vpop.f32.mrf.mxu0
        %3402 = vmatprep.mubr.f32.mxu0 0.0
        %3403 = vmatmul.mubr.f32.gmra.mxu0 %v3293
        %v3404 = vpop.f32.mrf.mxu0
        %v3405 = vadd.f32 0.0, %v3404
        %v3406 = vpop.f32.mrf.mxu0
        %3407 = vmatprep.mubr.f32.mxu0 0.0
        %3408 = vmatmul.mubr.f32.gmra.mxu0 %v3296
        %v3409 = vpop.f32.mrf.mxu0
        %v3410 = vadd.f32 0.0, %v3409
        %v3411 = vpop.f32.mrf.mxu0
        %3412 = vmatprep.mubr.f32.mxu0 0.0
        %3413 = vmatmul.mubr.f32.gmra.mxu0 %v3299
        %v3414 = vpop.f32.mrf.mxu0
        %v3415 = vadd.f32 0.0, %v3414
        %v3416 = vpop.f32.mrf.mxu0
        %3417 = vmatprep.mubr.f32.mxu0 0.0
        %3418 = vmatmul.mubr.f32.gmra.mxu0 %v3302
        %v3419 = vpop.f32.mrf.mxu0
        %v3420 = vadd.f32 0.0, %v3419
        %v3421 = vpop.f32.mrf.mxu0
        %3422 = vmatprep.mubr.f32.mxu0 0.0
        %3423 = vmatmul.mubr.f32.gmra.mxu0 %v3305
        %v3424 = vpop.f32.mrf.mxu0
        %v3425 = vadd.f32 0.0, %v3424
        %v3426 = vpop.f32.mrf.mxu0
        %3427 = vmatprep.mubr.f32.mxu0 0.0
        %3428 = vmatmul.mubr.f32.gmra.mxu0 %v3308
        %v3429 = vpop.f32.mrf.mxu0
        %v3430 = vadd.f32 0.0, %v3429
        %v3431 = vpop.f32.mrf.mxu0
        %3432 = vmatprep.mubr.f32.mxu0 0.0
        %3433 = vmatmul.mubr.f32.gmra.mxu0 %v3311
        %v3434 = vpop.f32.mrf.mxu0
        %v3435 = vadd.f32 0.0, %v3434
        %v3436 = vpop.f32.mrf.mxu0
        %3437 = vmatprep.mubr.f32.mxu0 0.0
        %3438 = vmatmul.mubr.f32.gmra.mxu0 %v3314
        %v3439 = vpop.f32.mrf.mxu0
        %v3440 = vadd.f32 0.0, %v3439
        %v3441 = vpop.f32.mrf.mxu0
        %3442 = vmatprep.mubr.f32.mxu0 0.0
        %3443 = vmatmul.mubr.f32.gmra.mxu0 %v3317
        %v3444 = vpop.f32.mrf.mxu0
        %v3445 = vadd.f32 0.0, %v3444
        %v3446 = vpop.f32.mrf.mxu0
        %3447 = vmatprep.mubr.f32.mxu0 0.0
        %3448 = vmatmul.mubr.f32.gmra.mxu0 %v3320
        %v3449 = vpop.f32.mrf.mxu0
        %v3450 = vadd.f32 0.0, %v3449
        %v3451 = vpop.f32.mrf.mxu0
        %3452 = vmatprep.mubr.f32.mxu0 0.0
        %3453 = vmatmul.mubr.f32.gmra.mxu0 %v3323
        %v3454 = vpop.f32.mrf.mxu0
        %v3455 = vadd.f32 0.0, %v3454
        %v3456 = vpop.f32.mrf.mxu0
        %3457 = vmatprep.mubr.f32.mxu0 0.0
        %3458 = vmatmul.mubr.f32.gmra.mxu0 %v3326
        %v3459 = vpop.f32.mrf.mxu0
        %v3460 = vadd.f32 0.0, %v3459
        %v3461 = vpop.f32.mrf.mxu0
        %3462 = vdwg.mxu0
        %v3463 = vadd.f32 %v3253, %v3395
        %v3464 = vadd.f32 %v3254, %v3400
        %v3465 = vadd.f32 %v3255, %v3405
        %v3466 = vadd.f32 %v3256, %v3410
        %v3467 = vadd.f32 %v3257, %v3415
        %v3468 = vadd.f32 %v3258, %v3420
        %v3469 = vadd.f32 %v3259, %v3425
        %v3470 = vadd.f32 %v3260, %v3430
        %v3471 = vadd.f32 %v3261, %v3435
        %v3472 = vadd.f32 %v3262, %v3440
        %v3473 = vadd.f32 %v3263, %v3445
        %v3474 = vadd.f32 %v3264, %v3450
        %v3475 = vadd.f32 %v3265, %v3455
        %v3476 = vadd.f32 %v3266, %v3460
        %v3477 = vld [vmem:[#allocation3 + $0x10] sm:$0xff]
        %v3478 = vld [vmem:[#allocation3 + $0x18] sm:$0xff]
        %v3479 = vld [vmem:[#allocation3 + $0x20] sm:$0xff]
        %v3480 = vld [vmem:[#allocation3 + $0x28] sm:$0xff]
        %v3481 = vld [vmem:[#allocation3 + $0x30] sm:$0xff]
        %v3482 = vld [vmem:[#allocation3 + $0x38] sm:$0xff]
        %v3483 = vld [vmem:[#allocation3 + $0x40] sm:$0xff]
        %v3484 = vld [vmem:[#allocation3 + $0x48] sm:$0xff]
        %v3485 = vld [vmem:[#allocation3 + $0x50] sm:$0xff]
        %v3486 = vld [vmem:[#allocation3 + $0x58] sm:$0xff]
        %v3487 = vld [vmem:[#allocation3 + $0x60] sm:$0xff]
        %v3488 = vld [vmem:[#allocation3 + $0x68] sm:$0xff]
        %v3489 = vld [vmem:[#allocation3 + $0x70] sm:$0xff]
        %v3490 = vld [vmem:[#allocation3 + $0x78] sm:$0xff]
        %s3491 = scalar_lea.vmem %s3, 224
        %v3492 = vld [vmem:[%s3491] sm:$0xff]
        %v3493 = vld [vmem:[%s3491 + $0x8] sm:$0xff]
        %v3494 = vld [vmem:[%s3491 + $0x10] sm:$0xff]
        %v3495 = vld [vmem:[%s3491 + $0x18] sm:$0xff]
        %v3497 = vsel %vm330, %v3477, 0
        %v3500 = vsel %vm330, %v3478, 0
        %v3503 = vsel %vm330, %v3479, 0
        %v3506 = vsel %vm330, %v3480, 0
        %v3509 = vsel %vm330, %v3481, 0
        %v3512 = vsel %vm330, %v3482, 0
        %v3515 = vsel %vm330, %v3483, 0
        %v3518 = vsel %vm330, %v3484, 0
        %v3521 = vsel %vm330, %v3485, 0
        %v3524 = vsel %vm330, %v3486, 0
        %v3527 = vsel %vm330, %v3487, 0
        %v3530 = vsel %vm330, %v3488, 0
        %v3533 = vsel %vm330, %v3489, 0
        %v3536 = vsel %vm330, %v3490, 0
        %3538 = vmatprep.subr.mxu0 0.0
        %3539 = vmatpush1.msra.mxu0 0.0
        %3540 = vmatprep.subr.mxu0 0.0
        %3541 = vmatpush1.msra.mxu0 0.0
        %3542 = vmatprep.subr.mxu0 0.0
        %3543 = vmatpush1.msra.mxu0 0.0
        %3544 = vmatprep.subr.mxu0 0.0
        %3545 = vmatpush1.msra.mxu0 0.0
        %3546 = vmatprep.subr.mxu0 0.0
        %3547 = vmatpush1.msra.mxu0 0.0
        %3548 = vmatprep.subr.mxu0 0.0
        %3549 = vmatpush1.msra.mxu0 0.0
        %3550 = vmatprep.subr.mxu0 0.0
        %3551 = vmatpush1.msra.mxu0 0.0
        %3552 = vmatprep.subr.mxu0 0.0
        %3553 = vmatpush1.msra.mxu0 0.0
        %3554 = vmatprep.subr.mxu0 0.0
        %3555 = vmatpush1.msra.mxu0 0.0
        %3556 = vmatprep.subr.mxu0 0.0
        %3557 = vmatpush1.msra.mxu0 0.0
        %3558 = vmatprep.subr.mxu0 0.0
        %3559 = vmatpush1.msra.mxu0 0.0
        %3560 = vmatprep.subr.mxu0 0.0
        %3561 = vmatpush1.msra.mxu0 0.0
        %3562 = vmatprep.subr.mxu0 0.0
        %3563 = vmatpush1.msra.mxu0 %v3495
        %3564 = vmatprep.subr.mxu0 0.0
        %3565 = vmatpush1.msra.mxu0 %v3494
        %3566 = vmatprep.subr.mxu0 0.0
        %3567 = vmatpush1.msra.mxu0 %v3493
        %3568 = vmatprep.subr.mxu0 0.0
        %3569 = vmatpush1.msra.mxu0 %v3492
        %3570 = vmatprep.subr.mxu0 0.0
        %3571 = vmatpush2.msra.mxu0 0.0
        %3572 = vmatprep.subr.mxu0 0.0
        %3573 = vmatpush2.msra.mxu0 0.0
        %3574 = vmatprep.subr.mxu0 0.0
        %3575 = vmatpush2.msra.mxu0 0.0
        %3576 = vmatprep.subr.mxu0 0.0
        %3577 = vmatpush2.msra.mxu0 0.0
        %3578 = vmatprep.subr.mxu0 0.0
        %3579 = vmatpush2.msra.mxu0 0.0
        %3580 = vmatprep.subr.mxu0 0.0
        %3581 = vmatpush2.msra.mxu0 0.0
        %3582 = vmatprep.subr.mxu0 0.0
        %3583 = vmatpush2.msra.mxu0 0.0
        %3584 = vmatprep.subr.mxu0 0.0
        %3585 = vmatpush2.msra.mxu0 0.0
        %3586 = vmatprep.subr.mxu0 0.0
        %3587 = vmatpush2.msra.mxu0 0.0
        %3588 = vmatprep.subr.mxu0 0.0
        %3589 = vmatpush2.msra.mxu0 0.0
        %3590 = vmatprep.subr.mxu0 0.0
        %3591 = vmatpush2.msra.mxu0 0.0
        %3592 = vmatprep.subr.mxu0 0.0
        %3593 = vmatpush2.msra.mxu0 0.0
        %3594 = vmatprep.subr.mxu0 0.0
        %3595 = vmatpush2.msra.mxu0 0.0
        %3596 = vmatprep.subr.mxu0 0.0
        %3597 = vmatpush2.msra.mxu0 0.0
        %3598 = vmatprep.subr.mxu0 0.0
        %3599 = vmatpush2.msra.mxu0 0.0
        %3600 = vmatprep.subr.mxu0 0.0
        %3601 = vmatpush2.msra.mxu0 0.0
        %3602 = vmatprep.mubr.f32.mxu0 0.0
        %3603 = vmatmul.mubr.f32.gmra.mxu0 %v3497
        %v3604 = vpop.f32.mrf.mxu0
        %v3605 = vadd.f32 0.0, %v3604
        %v3606 = vpop.f32.mrf.mxu0
        %3607 = vmatprep.mubr.f32.mxu0 0.0
        %3608 = vmatmul.mubr.f32.gmra.mxu0 %v3500
        %v3609 = vpop.f32.mrf.mxu0
        %v3610 = vadd.f32 0.0, %v3609
        %v3611 = vpop.f32.mrf.mxu0
        %3612 = vmatprep.mubr.f32.mxu0 0.0
        %3613 = vmatmul.mubr.f32.gmra.mxu0 %v3503
        %v3614 = vpop.f32.mrf.mxu0
        %v3615 = vadd.f32 0.0, %v3614
        %v3616 = vpop.f32.mrf.mxu0
        %3617 = vmatprep.mubr.f32.mxu0 0.0
        %3618 = vmatmul.mubr.f32.gmra.mxu0 %v3506
        %v3619 = vpop.f32.mrf.mxu0
        %v3620 = vadd.f32 0.0, %v3619
        %v3621 = vpop.f32.mrf.mxu0
        %3622 = vmatprep.mubr.f32.mxu0 0.0
        %3623 = vmatmul.mubr.f32.gmra.mxu0 %v3509
        %v3624 = vpop.f32.mrf.mxu0
        %v3625 = vadd.f32 0.0, %v3624
        %v3626 = vpop.f32.mrf.mxu0
        %3627 = vmatprep.mubr.f32.mxu0 0.0
        %3628 = vmatmul.mubr.f32.gmra.mxu0 %v3512
        %v3629 = vpop.f32.mrf.mxu0
        %v3630 = vadd.f32 0.0, %v3629
        %v3631 = vpop.f32.mrf.mxu0
        %3632 = vmatprep.mubr.f32.mxu0 0.0
        %3633 = vmatmul.mubr.f32.gmra.mxu0 %v3515
        %v3634 = vpop.f32.mrf.mxu0
        %v3635 = vadd.f32 0.0, %v3634
        %v3636 = vpop.f32.mrf.mxu0
        %3637 = vmatprep.mubr.f32.mxu0 0.0
        %3638 = vmatmul.mubr.f32.gmra.mxu0 %v3518
        %v3639 = vpop.f32.mrf.mxu0
        %v3640 = vadd.f32 0.0, %v3639
        %v3641 = vpop.f32.mrf.mxu0
        %3642 = vmatprep.mubr.f32.mxu0 0.0
        %3643 = vmatmul.mubr.f32.gmra.mxu0 %v3521
        %v3644 = vpop.f32.mrf.mxu0
        %v3645 = vadd.f32 0.0, %v3644
        %v3646 = vpop.f32.mrf.mxu0
        %3647 = vmatprep.mubr.f32.mxu0 0.0
        %3648 = vmatmul.mubr.f32.gmra.mxu0 %v3524
        %v3649 = vpop.f32.mrf.mxu0
        %v3650 = vadd.f32 0.0, %v3649
        %v3651 = vpop.f32.mrf.mxu0
        %3652 = vmatprep.mubr.f32.mxu0 0.0
        %3653 = vmatmul.mubr.f32.gmra.mxu0 %v3527
        %v3654 = vpop.f32.mrf.mxu0
        %v3655 = vadd.f32 0.0, %v3654
        %v3656 = vpop.f32.mrf.mxu0
        %3657 = vmatprep.mubr.f32.mxu0 0.0
        %3658 = vmatmul.mubr.f32.gmra.mxu0 %v3530
        %v3659 = vpop.f32.mrf.mxu0
        %v3660 = vadd.f32 0.0, %v3659
        %v3661 = vpop.f32.mrf.mxu0
        %3662 = vmatprep.mubr.f32.mxu0 0.0
        %3663 = vmatmul.mubr.f32.gmra.mxu0 %v3533
        %v3664 = vpop.f32.mrf.mxu0
        %v3665 = vadd.f32 0.0, %v3664
        %v3666 = vpop.f32.mrf.mxu0
        %3667 = vmatprep.mubr.f32.mxu0 0.0
        %3668 = vmatmul.mubr.f32.gmra.mxu0 %v3536
        %v3669 = vpop.f32.mrf.mxu0
        %v3670 = vadd.f32 0.0, %v3669
        %v3671 = vpop.f32.mrf.mxu0
        %3672 = vdwg.mxu0
        %v3673 = vadd.f32 %v3463, %v3605
        %v3674 = vadd.f32 %v3464, %v3610
        %v3675 = vadd.f32 %v3465, %v3615
        %v3676 = vadd.f32 %v3466, %v3620
        %v3677 = vadd.f32 %v3467, %v3625
        %v3678 = vadd.f32 %v3468, %v3630
        %v3679 = vadd.f32 %v3469, %v3635
        %v3680 = vadd.f32 %v3470, %v3640
        %v3681 = vadd.f32 %v3471, %v3645
        %v3682 = vadd.f32 %v3472, %v3650
        %v3683 = vadd.f32 %v3473, %v3655
        %v3684 = vadd.f32 %v3474, %v3660
        %v3685 = vadd.f32 %v3475, %v3665
        %v3686 = vadd.f32 %v3476, %v3670
        %v3687 = vld [vmem:[#allocation2 + $0x11] sm:$0xff]
        %v3688 = vld [vmem:[#allocation2 + $0x19] sm:$0xff]
        %v3689 = vld [vmem:[#allocation2 + $0x21] sm:$0xff]
        %v3690 = vld [vmem:[#allocation2 + $0x29] sm:$0xff]
        %v3691 = vld [vmem:[#allocation2 + $0x31] sm:$0xff]
        %v3692 = vld [vmem:[#allocation2 + $0x39] sm:$0xff]
        %v3693 = vld [vmem:[#allocation2 + $0x41] sm:$0xff]
        %v3694 = vld [vmem:[#allocation2 + $0x49] sm:$0xff]
        %v3695 = vld [vmem:[#allocation2 + $0x51] sm:$0xff]
        %v3696 = vld [vmem:[#allocation2 + $0x59] sm:$0xff]
        %v3697 = vld [vmem:[#allocation2 + $0x61] sm:$0xff]
        %v3698 = vld [vmem:[#allocation2 + $0x69] sm:$0xff]
        %v3699 = vld [vmem:[#allocation2 + $0x71] sm:$0xff]
        %v3700 = vld [vmem:[#allocation2 + $0x79] sm:$0xff]
        %s3701 = scalar_lea.vmem %s3, 256
        %v3702 = vld [vmem:[%s3701] sm:$0xff]
        %v3703 = vld [vmem:[%s3701 + $0x8] sm:$0xff]
        %v3704 = vld [vmem:[%s3701 + $0x10] sm:$0xff]
        %v3705 = vld [vmem:[%s3701 + $0x18] sm:$0xff]
        %v3707 = vsel %vm330, %v3687, 0
        %v3710 = vsel %vm330, %v3688, 0
        %v3713 = vsel %vm330, %v3689, 0
        %v3716 = vsel %vm330, %v3690, 0
        %v3719 = vsel %vm330, %v3691, 0
        %v3722 = vsel %vm330, %v3692, 0
        %v3725 = vsel %vm330, %v3693, 0
        %v3728 = vsel %vm330, %v3694, 0
        %v3731 = vsel %vm330, %v3695, 0
        %v3734 = vsel %vm330, %v3696, 0
        %v3737 = vsel %vm330, %v3697, 0
        %v3740 = vsel %vm330, %v3698, 0
        %v3743 = vsel %vm330, %v3699, 0
        %v3746 = vsel %vm330, %v3700, 0
        %3748 = vmatprep.subr.mxu0 0.0
        %3749 = vmatpush1.msra.mxu0 0.0
        %3750 = vmatprep.subr.mxu0 0.0
        %3751 = vmatpush1.msra.mxu0 0.0
        %3752 = vmatprep.subr.mxu0 0.0
        %3753 = vmatpush1.msra.mxu0 0.0
        %3754 = vmatprep.subr.mxu0 0.0
        %3755 = vmatpush1.msra.mxu0 0.0
        %3756 = vmatprep.subr.mxu0 0.0
        %3757 = vmatpush1.msra.mxu0 0.0
        %3758 = vmatprep.subr.mxu0 0.0
        %3759 = vmatpush1.msra.mxu0 0.0
        %3760 = vmatprep.subr.mxu0 0.0
        %3761 = vmatpush1.msra.mxu0 0.0
        %3762 = vmatprep.subr.mxu0 0.0
        %3763 = vmatpush1.msra.mxu0 0.0
        %3764 = vmatprep.subr.mxu0 0.0
        %3765 = vmatpush1.msra.mxu0 0.0
        %3766 = vmatprep.subr.mxu0 0.0
        %3767 = vmatpush1.msra.mxu0 0.0
        %3768 = vmatprep.subr.mxu0 0.0
        %3769 = vmatpush1.msra.mxu0 0.0
        %3770 = vmatprep.subr.mxu0 0.0
        %3771 = vmatpush1.msra.mxu0 0.0
        %3772 = vmatprep.subr.mxu0 0.0
        %3773 = vmatpush1.msra.mxu0 %v3705
        %3774 = vmatprep.subr.mxu0 0.0
        %3775 = vmatpush1.msra.mxu0 %v3704
        %3776 = vmatprep.subr.mxu0 0.0
        %3777 = vmatpush1.msra.mxu0 %v3703
        %3778 = vmatprep.subr.mxu0 0.0
        %3779 = vmatpush1.msra.mxu0 %v3702
        %3780 = vmatprep.subr.mxu0 0.0
        %3781 = vmatpush2.msra.mxu0 0.0
        %3782 = vmatprep.subr.mxu0 0.0
        %3783 = vmatpush2.msra.mxu0 0.0
        %3784 = vmatprep.subr.mxu0 0.0
        %3785 = vmatpush2.msra.mxu0 0.0
        %3786 = vmatprep.subr.mxu0 0.0
        %3787 = vmatpush2.msra.mxu0 0.0
        %3788 = vmatprep.subr.mxu0 0.0
        %3789 = vmatpush2.msra.mxu0 0.0
        %3790 = vmatprep.subr.mxu0 0.0
        %3791 = vmatpush2.msra.mxu0 0.0
        %3792 = vmatprep.subr.mxu0 0.0
        %3793 = vmatpush2.msra.mxu0 0.0
        %3794 = vmatprep.subr.mxu0 0.0
        %3795 = vmatpush2.msra.mxu0 0.0
        %3796 = vmatprep.subr.mxu0 0.0
        %3797 = vmatpush2.msra.mxu0 0.0
        %3798 = vmatprep.subr.mxu0 0.0
        %3799 = vmatpush2.msra.mxu0 0.0
        %3800 = vmatprep.subr.mxu0 0.0
        %3801 = vmatpush2.msra.mxu0 0.0
        %3802 = vmatprep.subr.mxu0 0.0
        %3803 = vmatpush2.msra.mxu0 0.0
        %3804 = vmatprep.subr.mxu0 0.0
        %3805 = vmatpush2.msra.mxu0 0.0
        %3806 = vmatprep.subr.mxu0 0.0
        %3807 = vmatpush2.msra.mxu0 0.0
        %3808 = vmatprep.subr.mxu0 0.0
        %3809 = vmatpush2.msra.mxu0 0.0
        %3810 = vmatprep.subr.mxu0 0.0
        %3811 = vmatpush2.msra.mxu0 0.0
        %3812 = vmatprep.mubr.f32.mxu0 0.0
        %3813 = vmatmul.mubr.f32.gmra.mxu0 %v3707
        %v3814 = vpop.f32.mrf.mxu0
        %v3815 = vadd.f32 0.0, %v3814
        %v3816 = vpop.f32.mrf.mxu0
        %3817 = vmatprep.mubr.f32.mxu0 0.0
        %3818 = vmatmul.mubr.f32.gmra.mxu0 %v3710
        %v3819 = vpop.f32.mrf.mxu0
        %v3820 = vadd.f32 0.0, %v3819
        %v3821 = vpop.f32.mrf.mxu0
        %3822 = vmatprep.mubr.f32.mxu0 0.0
        %3823 = vmatmul.mubr.f32.gmra.mxu0 %v3713
        %v3824 = vpop.f32.mrf.mxu0
        %v3825 = vadd.f32 0.0, %v3824
        %v3826 = vpop.f32.mrf.mxu0
        %3827 = vmatprep.mubr.f32.mxu0 0.0
        %3828 = vmatmul.mubr.f32.gmra.mxu0 %v3716
        %v3829 = vpop.f32.mrf.mxu0
        %v3830 = vadd.f32 0.0, %v3829
        %v3831 = vpop.f32.mrf.mxu0
        %3832 = vmatprep.mubr.f32.mxu0 0.0
        %3833 = vmatmul.mubr.f32.gmra.mxu0 %v3719
        %v3834 = vpop.f32.mrf.mxu0
        %v3835 = vadd.f32 0.0, %v3834
        %v3836 = vpop.f32.mrf.mxu0
        %3837 = vmatprep.mubr.f32.mxu0 0.0
        %3838 = vmatmul.mubr.f32.gmra.mxu0 %v3722
        %v3839 = vpop.f32.mrf.mxu0
        %v3840 = vadd.f32 0.0, %v3839
        %v3841 = vpop.f32.mrf.mxu0
        %3842 = vmatprep.mubr.f32.mxu0 0.0
        %3843 = vmatmul.mubr.f32.gmra.mxu0 %v3725
        %v3844 = vpop.f32.mrf.mxu0
        %v3845 = vadd.f32 0.0, %v3844
        %v3846 = vpop.f32.mrf.mxu0
        %3847 = vmatprep.mubr.f32.mxu0 0.0
        %3848 = vmatmul.mubr.f32.gmra.mxu0 %v3728
        %v3849 = vpop.f32.mrf.mxu0
        %v3850 = vadd.f32 0.0, %v3849
        %v3851 = vpop.f32.mrf.mxu0
        %3852 = vmatprep.mubr.f32.mxu0 0.0
        %3853 = vmatmul.mubr.f32.gmra.mxu0 %v3731
        %v3854 = vpop.f32.mrf.mxu0
        %v3855 = vadd.f32 0.0, %v3854
        %v3856 = vpop.f32.mrf.mxu0
        %3857 = vmatprep.mubr.f32.mxu0 0.0
        %3858 = vmatmul.mubr.f32.gmra.mxu0 %v3734
        %v3859 = vpop.f32.mrf.mxu0
        %v3860 = vadd.f32 0.0, %v3859
        %v3861 = vpop.f32.mrf.mxu0
        %3862 = vmatprep.mubr.f32.mxu0 0.0
        %3863 = vmatmul.mubr.f32.gmra.mxu0 %v3737
        %v3864 = vpop.f32.mrf.mxu0
        %v3865 = vadd.f32 0.0, %v3864
        %v3866 = vpop.f32.mrf.mxu0
        %3867 = vmatprep.mubr.f32.mxu0 0.0
        %3868 = vmatmul.mubr.f32.gmra.mxu0 %v3740
        %v3869 = vpop.f32.mrf.mxu0
        %v3870 = vadd.f32 0.0, %v3869
        %v3871 = vpop.f32.mrf.mxu0
        %3872 = vmatprep.mubr.f32.mxu0 0.0
        %3873 = vmatmul.mubr.f32.gmra.mxu0 %v3743
        %v3874 = vpop.f32.mrf.mxu0
        %v3875 = vadd.f32 0.0, %v3874
        %v3876 = vpop.f32.mrf.mxu0
        %3877 = vmatprep.mubr.f32.mxu0 0.0
        %3878 = vmatmul.mubr.f32.gmra.mxu0 %v3746
        %v3879 = vpop.f32.mrf.mxu0
        %v3880 = vadd.f32 0.0, %v3879
        %v3881 = vpop.f32.mrf.mxu0
        %3882 = vdwg.mxu0
        %v3883 = vadd.f32 %v3673, %v3815
        %v3884 = vadd.f32 %v3674, %v3820
        %v3885 = vadd.f32 %v3675, %v3825
        %v3886 = vadd.f32 %v3676, %v3830
        %v3887 = vadd.f32 %v3677, %v3835
        %v3888 = vadd.f32 %v3678, %v3840
        %v3889 = vadd.f32 %v3679, %v3845
        %v3890 = vadd.f32 %v3680, %v3850
        %v3891 = vadd.f32 %v3681, %v3855
        %v3892 = vadd.f32 %v3682, %v3860
        %v3893 = vadd.f32 %v3683, %v3865
        %v3894 = vadd.f32 %v3684, %v3870
        %v3895 = vadd.f32 %v3685, %v3875
        %v3896 = vadd.f32 %v3686, %v3880
        %v3897 = vld [vmem:[%s4] sm:$0x1]
        %v3899 = vlaneseq
        %v3900 = vshrl.u32 %v3899, 7
        %v3901 = vsub.s32 0, %v3900
        %v3902 = vrot.slane %v3897, %v3901
        %v3904 = vadd.f32 %v3883, %v3902
        %v3905 = vadd.f32 %v3884, %v3902
        %v3906 = vadd.f32 %v3885, %v3902
        %v3907 = vadd.f32 %v3886, %v3902
        %v3908 = vadd.f32 %v3887, %v3902
        %v3909 = vadd.f32 %v3888, %v3902
        %v3910 = vadd.f32 %v3889, %v3902
        %v3911 = vadd.f32 %v3890, %v3902
        %v3912 = vadd.f32 %v3891, %v3902
        %v3913 = vadd.f32 %v3892, %v3902
        %v3914 = vadd.f32 %v3893, %v3902
        %v3915 = vadd.f32 %v3894, %v3902
        %v3916 = vadd.f32 %v3895, %v3902
        %v3917 = vadd.f32 %v3896, %v3902
        %v3918 = vmax.f32 %v3904, 0.0
        %v3919 = vmax.f32 %v3905, 0.0
        %v3920 = vmax.f32 %v3906, 0.0
        %v3921 = vmax.f32 %v3907, 0.0
        %v3922 = vmax.f32 %v3908, 0.0
        %v3923 = vmax.f32 %v3909, 0.0
        %v3924 = vmax.f32 %v3910, 0.0
        %v3925 = vmax.f32 %v3911, 0.0
        %v3926 = vmax.f32 %v3912, 0.0
        %v3927 = vmax.f32 %v3913, 0.0
        %v3928 = vmax.f32 %v3914, 0.0
        %v3929 = vmax.f32 %v3915, 0.0
        %v3930 = vmax.f32 %v3916, 0.0
        %v3931 = vmax.f32 %v3917, 0.0
        %3932 = vmatprep.subr.mxu0 0.0
        %3933 = vmatpush1.msra.mxu0 0.0
        %3934 = vmatprep.subr.mxu0 0.0
        %3935 = vmatpush1.msra.mxu0 0.0
        %3936 = vmatprep.subr.mxu0 0.0
        %3937 = vmatpush1.msra.mxu0 0.0
        %3938 = vmatprep.subr.mxu0 0.0
        %3939 = vmatpush1.msra.mxu0 0.0
        %3940 = vmatprep.subr.mxu0 0.0
        %3941 = vmatpush1.msra.mxu0 0.0
        %3942 = vmatprep.subr.mxu0 0.0
        %3943 = vmatpush1.msra.mxu0 0.0
        %3944 = vmatprep.subr.mxu0 0.0
        %3945 = vmatpush1.msra.mxu0 0.0
        %3946 = vmatprep.subr.mxu0 0.0
        %3947 = vmatpush1.msra.mxu0 0.0
        %3948 = vmatprep.subr.mxu0 0.0
        %3949 = vmatpush1.msra.mxu0 0.0
        %3950 = vmatprep.subr.mxu0 0.0
        %3951 = vmatpush1.msra.mxu0 0.0
        %3952 = vmatprep.subr.mxu0 0.0
        %3953 = vmatpush1.msra.mxu0 0.0
        %3954 = vmatprep.subr.mxu0 0.0
        %3955 = vmatpush1.msra.mxu0 0.0
        %3956 = vmatprep.subr.mxu0 0.0
        %3957 = vmatpush1.msra.mxu0 %v2072
        %3958 = vmatprep.subr.mxu0 0.0
        %3959 = vmatpush1.msra.mxu0 %v2071
        %3960 = vmatprep.subr.mxu0 0.0
        %3961 = vmatpush1.msra.mxu0 %v2070
        %3962 = vmatprep.subr.mxu0 0.0
        %3963 = vmatpush1.msra.mxu0 %v2069
        %3964 = vmatprep.subr.mxu0 0.0
        %3965 = vmatpush2.msra.mxu0 0.0
        %3966 = vmatprep.subr.mxu0 0.0
        %3967 = vmatpush2.msra.mxu0 0.0
        %3968 = vmatprep.subr.mxu0 0.0
        %3969 = vmatpush2.msra.mxu0 0.0
        %3970 = vmatprep.subr.mxu0 0.0
        %3971 = vmatpush2.msra.mxu0 0.0
        %3972 = vmatprep.subr.mxu0 0.0
        %3973 = vmatpush2.msra.mxu0 0.0
        %3974 = vmatprep.subr.mxu0 0.0
        %3975 = vmatpush2.msra.mxu0 0.0
        %3976 = vmatprep.subr.mxu0 0.0
        %3977 = vmatpush2.msra.mxu0 0.0
        %3978 = vmatprep.subr.mxu0 0.0
        %3979 = vmatpush2.msra.mxu0 0.0
        %3980 = vmatprep.subr.mxu0 0.0
        %3981 = vmatpush2.msra.mxu0 0.0
        %3982 = vmatprep.subr.mxu0 0.0
        %3983 = vmatpush2.msra.mxu0 0.0
        %3984 = vmatprep.subr.mxu0 0.0
        %3985 = vmatpush2.msra.mxu0 0.0
        %3986 = vmatprep.subr.mxu0 0.0
        %3987 = vmatpush2.msra.mxu0 0.0
        %3988 = vmatprep.subr.mxu0 0.0
        %3989 = vmatpush2.msra.mxu0 0.0
        %3990 = vmatprep.subr.mxu0 0.0
        %3991 = vmatpush2.msra.mxu0 0.0
        %3992 = vmatprep.subr.mxu0 0.0
        %3993 = vmatpush2.msra.mxu0 0.0
        %3994 = vmatprep.subr.mxu0 0.0
        %3995 = vmatpush2.msra.mxu0 0.0
        %3996 = vmatprep.mubr.f32.mxu0 0.0
        %3997 = vmatmul.mubr.f32.gmra.mxu0 %v2447
        %v3998 = vpop.f32.mrf.mxu0
        %v3999 = vadd.f32 0.0, %v3998
        %v4000 = vpop.f32.mrf.mxu0
        %4001 = vmatprep.mubr.f32.mxu0 0.0
        %4002 = vmatmul.mubr.f32.gmra.mxu0 %v2450
        %v4003 = vpop.f32.mrf.mxu0
        %v4004 = vadd.f32 0.0, %v4003
        %v4005 = vpop.f32.mrf.mxu0
        %4006 = vmatprep.mubr.f32.mxu0 0.0
        %4007 = vmatmul.mubr.f32.gmra.mxu0 %v2453
        %v4008 = vpop.f32.mrf.mxu0
        %v4009 = vadd.f32 0.0, %v4008
        %v4010 = vpop.f32.mrf.mxu0
        %4011 = vmatprep.mubr.f32.mxu0 0.0
        %4012 = vmatmul.mubr.f32.gmra.mxu0 %v2456
        %v4013 = vpop.f32.mrf.mxu0
        %v4014 = vadd.f32 0.0, %v4013
        %v4015 = vpop.f32.mrf.mxu0
        %4016 = vmatprep.mubr.f32.mxu0 0.0
        %4017 = vmatmul.mubr.f32.gmra.mxu0 %v2459
        %v4018 = vpop.f32.mrf.mxu0
        %v4019 = vadd.f32 0.0, %v4018
        %v4020 = vpop.f32.mrf.mxu0
        %4021 = vmatprep.mubr.f32.mxu0 0.0
        %4022 = vmatmul.mubr.f32.gmra.mxu0 %v2462
        %v4023 = vpop.f32.mrf.mxu0
        %v4024 = vadd.f32 0.0, %v4023
        %v4025 = vpop.f32.mrf.mxu0
        %4026 = vmatprep.mubr.f32.mxu0 0.0
        %4027 = vmatmul.mubr.f32.gmra.mxu0 %v2465
        %v4028 = vpop.f32.mrf.mxu0
        %v4029 = vadd.f32 0.0, %v4028
        %v4030 = vpop.f32.mrf.mxu0
        %4031 = vmatprep.mubr.f32.mxu0 0.0
        %4032 = vmatmul.mubr.f32.gmra.mxu0 %v2468
        %v4033 = vpop.f32.mrf.mxu0
        %v4034 = vadd.f32 0.0, %v4033
        %v4035 = vpop.f32.mrf.mxu0
        %4036 = vmatprep.mubr.f32.mxu0 0.0
        %4037 = vmatmul.mubr.f32.gmra.mxu0 %v2471
        %v4038 = vpop.f32.mrf.mxu0
        %v4039 = vadd.f32 0.0, %v4038
        %v4040 = vpop.f32.mrf.mxu0
        %4041 = vmatprep.mubr.f32.mxu0 0.0
        %4042 = vmatmul.mubr.f32.gmra.mxu0 %v2474
        %v4043 = vpop.f32.mrf.mxu0
        %v4044 = vadd.f32 0.0, %v4043
        %v4045 = vpop.f32.mrf.mxu0
        %4046 = vmatprep.mubr.f32.mxu0 0.0
        %4047 = vmatmul.mubr.f32.gmra.mxu0 %v2477
        %v4048 = vpop.f32.mrf.mxu0
        %v4049 = vadd.f32 0.0, %v4048
        %v4050 = vpop.f32.mrf.mxu0
        %4051 = vmatprep.mubr.f32.mxu0 0.0
        %4052 = vmatmul.mubr.f32.gmra.mxu0 %v2480
        %v4053 = vpop.f32.mrf.mxu0
        %v4054 = vadd.f32 0.0, %v4053
        %v4055 = vpop.f32.mrf.mxu0
        %4056 = vmatprep.mubr.f32.mxu0 0.0
        %4057 = vmatmul.mubr.f32.gmra.mxu0 %v2483
        %v4058 = vpop.f32.mrf.mxu0
        %v4059 = vadd.f32 0.0, %v4058
        %v4060 = vpop.f32.mrf.mxu0
        %4061 = vmatprep.mubr.f32.mxu0 0.0
        %4062 = vmatmul.mubr.f32.gmra.mxu0 %v2486
        %v4063 = vpop.f32.mrf.mxu0
        %v4064 = vadd.f32 0.0, %v4063
        %v4065 = vpop.f32.mrf.mxu0
        %4066 = vdwg.mxu0
        %4067 = vmatprep.subr.mxu0 0.0
        %4068 = vmatpush1.msra.mxu0 0.0
        %4069 = vmatprep.subr.mxu0 0.0
        %4070 = vmatpush1.msra.mxu0 0.0
        %4071 = vmatprep.subr.mxu0 0.0
        %4072 = vmatpush1.msra.mxu0 0.0
        %4073 = vmatprep.subr.mxu0 0.0
        %4074 = vmatpush1.msra.mxu0 0.0
        %4075 = vmatprep.subr.mxu0 0.0
        %4076 = vmatpush1.msra.mxu0 0.0
        %4077 = vmatprep.subr.mxu0 0.0
        %4078 = vmatpush1.msra.mxu0 0.0
        %4079 = vmatprep.subr.mxu0 0.0
        %4080 = vmatpush1.msra.mxu0 0.0
        %4081 = vmatprep.subr.mxu0 0.0
        %4082 = vmatpush1.msra.mxu0 0.0
        %4083 = vmatprep.subr.mxu0 0.0
        %4084 = vmatpush1.msra.mxu0 0.0
        %4085 = vmatprep.subr.mxu0 0.0
        %4086 = vmatpush1.msra.mxu0 0.0
        %4087 = vmatprep.subr.mxu0 0.0
        %4088 = vmatpush1.msra.mxu0 0.0
        %4089 = vmatprep.subr.mxu0 0.0
        %4090 = vmatpush1.msra.mxu0 0.0
        %4091 = vmatprep.subr.mxu0 0.0
        %4092 = vmatpush1.msra.mxu0 %v2053
        %4093 = vmatprep.subr.mxu0 0.0
        %4094 = vmatpush1.msra.mxu0 %v2052
        %4095 = vmatprep.subr.mxu0 0.0
        %4096 = vmatpush1.msra.mxu0 %v2051
        %4097 = vmatprep.subr.mxu0 0.0
        %4098 = vmatpush1.msra.mxu0 %v2050
        %4099 = vmatprep.subr.mxu0 0.0
        %4100 = vmatpush2.msra.mxu0 0.0
        %4101 = vmatprep.subr.mxu0 0.0
        %4102 = vmatpush2.msra.mxu0 0.0
        %4103 = vmatprep.subr.mxu0 0.0
        %4104 = vmatpush2.msra.mxu0 0.0
        %4105 = vmatprep.subr.mxu0 0.0
        %4106 = vmatpush2.msra.mxu0 0.0
        %4107 = vmatprep.subr.mxu0 0.0
        %4108 = vmatpush2.msra.mxu0 0.0
        %4109 = vmatprep.subr.mxu0 0.0
        %4110 = vmatpush2.msra.mxu0 0.0
        %4111 = vmatprep.subr.mxu0 0.0
        %4112 = vmatpush2.msra.mxu0 0.0
        %4113 = vmatprep.subr.mxu0 0.0
        %4114 = vmatpush2.msra.mxu0 0.0
        %4115 = vmatprep.subr.mxu0 0.0
        %4116 = vmatpush2.msra.mxu0 0.0
        %4117 = vmatprep.subr.mxu0 0.0
        %4118 = vmatpush2.msra.mxu0 0.0
        %4119 = vmatprep.subr.mxu0 0.0
        %4120 = vmatpush2.msra.mxu0 0.0
        %4121 = vmatprep.subr.mxu0 0.0
        %4122 = vmatpush2.msra.mxu0 0.0
        %4123 = vmatprep.subr.mxu0 0.0
        %4124 = vmatpush2.msra.mxu0 0.0
        %4125 = vmatprep.subr.mxu0 0.0
        %4126 = vmatpush2.msra.mxu0 0.0
        %4127 = vmatprep.subr.mxu0 0.0
        %4128 = vmatpush2.msra.mxu0 0.0
        %4129 = vmatprep.subr.mxu0 0.0
        %4130 = vmatpush2.msra.mxu0 0.0
        %4131 = vmatprep.mubr.f32.mxu0 0.0
        %4132 = vmatmul.mubr.f32.gmra.mxu0 %v2074
        %v4133 = vpop.f32.mrf.mxu0
        %v4134 = vadd.f32 %v3999, %v4133
        %v4135 = vpop.f32.mrf.mxu0
        %4136 = vmatprep.mubr.f32.mxu0 0.0
        %4137 = vmatmul.mubr.f32.gmra.mxu0 %v2077
        %v4138 = vpop.f32.mrf.mxu0
        %v4139 = vadd.f32 %v4004, %v4138
        %v4140 = vpop.f32.mrf.mxu0
        %4141 = vmatprep.mubr.f32.mxu0 0.0
        %4142 = vmatmul.mubr.f32.gmra.mxu0 %v2080
        %v4143 = vpop.f32.mrf.mxu0
        %v4144 = vadd.f32 %v4009, %v4143
        %v4145 = vpop.f32.mrf.mxu0
        %4146 = vmatprep.mubr.f32.mxu0 0.0
        %4147 = vmatmul.mubr.f32.gmra.mxu0 %v2083
        %v4148 = vpop.f32.mrf.mxu0
        %v4149 = vadd.f32 %v4014, %v4148
        %v4150 = vpop.f32.mrf.mxu0
        %4151 = vmatprep.mubr.f32.mxu0 0.0
        %4152 = vmatmul.mubr.f32.gmra.mxu0 %v2086
        %v4153 = vpop.f32.mrf.mxu0
        %v4154 = vadd.f32 %v4019, %v4153
        %v4155 = vpop.f32.mrf.mxu0
        %4156 = vmatprep.mubr.f32.mxu0 0.0
        %4157 = vmatmul.mubr.f32.gmra.mxu0 %v2089
        %v4158 = vpop.f32.mrf.mxu0
        %v4159 = vadd.f32 %v4024, %v4158
        %v4160 = vpop.f32.mrf.mxu0
        %4161 = vmatprep.mubr.f32.mxu0 0.0
        %4162 = vmatmul.mubr.f32.gmra.mxu0 %v2092
        %v4163 = vpop.f32.mrf.mxu0
        %v4164 = vadd.f32 %v4029, %v4163
        %v4165 = vpop.f32.mrf.mxu0
        %4166 = vmatprep.mubr.f32.mxu0 0.0
        %4167 = vmatmul.mubr.f32.gmra.mxu0 %v2095
        %v4168 = vpop.f32.mrf.mxu0
        %v4169 = vadd.f32 %v4034, %v4168
        %v4170 = vpop.f32.mrf.mxu0
        %4171 = vmatprep.mubr.f32.mxu0 0.0
        %4172 = vmatmul.mubr.f32.gmra.mxu0 %v2098
        %v4173 = vpop.f32.mrf.mxu0
        %v4174 = vadd.f32 %v4039, %v4173
        %v4175 = vpop.f32.mrf.mxu0
        %4176 = vmatprep.mubr.f32.mxu0 0.0
        %4177 = vmatmul.mubr.f32.gmra.mxu0 %v2101
        %v4178 = vpop.f32.mrf.mxu0
        %v4179 = vadd.f32 %v4044, %v4178
        %v4180 = vpop.f32.mrf.mxu0
        %4181 = vmatprep.mubr.f32.mxu0 0.0
        %4182 = vmatmul.mubr.f32.gmra.mxu0 %v2104
        %v4183 = vpop.f32.mrf.mxu0
        %v4184 = vadd.f32 %v4049, %v4183
        %v4185 = vpop.f32.mrf.mxu0
        %4186 = vmatprep.mubr.f32.mxu0 0.0
        %4187 = vmatmul.mubr.f32.gmra.mxu0 %v2107
        %v4188 = vpop.f32.mrf.mxu0
        %v4189 = vadd.f32 %v4054, %v4188
        %v4190 = vpop.f32.mrf.mxu0
        %4191 = vmatprep.mubr.f32.mxu0 0.0
        %4192 = vmatmul.mubr.f32.gmra.mxu0 %v2110
        %v4193 = vpop.f32.mrf.mxu0
        %v4194 = vadd.f32 %v4059, %v4193
        %v4195 = vpop.f32.mrf.mxu0
        %4196 = vmatprep.mubr.f32.mxu0 0.0
        %4197 = vmatmul.mubr.f32.gmra.mxu0 %v2113
        %v4198 = vpop.f32.mrf.mxu0
        %v4199 = vadd.f32 %v4064, %v4198
        %v4200 = vpop.f32.mrf.mxu0
        %4201 = vdwg.mxu0
        %v4202 = vld [vmem:[#allocation3 + $0x1] sm:$0xff]
        %v4203 = vld [vmem:[#allocation3 + $0x9] sm:$0xff]
        %v4204 = vld [vmem:[#allocation3 + $0x11] sm:$0xff]
        %v4205 = vld [vmem:[#allocation3 + $0x19] sm:$0xff]
        %v4206 = vld [vmem:[#allocation3 + $0x21] sm:$0xff]
        %v4207 = vld [vmem:[#allocation3 + $0x29] sm:$0xff]
        %v4208 = vld [vmem:[#allocation3 + $0x31] sm:$0xff]
        %v4209 = vld [vmem:[#allocation3 + $0x39] sm:$0xff]
        %v4210 = vld [vmem:[#allocation3 + $0x41] sm:$0xff]
        %v4211 = vld [vmem:[#allocation3 + $0x49] sm:$0xff]
        %v4212 = vld [vmem:[#allocation3 + $0x51] sm:$0xff]
        %v4213 = vld [vmem:[#allocation3 + $0x59] sm:$0xff]
        %v4214 = vld [vmem:[#allocation3 + $0x61] sm:$0xff]
        %v4215 = vld [vmem:[#allocation3 + $0x69] sm:$0xff]
        %v4217 = vsel %vm330, %v4202, 0
        %v4220 = vsel %vm330, %v4203, 0
        %v4223 = vsel %vm330, %v4204, 0
        %v4226 = vsel %vm330, %v4205, 0
        %v4229 = vsel %vm330, %v4206, 0
        %v4232 = vsel %vm330, %v4207, 0
        %v4235 = vsel %vm330, %v4208, 0
        %v4238 = vsel %vm330, %v4209, 0
        %v4241 = vsel %vm330, %v4210, 0
        %v4244 = vsel %vm330, %v4211, 0
        %v4247 = vsel %vm330, %v4212, 0
        %v4250 = vsel %vm330, %v4213, 0
        %v4253 = vsel %vm330, %v4214, 0
        %v4256 = vsel %vm330, %v4215, 0
        %4258 = vmatprep.subr.mxu0 0.0
        %4259 = vmatpush1.msra.mxu0 0.0
        %4260 = vmatprep.subr.mxu0 0.0
        %4261 = vmatpush1.msra.mxu0 0.0
        %4262 = vmatprep.subr.mxu0 0.0
        %4263 = vmatpush1.msra.mxu0 0.0
        %4264 = vmatprep.subr.mxu0 0.0
        %4265 = vmatpush1.msra.mxu0 0.0
        %4266 = vmatprep.subr.mxu0 0.0
        %4267 = vmatpush1.msra.mxu0 0.0
        %4268 = vmatprep.subr.mxu0 0.0
        %4269 = vmatpush1.msra.mxu0 0.0
        %4270 = vmatprep.subr.mxu0 0.0
        %4271 = vmatpush1.msra.mxu0 0.0
        %4272 = vmatprep.subr.mxu0 0.0
        %4273 = vmatpush1.msra.mxu0 0.0
        %4274 = vmatprep.subr.mxu0 0.0
        %4275 = vmatpush1.msra.mxu0 0.0
        %4276 = vmatprep.subr.mxu0 0.0
        %4277 = vmatpush1.msra.mxu0 0.0
        %4278 = vmatprep.subr.mxu0 0.0
        %4279 = vmatpush1.msra.mxu0 0.0
        %4280 = vmatprep.subr.mxu0 0.0
        %4281 = vmatpush1.msra.mxu0 0.0
        %4282 = vmatprep.subr.mxu0 0.0
        %4283 = vmatpush1.msra.mxu0 %v2445
        %4284 = vmatprep.subr.mxu0 0.0
        %4285 = vmatpush1.msra.mxu0 %v2444
        %4286 = vmatprep.subr.mxu0 0.0
        %4287 = vmatpush1.msra.mxu0 %v2443
        %4288 = vmatprep.subr.mxu0 0.0
        %4289 = vmatpush1.msra.mxu0 %v2442
        %4290 = vmatprep.subr.mxu0 0.0
        %4291 = vmatpush2.msra.mxu0 0.0
        %4292 = vmatprep.subr.mxu0 0.0
        %4293 = vmatpush2.msra.mxu0 0.0
        %4294 = vmatprep.subr.mxu0 0.0
        %4295 = vmatpush2.msra.mxu0 0.0
        %4296 = vmatprep.subr.mxu0 0.0
        %4297 = vmatpush2.msra.mxu0 0.0
        %4298 = vmatprep.subr.mxu0 0.0
        %4299 = vmatpush2.msra.mxu0 0.0
        %4300 = vmatprep.subr.mxu0 0.0
        %4301 = vmatpush2.msra.mxu0 0.0
        %4302 = vmatprep.subr.mxu0 0.0
        %4303 = vmatpush2.msra.mxu0 0.0
        %4304 = vmatprep.subr.mxu0 0.0
        %4305 = vmatpush2.msra.mxu0 0.0
        %4306 = vmatprep.subr.mxu0 0.0
        %4307 = vmatpush2.msra.mxu0 0.0
        %4308 = vmatprep.subr.mxu0 0.0
        %4309 = vmatpush2.msra.mxu0 0.0
        %4310 = vmatprep.subr.mxu0 0.0
        %4311 = vmatpush2.msra.mxu0 0.0
        %4312 = vmatprep.subr.mxu0 0.0
        %4313 = vmatpush2.msra.mxu0 0.0
        %4314 = vmatprep.subr.mxu0 0.0
        %4315 = vmatpush2.msra.mxu0 0.0
        %4316 = vmatprep.subr.mxu0 0.0
        %4317 = vmatpush2.msra.mxu0 0.0
        %4318 = vmatprep.subr.mxu0 0.0
        %4319 = vmatpush2.msra.mxu0 0.0
        %4320 = vmatprep.subr.mxu0 0.0
        %4321 = vmatpush2.msra.mxu0 0.0
        %4322 = vmatprep.mubr.f32.mxu0 0.0
        %4323 = vmatmul.mubr.f32.gmra.mxu0 %v4217
        %v4324 = vpop.f32.mrf.mxu0
        %v4325 = vadd.f32 0.0, %v4324
        %v4326 = vpop.f32.mrf.mxu0
        %4327 = vmatprep.mubr.f32.mxu0 0.0
        %4328 = vmatmul.mubr.f32.gmra.mxu0 %v4220
        %v4329 = vpop.f32.mrf.mxu0
        %v4330 = vadd.f32 0.0, %v4329
        %v4331 = vpop.f32.mrf.mxu0
        %4332 = vmatprep.mubr.f32.mxu0 0.0
        %4333 = vmatmul.mubr.f32.gmra.mxu0 %v4223
        %v4334 = vpop.f32.mrf.mxu0
        %v4335 = vadd.f32 0.0, %v4334
        %v4336 = vpop.f32.mrf.mxu0
        %4337 = vmatprep.mubr.f32.mxu0 0.0
        %4338 = vmatmul.mubr.f32.gmra.mxu0 %v4226
        %v4339 = vpop.f32.mrf.mxu0
        %v4340 = vadd.f32 0.0, %v4339
        %v4341 = vpop.f32.mrf.mxu0
        %4342 = vmatprep.mubr.f32.mxu0 0.0
        %4343 = vmatmul.mubr.f32.gmra.mxu0 %v4229
        %v4344 = vpop.f32.mrf.mxu0
        %v4345 = vadd.f32 0.0, %v4344
        %v4346 = vpop.f32.mrf.mxu0
        %4347 = vmatprep.mubr.f32.mxu0 0.0
        %4348 = vmatmul.mubr.f32.gmra.mxu0 %v4232
        %v4349 = vpop.f32.mrf.mxu0
        %v4350 = vadd.f32 0.0, %v4349
        %v4351 = vpop.f32.mrf.mxu0
        %4352 = vmatprep.mubr.f32.mxu0 0.0
        %4353 = vmatmul.mubr.f32.gmra.mxu0 %v4235
        %v4354 = vpop.f32.mrf.mxu0
        %v4355 = vadd.f32 0.0, %v4354
        %v4356 = vpop.f32.mrf.mxu0
        %4357 = vmatprep.mubr.f32.mxu0 0.0
        %4358 = vmatmul.mubr.f32.gmra.mxu0 %v4238
        %v4359 = vpop.f32.mrf.mxu0
        %v4360 = vadd.f32 0.0, %v4359
        %v4361 = vpop.f32.mrf.mxu0
        %4362 = vmatprep.mubr.f32.mxu0 0.0
        %4363 = vmatmul.mubr.f32.gmra.mxu0 %v4241
        %v4364 = vpop.f32.mrf.mxu0
        %v4365 = vadd.f32 0.0, %v4364
        %v4366 = vpop.f32.mrf.mxu0
        %4367 = vmatprep.mubr.f32.mxu0 0.0
        %4368 = vmatmul.mubr.f32.gmra.mxu0 %v4244
        %v4369 = vpop.f32.mrf.mxu0
        %v4370 = vadd.f32 0.0, %v4369
        %v4371 = vpop.f32.mrf.mxu0
        %4372 = vmatprep.mubr.f32.mxu0 0.0
        %4373 = vmatmul.mubr.f32.gmra.mxu0 %v4247
        %v4374 = vpop.f32.mrf.mxu0
        %v4375 = vadd.f32 0.0, %v4374
        %v4376 = vpop.f32.mrf.mxu0
        %4377 = vmatprep.mubr.f32.mxu0 0.0
        %4378 = vmatmul.mubr.f32.gmra.mxu0 %v4250
        %v4379 = vpop.f32.mrf.mxu0
        %v4380 = vadd.f32 0.0, %v4379
        %v4381 = vpop.f32.mrf.mxu0
        %4382 = vmatprep.mubr.f32.mxu0 0.0
        %4383 = vmatmul.mubr.f32.gmra.mxu0 %v4253
        %v4384 = vpop.f32.mrf.mxu0
        %v4385 = vadd.f32 0.0, %v4384
        %v4386 = vpop.f32.mrf.mxu0
        %4387 = vmatprep.mubr.f32.mxu0 0.0
        %4388 = vmatmul.mubr.f32.gmra.mxu0 %v4256
        %v4389 = vpop.f32.mrf.mxu0
        %v4390 = vadd.f32 0.0, %v4389
        %v4391 = vpop.f32.mrf.mxu0
        %4392 = vdwg.mxu0
        %v4393 = vadd.f32 %v4134, %v4325
        %v4394 = vadd.f32 %v4139, %v4330
        %v4395 = vadd.f32 %v4144, %v4335
        %v4396 = vadd.f32 %v4149, %v4340
        %v4397 = vadd.f32 %v4154, %v4345
        %v4398 = vadd.f32 %v4159, %v4350
        %v4399 = vadd.f32 %v4164, %v4355
        %v4400 = vadd.f32 %v4169, %v4360
        %v4401 = vadd.f32 %v4174, %v4365
        %v4402 = vadd.f32 %v4179, %v4370
        %v4403 = vadd.f32 %v4184, %v4375
        %v4404 = vadd.f32 %v4189, %v4380
        %v4405 = vadd.f32 %v4194, %v4385
        %v4406 = vadd.f32 %v4199, %v4390
        %4407 = vmatprep.subr.mxu0 0.0
        %4408 = vmatpush1.msra.mxu0 0.0
        %4409 = vmatprep.subr.mxu0 0.0
        %4410 = vmatpush1.msra.mxu0 0.0
        %4411 = vmatprep.subr.mxu0 0.0
        %4412 = vmatpush1.msra.mxu0 0.0
        %4413 = vmatprep.subr.mxu0 0.0
        %4414 = vmatpush1.msra.mxu0 0.0
        %4415 = vmatprep.subr.mxu0 0.0
        %4416 = vmatpush1.msra.mxu0 0.0
        %4417 = vmatprep.subr.mxu0 0.0
        %4418 = vmatpush1.msra.mxu0 0.0
        %4419 = vmatprep.subr.mxu0 0.0
        %4420 = vmatpush1.msra.mxu0 0.0
        %4421 = vmatprep.subr.mxu0 0.0
        %4422 = vmatpush1.msra.mxu0 0.0
        %4423 = vmatprep.subr.mxu0 0.0
        %4424 = vmatpush1.msra.mxu0 0.0
        %4425 = vmatprep.subr.mxu0 0.0
        %4426 = vmatpush1.msra.mxu0 0.0
        %4427 = vmatprep.subr.mxu0 0.0
        %4428 = vmatpush1.msra.mxu0 0.0
        %4429 = vmatprep.subr.mxu0 0.0
        %4430 = vmatpush1.msra.mxu0 0.0
        %4431 = vmatprep.subr.mxu0 0.0
        %4432 = vmatpush1.msra.mxu0 %v2655
        %4433 = vmatprep.subr.mxu0 0.0
        %4434 = vmatpush1.msra.mxu0 %v2654
        %4435 = vmatprep.subr.mxu0 0.0
        %4436 = vmatpush1.msra.mxu0 %v2653
        %4437 = vmatprep.subr.mxu0 0.0
        %4438 = vmatpush1.msra.mxu0 %v2652
        %4439 = vmatprep.subr.mxu0 0.0
        %4440 = vmatpush2.msra.mxu0 0.0
        %4441 = vmatprep.subr.mxu0 0.0
        %4442 = vmatpush2.msra.mxu0 0.0
        %4443 = vmatprep.subr.mxu0 0.0
        %4444 = vmatpush2.msra.mxu0 0.0
        %4445 = vmatprep.subr.mxu0 0.0
        %4446 = vmatpush2.msra.mxu0 0.0
        %4447 = vmatprep.subr.mxu0 0.0
        %4448 = vmatpush2.msra.mxu0 0.0
        %4449 = vmatprep.subr.mxu0 0.0
        %4450 = vmatpush2.msra.mxu0 0.0
        %4451 = vmatprep.subr.mxu0 0.0
        %4452 = vmatpush2.msra.mxu0 0.0
        %4453 = vmatprep.subr.mxu0 0.0
        %4454 = vmatpush2.msra.mxu0 0.0
        %4455 = vmatprep.subr.mxu0 0.0
        %4456 = vmatpush2.msra.mxu0 0.0
        %4457 = vmatprep.subr.mxu0 0.0
        %4458 = vmatpush2.msra.mxu0 0.0
        %4459 = vmatprep.subr.mxu0 0.0
        %4460 = vmatpush2.msra.mxu0 0.0
        %4461 = vmatprep.subr.mxu0 0.0
        %4462 = vmatpush2.msra.mxu0 0.0
        %4463 = vmatprep.subr.mxu0 0.0
        %4464 = vmatpush2.msra.mxu0 0.0
        %4465 = vmatprep.subr.mxu0 0.0
        %4466 = vmatpush2.msra.mxu0 0.0
        %4467 = vmatprep.subr.mxu0 0.0
        %4468 = vmatpush2.msra.mxu0 0.0
        %4469 = vmatprep.subr.mxu0 0.0
        %4470 = vmatpush2.msra.mxu0 0.0
        %4471 = vmatprep.mubr.f32.mxu0 0.0
        %4472 = vmatmul.mubr.f32.gmra.mxu0 %v2867
        %v4473 = vpop.f32.mrf.mxu0
        %v4474 = vadd.f32 0.0, %v4473
        %v4475 = vpop.f32.mrf.mxu0
        %4476 = vmatprep.mubr.f32.mxu0 0.0
        %4477 = vmatmul.mubr.f32.gmra.mxu0 %v2870
        %v4478 = vpop.f32.mrf.mxu0
        %v4479 = vadd.f32 0.0, %v4478
        %v4480 = vpop.f32.mrf.mxu0
        %4481 = vmatprep.mubr.f32.mxu0 0.0
        %4482 = vmatmul.mubr.f32.gmra.mxu0 %v2873
        %v4483 = vpop.f32.mrf.mxu0
        %v4484 = vadd.f32 0.0, %v4483
        %v4485 = vpop.f32.mrf.mxu0
        %4486 = vmatprep.mubr.f32.mxu0 0.0
        %4487 = vmatmul.mubr.f32.gmra.mxu0 %v2876
        %v4488 = vpop.f32.mrf.mxu0
        %v4489 = vadd.f32 0.0, %v4488
        %v4490 = vpop.f32.mrf.mxu0
        %4491 = vmatprep.mubr.f32.mxu0 0.0
        %4492 = vmatmul.mubr.f32.gmra.mxu0 %v2879
        %v4493 = vpop.f32.mrf.mxu0
        %v4494 = vadd.f32 0.0, %v4493
        %v4495 = vpop.f32.mrf.mxu0
        %4496 = vmatprep.mubr.f32.mxu0 0.0
        %4497 = vmatmul.mubr.f32.gmra.mxu0 %v2882
        %v4498 = vpop.f32.mrf.mxu0
        %v4499 = vadd.f32 0.0, %v4498
        %v4500 = vpop.f32.mrf.mxu0
        %4501 = vmatprep.mubr.f32.mxu0 0.0
        %4502 = vmatmul.mubr.f32.gmra.mxu0 %v2885
        %v4503 = vpop.f32.mrf.mxu0
        %v4504 = vadd.f32 0.0, %v4503
        %v4505 = vpop.f32.mrf.mxu0
        %4506 = vmatprep.mubr.f32.mxu0 0.0
        %4507 = vmatmul.mubr.f32.gmra.mxu0 %v2888
        %v4508 = vpop.f32.mrf.mxu0
        %v4509 = vadd.f32 0.0, %v4508
        %v4510 = vpop.f32.mrf.mxu0
        %4511 = vmatprep.mubr.f32.mxu0 0.0
        %4512 = vmatmul.mubr.f32.gmra.mxu0 %v2891
        %v4513 = vpop.f32.mrf.mxu0
        %v4514 = vadd.f32 0.0, %v4513
        %v4515 = vpop.f32.mrf.mxu0
        %4516 = vmatprep.mubr.f32.mxu0 0.0
        %4517 = vmatmul.mubr.f32.gmra.mxu0 %v2894
        %v4518 = vpop.f32.mrf.mxu0
        %v4519 = vadd.f32 0.0, %v4518
        %v4520 = vpop.f32.mrf.mxu0
        %4521 = vmatprep.mubr.f32.mxu0 0.0
        %4522 = vmatmul.mubr.f32.gmra.mxu0 %v2897
        %v4523 = vpop.f32.mrf.mxu0
        %v4524 = vadd.f32 0.0, %v4523
        %v4525 = vpop.f32.mrf.mxu0
        %4526 = vmatprep.mubr.f32.mxu0 0.0
        %4527 = vmatmul.mubr.f32.gmra.mxu0 %v2900
        %v4528 = vpop.f32.mrf.mxu0
        %v4529 = vadd.f32 0.0, %v4528
        %v4530 = vpop.f32.mrf.mxu0
        %4531 = vmatprep.mubr.f32.mxu0 0.0
        %4532 = vmatmul.mubr.f32.gmra.mxu0 %v2903
        %v4533 = vpop.f32.mrf.mxu0
        %v4534 = vadd.f32 0.0, %v4533
        %v4535 = vpop.f32.mrf.mxu0
        %4536 = vmatprep.mubr.f32.mxu0 0.0
        %4537 = vmatmul.mubr.f32.gmra.mxu0 %v2906
        %v4538 = vpop.f32.mrf.mxu0
        %v4539 = vadd.f32 0.0, %v4538
        %v4540 = vpop.f32.mrf.mxu0
        %4541 = vdwg.mxu0
        %v4542 = vadd.f32 %v4393, %v4474
        %v4543 = vadd.f32 %v4394, %v4479
        %v4544 = vadd.f32 %v4395, %v4484
        %v4545 = vadd.f32 %v4396, %v4489
        %v4546 = vadd.f32 %v4397, %v4494
        %v4547 = vadd.f32 %v4398, %v4499
        %v4548 = vadd.f32 %v4399, %v4504
        %v4549 = vadd.f32 %v4400, %v4509
        %v4550 = vadd.f32 %v4401, %v4514
        %v4551 = vadd.f32 %v4402, %v4519
        %v4552 = vadd.f32 %v4403, %v4524
        %v4553 = vadd.f32 %v4404, %v4529
        %v4554 = vadd.f32 %v4405, %v4534
        %v4555 = vadd.f32 %v4406, %v4539
        %4556 = vmatprep.subr.mxu0 0.0
        %4557 = vmatpush1.msra.mxu0 0.0
        %4558 = vmatprep.subr.mxu0 0.0
        %4559 = vmatpush1.msra.mxu0 0.0
        %4560 = vmatprep.subr.mxu0 0.0
        %4561 = vmatpush1.msra.mxu0 0.0
        %4562 = vmatprep.subr.mxu0 0.0
        %4563 = vmatpush1.msra.mxu0 0.0
        %4564 = vmatprep.subr.mxu0 0.0
        %4565 = vmatpush1.msra.mxu0 0.0
        %4566 = vmatprep.subr.mxu0 0.0
        %4567 = vmatpush1.msra.mxu0 0.0
        %4568 = vmatprep.subr.mxu0 0.0
        %4569 = vmatpush1.msra.mxu0 0.0
        %4570 = vmatprep.subr.mxu0 0.0
        %4571 = vmatpush1.msra.mxu0 0.0
        %4572 = vmatprep.subr.mxu0 0.0
        %4573 = vmatpush1.msra.mxu0 0.0
        %4574 = vmatprep.subr.mxu0 0.0
        %4575 = vmatpush1.msra.mxu0 0.0
        %4576 = vmatprep.subr.mxu0 0.0
        %4577 = vmatpush1.msra.mxu0 0.0
        %4578 = vmatprep.subr.mxu0 0.0
        %4579 = vmatpush1.msra.mxu0 0.0
        %4580 = vmatprep.subr.mxu0 0.0
        %4581 = vmatpush1.msra.mxu0 %v2865
        %4582 = vmatprep.subr.mxu0 0.0
        %4583 = vmatpush1.msra.mxu0 %v2864
        %4584 = vmatprep.subr.mxu0 0.0
        %4585 = vmatpush1.msra.mxu0 %v2863
        %4586 = vmatprep.subr.mxu0 0.0
        %4587 = vmatpush1.msra.mxu0 %v2862
        %4588 = vmatprep.subr.mxu0 0.0
        %4589 = vmatpush2.msra.mxu0 0.0
        %4590 = vmatprep.subr.mxu0 0.0
        %4591 = vmatpush2.msra.mxu0 0.0
        %4592 = vmatprep.subr.mxu0 0.0
        %4593 = vmatpush2.msra.mxu0 0.0
        %4594 = vmatprep.subr.mxu0 0.0
        %4595 = vmatpush2.msra.mxu0 0.0
        %4596 = vmatprep.subr.mxu0 0.0
        %4597 = vmatpush2.msra.mxu0 0.0
        %4598 = vmatprep.subr.mxu0 0.0
        %4599 = vmatpush2.msra.mxu0 0.0
        %4600 = vmatprep.subr.mxu0 0.0
        %4601 = vmatpush2.msra.mxu0 0.0
        %4602 = vmatprep.subr.mxu0 0.0
        %4603 = vmatpush2.msra.mxu0 0.0
        %4604 = vmatprep.subr.mxu0 0.0
        %4605 = vmatpush2.msra.mxu0 0.0
        %4606 = vmatprep.subr.mxu0 0.0
        %4607 = vmatpush2.msra.mxu0 0.0
        %4608 = vmatprep.subr.mxu0 0.0
        %4609 = vmatpush2.msra.mxu0 0.0
        %4610 = vmatprep.subr.mxu0 0.0
        %4611 = vmatpush2.msra.mxu0 0.0
        %4612 = vmatprep.subr.mxu0 0.0
        %4613 = vmatpush2.msra.mxu0 0.0
        %4614 = vmatprep.subr.mxu0 0.0
        %4615 = vmatpush2.msra.mxu0 0.0
        %4616 = vmatprep.subr.mxu0 0.0
        %4617 = vmatpush2.msra.mxu0 0.0
        %4618 = vmatprep.subr.mxu0 0.0
        %4619 = vmatpush2.msra.mxu0 0.0
        %4620 = vmatprep.mubr.f32.mxu0 0.0
        %4621 = vmatmul.mubr.f32.gmra.mxu0 %v3077
        %v4622 = vpop.f32.mrf.mxu0
        %v4623 = vadd.f32 0.0, %v4622
        %v4624 = vpop.f32.mrf.mxu0
        %4625 = vmatprep.mubr.f32.mxu0 0.0
        %4626 = vmatmul.mubr.f32.gmra.mxu0 %v3080
        %v4627 = vpop.f32.mrf.mxu0
        %v4628 = vadd.f32 0.0, %v4627
        %v4629 = vpop.f32.mrf.mxu0
        %4630 = vmatprep.mubr.f32.mxu0 0.0
        %4631 = vmatmul.mubr.f32.gmra.mxu0 %v3083
        %v4632 = vpop.f32.mrf.mxu0
        %v4633 = vadd.f32 0.0, %v4632
        %v4634 = vpop.f32.mrf.mxu0
        %4635 = vmatprep.mubr.f32.mxu0 0.0
        %4636 = vmatmul.mubr.f32.gmra.mxu0 %v3086
        %v4637 = vpop.f32.mrf.mxu0
        %v4638 = vadd.f32 0.0, %v4637
        %v4639 = vpop.f32.mrf.mxu0
        %4640 = vmatprep.mubr.f32.mxu0 0.0
        %4641 = vmatmul.mubr.f32.gmra.mxu0 %v3089
        %v4642 = vpop.f32.mrf.mxu0
        %v4643 = vadd.f32 0.0, %v4642
        %v4644 = vpop.f32.mrf.mxu0
        %4645 = vmatprep.mubr.f32.mxu0 0.0
        %4646 = vmatmul.mubr.f32.gmra.mxu0 %v3092
        %v4647 = vpop.f32.mrf.mxu0
        %v4648 = vadd.f32 0.0, %v4647
        %v4649 = vpop.f32.mrf.mxu0
        %4650 = vmatprep.mubr.f32.mxu0 0.0
        %4651 = vmatmul.mubr.f32.gmra.mxu0 %v3095
        %v4652 = vpop.f32.mrf.mxu0
        %v4653 = vadd.f32 0.0, %v4652
        %v4654 = vpop.f32.mrf.mxu0
        %4655 = vmatprep.mubr.f32.mxu0 0.0
        %4656 = vmatmul.mubr.f32.gmra.mxu0 %v3098
        %v4657 = vpop.f32.mrf.mxu0
        %v4658 = vadd.f32 0.0, %v4657
        %v4659 = vpop.f32.mrf.mxu0
        %4660 = vmatprep.mubr.f32.mxu0 0.0
        %4661 = vmatmul.mubr.f32.gmra.mxu0 %v3101
        %v4662 = vpop.f32.mrf.mxu0
        %v4663 = vadd.f32 0.0, %v4662
        %v4664 = vpop.f32.mrf.mxu0
        %4665 = vmatprep.mubr.f32.mxu0 0.0
        %4666 = vmatmul.mubr.f32.gmra.mxu0 %v3104
        %v4667 = vpop.f32.mrf.mxu0
        %v4668 = vadd.f32 0.0, %v4667
        %v4669 = vpop.f32.mrf.mxu0
        %4670 = vmatprep.mubr.f32.mxu0 0.0
        %4671 = vmatmul.mubr.f32.gmra.mxu0 %v3107
        %v4672 = vpop.f32.mrf.mxu0
        %v4673 = vadd.f32 0.0, %v4672
        %v4674 = vpop.f32.mrf.mxu0
        %4675 = vmatprep.mubr.f32.mxu0 0.0
        %4676 = vmatmul.mubr.f32.gmra.mxu0 %v3110
        %v4677 = vpop.f32.mrf.mxu0
        %v4678 = vadd.f32 0.0, %v4677
        %v4679 = vpop.f32.mrf.mxu0
        %4680 = vmatprep.mubr.f32.mxu0 0.0
        %4681 = vmatmul.mubr.f32.gmra.mxu0 %v3113
        %v4682 = vpop.f32.mrf.mxu0
        %v4683 = vadd.f32 0.0, %v4682
        %v4684 = vpop.f32.mrf.mxu0
        %4685 = vmatprep.mubr.f32.mxu0 0.0
        %4686 = vmatmul.mubr.f32.gmra.mxu0 %v3116
        %v4687 = vpop.f32.mrf.mxu0
        %v4688 = vadd.f32 0.0, %v4687
        %v4689 = vpop.f32.mrf.mxu0
        %4690 = vdwg.mxu0
        %v4691 = vadd.f32 %v4542, %v4623
        %v4692 = vadd.f32 %v4543, %v4628
        %v4693 = vadd.f32 %v4544, %v4633
        %v4694 = vadd.f32 %v4545, %v4638
        %v4695 = vadd.f32 %v4546, %v4643
        %v4696 = vadd.f32 %v4547, %v4648
        %v4697 = vadd.f32 %v4548, %v4653
        %v4698 = vadd.f32 %v4549, %v4658
        %v4699 = vadd.f32 %v4550, %v4663
        %v4700 = vadd.f32 %v4551, %v4668
        %v4701 = vadd.f32 %v4552, %v4673
        %v4702 = vadd.f32 %v4553, %v4678
        %v4703 = vadd.f32 %v4554, %v4683
        %v4704 = vadd.f32 %v4555, %v4688
        %v4705 = vld [vmem:[#allocation3 + $0x9] sm:$0xff]
        %v4706 = vld [vmem:[#allocation3 + $0x11] sm:$0xff]
        %v4707 = vld [vmem:[#allocation3 + $0x19] sm:$0xff]
        %v4708 = vld [vmem:[#allocation3 + $0x21] sm:$0xff]
        %v4709 = vld [vmem:[#allocation3 + $0x29] sm:$0xff]
        %v4710 = vld [vmem:[#allocation3 + $0x31] sm:$0xff]
        %v4711 = vld [vmem:[#allocation3 + $0x39] sm:$0xff]
        %v4712 = vld [vmem:[#allocation3 + $0x41] sm:$0xff]
        %v4713 = vld [vmem:[#allocation3 + $0x49] sm:$0xff]
        %v4714 = vld [vmem:[#allocation3 + $0x51] sm:$0xff]
        %v4715 = vld [vmem:[#allocation3 + $0x59] sm:$0xff]
        %v4716 = vld [vmem:[#allocation3 + $0x61] sm:$0xff]
        %v4717 = vld [vmem:[#allocation3 + $0x69] sm:$0xff]
        %v4718 = vld [vmem:[#allocation3 + $0x71] sm:$0xff]
        %v4720 = vsel %vm330, %v4705, 0
        %v4723 = vsel %vm330, %v4706, 0
        %v4726 = vsel %vm330, %v4707, 0
        %v4729 = vsel %vm330, %v4708, 0
        %v4732 = vsel %vm330, %v4709, 0
        %v4735 = vsel %vm330, %v4710, 0
        %v4738 = vsel %vm330, %v4711, 0
        %v4741 = vsel %vm330, %v4712, 0
        %v4744 = vsel %vm330, %v4713, 0
        %v4747 = vsel %vm330, %v4714, 0
        %v4750 = vsel %vm330, %v4715, 0
        %v4753 = vsel %vm330, %v4716, 0
        %v4756 = vsel %vm330, %v4717, 0
        %v4759 = vsel %vm330, %v4718, 0
        %4761 = vmatprep.subr.mxu0 0.0
        %4762 = vmatpush1.msra.mxu0 0.0
        %4763 = vmatprep.subr.mxu0 0.0
        %4764 = vmatpush1.msra.mxu0 0.0
        %4765 = vmatprep.subr.mxu0 0.0
        %4766 = vmatpush1.msra.mxu0 0.0
        %4767 = vmatprep.subr.mxu0 0.0
        %4768 = vmatpush1.msra.mxu0 0.0
        %4769 = vmatprep.subr.mxu0 0.0
        %4770 = vmatpush1.msra.mxu0 0.0
        %4771 = vmatprep.subr.mxu0 0.0
        %4772 = vmatpush1.msra.mxu0 0.0
        %4773 = vmatprep.subr.mxu0 0.0
        %4774 = vmatpush1.msra.mxu0 0.0
        %4775 = vmatprep.subr.mxu0 0.0
        %4776 = vmatpush1.msra.mxu0 0.0
        %4777 = vmatprep.subr.mxu0 0.0
        %4778 = vmatpush1.msra.mxu0 0.0
        %4779 = vmatprep.subr.mxu0 0.0
        %4780 = vmatpush1.msra.mxu0 0.0
        %4781 = vmatprep.subr.mxu0 0.0
        %4782 = vmatpush1.msra.mxu0 0.0
        %4783 = vmatprep.subr.mxu0 0.0
        %4784 = vmatpush1.msra.mxu0 0.0
        %4785 = vmatprep.subr.mxu0 0.0
        %4786 = vmatpush1.msra.mxu0 %v3075
        %4787 = vmatprep.subr.mxu0 0.0
        %4788 = vmatpush1.msra.mxu0 %v3074
        %4789 = vmatprep.subr.mxu0 0.0
        %4790 = vmatpush1.msra.mxu0 %v3073
        %4791 = vmatprep.subr.mxu0 0.0
        %4792 = vmatpush1.msra.mxu0 %v3072
        %4793 = vmatprep.subr.mxu0 0.0
        %4794 = vmatpush2.msra.mxu0 0.0
        %4795 = vmatprep.subr.mxu0 0.0
        %4796 = vmatpush2.msra.mxu0 0.0
        %4797 = vmatprep.subr.mxu0 0.0
        %4798 = vmatpush2.msra.mxu0 0.0
        %4799 = vmatprep.subr.mxu0 0.0
        %4800 = vmatpush2.msra.mxu0 0.0
        %4801 = vmatprep.subr.mxu0 0.0
        %4802 = vmatpush2.msra.mxu0 0.0
        %4803 = vmatprep.subr.mxu0 0.0
        %4804 = vmatpush2.msra.mxu0 0.0
        %4805 = vmatprep.subr.mxu0 0.0
        %4806 = vmatpush2.msra.mxu0 0.0
        %4807 = vmatprep.subr.mxu0 0.0
        %4808 = vmatpush2.msra.mxu0 0.0
        %4809 = vmatprep.subr.mxu0 0.0
        %4810 = vmatpush2.msra.mxu0 0.0
        %4811 = vmatprep.subr.mxu0 0.0
        %4812 = vmatpush2.msra.mxu0 0.0
        %4813 = vmatprep.subr.mxu0 0.0
        %4814 = vmatpush2.msra.mxu0 0.0
        %4815 = vmatprep.subr.mxu0 0.0
        %4816 = vmatpush2.msra.mxu0 0.0
        %4817 = vmatprep.subr.mxu0 0.0
        %4818 = vmatpush2.msra.mxu0 0.0
        %4819 = vmatprep.subr.mxu0 0.0
        %4820 = vmatpush2.msra.mxu0 0.0
        %4821 = vmatprep.subr.mxu0 0.0
        %4822 = vmatpush2.msra.mxu0 0.0
        %4823 = vmatprep.subr.mxu0 0.0
        %4824 = vmatpush2.msra.mxu0 0.0
        %4825 = vmatprep.mubr.f32.mxu0 0.0
        %4826 = vmatmul.mubr.f32.gmra.mxu0 %v4720
        %v4827 = vpop.f32.mrf.mxu0
        %v4828 = vadd.f32 0.0, %v4827
        %v4829 = vpop.f32.mrf.mxu0
        %4830 = vmatprep.mubr.f32.mxu0 0.0
        %4831 = vmatmul.mubr.f32.gmra.mxu0 %v4723
        %v4832 = vpop.f32.mrf.mxu0
        %v4833 = vadd.f32 0.0, %v4832
        %v4834 = vpop.f32.mrf.mxu0
        %4835 = vmatprep.mubr.f32.mxu0 0.0
        %4836 = vmatmul.mubr.f32.gmra.mxu0 %v4726
        %v4837 = vpop.f32.mrf.mxu0
        %v4838 = vadd.f32 0.0, %v4837
        %v4839 = vpop.f32.mrf.mxu0
        %4840 = vmatprep.mubr.f32.mxu0 0.0
        %4841 = vmatmul.mubr.f32.gmra.mxu0 %v4729
        %v4842 = vpop.f32.mrf.mxu0
        %v4843 = vadd.f32 0.0, %v4842
        %v4844 = vpop.f32.mrf.mxu0
        %4845 = vmatprep.mubr.f32.mxu0 0.0
        %4846 = vmatmul.mubr.f32.gmra.mxu0 %v4732
        %v4847 = vpop.f32.mrf.mxu0
        %v4848 = vadd.f32 0.0, %v4847
        %v4849 = vpop.f32.mrf.mxu0
        %4850 = vmatprep.mubr.f32.mxu0 0.0
        %4851 = vmatmul.mubr.f32.gmra.mxu0 %v4735
        %v4852 = vpop.f32.mrf.mxu0
        %v4853 = vadd.f32 0.0, %v4852
        %v4854 = vpop.f32.mrf.mxu0
        %4855 = vmatprep.mubr.f32.mxu0 0.0
        %4856 = vmatmul.mubr.f32.gmra.mxu0 %v4738
        %v4857 = vpop.f32.mrf.mxu0
        %v4858 = vadd.f32 0.0, %v4857
        %v4859 = vpop.f32.mrf.mxu0
        %4860 = vmatprep.mubr.f32.mxu0 0.0
        %4861 = vmatmul.mubr.f32.gmra.mxu0 %v4741
        %v4862 = vpop.f32.mrf.mxu0
        %v4863 = vadd.f32 0.0, %v4862
        %v4864 = vpop.f32.mrf.mxu0
        %4865 = vmatprep.mubr.f32.mxu0 0.0
        %4866 = vmatmul.mubr.f32.gmra.mxu0 %v4744
        %v4867 = vpop.f32.mrf.mxu0
        %v4868 = vadd.f32 0.0, %v4867
        %v4869 = vpop.f32.mrf.mxu0
        %4870 = vmatprep.mubr.f32.mxu0 0.0
        %4871 = vmatmul.mubr.f32.gmra.mxu0 %v4747
        %v4872 = vpop.f32.mrf.mxu0
        %v4873 = vadd.f32 0.0, %v4872
        %v4874 = vpop.f32.mrf.mxu0
        %4875 = vmatprep.mubr.f32.mxu0 0.0
        %4876 = vmatmul.mubr.f32.gmra.mxu0 %v4750
        %v4877 = vpop.f32.mrf.mxu0
        %v4878 = vadd.f32 0.0, %v4877
        %v4879 = vpop.f32.mrf.mxu0
        %4880 = vmatprep.mubr.f32.mxu0 0.0
        %4881 = vmatmul.mubr.f32.gmra.mxu0 %v4753
        %v4882 = vpop.f32.mrf.mxu0
        %v4883 = vadd.f32 0.0, %v4882
        %v4884 = vpop.f32.mrf.mxu0
        %4885 = vmatprep.mubr.f32.mxu0 0.0
        %4886 = vmatmul.mubr.f32.gmra.mxu0 %v4756
        %v4887 = vpop.f32.mrf.mxu0
        %v4888 = vadd.f32 0.0, %v4887
        %v4889 = vpop.f32.mrf.mxu0
        %4890 = vmatprep.mubr.f32.mxu0 0.0
        %4891 = vmatmul.mubr.f32.gmra.mxu0 %v4759
        %v4892 = vpop.f32.mrf.mxu0
        %v4893 = vadd.f32 0.0, %v4892
        %v4894 = vpop.f32.mrf.mxu0
        %4895 = vdwg.mxu0
        %v4896 = vadd.f32 %v4691, %v4828
        %v4897 = vadd.f32 %v4692, %v4833
        %v4898 = vadd.f32 %v4693, %v4838
        %v4899 = vadd.f32 %v4694, %v4843
        %v4900 = vadd.f32 %v4695, %v4848
        %v4901 = vadd.f32 %v4696, %v4853
        %v4902 = vadd.f32 %v4697, %v4858
        %v4903 = vadd.f32 %v4698, %v4863
        %v4904 = vadd.f32 %v4699, %v4868
        %v4905 = vadd.f32 %v4700, %v4873
        %v4906 = vadd.f32 %v4701, %v4878
        %v4907 = vadd.f32 %v4702, %v4883
        %v4908 = vadd.f32 %v4703, %v4888
        %v4909 = vadd.f32 %v4704, %v4893
        %4910 = vmatprep.subr.mxu0 0.0
        %4911 = vmatpush1.msra.mxu0 0.0
        %4912 = vmatprep.subr.mxu0 0.0
        %4913 = vmatpush1.msra.mxu0 0.0
        %4914 = vmatprep.subr.mxu0 0.0
        %4915 = vmatpush1.msra.mxu0 0.0
        %4916 = vmatprep.subr.mxu0 0.0
        %4917 = vmatpush1.msra.mxu0 0.0
        %4918 = vmatprep.subr.mxu0 0.0
        %4919 = vmatpush1.msra.mxu0 0.0
        %4920 = vmatprep.subr.mxu0 0.0
        %4921 = vmatpush1.msra.mxu0 0.0
        %4922 = vmatprep.subr.mxu0 0.0
        %4923 = vmatpush1.msra.mxu0 0.0
        %4924 = vmatprep.subr.mxu0 0.0
        %4925 = vmatpush1.msra.mxu0 0.0
        %4926 = vmatprep.subr.mxu0 0.0
        %4927 = vmatpush1.msra.mxu0 0.0
        %4928 = vmatprep.subr.mxu0 0.0
        %4929 = vmatpush1.msra.mxu0 0.0
        %4930 = vmatprep.subr.mxu0 0.0
        %4931 = vmatpush1.msra.mxu0 0.0
        %4932 = vmatprep.subr.mxu0 0.0
        %4933 = vmatpush1.msra.mxu0 0.0
        %4934 = vmatprep.subr.mxu0 0.0
        %4935 = vmatpush1.msra.mxu0 %v3285
        %4936 = vmatprep.subr.mxu0 0.0
        %4937 = vmatpush1.msra.mxu0 %v3284
        %4938 = vmatprep.subr.mxu0 0.0
        %4939 = vmatpush1.msra.mxu0 %v3283
        %4940 = vmatprep.subr.mxu0 0.0
        %4941 = vmatpush1.msra.mxu0 %v3282
        %4942 = vmatprep.subr.mxu0 0.0
        %4943 = vmatpush2.msra.mxu0 0.0
        %4944 = vmatprep.subr.mxu0 0.0
        %4945 = vmatpush2.msra.mxu0 0.0
        %4946 = vmatprep.subr.mxu0 0.0
        %4947 = vmatpush2.msra.mxu0 0.0
        %4948 = vmatprep.subr.mxu0 0.0
        %4949 = vmatpush2.msra.mxu0 0.0
        %4950 = vmatprep.subr.mxu0 0.0
        %4951 = vmatpush2.msra.mxu0 0.0
        %4952 = vmatprep.subr.mxu0 0.0
        %4953 = vmatpush2.msra.mxu0 0.0
        %4954 = vmatprep.subr.mxu0 0.0
        %4955 = vmatpush2.msra.mxu0 0.0
        %4956 = vmatprep.subr.mxu0 0.0
        %4957 = vmatpush2.msra.mxu0 0.0
        %4958 = vmatprep.subr.mxu0 0.0
        %4959 = vmatpush2.msra.mxu0 0.0
        %4960 = vmatprep.subr.mxu0 0.0
        %4961 = vmatpush2.msra.mxu0 0.0
        %4962 = vmatprep.subr.mxu0 0.0
        %4963 = vmatpush2.msra.mxu0 0.0
        %4964 = vmatprep.subr.mxu0 0.0
        %4965 = vmatpush2.msra.mxu0 0.0
        %4966 = vmatprep.subr.mxu0 0.0
        %4967 = vmatpush2.msra.mxu0 0.0
        %4968 = vmatprep.subr.mxu0 0.0
        %4969 = vmatpush2.msra.mxu0 0.0
        %4970 = vmatprep.subr.mxu0 0.0
        %4971 = vmatpush2.msra.mxu0 0.0
        %4972 = vmatprep.subr.mxu0 0.0
        %4973 = vmatpush2.msra.mxu0 0.0
        %4974 = vmatprep.mubr.f32.mxu0 0.0
        %4975 = vmatmul.mubr.f32.gmra.mxu0 %v3497
        %v4976 = vpop.f32.mrf.mxu0
        %v4977 = vadd.f32 0.0, %v4976
        %v4978 = vpop.f32.mrf.mxu0
        %4979 = vmatprep.mubr.f32.mxu0 0.0
        %4980 = vmatmul.mubr.f32.gmra.mxu0 %v3500
        %v4981 = vpop.f32.mrf.mxu0
        %v4982 = vadd.f32 0.0, %v4981
        %v4983 = vpop.f32.mrf.mxu0
        %4984 = vmatprep.mubr.f32.mxu0 0.0
        %4985 = vmatmul.mubr.f32.gmra.mxu0 %v3503
        %v4986 = vpop.f32.mrf.mxu0
        %v4987 = vadd.f32 0.0, %v4986
        %v4988 = vpop.f32.mrf.mxu0
        %4989 = vmatprep.mubr.f32.mxu0 0.0
        %4990 = vmatmul.mubr.f32.gmra.mxu0 %v3506
        %v4991 = vpop.f32.mrf.mxu0
        %v4992 = vadd.f32 0.0, %v4991
        %v4993 = vpop.f32.mrf.mxu0
        %4994 = vmatprep.mubr.f32.mxu0 0.0
        %4995 = vmatmul.mubr.f32.gmra.mxu0 %v3509
        %v4996 = vpop.f32.mrf.mxu0
        %v4997 = vadd.f32 0.0, %v4996
        %v4998 = vpop.f32.mrf.mxu0
        %4999 = vmatprep.mubr.f32.mxu0 0.0
        %5000 = vmatmul.mubr.f32.gmra.mxu0 %v3512
        %v5001 = vpop.f32.mrf.mxu0
        %v5002 = vadd.f32 0.0, %v5001
        %v5003 = vpop.f32.mrf.mxu0
        %5004 = vmatprep.mubr.f32.mxu0 0.0
        %5005 = vmatmul.mubr.f32.gmra.mxu0 %v3515
        %v5006 = vpop.f32.mrf.mxu0
        %v5007 = vadd.f32 0.0, %v5006
        %v5008 = vpop.f32.mrf.mxu0
        %5009 = vmatprep.mubr.f32.mxu0 0.0
        %5010 = vmatmul.mubr.f32.gmra.mxu0 %v3518
        %v5011 = vpop.f32.mrf.mxu0
        %v5012 = vadd.f32 0.0, %v5011
        %v5013 = vpop.f32.mrf.mxu0
        %5014 = vmatprep.mubr.f32.mxu0 0.0
        %5015 = vmatmul.mubr.f32.gmra.mxu0 %v3521
        %v5016 = vpop.f32.mrf.mxu0
        %v5017 = vadd.f32 0.0, %v5016
        %v5018 = vpop.f32.mrf.mxu0
        %5019 = vmatprep.mubr.f32.mxu0 0.0
        %5020 = vmatmul.mubr.f32.gmra.mxu0 %v3524
        %v5021 = vpop.f32.mrf.mxu0
        %v5022 = vadd.f32 0.0, %v5021
        %v5023 = vpop.f32.mrf.mxu0
        %5024 = vmatprep.mubr.f32.mxu0 0.0
        %5025 = vmatmul.mubr.f32.gmra.mxu0 %v3527
        %v5026 = vpop.f32.mrf.mxu0
        %v5027 = vadd.f32 0.0, %v5026
        %v5028 = vpop.f32.mrf.mxu0
        %5029 = vmatprep.mubr.f32.mxu0 0.0
        %5030 = vmatmul.mubr.f32.gmra.mxu0 %v3530
        %v5031 = vpop.f32.mrf.mxu0
        %v5032 = vadd.f32 0.0, %v5031
        %v5033 = vpop.f32.mrf.mxu0
        %5034 = vmatprep.mubr.f32.mxu0 0.0
        %5035 = vmatmul.mubr.f32.gmra.mxu0 %v3533
        %v5036 = vpop.f32.mrf.mxu0
        %v5037 = vadd.f32 0.0, %v5036
        %v5038 = vpop.f32.mrf.mxu0
        %5039 = vmatprep.mubr.f32.mxu0 0.0
        %5040 = vmatmul.mubr.f32.gmra.mxu0 %v3536
        %v5041 = vpop.f32.mrf.mxu0
        %v5042 = vadd.f32 0.0, %v5041
        %v5043 = vpop.f32.mrf.mxu0
        %5044 = vdwg.mxu0
        %v5045 = vadd.f32 %v4896, %v4977
        %v5046 = vadd.f32 %v4897, %v4982
        %v5047 = vadd.f32 %v4898, %v4987
        %v5048 = vadd.f32 %v4899, %v4992
        %v5049 = vadd.f32 %v4900, %v4997
        %v5050 = vadd.f32 %v4901, %v5002
        %v5051 = vadd.f32 %v4902, %v5007
        %v5052 = vadd.f32 %v4903, %v5012
        %v5053 = vadd.f32 %v4904, %v5017
        %v5054 = vadd.f32 %v4905, %v5022
        %v5055 = vadd.f32 %v4906, %v5027
        %v5056 = vadd.f32 %v4907, %v5032
        %v5057 = vadd.f32 %v4908, %v5037
        %v5058 = vadd.f32 %v4909, %v5042
        %5059 = vmatprep.subr.mxu0 0.0
        %5060 = vmatpush1.msra.mxu0 0.0
        %5061 = vmatprep.subr.mxu0 0.0
        %5062 = vmatpush1.msra.mxu0 0.0
        %5063 = vmatprep.subr.mxu0 0.0
        %5064 = vmatpush1.msra.mxu0 0.0
        %5065 = vmatprep.subr.mxu0 0.0
        %5066 = vmatpush1.msra.mxu0 0.0
        %5067 = vmatprep.subr.mxu0 0.0
        %5068 = vmatpush1.msra.mxu0 0.0
        %5069 = vmatprep.subr.mxu0 0.0
        %5070 = vmatpush1.msra.mxu0 0.0
        %5071 = vmatprep.subr.mxu0 0.0
        %5072 = vmatpush1.msra.mxu0 0.0
        %5073 = vmatprep.subr.mxu0 0.0
        %5074 = vmatpush1.msra.mxu0 0.0
        %5075 = vmatprep.subr.mxu0 0.0
        %5076 = vmatpush1.msra.mxu0 0.0
        %5077 = vmatprep.subr.mxu0 0.0
        %5078 = vmatpush1.msra.mxu0 0.0
        %5079 = vmatprep.subr.mxu0 0.0
        %5080 = vmatpush1.msra.mxu0 0.0
        %5081 = vmatprep.subr.mxu0 0.0
        %5082 = vmatpush1.msra.mxu0 0.0
        %5083 = vmatprep.subr.mxu0 0.0
        %5084 = vmatpush1.msra.mxu0 %v3495
        %5085 = vmatprep.subr.mxu0 0.0
        %5086 = vmatpush1.msra.mxu0 %v3494
        %5087 = vmatprep.subr.mxu0 0.0
        %5088 = vmatpush1.msra.mxu0 %v3493
        %5089 = vmatprep.subr.mxu0 0.0
        %5090 = vmatpush1.msra.mxu0 %v3492
        %5091 = vmatprep.subr.mxu0 0.0
        %5092 = vmatpush2.msra.mxu0 0.0
        %5093 = vmatprep.subr.mxu0 0.0
        %5094 = vmatpush2.msra.mxu0 0.0
        %5095 = vmatprep.subr.mxu0 0.0
        %5096 = vmatpush2.msra.mxu0 0.0
        %5097 = vmatprep.subr.mxu0 0.0
        %5098 = vmatpush2.msra.mxu0 0.0
        %5099 = vmatprep.subr.mxu0 0.0
        %5100 = vmatpush2.msra.mxu0 0.0
        %5101 = vmatprep.subr.mxu0 0.0
        %5102 = vmatpush2.msra.mxu0 0.0
        %5103 = vmatprep.subr.mxu0 0.0
        %5104 = vmatpush2.msra.mxu0 0.0
        %5105 = vmatprep.subr.mxu0 0.0
        %5106 = vmatpush2.msra.mxu0 0.0
        %5107 = vmatprep.subr.mxu0 0.0
        %5108 = vmatpush2.msra.mxu0 0.0
        %5109 = vmatprep.subr.mxu0 0.0
        %5110 = vmatpush2.msra.mxu0 0.0
        %5111 = vmatprep.subr.mxu0 0.0
        %5112 = vmatpush2.msra.mxu0 0.0
        %5113 = vmatprep.subr.mxu0 0.0
        %5114 = vmatpush2.msra.mxu0 0.0
        %5115 = vmatprep.subr.mxu0 0.0
        %5116 = vmatpush2.msra.mxu0 0.0
        %5117 = vmatprep.subr.mxu0 0.0
        %5118 = vmatpush2.msra.mxu0 0.0
        %5119 = vmatprep.subr.mxu0 0.0
        %5120 = vmatpush2.msra.mxu0 0.0
        %5121 = vmatprep.subr.mxu0 0.0
        %5122 = vmatpush2.msra.mxu0 0.0
        %5123 = vmatprep.mubr.f32.mxu0 0.0
        %5124 = vmatmul.mubr.f32.gmra.mxu0 %v3707
        %v5125 = vpop.f32.mrf.mxu0
        %v5126 = vadd.f32 0.0, %v5125
        %v5127 = vpop.f32.mrf.mxu0
        %5128 = vmatprep.mubr.f32.mxu0 0.0
        %5129 = vmatmul.mubr.f32.gmra.mxu0 %v3710
        %v5130 = vpop.f32.mrf.mxu0
        %v5131 = vadd.f32 0.0, %v5130
        %v5132 = vpop.f32.mrf.mxu0
        %5133 = vmatprep.mubr.f32.mxu0 0.0
        %5134 = vmatmul.mubr.f32.gmra.mxu0 %v3713
        %v5135 = vpop.f32.mrf.mxu0
        %v5136 = vadd.f32 0.0, %v5135
        %v5137 = vpop.f32.mrf.mxu0
        %5138 = vmatprep.mubr.f32.mxu0 0.0
        %5139 = vmatmul.mubr.f32.gmra.mxu0 %v3716
        %v5140 = vpop.f32.mrf.mxu0
        %v5141 = vadd.f32 0.0, %v5140
        %v5142 = vpop.f32.mrf.mxu0
        %5143 = vmatprep.mubr.f32.mxu0 0.0
        %5144 = vmatmul.mubr.f32.gmra.mxu0 %v3719
        %v5145 = vpop.f32.mrf.mxu0
        %v5146 = vadd.f32 0.0, %v5145
        %v5147 = vpop.f32.mrf.mxu0
        %5148 = vmatprep.mubr.f32.mxu0 0.0
        %5149 = vmatmul.mubr.f32.gmra.mxu0 %v3722
        %v5150 = vpop.f32.mrf.mxu0
        %v5151 = vadd.f32 0.0, %v5150
        %v5152 = vpop.f32.mrf.mxu0
        %5153 = vmatprep.mubr.f32.mxu0 0.0
        %5154 = vmatmul.mubr.f32.gmra.mxu0 %v3725
        %v5155 = vpop.f32.mrf.mxu0
        %v5156 = vadd.f32 0.0, %v5155
        %v5157 = vpop.f32.mrf.mxu0
        %5158 = vmatprep.mubr.f32.mxu0 0.0
        %5159 = vmatmul.mubr.f32.gmra.mxu0 %v3728
        %v5160 = vpop.f32.mrf.mxu0
        %v5161 = vadd.f32 0.0, %v5160
        %v5162 = vpop.f32.mrf.mxu0
        %5163 = vmatprep.mubr.f32.mxu0 0.0
        %5164 = vmatmul.mubr.f32.gmra.mxu0 %v3731
        %v5165 = vpop.f32.mrf.mxu0
        %v5166 = vadd.f32 0.0, %v5165
        %v5167 = vpop.f32.mrf.mxu0
        %5168 = vmatprep.mubr.f32.mxu0 0.0
        %5169 = vmatmul.mubr.f32.gmra.mxu0 %v3734
        %v5170 = vpop.f32.mrf.mxu0
        %v5171 = vadd.f32 0.0, %v5170
        %v5172 = vpop.f32.mrf.mxu0
        %5173 = vmatprep.mubr.f32.mxu0 0.0
        %5174 = vmatmul.mubr.f32.gmra.mxu0 %v3737
        %v5175 = vpop.f32.mrf.mxu0
        %v5176 = vadd.f32 0.0, %v5175
        %v5177 = vpop.f32.mrf.mxu0
        %5178 = vmatprep.mubr.f32.mxu0 0.0
        %5179 = vmatmul.mubr.f32.gmra.mxu0 %v3740
        %v5180 = vpop.f32.mrf.mxu0
        %v5181 = vadd.f32 0.0, %v5180
        %v5182 = vpop.f32.mrf.mxu0
        %5183 = vmatprep.mubr.f32.mxu0 0.0
        %5184 = vmatmul.mubr.f32.gmra.mxu0 %v3743
        %v5185 = vpop.f32.mrf.mxu0
        %v5186 = vadd.f32 0.0, %v5185
        %v5187 = vpop.f32.mrf.mxu0
        %5188 = vmatprep.mubr.f32.mxu0 0.0
        %5189 = vmatmul.mubr.f32.gmra.mxu0 %v3746
        %v5190 = vpop.f32.mrf.mxu0
        %v5191 = vadd.f32 0.0, %v5190
        %v5192 = vpop.f32.mrf.mxu0
        %5193 = vdwg.mxu0
        %v5194 = vadd.f32 %v5045, %v5126
        %v5195 = vadd.f32 %v5046, %v5131
        %v5196 = vadd.f32 %v5047, %v5136
        %v5197 = vadd.f32 %v5048, %v5141
        %v5198 = vadd.f32 %v5049, %v5146
        %v5199 = vadd.f32 %v5050, %v5151
        %v5200 = vadd.f32 %v5051, %v5156
        %v5201 = vadd.f32 %v5052, %v5161
        %v5202 = vadd.f32 %v5053, %v5166
        %v5203 = vadd.f32 %v5054, %v5171
        %v5204 = vadd.f32 %v5055, %v5176
        %v5205 = vadd.f32 %v5056, %v5181
        %v5206 = vadd.f32 %v5057, %v5186
        %v5207 = vadd.f32 %v5058, %v5191
        %v5208 = vld [vmem:[#allocation3 + $0x11] sm:$0xff]
        %v5209 = vld [vmem:[#allocation3 + $0x19] sm:$0xff]
        %v5210 = vld [vmem:[#allocation3 + $0x21] sm:$0xff]
        %v5211 = vld [vmem:[#allocation3 + $0x29] sm:$0xff]
        %v5212 = vld [vmem:[#allocation3 + $0x31] sm:$0xff]
        %v5213 = vld [vmem:[#allocation3 + $0x39] sm:$0xff]
        %v5214 = vld [vmem:[#allocation3 + $0x41] sm:$0xff]
        %v5215 = vld [vmem:[#allocation3 + $0x49] sm:$0xff]
        %v5216 = vld [vmem:[#allocation3 + $0x51] sm:$0xff]
        %v5217 = vld [vmem:[#allocation3 + $0x59] sm:$0xff]
        %v5218 = vld [vmem:[#allocation3 + $0x61] sm:$0xff]
        %v5219 = vld [vmem:[#allocation3 + $0x69] sm:$0xff]
        %v5220 = vld [vmem:[#allocation3 + $0x71] sm:$0xff]
        %v5221 = vld [vmem:[#allocation3 + $0x79] sm:$0xff]
        %v5223 = vsel %vm330, %v5208, 0
        %v5226 = vsel %vm330, %v5209, 0
        %v5229 = vsel %vm330, %v5210, 0
        %v5232 = vsel %vm330, %v5211, 0
        %v5235 = vsel %vm330, %v5212, 0
        %v5238 = vsel %vm330, %v5213, 0
        %v5241 = vsel %vm330, %v5214, 0
        %v5244 = vsel %vm330, %v5215, 0
        %v5247 = vsel %vm330, %v5216, 0
        %v5250 = vsel %vm330, %v5217, 0
        %v5253 = vsel %vm330, %v5218, 0
        %v5256 = vsel %vm330, %v5219, 0
        %v5259 = vsel %vm330, %v5220, 0
        %v5262 = vsel %vm330, %v5221, 0
        %5264 = vmatprep.subr.mxu0 0.0
        %5265 = vmatpush1.msra.mxu0 0.0
        %5266 = vmatprep.subr.mxu0 0.0
        %5267 = vmatpush1.msra.mxu0 0.0
        %5268 = vmatprep.subr.mxu0 0.0
        %5269 = vmatpush1.msra.mxu0 0.0
        %5270 = vmatprep.subr.mxu0 0.0
        %5271 = vmatpush1.msra.mxu0 0.0
        %5272 = vmatprep.subr.mxu0 0.0
        %5273 = vmatpush1.msra.mxu0 0.0
        %5274 = vmatprep.subr.mxu0 0.0
        %5275 = vmatpush1.msra.mxu0 0.0
        %5276 = vmatprep.subr.mxu0 0.0
        %5277 = vmatpush1.msra.mxu0 0.0
        %5278 = vmatprep.subr.mxu0 0.0
        %5279 = vmatpush1.msra.mxu0 0.0
        %5280 = vmatprep.subr.mxu0 0.0
        %5281 = vmatpush1.msra.mxu0 0.0
        %5282 = vmatprep.subr.mxu0 0.0
        %5283 = vmatpush1.msra.mxu0 0.0
        %5284 = vmatprep.subr.mxu0 0.0
        %5285 = vmatpush1.msra.mxu0 0.0
        %5286 = vmatprep.subr.mxu0 0.0
        %5287 = vmatpush1.msra.mxu0 0.0
        %5288 = vmatprep.subr.mxu0 0.0
        %5289 = vmatpush1.msra.mxu0 %v3705
        %5290 = vmatprep.subr.mxu0 0.0
        %5291 = vmatpush1.msra.mxu0 %v3704
        %5292 = vmatprep.subr.mxu0 0.0
        %5293 = vmatpush1.msra.mxu0 %v3703
        %5294 = vmatprep.subr.mxu0 0.0
        %5295 = vmatpush1.msra.mxu0 %v3702
        %5296 = vmatprep.subr.mxu0 0.0
        %5297 = vmatpush2.msra.mxu0 0.0
        %5298 = vmatprep.subr.mxu0 0.0
        %5299 = vmatpush2.msra.mxu0 0.0
        %5300 = vmatprep.subr.mxu0 0.0
        %5301 = vmatpush2.msra.mxu0 0.0
        %5302 = vmatprep.subr.mxu0 0.0
        %5303 = vmatpush2.msra.mxu0 0.0
        %5304 = vmatprep.subr.mxu0 0.0
        %5305 = vmatpush2.msra.mxu0 0.0
        %5306 = vmatprep.subr.mxu0 0.0
        %5307 = vmatpush2.msra.mxu0 0.0
        %5308 = vmatprep.subr.mxu0 0.0
        %5309 = vmatpush2.msra.mxu0 0.0
        %5310 = vmatprep.subr.mxu0 0.0
        %5311 = vmatpush2.msra.mxu0 0.0
        %5312 = vmatprep.subr.mxu0 0.0
        %5313 = vmatpush2.msra.mxu0 0.0
        %5314 = vmatprep.subr.mxu0 0.0
        %5315 = vmatpush2.msra.mxu0 0.0
        %5316 = vmatprep.subr.mxu0 0.0
        %5317 = vmatpush2.msra.mxu0 0.0
        %5318 = vmatprep.subr.mxu0 0.0
        %5319 = vmatpush2.msra.mxu0 0.0
        %5320 = vmatprep.subr.mxu0 0.0
        %5321 = vmatpush2.msra.mxu0 0.0
        %5322 = vmatprep.subr.mxu0 0.0
        %5323 = vmatpush2.msra.mxu0 0.0
        %5324 = vmatprep.subr.mxu0 0.0
        %5325 = vmatpush2.msra.mxu0 0.0
        %5326 = vmatprep.subr.mxu0 0.0
        %5327 = vmatpush2.msra.mxu0 0.0
        %5328 = vmatprep.mubr.f32.mxu0 0.0
        %5329 = vmatmul.mubr.f32.gmra.mxu0 %v5223
        %v5330 = vpop.f32.mrf.mxu0
        %v5331 = vadd.f32 0.0, %v5330
        %v5332 = vpop.f32.mrf.mxu0
        %5333 = vmatprep.mubr.f32.mxu0 0.0
        %5334 = vmatmul.mubr.f32.gmra.mxu0 %v5226
        %v5335 = vpop.f32.mrf.mxu0
        %v5336 = vadd.f32 0.0, %v5335
        %v5337 = vpop.f32.mrf.mxu0
        %5338 = vmatprep.mubr.f32.mxu0 0.0
        %5339 = vmatmul.mubr.f32.gmra.mxu0 %v5229
        %v5340 = vpop.f32.mrf.mxu0
        %v5341 = vadd.f32 0.0, %v5340
        %v5342 = vpop.f32.mrf.mxu0
        %5343 = vmatprep.mubr.f32.mxu0 0.0
        %5344 = vmatmul.mubr.f32.gmra.mxu0 %v5232
        %v5345 = vpop.f32.mrf.mxu0
        %v5346 = vadd.f32 0.0, %v5345
        %v5347 = vpop.f32.mrf.mxu0
        %5348 = vmatprep.mubr.f32.mxu0 0.0
        %5349 = vmatmul.mubr.f32.gmra.mxu0 %v5235
        %v5350 = vpop.f32.mrf.mxu0
        %v5351 = vadd.f32 0.0, %v5350
        %v5352 = vpop.f32.mrf.mxu0
        %5353 = vmatprep.mubr.f32.mxu0 0.0
        %5354 = vmatmul.mubr.f32.gmra.mxu0 %v5238
        %v5355 = vpop.f32.mrf.mxu0
        %v5356 = vadd.f32 0.0, %v5355
        %v5357 = vpop.f32.mrf.mxu0
        %5358 = vmatprep.mubr.f32.mxu0 0.0
        %5359 = vmatmul.mubr.f32.gmra.mxu0 %v5241
        %v5360 = vpop.f32.mrf.mxu0
        %v5361 = vadd.f32 0.0, %v5360
        %v5362 = vpop.f32.mrf.mxu0
        %5363 = vmatprep.mubr.f32.mxu0 0.0
        %5364 = vmatmul.mubr.f32.gmra.mxu0 %v5244
        %v5365 = vpop.f32.mrf.mxu0
        %v5366 = vadd.f32 0.0, %v5365
        %v5367 = vpop.f32.mrf.mxu0
        %5368 = vmatprep.mubr.f32.mxu0 0.0
        %5369 = vmatmul.mubr.f32.gmra.mxu0 %v5247
        %v5370 = vpop.f32.mrf.mxu0
        %v5371 = vadd.f32 0.0, %v5370
        %v5372 = vpop.f32.mrf.mxu0
        %5373 = vmatprep.mubr.f32.mxu0 0.0
        %5374 = vmatmul.mubr.f32.gmra.mxu0 %v5250
        %v5375 = vpop.f32.mrf.mxu0
        %v5376 = vadd.f32 0.0, %v5375
        %v5377 = vpop.f32.mrf.mxu0
        %5378 = vmatprep.mubr.f32.mxu0 0.0
        %5379 = vmatmul.mubr.f32.gmra.mxu0 %v5253
        %v5380 = vpop.f32.mrf.mxu0
        %v5381 = vadd.f32 0.0, %v5380
        %v5382 = vpop.f32.mrf.mxu0
        %5383 = vmatprep.mubr.f32.mxu0 0.0
        %5384 = vmatmul.mubr.f32.gmra.mxu0 %v5256
        %v5385 = vpop.f32.mrf.mxu0
        %v5386 = vadd.f32 0.0, %v5385
        %v5387 = vpop.f32.mrf.mxu0
        %5388 = vmatprep.mubr.f32.mxu0 0.0
        %5389 = vmatmul.mubr.f32.gmra.mxu0 %v5259
        %v5390 = vpop.f32.mrf.mxu0
        %v5391 = vadd.f32 0.0, %v5390
        %v5392 = vpop.f32.mrf.mxu0
        %5393 = vmatprep.mubr.f32.mxu0 0.0
        %5394 = vmatmul.mubr.f32.gmra.mxu0 %v5262
        %v5395 = vpop.f32.mrf.mxu0
        %v5396 = vadd.f32 0.0, %v5395
        %v5397 = vpop.f32.mrf.mxu0
        %5398 = vdwg.mxu0
        %v5399 = vadd.f32 %v5194, %v5331
        %v5400 = vadd.f32 %v5195, %v5336
        %v5401 = vadd.f32 %v5196, %v5341
        %v5402 = vadd.f32 %v5197, %v5346
        %v5403 = vadd.f32 %v5198, %v5351
        %v5404 = vadd.f32 %v5199, %v5356
        %v5405 = vadd.f32 %v5200, %v5361
        %v5406 = vadd.f32 %v5201, %v5366
        %v5407 = vadd.f32 %v5202, %v5371
        %v5408 = vadd.f32 %v5203, %v5376
        %v5409 = vadd.f32 %v5204, %v5381
        %v5410 = vadd.f32 %v5205, %v5386
        %v5411 = vadd.f32 %v5206, %v5391
        %v5412 = vadd.f32 %v5207, %v5396
        %v5413 = vadd.f32 %v5399, %v3902
        %v5414 = vadd.f32 %v5400, %v3902
        %v5415 = vadd.f32 %v5401, %v3902
        %v5416 = vadd.f32 %v5402, %v3902
        %v5417 = vadd.f32 %v5403, %v3902
        %v5418 = vadd.f32 %v5404, %v3902
        %v5419 = vadd.f32 %v5405, %v3902
        %v5420 = vadd.f32 %v5406, %v3902
        %v5421 = vadd.f32 %v5407, %v3902
        %v5422 = vadd.f32 %v5408, %v3902
        %v5423 = vadd.f32 %v5409, %v3902
        %v5424 = vadd.f32 %v5410, %v3902
        %v5425 = vadd.f32 %v5411, %v3902
        %v5426 = vadd.f32 %v5412, %v3902
        %v5427 = vmax.f32 %v5413, 0.0
        %v5428 = vmax.f32 %v5414, 0.0
        %v5429 = vmax.f32 %v5415, 0.0
        %v5430 = vmax.f32 %v5416, 0.0
        %v5431 = vmax.f32 %v5417, 0.0
        %v5432 = vmax.f32 %v5418, 0.0
        %v5433 = vmax.f32 %v5419, 0.0
        %v5434 = vmax.f32 %v5420, 0.0
        %v5435 = vmax.f32 %v5421, 0.0
        %v5436 = vmax.f32 %v5422, 0.0
        %v5437 = vmax.f32 %v5423, 0.0
        %v5438 = vmax.f32 %v5424, 0.0
        %v5439 = vmax.f32 %v5425, 0.0
        %v5440 = vmax.f32 %v5426, 0.0
        %v5441 = vmax.f32 %v3918, %v5427
        %v5442 = vmax.f32 %v3919, %v5428
        %v5443 = vmax.f32 %v3920, %v5429
        %v5444 = vmax.f32 %v3921, %v5430
        %v5445 = vmax.f32 %v3922, %v5431
        %v5446 = vmax.f32 %v3923, %v5432
        %v5447 = vmax.f32 %v3924, %v5433
        %v5448 = vmax.f32 %v3925, %v5434
        %v5449 = vmax.f32 %v3926, %v5435
        %v5450 = vmax.f32 %v3927, %v5436
        %v5451 = vmax.f32 %v3928, %v5437
        %v5452 = vmax.f32 %v3929, %v5438
        %v5453 = vmax.f32 %v3930, %v5439
        %v5454 = vmax.f32 %v3931, %v5440
        %v5455 = vld [vmem:[%s6] sm:$0x1]
        %v5456 = vmax.f32 %v5441, %v5442
        %v5457 = vld [vmem:[%s5] sm:$0xff]
        %v5458 = vld [vmem:[%s5 + $0x8] sm:$0xff]
        %v5459 = vld [vmem:[%s5 + $0x10] sm:$0xff]
        %v5460 = vld [vmem:[%s5 + $0x18] sm:$0xff]
        %v5461 = vld [vmem:[%s5 + $0x20] sm:$0xff]
        %v5462 = vld [vmem:[%s5 + $0x28] sm:$0xff]
        %v5463 = vld [vmem:[%s5 + $0x30] sm:$0xff]
        %v5464 = vld [vmem:[%s5 + $0x38] sm:$0xff]
        %vm5465 = vcmask 523264
        %v5467 = vsel %vm5465, %v5456, 0
        %5469 = vmatprep.subr.mxu0 0.0
        %5470 = vmatpush1.msra.mxu0 0.0
        %5471 = vmatprep.subr.mxu0 0.0
        %5472 = vmatpush1.msra.mxu0 0.0
        %5473 = vmatprep.subr.mxu0 0.0
        %5474 = vmatpush1.msra.mxu0 0.0
        %5475 = vmatprep.subr.mxu0 0.0
        %5476 = vmatpush1.msra.mxu0 0.0
        %5477 = vmatprep.subr.mxu0 0.0
        %5478 = vmatpush1.msra.mxu0 0.0
        %5479 = vmatprep.subr.mxu0 0.0
        %5480 = vmatpush1.msra.mxu0 0.0
        %5481 = vmatprep.subr.mxu0 0.0
        %5482 = vmatpush1.msra.mxu0 0.0
        %5483 = vmatprep.subr.mxu0 0.0
        %5484 = vmatpush1.msra.mxu0 0.0
        %5485 = vmatprep.subr.mxu0 0.0
        %5486 = vmatpush1.msra.mxu0 %v5464
        %5487 = vmatprep.subr.mxu0 0.0
        %5488 = vmatpush1.msra.mxu0 %v5463
        %5489 = vmatprep.subr.mxu0 0.0
        %5490 = vmatpush1.msra.mxu0 %v5462
        %5491 = vmatprep.subr.mxu0 0.0
        %5492 = vmatpush1.msra.mxu0 %v5461
        %5493 = vmatprep.subr.mxu0 0.0
        %5494 = vmatpush1.msra.mxu0 %v5460
        %5495 = vmatprep.subr.mxu0 0.0
        %5496 = vmatpush1.msra.mxu0 %v5459
        %5497 = vmatprep.subr.mxu0 0.0
        %5498 = vmatpush1.msra.mxu0 %v5458
        %5499 = vmatprep.subr.mxu0 0.0
        %5500 = vmatpush1.msra.mxu0 %v5457
        %5501 = vmatprep.subr.mxu0 0.0
        %5502 = vmatpush2.msra.mxu0 0.0
        %5503 = vmatprep.subr.mxu0 0.0
        %5504 = vmatpush2.msra.mxu0 0.0
        %5505 = vmatprep.subr.mxu0 0.0
        %5506 = vmatpush2.msra.mxu0 0.0
        %5507 = vmatprep.subr.mxu0 0.0
        %5508 = vmatpush2.msra.mxu0 0.0
        %5509 = vmatprep.subr.mxu0 0.0
        %5510 = vmatpush2.msra.mxu0 0.0
        %5511 = vmatprep.subr.mxu0 0.0
        %5512 = vmatpush2.msra.mxu0 0.0
        %5513 = vmatprep.subr.mxu0 0.0
        %5514 = vmatpush2.msra.mxu0 0.0
        %5515 = vmatprep.subr.mxu0 0.0
        %5516 = vmatpush2.msra.mxu0 0.0
        %5517 = vmatprep.subr.mxu0 0.0
        %5518 = vmatpush2.msra.mxu0 0.0
        %5519 = vmatprep.subr.mxu0 0.0
        %5520 = vmatpush2.msra.mxu0 0.0
        %5521 = vmatprep.subr.mxu0 0.0
        %5522 = vmatpush2.msra.mxu0 0.0
        %5523 = vmatprep.subr.mxu0 0.0
        %5524 = vmatpush2.msra.mxu0 0.0
        %5525 = vmatprep.subr.mxu0 0.0
        %5526 = vmatpush2.msra.mxu0 0.0
        %5527 = vmatprep.subr.mxu0 0.0
        %5528 = vmatpush2.msra.mxu0 0.0
        %5529 = vmatprep.subr.mxu0 0.0
        %5530 = vmatpush2.msra.mxu0 0.0
        %5531 = vmatprep.subr.mxu0 0.0
        %5532 = vmatpush2.msra.mxu0 0.0
        %5533 = vmatprep.mubr.f32.mxu0 0.0
        %5534 = vmatmul.mubr.f32.gmra.mxu0 %v5467
        %v5535 = vpop.f32.mrf.mxu0
        %v5536 = vadd.f32 0.0, %v5535
        %v5537 = vpop.f32.mrf.mxu0
        %5538 = vdwg.mxu0
        %v5539 = vadd.f32 %v5455, %v5536
        %s5540 = scalar_lea.vmem %s5, 64
        %v5541 = vld [vmem:[%s5540] sm:$0xff]
        %v5542 = vld [vmem:[%s5540 + $0x8] sm:$0xff]
        %v5543 = vld [vmem:[%s5540 + $0x10] sm:$0xff]
        %v5544 = vld [vmem:[%s5540 + $0x18] sm:$0xff]
        %v5545 = vld [vmem:[%s5540 + $0x20] sm:$0xff]
        %v5546 = vld [vmem:[%s5540 + $0x28] sm:$0xff]
        %v5547 = vld [vmem:[%s5540 + $0x30] sm:$0xff]
        %v5548 = vld [vmem:[%s5540 + $0x38] sm:$0xff]
        %v5549 = vrot.slane %v5456, 1
        %v5550 = vsel %vm5465, %v5549, 0
        %5552 = vmatprep.subr.mxu0 0.0
        %5553 = vmatpush1.msra.mxu0 0.0
        %5554 = vmatprep.subr.mxu0 0.0
        %5555 = vmatpush1.msra.mxu0 0.0
        %5556 = vmatprep.subr.mxu0 0.0
        %5557 = vmatpush1.msra.mxu0 0.0
        %5558 = vmatprep.subr.mxu0 0.0
        %5559 = vmatpush1.msra.mxu0 0.0
        %5560 = vmatprep.subr.mxu0 0.0
        %5561 = vmatpush1.msra.mxu0 0.0
        %5562 = vmatprep.subr.mxu0 0.0
        %5563 = vmatpush1.msra.mxu0 0.0
        %5564 = vmatprep.subr.mxu0 0.0
        %5565 = vmatpush1.msra.mxu0 0.0
        %5566 = vmatprep.subr.mxu0 0.0
        %5567 = vmatpush1.msra.mxu0 0.0
        %5568 = vmatprep.subr.mxu0 0.0
        %5569 = vmatpush1.msra.mxu0 %v5548
        %5570 = vmatprep.subr.mxu0 0.0
        %5571 = vmatpush1.msra.mxu0 %v5547
        %5572 = vmatprep.subr.mxu0 0.0
        %5573 = vmatpush1.msra.mxu0 %v5546
        %5574 = vmatprep.subr.mxu0 0.0
        %5575 = vmatpush1.msra.mxu0 %v5545
        %5576 = vmatprep.subr.mxu0 0.0
        %5577 = vmatpush1.msra.mxu0 %v5544
        %5578 = vmatprep.subr.mxu0 0.0
        %5579 = vmatpush1.msra.mxu0 %v5543
        %5580 = vmatprep.subr.mxu0 0.0
        %5581 = vmatpush1.msra.mxu0 %v5542
        %5582 = vmatprep.subr.mxu0 0.0
        %5583 = vmatpush1.msra.mxu0 %v5541
        %5584 = vmatprep.subr.mxu0 0.0
        %5585 = vmatpush2.msra.mxu0 0.0
        %5586 = vmatprep.subr.mxu0 0.0
        %5587 = vmatpush2.msra.mxu0 0.0
        %5588 = vmatprep.subr.mxu0 0.0
        %5589 = vmatpush2.msra.mxu0 0.0
        %5590 = vmatprep.subr.mxu0 0.0
        %5591 = vmatpush2.msra.mxu0 0.0
        %5592 = vmatprep.subr.mxu0 0.0
        %5593 = vmatpush2.msra.mxu0 0.0
        %5594 = vmatprep.subr.mxu0 0.0
        %5595 = vmatpush2.msra.mxu0 0.0
        %5596 = vmatprep.subr.mxu0 0.0
        %5597 = vmatpush2.msra.mxu0 0.0
        %5598 = vmatprep.subr.mxu0 0.0
        %5599 = vmatpush2.msra.mxu0 0.0
        %5600 = vmatprep.subr.mxu0 0.0
        %5601 = vmatpush2.msra.mxu0 0.0
        %5602 = vmatprep.subr.mxu0 0.0
        %5603 = vmatpush2.msra.mxu0 0.0
        %5604 = vmatprep.subr.mxu0 0.0
        %5605 = vmatpush2.msra.mxu0 0.0
        %5606 = vmatprep.subr.mxu0 0.0
        %5607 = vmatpush2.msra.mxu0 0.0
        %5608 = vmatprep.subr.mxu0 0.0
        %5609 = vmatpush2.msra.mxu0 0.0
        %5610 = vmatprep.subr.mxu0 0.0
        %5611 = vmatpush2.msra.mxu0 0.0
        %5612 = vmatprep.subr.mxu0 0.0
        %5613 = vmatpush2.msra.mxu0 0.0
        %5614 = vmatprep.subr.mxu0 0.0
        %5615 = vmatpush2.msra.mxu0 0.0
        %5616 = vmatprep.mubr.f32.mxu0 0.0
        %5617 = vmatmul.mubr.f32.gmra.mxu0 %v5550
        %v5618 = vpop.f32.mrf.mxu0
        %v5619 = vadd.f32 0.0, %v5618
        %v5620 = vpop.f32.mrf.mxu0
        %5621 = vdwg.mxu0
        %v5622 = vadd.f32 %v5539, %v5619
        %s5623 = scalar_lea.vmem %s5, 128
        %v5624 = vld [vmem:[%s5623] sm:$0xff]
        %v5625 = vld [vmem:[%s5623 + $0x8] sm:$0xff]
        %v5626 = vld [vmem:[%s5623 + $0x10] sm:$0xff]
        %v5627 = vld [vmem:[%s5623 + $0x18] sm:$0xff]
        %v5628 = vld [vmem:[%s5623 + $0x20] sm:$0xff]
        %v5629 = vld [vmem:[%s5623 + $0x28] sm:$0xff]
        %v5630 = vld [vmem:[%s5623 + $0x30] sm:$0xff]
        %v5631 = vld [vmem:[%s5623 + $0x38] sm:$0xff]
        %v5632 = vrot.slane %v5456, 2
        %v5633 = vsel %vm5465, %v5632, 0
        %5635 = vmatprep.subr.mxu0 0.0
        %5636 = vmatpush1.msra.mxu0 0.0
        %5637 = vmatprep.subr.mxu0 0.0
        %5638 = vmatpush1.msra.mxu0 0.0
        %5639 = vmatprep.subr.mxu0 0.0
        %5640 = vmatpush1.msra.mxu0 0.0
        %5641 = vmatprep.subr.mxu0 0.0
        %5642 = vmatpush1.msra.mxu0 0.0
        %5643 = vmatprep.subr.mxu0 0.0
        %5644 = vmatpush1.msra.mxu0 0.0
        %5645 = vmatprep.subr.mxu0 0.0
        %5646 = vmatpush1.msra.mxu0 0.0
        %5647 = vmatprep.subr.mxu0 0.0
        %5648 = vmatpush1.msra.mxu0 0.0
        %5649 = vmatprep.subr.mxu0 0.0
        %5650 = vmatpush1.msra.mxu0 0.0
        %5651 = vmatprep.subr.mxu0 0.0
        %5652 = vmatpush1.msra.mxu0 %v5631
        %5653 = vmatprep.subr.mxu0 0.0
        %5654 = vmatpush1.msra.mxu0 %v5630
        %5655 = vmatprep.subr.mxu0 0.0
        %5656 = vmatpush1.msra.mxu0 %v5629
        %5657 = vmatprep.subr.mxu0 0.0
        %5658 = vmatpush1.msra.mxu0 %v5628
        %5659 = vmatprep.subr.mxu0 0.0
        %5660 = vmatpush1.msra.mxu0 %v5627
        %5661 = vmatprep.subr.mxu0 0.0
        %5662 = vmatpush1.msra.mxu0 %v5626
        %5663 = vmatprep.subr.mxu0 0.0
        %5664 = vmatpush1.msra.mxu0 %v5625
        %5665 = vmatprep.subr.mxu0 0.0
        %5666 = vmatpush1.msra.mxu0 %v5624
        %5667 = vmatprep.subr.mxu0 0.0
        %5668 = vmatpush2.msra.mxu0 0.0
        %5669 = vmatprep.subr.mxu0 0.0
        %5670 = vmatpush2.msra.mxu0 0.0
        %5671 = vmatprep.subr.mxu0 0.0
        %5672 = vmatpush2.msra.mxu0 0.0
        %5673 = vmatprep.subr.mxu0 0.0
        %5674 = vmatpush2.msra.mxu0 0.0
        %5675 = vmatprep.subr.mxu0 0.0
        %5676 = vmatpush2.msra.mxu0 0.0
        %5677 = vmatprep.subr.mxu0 0.0
        %5678 = vmatpush2.msra.mxu0 0.0
        %5679 = vmatprep.subr.mxu0 0.0
        %5680 = vmatpush2.msra.mxu0 0.0
        %5681 = vmatprep.subr.mxu0 0.0
        %5682 = vmatpush2.msra.mxu0 0.0
        %5683 = vmatprep.subr.mxu0 0.0
        %5684 = vmatpush2.msra.mxu0 0.0
        %5685 = vmatprep.subr.mxu0 0.0
        %5686 = vmatpush2.msra.mxu0 0.0
        %5687 = vmatprep.subr.mxu0 0.0
        %5688 = vmatpush2.msra.mxu0 0.0
        %5689 = vmatprep.subr.mxu0 0.0
        %5690 = vmatpush2.msra.mxu0 0.0
        %5691 = vmatprep.subr.mxu0 0.0
        %5692 = vmatpush2.msra.mxu0 0.0
        %5693 = vmatprep.subr.mxu0 0.0
        %5694 = vmatpush2.msra.mxu0 0.0
        %5695 = vmatprep.subr.mxu0 0.0
        %5696 = vmatpush2.msra.mxu0 0.0
        %5697 = vmatprep.subr.mxu0 0.0
        %5698 = vmatpush2.msra.mxu0 0.0
        %5699 = vmatprep.mubr.f32.mxu0 0.0
        %5700 = vmatmul.mubr.f32.gmra.mxu0 %v5633
        %v5701 = vpop.f32.mrf.mxu0
        %v5702 = vadd.f32 0.0, %v5701
        %v5703 = vpop.f32.mrf.mxu0
        %5704 = vdwg.mxu0
        %v5705 = vadd.f32 %v5622, %v5702
        %s5706 = scalar_lea.vmem %s5, 192
        %v5707 = vld [vmem:[%s5706] sm:$0xff]
        %v5708 = vld [vmem:[%s5706 + $0x8] sm:$0xff]
        %v5709 = vld [vmem:[%s5706 + $0x10] sm:$0xff]
        %v5710 = vld [vmem:[%s5706 + $0x18] sm:$0xff]
        %v5711 = vld [vmem:[%s5706 + $0x20] sm:$0xff]
        %v5712 = vld [vmem:[%s5706 + $0x28] sm:$0xff]
        %v5713 = vld [vmem:[%s5706 + $0x30] sm:$0xff]
        %v5714 = vld [vmem:[%s5706 + $0x38] sm:$0xff]
        %v5715 = vrot.slane %v5456, 3
        %v5716 = vsel %vm5465, %v5715, 0
        %5718 = vmatprep.subr.mxu0 0.0
        %5719 = vmatpush1.msra.mxu0 0.0
        %5720 = vmatprep.subr.mxu0 0.0
        %5721 = vmatpush1.msra.mxu0 0.0
        %5722 = vmatprep.subr.mxu0 0.0
        %5723 = vmatpush1.msra.mxu0 0.0
        %5724 = vmatprep.subr.mxu0 0.0
        %5725 = vmatpush1.msra.mxu0 0.0
        %5726 = vmatprep.subr.mxu0 0.0
        %5727 = vmatpush1.msra.mxu0 0.0
        %5728 = vmatprep.subr.mxu0 0.0
        %5729 = vmatpush1.msra.mxu0 0.0
        %5730 = vmatprep.subr.mxu0 0.0
        %5731 = vmatpush1.msra.mxu0 0.0
        %5732 = vmatprep.subr.mxu0 0.0
        %5733 = vmatpush1.msra.mxu0 0.0
        %5734 = vmatprep.subr.mxu0 0.0
        %5735 = vmatpush1.msra.mxu0 %v5714
        %5736 = vmatprep.subr.mxu0 0.0
        %5737 = vmatpush1.msra.mxu0 %v5713
        %5738 = vmatprep.subr.mxu0 0.0
        %5739 = vmatpush1.msra.mxu0 %v5712
        %5740 = vmatprep.subr.mxu0 0.0
        %5741 = vmatpush1.msra.mxu0 %v5711
        %5742 = vmatprep.subr.mxu0 0.0
        %5743 = vmatpush1.msra.mxu0 %v5710
        %5744 = vmatprep.subr.mxu0 0.0
        %5745 = vmatpush1.msra.mxu0 %v5709
        %5746 = vmatprep.subr.mxu0 0.0
        %5747 = vmatpush1.msra.mxu0 %v5708
        %5748 = vmatprep.subr.mxu0 0.0
        %5749 = vmatpush1.msra.mxu0 %v5707
        %5750 = vmatprep.subr.mxu0 0.0
        %5751 = vmatpush2.msra.mxu0 0.0
        %5752 = vmatprep.subr.mxu0 0.0
        %5753 = vmatpush2.msra.mxu0 0.0
        %5754 = vmatprep.subr.mxu0 0.0
        %5755 = vmatpush2.msra.mxu0 0.0
        %5756 = vmatprep.subr.mxu0 0.0
        %5757 = vmatpush2.msra.mxu0 0.0
        %5758 = vmatprep.subr.mxu0 0.0
        %5759 = vmatpush2.msra.mxu0 0.0
        %5760 = vmatprep.subr.mxu0 0.0
        %5761 = vmatpush2.msra.mxu0 0.0
        %5762 = vmatprep.subr.mxu0 0.0
        %5763 = vmatpush2.msra.mxu0 0.0
        %5764 = vmatprep.subr.mxu0 0.0
        %5765 = vmatpush2.msra.mxu0 0.0
        %5766 = vmatprep.subr.mxu0 0.0
        %5767 = vmatpush2.msra.mxu0 0.0
        %5768 = vmatprep.subr.mxu0 0.0
        %5769 = vmatpush2.msra.mxu0 0.0
        %5770 = vmatprep.subr.mxu0 0.0
        %5771 = vmatpush2.msra.mxu0 0.0
        %5772 = vmatprep.subr.mxu0 0.0
        %5773 = vmatpush2.msra.mxu0 0.0
        %5774 = vmatprep.subr.mxu0 0.0
        %5775 = vmatpush2.msra.mxu0 0.0
        %5776 = vmatprep.subr.mxu0 0.0
        %5777 = vmatpush2.msra.mxu0 0.0
        %5778 = vmatprep.subr.mxu0 0.0
        %5779 = vmatpush2.msra.mxu0 0.0
        %5780 = vmatprep.subr.mxu0 0.0
        %5781 = vmatpush2.msra.mxu0 0.0
        %5782 = vmatprep.mubr.f32.mxu0 0.0
        %5783 = vmatmul.mubr.f32.gmra.mxu0 %v5716
        %v5784 = vpop.f32.mrf.mxu0
        %v5785 = vadd.f32 0.0, %v5784
        %v5786 = vpop.f32.mrf.mxu0
        %5787 = vdwg.mxu0
        %v5788 = vadd.f32 %v5705, %v5785
        %s5789 = scalar_lea.vmem %s5, 256
        %v5790 = vld [vmem:[%s5789] sm:$0xff]
        %v5791 = vld [vmem:[%s5789 + $0x8] sm:$0xff]
        %v5792 = vld [vmem:[%s5789 + $0x10] sm:$0xff]
        %v5793 = vld [vmem:[%s5789 + $0x18] sm:$0xff]
        %v5794 = vld [vmem:[%s5789 + $0x20] sm:$0xff]
        %v5795 = vld [vmem:[%s5789 + $0x28] sm:$0xff]
        %v5796 = vld [vmem:[%s5789 + $0x30] sm:$0xff]
        %v5797 = vld [vmem:[%s5789 + $0x38] sm:$0xff]
        %v5798 = vrot.slane %v5456, 4
        %v5799 = vsel %vm5465, %v5798, 0
        %5801 = vmatprep.subr.mxu0 0.0
        %5802 = vmatpush1.msra.mxu0 0.0
        %5803 = vmatprep.subr.mxu0 0.0
        %5804 = vmatpush1.msra.mxu0 0.0
        %5805 = vmatprep.subr.mxu0 0.0
        %5806 = vmatpush1.msra.mxu0 0.0
        %5807 = vmatprep.subr.mxu0 0.0
        %5808 = vmatpush1.msra.mxu0 0.0
        %5809 = vmatprep.subr.mxu0 0.0
        %5810 = vmatpush1.msra.mxu0 0.0
        %5811 = vmatprep.subr.mxu0 0.0
        %5812 = vmatpush1.msra.mxu0 0.0
        %5813 = vmatprep.subr.mxu0 0.0
        %5814 = vmatpush1.msra.mxu0 0.0
        %5815 = vmatprep.subr.mxu0 0.0
        %5816 = vmatpush1.msra.mxu0 0.0
        %5817 = vmatprep.subr.mxu0 0.0
        %5818 = vmatpush1.msra.mxu0 %v5797
        %5819 = vmatprep.subr.mxu0 0.0
        %5820 = vmatpush1.msra.mxu0 %v5796
        %5821 = vmatprep.subr.mxu0 0.0
        %5822 = vmatpush1.msra.mxu0 %v5795
        %5823 = vmatprep.subr.mxu0 0.0
        %5824 = vmatpush1.msra.mxu0 %v5794
        %5825 = vmatprep.subr.mxu0 0.0
        %5826 = vmatpush1.msra.mxu0 %v5793
        %5827 = vmatprep.subr.mxu0 0.0
        %5828 = vmatpush1.msra.mxu0 %v5792
        %5829 = vmatprep.subr.mxu0 0.0
        %5830 = vmatpush1.msra.mxu0 %v5791
        %5831 = vmatprep.subr.mxu0 0.0
        %5832 = vmatpush1.msra.mxu0 %v5790
        %5833 = vmatprep.subr.mxu0 0.0
        %5834 = vmatpush2.msra.mxu0 0.0
        %5835 = vmatprep.subr.mxu0 0.0
        %5836 = vmatpush2.msra.mxu0 0.0
        %5837 = vmatprep.subr.mxu0 0.0
        %5838 = vmatpush2.msra.mxu0 0.0
        %5839 = vmatprep.subr.mxu0 0.0
        %5840 = vmatpush2.msra.mxu0 0.0
        %5841 = vmatprep.subr.mxu0 0.0
        %5842 = vmatpush2.msra.mxu0 0.0
        %5843 = vmatprep.subr.mxu0 0.0
        %5844 = vmatpush2.msra.mxu0 0.0
        %5845 = vmatprep.subr.mxu0 0.0
        %5846 = vmatpush2.msra.mxu0 0.0
        %5847 = vmatprep.subr.mxu0 0.0
        %5848 = vmatpush2.msra.mxu0 0.0
        %5849 = vmatprep.subr.mxu0 0.0
        %5850 = vmatpush2.msra.mxu0 0.0
        %5851 = vmatprep.subr.mxu0 0.0
        %5852 = vmatpush2.msra.mxu0 0.0
        %5853 = vmatprep.subr.mxu0 0.0
        %5854 = vmatpush2.msra.mxu0 0.0
        %5855 = vmatprep.subr.mxu0 0.0
        %5856 = vmatpush2.msra.mxu0 0.0
        %5857 = vmatprep.subr.mxu0 0.0
        %5858 = vmatpush2.msra.mxu0 0.0
        %5859 = vmatprep.subr.mxu0 0.0
        %5860 = vmatpush2.msra.mxu0 0.0
        %5861 = vmatprep.subr.mxu0 0.0
        %5862 = vmatpush2.msra.mxu0 0.0
        %5863 = vmatprep.subr.mxu0 0.0
        %5864 = vmatpush2.msra.mxu0 0.0
        %5865 = vmatprep.mubr.f32.mxu0 0.0
        %5866 = vmatmul.mubr.f32.gmra.mxu0 %v5799
        %v5867 = vpop.f32.mrf.mxu0
        %v5868 = vadd.f32 0.0, %v5867
        %v5869 = vpop.f32.mrf.mxu0
        %5870 = vdwg.mxu0
        %v5871 = vadd.f32 %v5788, %v5868
        %s5872 = scalar_lea.vmem %s5, 320
        %v5873 = vld [vmem:[%s5872] sm:$0xff]
        %v5874 = vld [vmem:[%s5872 + $0x8] sm:$0xff]
        %v5875 = vld [vmem:[%s5872 + $0x10] sm:$0xff]
        %v5876 = vld [vmem:[%s5872 + $0x18] sm:$0xff]
        %v5877 = vld [vmem:[%s5872 + $0x20] sm:$0xff]
        %v5878 = vld [vmem:[%s5872 + $0x28] sm:$0xff]
        %v5879 = vld [vmem:[%s5872 + $0x30] sm:$0xff]
        %v5880 = vld [vmem:[%s5872 + $0x38] sm:$0xff]
        %v5881 = vrot.slane %v5456, 5
        %v5882 = vsel %vm5465, %v5881, 0
        %5884 = vmatprep.subr.mxu0 0.0
        %5885 = vmatpush1.msra.mxu0 0.0
        %5886 = vmatprep.subr.mxu0 0.0
        %5887 = vmatpush1.msra.mxu0 0.0
        %5888 = vmatprep.subr.mxu0 0.0
        %5889 = vmatpush1.msra.mxu0 0.0
        %5890 = vmatprep.subr.mxu0 0.0
        %5891 = vmatpush1.msra.mxu0 0.0
        %5892 = vmatprep.subr.mxu0 0.0
        %5893 = vmatpush1.msra.mxu0 0.0
        %5894 = vmatprep.subr.mxu0 0.0
        %5895 = vmatpush1.msra.mxu0 0.0
        %5896 = vmatprep.subr.mxu0 0.0
        %5897 = vmatpush1.msra.mxu0 0.0
        %5898 = vmatprep.subr.mxu0 0.0
        %5899 = vmatpush1.msra.mxu0 0.0
        %5900 = vmatprep.subr.mxu0 0.0
        %5901 = vmatpush1.msra.mxu0 %v5880
        %5902 = vmatprep.subr.mxu0 0.0
        %5903 = vmatpush1.msra.mxu0 %v5879
        %5904 = vmatprep.subr.mxu0 0.0
        %5905 = vmatpush1.msra.mxu0 %v5878
        %5906 = vmatprep.subr.mxu0 0.0
        %5907 = vmatpush1.msra.mxu0 %v5877
        %5908 = vmatprep.subr.mxu0 0.0
        %5909 = vmatpush1.msra.mxu0 %v5876
        %5910 = vmatprep.subr.mxu0 0.0
        %5911 = vmatpush1.msra.mxu0 %v5875
        %5912 = vmatprep.subr.mxu0 0.0
        %5913 = vmatpush1.msra.mxu0 %v5874
        %5914 = vmatprep.subr.mxu0 0.0
        %5915 = vmatpush1.msra.mxu0 %v5873
        %5916 = vmatprep.subr.mxu0 0.0
        %5917 = vmatpush2.msra.mxu0 0.0
        %5918 = vmatprep.subr.mxu0 0.0
        %5919 = vmatpush2.msra.mxu0 0.0
        %5920 = vmatprep.subr.mxu0 0.0
        %5921 = vmatpush2.msra.mxu0 0.0
        %5922 = vmatprep.subr.mxu0 0.0
        %5923 = vmatpush2.msra.mxu0 0.0
        %5924 = vmatprep.subr.mxu0 0.0
        %5925 = vmatpush2.msra.mxu0 0.0
        %5926 = vmatprep.subr.mxu0 0.0
        %5927 = vmatpush2.msra.mxu0 0.0
        %5928 = vmatprep.subr.mxu0 0.0
        %5929 = vmatpush2.msra.mxu0 0.0
        %5930 = vmatprep.subr.mxu0 0.0
        %5931 = vmatpush2.msra.mxu0 0.0
        %5932 = vmatprep.subr.mxu0 0.0
        %5933 = vmatpush2.msra.mxu0 0.0
        %5934 = vmatprep.subr.mxu0 0.0
        %5935 = vmatpush2.msra.mxu0 0.0
        %5936 = vmatprep.subr.mxu0 0.0
        %5937 = vmatpush2.msra.mxu0 0.0
        %5938 = vmatprep.subr.mxu0 0.0
        %5939 = vmatpush2.msra.mxu0 0.0
        %5940 = vmatprep.subr.mxu0 0.0
        %5941 = vmatpush2.msra.mxu0 0.0
        %5942 = vmatprep.subr.mxu0 0.0
        %5943 = vmatpush2.msra.mxu0 0.0
        %5944 = vmatprep.subr.mxu0 0.0
        %5945 = vmatpush2.msra.mxu0 0.0
        %5946 = vmatprep.subr.mxu0 0.0
        %5947 = vmatpush2.msra.mxu0 0.0
        %5948 = vmatprep.mubr.f32.mxu0 0.0
        %5949 = vmatmul.mubr.f32.gmra.mxu0 %v5882
        %v5950 = vpop.f32.mrf.mxu0
        %v5951 = vadd.f32 0.0, %v5950
        %v5952 = vpop.f32.mrf.mxu0
        %5953 = vdwg.mxu0
        %v5954 = vadd.f32 %v5871, %v5951
        %s5955 = scalar_lea.vmem %s5, 384
        %v5956 = vld [vmem:[%s5955] sm:$0xff]
        %v5957 = vld [vmem:[%s5955 + $0x8] sm:$0xff]
        %v5958 = vld [vmem:[%s5955 + $0x10] sm:$0xff]
        %v5959 = vld [vmem:[%s5955 + $0x18] sm:$0xff]
        %v5960 = vld [vmem:[%s5955 + $0x20] sm:$0xff]
        %v5961 = vld [vmem:[%s5955 + $0x28] sm:$0xff]
        %v5962 = vld [vmem:[%s5955 + $0x30] sm:$0xff]
        %v5963 = vld [vmem:[%s5955 + $0x38] sm:$0xff]
        %v5964 = vrot.slane %v5456, 6
        %v5965 = vsel %vm5465, %v5964, 0
        %5967 = vmatprep.subr.mxu0 0.0
        %5968 = vmatpush1.msra.mxu0 0.0
        %5969 = vmatprep.subr.mxu0 0.0
        %5970 = vmatpush1.msra.mxu0 0.0
        %5971 = vmatprep.subr.mxu0 0.0
        %5972 = vmatpush1.msra.mxu0 0.0
        %5973 = vmatprep.subr.mxu0 0.0
        %5974 = vmatpush1.msra.mxu0 0.0
        %5975 = vmatprep.subr.mxu0 0.0
        %5976 = vmatpush1.msra.mxu0 0.0
        %5977 = vmatprep.subr.mxu0 0.0
        %5978 = vmatpush1.msra.mxu0 0.0
        %5979 = vmatprep.subr.mxu0 0.0
        %5980 = vmatpush1.msra.mxu0 0.0
        %5981 = vmatprep.subr.mxu0 0.0
        %5982 = vmatpush1.msra.mxu0 0.0
        %5983 = vmatprep.subr.mxu0 0.0
        %5984 = vmatpush1.msra.mxu0 %v5963
        %5985 = vmatprep.subr.mxu0 0.0
        %5986 = vmatpush1.msra.mxu0 %v5962
        %5987 = vmatprep.subr.mxu0 0.0
        %5988 = vmatpush1.msra.mxu0 %v5961
        %5989 = vmatprep.subr.mxu0 0.0
        %5990 = vmatpush1.msra.mxu0 %v5960
        %5991 = vmatprep.subr.mxu0 0.0
        %5992 = vmatpush1.msra.mxu0 %v5959
        %5993 = vmatprep.subr.mxu0 0.0
        %5994 = vmatpush1.msra.mxu0 %v5958
        %5995 = vmatprep.subr.mxu0 0.0
        %5996 = vmatpush1.msra.mxu0 %v5957
        %5997 = vmatprep.subr.mxu0 0.0
        %5998 = vmatpush1.msra.mxu0 %v5956
        %5999 = vmatprep.subr.mxu0 0.0
        %6000 = vmatpush2.msra.mxu0 0.0
        %6001 = vmatprep.subr.mxu0 0.0
        %6002 = vmatpush2.msra.mxu0 0.0
        %6003 = vmatprep.subr.mxu0 0.0
        %6004 = vmatpush2.msra.mxu0 0.0
        %6005 = vmatprep.subr.mxu0 0.0
        %6006 = vmatpush2.msra.mxu0 0.0
        %6007 = vmatprep.subr.mxu0 0.0
        %6008 = vmatpush2.msra.mxu0 0.0
        %6009 = vmatprep.subr.mxu0 0.0
        %6010 = vmatpush2.msra.mxu0 0.0
        %6011 = vmatprep.subr.mxu0 0.0
        %6012 = vmatpush2.msra.mxu0 0.0
        %6013 = vmatprep.subr.mxu0 0.0
        %6014 = vmatpush2.msra.mxu0 0.0
        %6015 = vmatprep.subr.mxu0 0.0
        %6016 = vmatpush2.msra.mxu0 0.0
        %6017 = vmatprep.subr.mxu0 0.0
        %6018 = vmatpush2.msra.mxu0 0.0
        %6019 = vmatprep.subr.mxu0 0.0
        %6020 = vmatpush2.msra.mxu0 0.0
        %6021 = vmatprep.subr.mxu0 0.0
        %6022 = vmatpush2.msra.mxu0 0.0
        %6023 = vmatprep.subr.mxu0 0.0
        %6024 = vmatpush2.msra.mxu0 0.0
        %6025 = vmatprep.subr.mxu0 0.0
        %6026 = vmatpush2.msra.mxu0 0.0
        %6027 = vmatprep.subr.mxu0 0.0
        %6028 = vmatpush2.msra.mxu0 0.0
        %6029 = vmatprep.subr.mxu0 0.0
        %6030 = vmatpush2.msra.mxu0 0.0
        %6031 = vmatprep.mubr.f32.mxu0 0.0
        %6032 = vmatmul.mubr.f32.gmra.mxu0 %v5965
        %v6033 = vpop.f32.mrf.mxu0
        %v6034 = vadd.f32 0.0, %v6033
        %v6035 = vpop.f32.mrf.mxu0
        %6036 = vdwg.mxu0
        %v6037 = vadd.f32 %v5954, %v6034
        %v6038 = vmax.f32 %v5443, %v5444
        %s6039 = scalar_lea.vmem %s5, 448
        %v6040 = vld [vmem:[%s6039] sm:$0xff]
        %v6041 = vld [vmem:[%s6039 + $0x8] sm:$0xff]
        %v6042 = vld [vmem:[%s6039 + $0x10] sm:$0xff]
        %v6043 = vld [vmem:[%s6039 + $0x18] sm:$0xff]
        %v6044 = vld [vmem:[%s6039 + $0x20] sm:$0xff]
        %v6045 = vld [vmem:[%s6039 + $0x28] sm:$0xff]
        %v6046 = vld [vmem:[%s6039 + $0x30] sm:$0xff]
        %v6047 = vld [vmem:[%s6039 + $0x38] sm:$0xff]
        %v6049 = vsel %vm5465, %v6038, 0
        %6051 = vmatprep.subr.mxu0 0.0
        %6052 = vmatpush1.msra.mxu0 0.0
        %6053 = vmatprep.subr.mxu0 0.0
        %6054 = vmatpush1.msra.mxu0 0.0
        %6055 = vmatprep.subr.mxu0 0.0
        %6056 = vmatpush1.msra.mxu0 0.0
        %6057 = vmatprep.subr.mxu0 0.0
        %6058 = vmatpush1.msra.mxu0 0.0
        %6059 = vmatprep.subr.mxu0 0.0
        %6060 = vmatpush1.msra.mxu0 0.0
        %6061 = vmatprep.subr.mxu0 0.0
        %6062 = vmatpush1.msra.mxu0 0.0
        %6063 = vmatprep.subr.mxu0 0.0
        %6064 = vmatpush1.msra.mxu0 0.0
        %6065 = vmatprep.subr.mxu0 0.0
        %6066 = vmatpush1.msra.mxu0 0.0
        %6067 = vmatprep.subr.mxu0 0.0
        %6068 = vmatpush1.msra.mxu0 %v6047
        %6069 = vmatprep.subr.mxu0 0.0
        %6070 = vmatpush1.msra.mxu0 %v6046
        %6071 = vmatprep.subr.mxu0 0.0
        %6072 = vmatpush1.msra.mxu0 %v6045
        %6073 = vmatprep.subr.mxu0 0.0
        %6074 = vmatpush1.msra.mxu0 %v6044
        %6075 = vmatprep.subr.mxu0 0.0
        %6076 = vmatpush1.msra.mxu0 %v6043
        %6077 = vmatprep.subr.mxu0 0.0
        %6078 = vmatpush1.msra.mxu0 %v6042
        %6079 = vmatprep.subr.mxu0 0.0
        %6080 = vmatpush1.msra.mxu0 %v6041
        %6081 = vmatprep.subr.mxu0 0.0
        %6082 = vmatpush1.msra.mxu0 %v6040
        %6083 = vmatprep.subr.mxu0 0.0
        %6084 = vmatpush2.msra.mxu0 0.0
        %6085 = vmatprep.subr.mxu0 0.0
        %6086 = vmatpush2.msra.mxu0 0.0
        %6087 = vmatprep.subr.mxu0 0.0
        %6088 = vmatpush2.msra.mxu0 0.0
        %6089 = vmatprep.subr.mxu0 0.0
        %6090 = vmatpush2.msra.mxu0 0.0
        %6091 = vmatprep.subr.mxu0 0.0
        %6092 = vmatpush2.msra.mxu0 0.0
        %6093 = vmatprep.subr.mxu0 0.0
        %6094 = vmatpush2.msra.mxu0 0.0
        %6095 = vmatprep.subr.mxu0 0.0
        %6096 = vmatpush2.msra.mxu0 0.0
        %6097 = vmatprep.subr.mxu0 0.0
        %6098 = vmatpush2.msra.mxu0 0.0
        %6099 = vmatprep.subr.mxu0 0.0
        %6100 = vmatpush2.msra.mxu0 0.0
        %6101 = vmatprep.subr.mxu0 0.0
        %6102 = vmatpush2.msra.mxu0 0.0
        %6103 = vmatprep.subr.mxu0 0.0
        %6104 = vmatpush2.msra.mxu0 0.0
        %6105 = vmatprep.subr.mxu0 0.0
        %6106 = vmatpush2.msra.mxu0 0.0
        %6107 = vmatprep.subr.mxu0 0.0
        %6108 = vmatpush2.msra.mxu0 0.0
        %6109 = vmatprep.subr.mxu0 0.0
        %6110 = vmatpush2.msra.mxu0 0.0
        %6111 = vmatprep.subr.mxu0 0.0
        %6112 = vmatpush2.msra.mxu0 0.0
        %6113 = vmatprep.subr.mxu0 0.0
        %6114 = vmatpush2.msra.mxu0 0.0
        %6115 = vmatprep.mubr.f32.mxu0 0.0
        %6116 = vmatmul.mubr.f32.gmra.mxu0 %v6049
        %v6117 = vpop.f32.mrf.mxu0
        %v6118 = vadd.f32 0.0, %v6117
        %v6119 = vpop.f32.mrf.mxu0
        %6120 = vdwg.mxu0
        %v6121 = vadd.f32 %v6037, %v6118
        %s6122 = scalar_lea.vmem %s5, 512
        %v6123 = vld [vmem:[%s6122] sm:$0xff]
        %v6124 = vld [vmem:[%s6122 + $0x8] sm:$0xff]
        %v6125 = vld [vmem:[%s6122 + $0x10] sm:$0xff]
        %v6126 = vld [vmem:[%s6122 + $0x18] sm:$0xff]
        %v6127 = vld [vmem:[%s6122 + $0x20] sm:$0xff]
        %v6128 = vld [vmem:[%s6122 + $0x28] sm:$0xff]
        %v6129 = vld [vmem:[%s6122 + $0x30] sm:$0xff]
        %v6130 = vld [vmem:[%s6122 + $0x38] sm:$0xff]
        %v6131 = vrot.slane %v6038, 1
        %v6132 = vsel %vm5465, %v6131, 0
        %6134 = vmatprep.subr.mxu0 0.0
        %6135 = vmatpush1.msra.mxu0 0.0
        %6136 = vmatprep.subr.mxu0 0.0
        %6137 = vmatpush1.msra.mxu0 0.0
        %6138 = vmatprep.subr.mxu0 0.0
        %6139 = vmatpush1.msra.mxu0 0.0
        %6140 = vmatprep.subr.mxu0 0.0
        %6141 = vmatpush1.msra.mxu0 0.0
        %6142 = vmatprep.subr.mxu0 0.0
        %6143 = vmatpush1.msra.mxu0 0.0
        %6144 = vmatprep.subr.mxu0 0.0
        %6145 = vmatpush1.msra.mxu0 0.0
        %6146 = vmatprep.subr.mxu0 0.0
        %6147 = vmatpush1.msra.mxu0 0.0
        %6148 = vmatprep.subr.mxu0 0.0
        %6149 = vmatpush1.msra.mxu0 0.0
        %6150 = vmatprep.subr.mxu0 0.0
        %6151 = vmatpush1.msra.mxu0 %v6130
        %6152 = vmatprep.subr.mxu0 0.0
        %6153 = vmatpush1.msra.mxu0 %v6129
        %6154 = vmatprep.subr.mxu0 0.0
        %6155 = vmatpush1.msra.mxu0 %v6128
        %6156 = vmatprep.subr.mxu0 0.0
        %6157 = vmatpush1.msra.mxu0 %v6127
        %6158 = vmatprep.subr.mxu0 0.0
        %6159 = vmatpush1.msra.mxu0 %v6126
        %6160 = vmatprep.subr.mxu0 0.0
        %6161 = vmatpush1.msra.mxu0 %v6125
        %6162 = vmatprep.subr.mxu0 0.0
        %6163 = vmatpush1.msra.mxu0 %v6124
        %6164 = vmatprep.subr.mxu0 0.0
        %6165 = vmatpush1.msra.mxu0 %v6123
        %6166 = vmatprep.subr.mxu0 0.0
        %6167 = vmatpush2.msra.mxu0 0.0
        %6168 = vmatprep.subr.mxu0 0.0
        %6169 = vmatpush2.msra.mxu0 0.0
        %6170 = vmatprep.subr.mxu0 0.0
        %6171 = vmatpush2.msra.mxu0 0.0
        %6172 = vmatprep.subr.mxu0 0.0
        %6173 = vmatpush2.msra.mxu0 0.0
        %6174 = vmatprep.subr.mxu0 0.0
        %6175 = vmatpush2.msra.mxu0 0.0
        %6176 = vmatprep.subr.mxu0 0.0
        %6177 = vmatpush2.msra.mxu0 0.0
        %6178 = vmatprep.subr.mxu0 0.0
        %6179 = vmatpush2.msra.mxu0 0.0
        %6180 = vmatprep.subr.mxu0 0.0
        %6181 = vmatpush2.msra.mxu0 0.0
        %6182 = vmatprep.subr.mxu0 0.0
        %6183 = vmatpush2.msra.mxu0 0.0
        %6184 = vmatprep.subr.mxu0 0.0
        %6185 = vmatpush2.msra.mxu0 0.0
        %6186 = vmatprep.subr.mxu0 0.0
        %6187 = vmatpush2.msra.mxu0 0.0
        %6188 = vmatprep.subr.mxu0 0.0
        %6189 = vmatpush2.msra.mxu0 0.0
        %6190 = vmatprep.subr.mxu0 0.0
        %6191 = vmatpush2.msra.mxu0 0.0
        %6192 = vmatprep.subr.mxu0 0.0
        %6193 = vmatpush2.msra.mxu0 0.0
        %6194 = vmatprep.subr.mxu0 0.0
        %6195 = vmatpush2.msra.mxu0 0.0
        %6196 = vmatprep.subr.mxu0 0.0
        %6197 = vmatpush2.msra.mxu0 0.0
        %6198 = vmatprep.mubr.f32.mxu0 0.0
        %6199 = vmatmul.mubr.f32.gmra.mxu0 %v6132
        %v6200 = vpop.f32.mrf.mxu0
        %v6201 = vadd.f32 0.0, %v6200
        %v6202 = vpop.f32.mrf.mxu0
        %6203 = vdwg.mxu0
        %v6204 = vadd.f32 %v6121, %v6201
        %s6205 = scalar_lea.vmem %s5, 576
        %v6206 = vld [vmem:[%s6205] sm:$0xff]
        %v6207 = vld [vmem:[%s6205 + $0x8] sm:$0xff]
        %v6208 = vld [vmem:[%s6205 + $0x10] sm:$0xff]
        %v6209 = vld [vmem:[%s6205 + $0x18] sm:$0xff]
        %v6210 = vld [vmem:[%s6205 + $0x20] sm:$0xff]
        %v6211 = vld [vmem:[%s6205 + $0x28] sm:$0xff]
        %v6212 = vld [vmem:[%s6205 + $0x30] sm:$0xff]
        %v6213 = vld [vmem:[%s6205 + $0x38] sm:$0xff]
        %v6214 = vrot.slane %v6038, 2
        %v6215 = vsel %vm5465, %v6214, 0
        %6217 = vmatprep.subr.mxu0 0.0
        %6218 = vmatpush1.msra.mxu0 0.0
        %6219 = vmatprep.subr.mxu0 0.0
        %6220 = vmatpush1.msra.mxu0 0.0
        %6221 = vmatprep.subr.mxu0 0.0
        %6222 = vmatpush1.msra.mxu0 0.0
        %6223 = vmatprep.subr.mxu0 0.0
        %6224 = vmatpush1.msra.mxu0 0.0
        %6225 = vmatprep.subr.mxu0 0.0
        %6226 = vmatpush1.msra.mxu0 0.0
        %6227 = vmatprep.subr.mxu0 0.0
        %6228 = vmatpush1.msra.mxu0 0.0
        %6229 = vmatprep.subr.mxu0 0.0
        %6230 = vmatpush1.msra.mxu0 0.0
        %6231 = vmatprep.subr.mxu0 0.0
        %6232 = vmatpush1.msra.mxu0 0.0
        %6233 = vmatprep.subr.mxu0 0.0
        %6234 = vmatpush1.msra.mxu0 %v6213
        %6235 = vmatprep.subr.mxu0 0.0
        %6236 = vmatpush1.msra.mxu0 %v6212
        %6237 = vmatprep.subr.mxu0 0.0
        %6238 = vmatpush1.msra.mxu0 %v6211
        %6239 = vmatprep.subr.mxu0 0.0
        %6240 = vmatpush1.msra.mxu0 %v6210
        %6241 = vmatprep.subr.mxu0 0.0
        %6242 = vmatpush1.msra.mxu0 %v6209
        %6243 = vmatprep.subr.mxu0 0.0
        %6244 = vmatpush1.msra.mxu0 %v6208
        %6245 = vmatprep.subr.mxu0 0.0
        %6246 = vmatpush1.msra.mxu0 %v6207
        %6247 = vmatprep.subr.mxu0 0.0
        %6248 = vmatpush1.msra.mxu0 %v6206
        %6249 = vmatprep.subr.mxu0 0.0
        %6250 = vmatpush2.msra.mxu0 0.0
        %6251 = vmatprep.subr.mxu0 0.0
        %6252 = vmatpush2.msra.mxu0 0.0
        %6253 = vmatprep.subr.mxu0 0.0
        %6254 = vmatpush2.msra.mxu0 0.0
        %6255 = vmatprep.subr.mxu0 0.0
        %6256 = vmatpush2.msra.mxu0 0.0
        %6257 = vmatprep.subr.mxu0 0.0
        %6258 = vmatpush2.msra.mxu0 0.0
        %6259 = vmatprep.subr.mxu0 0.0
        %6260 = vmatpush2.msra.mxu0 0.0
        %6261 = vmatprep.subr.mxu0 0.0
        %6262 = vmatpush2.msra.mxu0 0.0
        %6263 = vmatprep.subr.mxu0 0.0
        %6264 = vmatpush2.msra.mxu0 0.0
        %6265 = vmatprep.subr.mxu0 0.0
        %6266 = vmatpush2.msra.mxu0 0.0
        %6267 = vmatprep.subr.mxu0 0.0
        %6268 = vmatpush2.msra.mxu0 0.0
        %6269 = vmatprep.subr.mxu0 0.0
        %6270 = vmatpush2.msra.mxu0 0.0
        %6271 = vmatprep.subr.mxu0 0.0
        %6272 = vmatpush2.msra.mxu0 0.0
        %6273 = vmatprep.subr.mxu0 0.0
        %6274 = vmatpush2.msra.mxu0 0.0
        %6275 = vmatprep.subr.mxu0 0.0
        %6276 = vmatpush2.msra.mxu0 0.0
        %6277 = vmatprep.subr.mxu0 0.0
        %6278 = vmatpush2.msra.mxu0 0.0
        %6279 = vmatprep.subr.mxu0 0.0
        %6280 = vmatpush2.msra.mxu0 0.0
        %6281 = vmatprep.mubr.f32.mxu0 0.0
        %6282 = vmatmul.mubr.f32.gmra.mxu0 %v6215
        %v6283 = vpop.f32.mrf.mxu0
        %v6284 = vadd.f32 0.0, %v6283
        %v6285 = vpop.f32.mrf.mxu0
        %6286 = vdwg.mxu0
        %v6287 = vadd.f32 %v6204, %v6284
        %s6288 = scalar_lea.vmem %s5, 640
        %v6289 = vld [vmem:[%s6288] sm:$0xff]
        %v6290 = vld [vmem:[%s6288 + $0x8] sm:$0xff]
        %v6291 = vld [vmem:[%s6288 + $0x10] sm:$0xff]
        %v6292 = vld [vmem:[%s6288 + $0x18] sm:$0xff]
        %v6293 = vld [vmem:[%s6288 + $0x20] sm:$0xff]
        %v6294 = vld [vmem:[%s6288 + $0x28] sm:$0xff]
        %v6295 = vld [vmem:[%s6288 + $0x30] sm:$0xff]
        %v6296 = vld [vmem:[%s6288 + $0x38] sm:$0xff]
        %v6297 = vrot.slane %v6038, 3
        %v6298 = vsel %vm5465, %v6297, 0
        %6300 = vmatprep.subr.mxu0 0.0
        %6301 = vmatpush1.msra.mxu0 0.0
        %6302 = vmatprep.subr.mxu0 0.0
        %6303 = vmatpush1.msra.mxu0 0.0
        %6304 = vmatprep.subr.mxu0 0.0
        %6305 = vmatpush1.msra.mxu0 0.0
        %6306 = vmatprep.subr.mxu0 0.0
        %6307 = vmatpush1.msra.mxu0 0.0
        %6308 = vmatprep.subr.mxu0 0.0
        %6309 = vmatpush1.msra.mxu0 0.0
        %6310 = vmatprep.subr.mxu0 0.0
        %6311 = vmatpush1.msra.mxu0 0.0
        %6312 = vmatprep.subr.mxu0 0.0
        %6313 = vmatpush1.msra.mxu0 0.0
        %6314 = vmatprep.subr.mxu0 0.0
        %6315 = vmatpush1.msra.mxu0 0.0
        %6316 = vmatprep.subr.mxu0 0.0
        %6317 = vmatpush1.msra.mxu0 %v6296
        %6318 = vmatprep.subr.mxu0 0.0
        %6319 = vmatpush1.msra.mxu0 %v6295
        %6320 = vmatprep.subr.mxu0 0.0
        %6321 = vmatpush1.msra.mxu0 %v6294
        %6322 = vmatprep.subr.mxu0 0.0
        %6323 = vmatpush1.msra.mxu0 %v6293
        %6324 = vmatprep.subr.mxu0 0.0
        %6325 = vmatpush1.msra.mxu0 %v6292
        %6326 = vmatprep.subr.mxu0 0.0
        %6327 = vmatpush1.msra.mxu0 %v6291
        %6328 = vmatprep.subr.mxu0 0.0
        %6329 = vmatpush1.msra.mxu0 %v6290
        %6330 = vmatprep.subr.mxu0 0.0
        %6331 = vmatpush1.msra.mxu0 %v6289
        %6332 = vmatprep.subr.mxu0 0.0
        %6333 = vmatpush2.msra.mxu0 0.0
        %6334 = vmatprep.subr.mxu0 0.0
        %6335 = vmatpush2.msra.mxu0 0.0
        %6336 = vmatprep.subr.mxu0 0.0
        %6337 = vmatpush2.msra.mxu0 0.0
        %6338 = vmatprep.subr.mxu0 0.0
        %6339 = vmatpush2.msra.mxu0 0.0
        %6340 = vmatprep.subr.mxu0 0.0
        %6341 = vmatpush2.msra.mxu0 0.0
        %6342 = vmatprep.subr.mxu0 0.0
        %6343 = vmatpush2.msra.mxu0 0.0
        %6344 = vmatprep.subr.mxu0 0.0
        %6345 = vmatpush2.msra.mxu0 0.0
        %6346 = vmatprep.subr.mxu0 0.0
        %6347 = vmatpush2.msra.mxu0 0.0
        %6348 = vmatprep.subr.mxu0 0.0
        %6349 = vmatpush2.msra.mxu0 0.0
        %6350 = vmatprep.subr.mxu0 0.0
        %6351 = vmatpush2.msra.mxu0 0.0
        %6352 = vmatprep.subr.mxu0 0.0
        %6353 = vmatpush2.msra.mxu0 0.0
        %6354 = vmatprep.subr.mxu0 0.0
        %6355 = vmatpush2.msra.mxu0 0.0
        %6356 = vmatprep.subr.mxu0 0.0
        %6357 = vmatpush2.msra.mxu0 0.0
        %6358 = vmatprep.subr.mxu0 0.0
        %6359 = vmatpush2.msra.mxu0 0.0
        %6360 = vmatprep.subr.mxu0 0.0
        %6361 = vmatpush2.msra.mxu0 0.0
        %6362 = vmatprep.subr.mxu0 0.0
        %6363 = vmatpush2.msra.mxu0 0.0
        %6364 = vmatprep.mubr.f32.mxu0 0.0
        %6365 = vmatmul.mubr.f32.gmra.mxu0 %v6298
        %v6366 = vpop.f32.mrf.mxu0
        %v6367 = vadd.f32 0.0, %v6366
        %v6368 = vpop.f32.mrf.mxu0
        %6369 = vdwg.mxu0
        %v6370 = vadd.f32 %v6287, %v6367
        %s6371 = scalar_lea.vmem %s5, 704
        %v6372 = vld [vmem:[%s6371] sm:$0xff]
        %v6373 = vld [vmem:[%s6371 + $0x8] sm:$0xff]
        %v6374 = vld [vmem:[%s6371 + $0x10] sm:$0xff]
        %v6375 = vld [vmem:[%s6371 + $0x18] sm:$0xff]
        %v6376 = vld [vmem:[%s6371 + $0x20] sm:$0xff]
        %v6377 = vld [vmem:[%s6371 + $0x28] sm:$0xff]
        %v6378 = vld [vmem:[%s6371 + $0x30] sm:$0xff]
        %v6379 = vld [vmem:[%s6371 + $0x38] sm:$0xff]
        %v6380 = vrot.slane %v6038, 4
        %v6381 = vsel %vm5465, %v6380, 0
        %6383 = vmatprep.subr.mxu0 0.0
        %6384 = vmatpush1.msra.mxu0 0.0
        %6385 = vmatprep.subr.mxu0 0.0
        %6386 = vmatpush1.msra.mxu0 0.0
        %6387 = vmatprep.subr.mxu0 0.0
        %6388 = vmatpush1.msra.mxu0 0.0
        %6389 = vmatprep.subr.mxu0 0.0
        %6390 = vmatpush1.msra.mxu0 0.0
        %6391 = vmatprep.subr.mxu0 0.0
        %6392 = vmatpush1.msra.mxu0 0.0
        %6393 = vmatprep.subr.mxu0 0.0
        %6394 = vmatpush1.msra.mxu0 0.0
        %6395 = vmatprep.subr.mxu0 0.0
        %6396 = vmatpush1.msra.mxu0 0.0
        %6397 = vmatprep.subr.mxu0 0.0
        %6398 = vmatpush1.msra.mxu0 0.0
        %6399 = vmatprep.subr.mxu0 0.0
        %6400 = vmatpush1.msra.mxu0 %v6379
        %6401 = vmatprep.subr.mxu0 0.0
        %6402 = vmatpush1.msra.mxu0 %v6378
        %6403 = vmatprep.subr.mxu0 0.0
        %6404 = vmatpush1.msra.mxu0 %v6377
        %6405 = vmatprep.subr.mxu0 0.0
        %6406 = vmatpush1.msra.mxu0 %v6376
        %6407 = vmatprep.subr.mxu0 0.0
        %6408 = vmatpush1.msra.mxu0 %v6375
        %6409 = vmatprep.subr.mxu0 0.0
        %6410 = vmatpush1.msra.mxu0 %v6374
        %6411 = vmatprep.subr.mxu0 0.0
        %6412 = vmatpush1.msra.mxu0 %v6373
        %6413 = vmatprep.subr.mxu0 0.0
        %6414 = vmatpush1.msra.mxu0 %v6372
        %6415 = vmatprep.subr.mxu0 0.0
        %6416 = vmatpush2.msra.mxu0 0.0
        %6417 = vmatprep.subr.mxu0 0.0
        %6418 = vmatpush2.msra.mxu0 0.0
        %6419 = vmatprep.subr.mxu0 0.0
        %6420 = vmatpush2.msra.mxu0 0.0
        %6421 = vmatprep.subr.mxu0 0.0
        %6422 = vmatpush2.msra.mxu0 0.0
        %6423 = vmatprep.subr.mxu0 0.0
        %6424 = vmatpush2.msra.mxu0 0.0
        %6425 = vmatprep.subr.mxu0 0.0
        %6426 = vmatpush2.msra.mxu0 0.0
        %6427 = vmatprep.subr.mxu0 0.0
        %6428 = vmatpush2.msra.mxu0 0.0
        %6429 = vmatprep.subr.mxu0 0.0
        %6430 = vmatpush2.msra.mxu0 0.0
        %6431 = vmatprep.subr.mxu0 0.0
        %6432 = vmatpush2.msra.mxu0 0.0
        %6433 = vmatprep.subr.mxu0 0.0
        %6434 = vmatpush2.msra.mxu0 0.0
        %6435 = vmatprep.subr.mxu0 0.0
        %6436 = vmatpush2.msra.mxu0 0.0
        %6437 = vmatprep.subr.mxu0 0.0
        %6438 = vmatpush2.msra.mxu0 0.0
        %6439 = vmatprep.subr.mxu0 0.0
        %6440 = vmatpush2.msra.mxu0 0.0
        %6441 = vmatprep.subr.mxu0 0.0
        %6442 = vmatpush2.msra.mxu0 0.0
        %6443 = vmatprep.subr.mxu0 0.0
        %6444 = vmatpush2.msra.mxu0 0.0
        %6445 = vmatprep.subr.mxu0 0.0
        %6446 = vmatpush2.msra.mxu0 0.0
        %6447 = vmatprep.mubr.f32.mxu0 0.0
        %6448 = vmatmul.mubr.f32.gmra.mxu0 %v6381
        %v6449 = vpop.f32.mrf.mxu0
        %v6450 = vadd.f32 0.0, %v6449
        %v6451 = vpop.f32.mrf.mxu0
        %6452 = vdwg.mxu0
        %v6453 = vadd.f32 %v6370, %v6450
        %s6454 = scalar_lea.vmem %s5, 768
        %v6455 = vld [vmem:[%s6454] sm:$0xff]
        %v6456 = vld [vmem:[%s6454 + $0x8] sm:$0xff]
        %v6457 = vld [vmem:[%s6454 + $0x10] sm:$0xff]
        %v6458 = vld [vmem:[%s6454 + $0x18] sm:$0xff]
        %v6459 = vld [vmem:[%s6454 + $0x20] sm:$0xff]
        %v6460 = vld [vmem:[%s6454 + $0x28] sm:$0xff]
        %v6461 = vld [vmem:[%s6454 + $0x30] sm:$0xff]
        %v6462 = vld [vmem:[%s6454 + $0x38] sm:$0xff]
        %v6463 = vrot.slane %v6038, 5
        %v6464 = vsel %vm5465, %v6463, 0
        %6466 = vmatprep.subr.mxu0 0.0
        %6467 = vmatpush1.msra.mxu0 0.0
        %6468 = vmatprep.subr.mxu0 0.0
        %6469 = vmatpush1.msra.mxu0 0.0
        %6470 = vmatprep.subr.mxu0 0.0
        %6471 = vmatpush1.msra.mxu0 0.0
        %6472 = vmatprep.subr.mxu0 0.0
        %6473 = vmatpush1.msra.mxu0 0.0
        %6474 = vmatprep.subr.mxu0 0.0
        %6475 = vmatpush1.msra.mxu0 0.0
        %6476 = vmatprep.subr.mxu0 0.0
        %6477 = vmatpush1.msra.mxu0 0.0
        %6478 = vmatprep.subr.mxu0 0.0
        %6479 = vmatpush1.msra.mxu0 0.0
        %6480 = vmatprep.subr.mxu0 0.0
        %6481 = vmatpush1.msra.mxu0 0.0
        %6482 = vmatprep.subr.mxu0 0.0
        %6483 = vmatpush1.msra.mxu0 %v6462
        %6484 = vmatprep.subr.mxu0 0.0
        %6485 = vmatpush1.msra.mxu0 %v6461
        %6486 = vmatprep.subr.mxu0 0.0
        %6487 = vmatpush1.msra.mxu0 %v6460
        %6488 = vmatprep.subr.mxu0 0.0
        %6489 = vmatpush1.msra.mxu0 %v6459
        %6490 = vmatprep.subr.mxu0 0.0
        %6491 = vmatpush1.msra.mxu0 %v6458
        %6492 = vmatprep.subr.mxu0 0.0
        %6493 = vmatpush1.msra.mxu0 %v6457
        %6494 = vmatprep.subr.mxu0 0.0
        %6495 = vmatpush1.msra.mxu0 %v6456
        %6496 = vmatprep.subr.mxu0 0.0
        %6497 = vmatpush1.msra.mxu0 %v6455
        %6498 = vmatprep.subr.mxu0 0.0
        %6499 = vmatpush2.msra.mxu0 0.0
        %6500 = vmatprep.subr.mxu0 0.0
        %6501 = vmatpush2.msra.mxu0 0.0
        %6502 = vmatprep.subr.mxu0 0.0
        %6503 = vmatpush2.msra.mxu0 0.0
        %6504 = vmatprep.subr.mxu0 0.0
        %6505 = vmatpush2.msra.mxu0 0.0
        %6506 = vmatprep.subr.mxu0 0.0
        %6507 = vmatpush2.msra.mxu0 0.0
        %6508 = vmatprep.subr.mxu0 0.0
        %6509 = vmatpush2.msra.mxu0 0.0
        %6510 = vmatprep.subr.mxu0 0.0
        %6511 = vmatpush2.msra.mxu0 0.0
        %6512 = vmatprep.subr.mxu0 0.0
        %6513 = vmatpush2.msra.mxu0 0.0
        %6514 = vmatprep.subr.mxu0 0.0
        %6515 = vmatpush2.msra.mxu0 0.0
        %6516 = vmatprep.subr.mxu0 0.0
        %6517 = vmatpush2.msra.mxu0 0.0
        %6518 = vmatprep.subr.mxu0 0.0
        %6519 = vmatpush2.msra.mxu0 0.0
        %6520 = vmatprep.subr.mxu0 0.0
        %6521 = vmatpush2.msra.mxu0 0.0
        %6522 = vmatprep.subr.mxu0 0.0
        %6523 = vmatpush2.msra.mxu0 0.0
        %6524 = vmatprep.subr.mxu0 0.0
        %6525 = vmatpush2.msra.mxu0 0.0
        %6526 = vmatprep.subr.mxu0 0.0
        %6527 = vmatpush2.msra.mxu0 0.0
        %6528 = vmatprep.subr.mxu0 0.0
        %6529 = vmatpush2.msra.mxu0 0.0
        %6530 = vmatprep.mubr.f32.mxu0 0.0
        %6531 = vmatmul.mubr.f32.gmra.mxu0 %v6464
        %v6532 = vpop.f32.mrf.mxu0
        %v6533 = vadd.f32 0.0, %v6532
        %v6534 = vpop.f32.mrf.mxu0
        %6535 = vdwg.mxu0
        %v6536 = vadd.f32 %v6453, %v6533
        %s6537 = scalar_lea.vmem %s5, 832
        %v6538 = vld [vmem:[%s6537] sm:$0xff]
        %v6539 = vld [vmem:[%s6537 + $0x8] sm:$0xff]
        %v6540 = vld [vmem:[%s6537 + $0x10] sm:$0xff]
        %v6541 = vld [vmem:[%s6537 + $0x18] sm:$0xff]
        %v6542 = vld [vmem:[%s6537 + $0x20] sm:$0xff]
        %v6543 = vld [vmem:[%s6537 + $0x28] sm:$0xff]
        %v6544 = vld [vmem:[%s6537 + $0x30] sm:$0xff]
        %v6545 = vld [vmem:[%s6537 + $0x38] sm:$0xff]
        %v6546 = vrot.slane %v6038, 6
        %v6547 = vsel %vm5465, %v6546, 0
        %6549 = vmatprep.subr.mxu0 0.0
        %6550 = vmatpush1.msra.mxu0 0.0
        %6551 = vmatprep.subr.mxu0 0.0
        %6552 = vmatpush1.msra.mxu0 0.0
        %6553 = vmatprep.subr.mxu0 0.0
        %6554 = vmatpush1.msra.mxu0 0.0
        %6555 = vmatprep.subr.mxu0 0.0
        %6556 = vmatpush1.msra.mxu0 0.0
        %6557 = vmatprep.subr.mxu0 0.0
        %6558 = vmatpush1.msra.mxu0 0.0
        %6559 = vmatprep.subr.mxu0 0.0
        %6560 = vmatpush1.msra.mxu0 0.0
        %6561 = vmatprep.subr.mxu0 0.0
        %6562 = vmatpush1.msra.mxu0 0.0
        %6563 = vmatprep.subr.mxu0 0.0
        %6564 = vmatpush1.msra.mxu0 0.0
        %6565 = vmatprep.subr.mxu0 0.0
        %6566 = vmatpush1.msra.mxu0 %v6545
        %6567 = vmatprep.subr.mxu0 0.0
        %6568 = vmatpush1.msra.mxu0 %v6544
        %6569 = vmatprep.subr.mxu0 0.0
        %6570 = vmatpush1.msra.mxu0 %v6543
        %6571 = vmatprep.subr.mxu0 0.0
        %6572 = vmatpush1.msra.mxu0 %v6542
        %6573 = vmatprep.subr.mxu0 0.0
        %6574 = vmatpush1.msra.mxu0 %v6541
        %6575 = vmatprep.subr.mxu0 0.0
        %6576 = vmatpush1.msra.mxu0 %v6540
        %6577 = vmatprep.subr.mxu0 0.0
        %6578 = vmatpush1.msra.mxu0 %v6539
        %6579 = vmatprep.subr.mxu0 0.0
        %6580 = vmatpush1.msra.mxu0 %v6538
        %6581 = vmatprep.subr.mxu0 0.0
        %6582 = vmatpush2.msra.mxu0 0.0
        %6583 = vmatprep.subr.mxu0 0.0
        %6584 = vmatpush2.msra.mxu0 0.0
        %6585 = vmatprep.subr.mxu0 0.0
        %6586 = vmatpush2.msra.mxu0 0.0
        %6587 = vmatprep.subr.mxu0 0.0
        %6588 = vmatpush2.msra.mxu0 0.0
        %6589 = vmatprep.subr.mxu0 0.0
        %6590 = vmatpush2.msra.mxu0 0.0
        %6591 = vmatprep.subr.mxu0 0.0
        %6592 = vmatpush2.msra.mxu0 0.0
        %6593 = vmatprep.subr.mxu0 0.0
        %6594 = vmatpush2.msra.mxu0 0.0
        %6595 = vmatprep.subr.mxu0 0.0
        %6596 = vmatpush2.msra.mxu0 0.0
        %6597 = vmatprep.subr.mxu0 0.0
        %6598 = vmatpush2.msra.mxu0 0.0
        %6599 = vmatprep.subr.mxu0 0.0
        %6600 = vmatpush2.msra.mxu0 0.0
        %6601 = vmatprep.subr.mxu0 0.0
        %6602 = vmatpush2.msra.mxu0 0.0
        %6603 = vmatprep.subr.mxu0 0.0
        %6604 = vmatpush2.msra.mxu0 0.0
        %6605 = vmatprep.subr.mxu0 0.0
        %6606 = vmatpush2.msra.mxu0 0.0
        %6607 = vmatprep.subr.mxu0 0.0
        %6608 = vmatpush2.msra.mxu0 0.0
        %6609 = vmatprep.subr.mxu0 0.0
        %6610 = vmatpush2.msra.mxu0 0.0
        %6611 = vmatprep.subr.mxu0 0.0
        %6612 = vmatpush2.msra.mxu0 0.0
        %6613 = vmatprep.mubr.f32.mxu0 0.0
        %6614 = vmatmul.mubr.f32.gmra.mxu0 %v6547
        %v6615 = vpop.f32.mrf.mxu0
        %v6616 = vadd.f32 0.0, %v6615
        %v6617 = vpop.f32.mrf.mxu0
        %6618 = vdwg.mxu0
        %v6619 = vadd.f32 %v6536, %v6616
        %v6620 = vmax.f32 %v5445, %v5446
        %s6621 = scalar_lea.vmem %s5, 896
        %v6622 = vld [vmem:[%s6621] sm:$0xff]
        %v6623 = vld [vmem:[%s6621 + $0x8] sm:$0xff]
        %v6624 = vld [vmem:[%s6621 + $0x10] sm:$0xff]
        %v6625 = vld [vmem:[%s6621 + $0x18] sm:$0xff]
        %v6626 = vld [vmem:[%s6621 + $0x20] sm:$0xff]
        %v6627 = vld [vmem:[%s6621 + $0x28] sm:$0xff]
        %v6628 = vld [vmem:[%s6621 + $0x30] sm:$0xff]
        %v6629 = vld [vmem:[%s6621 + $0x38] sm:$0xff]
        %v6631 = vsel %vm5465, %v6620, 0
        %6633 = vmatprep.subr.mxu0 0.0
        %6634 = vmatpush1.msra.mxu0 0.0
        %6635 = vmatprep.subr.mxu0 0.0
        %6636 = vmatpush1.msra.mxu0 0.0
        %6637 = vmatprep.subr.mxu0 0.0
        %6638 = vmatpush1.msra.mxu0 0.0
        %6639 = vmatprep.subr.mxu0 0.0
        %6640 = vmatpush1.msra.mxu0 0.0
        %6641 = vmatprep.subr.mxu0 0.0
        %6642 = vmatpush1.msra.mxu0 0.0
        %6643 = vmatprep.subr.mxu0 0.0
        %6644 = vmatpush1.msra.mxu0 0.0
        %6645 = vmatprep.subr.mxu0 0.0
        %6646 = vmatpush1.msra.mxu0 0.0
        %6647 = vmatprep.subr.mxu0 0.0
        %6648 = vmatpush1.msra.mxu0 0.0
        %6649 = vmatprep.subr.mxu0 0.0
        %6650 = vmatpush1.msra.mxu0 %v6629
        %6651 = vmatprep.subr.mxu0 0.0
        %6652 = vmatpush1.msra.mxu0 %v6628
        %6653 = vmatprep.subr.mxu0 0.0
        %6654 = vmatpush1.msra.mxu0 %v6627
        %6655 = vmatprep.subr.mxu0 0.0
        %6656 = vmatpush1.msra.mxu0 %v6626
        %6657 = vmatprep.subr.mxu0 0.0
        %6658 = vmatpush1.msra.mxu0 %v6625
        %6659 = vmatprep.subr.mxu0 0.0
        %6660 = vmatpush1.msra.mxu0 %v6624
        %6661 = vmatprep.subr.mxu0 0.0
        %6662 = vmatpush1.msra.mxu0 %v6623
        %6663 = vmatprep.subr.mxu0 0.0
        %6664 = vmatpush1.msra.mxu0 %v6622
        %6665 = vmatprep.subr.mxu0 0.0
        %6666 = vmatpush2.msra.mxu0 0.0
        %6667 = vmatprep.subr.mxu0 0.0
        %6668 = vmatpush2.msra.mxu0 0.0
        %6669 = vmatprep.subr.mxu0 0.0
        %6670 = vmatpush2.msra.mxu0 0.0
        %6671 = vmatprep.subr.mxu0 0.0
        %6672 = vmatpush2.msra.mxu0 0.0
        %6673 = vmatprep.subr.mxu0 0.0
        %6674 = vmatpush2.msra.mxu0 0.0
        %6675 = vmatprep.subr.mxu0 0.0
        %6676 = vmatpush2.msra.mxu0 0.0
        %6677 = vmatprep.subr.mxu0 0.0
        %6678 = vmatpush2.msra.mxu0 0.0
        %6679 = vmatprep.subr.mxu0 0.0
        %6680 = vmatpush2.msra.mxu0 0.0
        %6681 = vmatprep.subr.mxu0 0.0
        %6682 = vmatpush2.msra.mxu0 0.0
        %6683 = vmatprep.subr.mxu0 0.0
        %6684 = vmatpush2.msra.mxu0 0.0
        %6685 = vmatprep.subr.mxu0 0.0
        %6686 = vmatpush2.msra.mxu0 0.0
        %6687 = vmatprep.subr.mxu0 0.0
        %6688 = vmatpush2.msra.mxu0 0.0
        %6689 = vmatprep.subr.mxu0 0.0
        %6690 = vmatpush2.msra.mxu0 0.0
        %6691 = vmatprep.subr.mxu0 0.0
        %6692 = vmatpush2.msra.mxu0 0.0
        %6693 = vmatprep.subr.mxu0 0.0
        %6694 = vmatpush2.msra.mxu0 0.0
        %6695 = vmatprep.subr.mxu0 0.0
        %6696 = vmatpush2.msra.mxu0 0.0
        %6697 = vmatprep.mubr.f32.mxu0 0.0
        %6698 = vmatmul.mubr.f32.gmra.mxu0 %v6631
        %v6699 = vpop.f32.mrf.mxu0
        %v6700 = vadd.f32 0.0, %v6699
        %v6701 = vpop.f32.mrf.mxu0
        %6702 = vdwg.mxu0
        %v6703 = vadd.f32 %v6619, %v6700
        %s6704 = scalar_lea.vmem %s5, 960
        %v6705 = vld [vmem:[%s6704] sm:$0xff]
        %v6706 = vld [vmem:[%s6704 + $0x8] sm:$0xff]
        %v6707 = vld [vmem:[%s6704 + $0x10] sm:$0xff]
        %v6708 = vld [vmem:[%s6704 + $0x18] sm:$0xff]
        %v6709 = vld [vmem:[%s6704 + $0x20] sm:$0xff]
        %v6710 = vld [vmem:[%s6704 + $0x28] sm:$0xff]
        %v6711 = vld [vmem:[%s6704 + $0x30] sm:$0xff]
        %v6712 = vld [vmem:[%s6704 + $0x38] sm:$0xff]
        %v6713 = vrot.slane %v6620, 1
        %v6714 = vsel %vm5465, %v6713, 0
        %6716 = vmatprep.subr.mxu0 0.0
        %6717 = vmatpush1.msra.mxu0 0.0
        %6718 = vmatprep.subr.mxu0 0.0
        %6719 = vmatpush1.msra.mxu0 0.0
        %6720 = vmatprep.subr.mxu0 0.0
        %6721 = vmatpush1.msra.mxu0 0.0
        %6722 = vmatprep.subr.mxu0 0.0
        %6723 = vmatpush1.msra.mxu0 0.0
        %6724 = vmatprep.subr.mxu0 0.0
        %6725 = vmatpush1.msra.mxu0 0.0
        %6726 = vmatprep.subr.mxu0 0.0
        %6727 = vmatpush1.msra.mxu0 0.0
        %6728 = vmatprep.subr.mxu0 0.0
        %6729 = vmatpush1.msra.mxu0 0.0
        %6730 = vmatprep.subr.mxu0 0.0
        %6731 = vmatpush1.msra.mxu0 0.0
        %6732 = vmatprep.subr.mxu0 0.0
        %6733 = vmatpush1.msra.mxu0 %v6712
        %6734 = vmatprep.subr.mxu0 0.0
        %6735 = vmatpush1.msra.mxu0 %v6711
        %6736 = vmatprep.subr.mxu0 0.0
        %6737 = vmatpush1.msra.mxu0 %v6710
        %6738 = vmatprep.subr.mxu0 0.0
        %6739 = vmatpush1.msra.mxu0 %v6709
        %6740 = vmatprep.subr.mxu0 0.0
        %6741 = vmatpush1.msra.mxu0 %v6708
        %6742 = vmatprep.subr.mxu0 0.0
        %6743 = vmatpush1.msra.mxu0 %v6707
        %6744 = vmatprep.subr.mxu0 0.0
        %6745 = vmatpush1.msra.mxu0 %v6706
        %6746 = vmatprep.subr.mxu0 0.0
        %6747 = vmatpush1.msra.mxu0 %v6705
        %6748 = vmatprep.subr.mxu0 0.0
        %6749 = vmatpush2.msra.mxu0 0.0
        %6750 = vmatprep.subr.mxu0 0.0
        %6751 = vmatpush2.msra.mxu0 0.0
        %6752 = vmatprep.subr.mxu0 0.0
        %6753 = vmatpush2.msra.mxu0 0.0
        %6754 = vmatprep.subr.mxu0 0.0
        %6755 = vmatpush2.msra.mxu0 0.0
        %6756 = vmatprep.subr.mxu0 0.0
        %6757 = vmatpush2.msra.mxu0 0.0
        %6758 = vmatprep.subr.mxu0 0.0
        %6759 = vmatpush2.msra.mxu0 0.0
        %6760 = vmatprep.subr.mxu0 0.0
        %6761 = vmatpush2.msra.mxu0 0.0
        %6762 = vmatprep.subr.mxu0 0.0
        %6763 = vmatpush2.msra.mxu0 0.0
        %6764 = vmatprep.subr.mxu0 0.0
        %6765 = vmatpush2.msra.mxu0 0.0
        %6766 = vmatprep.subr.mxu0 0.0
        %6767 = vmatpush2.msra.mxu0 0.0
        %6768 = vmatprep.subr.mxu0 0.0
        %6769 = vmatpush2.msra.mxu0 0.0
        %6770 = vmatprep.subr.mxu0 0.0
        %6771 = vmatpush2.msra.mxu0 0.0
        %6772 = vmatprep.subr.mxu0 0.0
        %6773 = vmatpush2.msra.mxu0 0.0
        %6774 = vmatprep.subr.mxu0 0.0
        %6775 = vmatpush2.msra.mxu0 0.0
        %6776 = vmatprep.subr.mxu0 0.0
        %6777 = vmatpush2.msra.mxu0 0.0
        %6778 = vmatprep.subr.mxu0 0.0
        %6779 = vmatpush2.msra.mxu0 0.0
        %6780 = vmatprep.mubr.f32.mxu0 0.0
        %6781 = vmatmul.mubr.f32.gmra.mxu0 %v6714
        %v6782 = vpop.f32.mrf.mxu0
        %v6783 = vadd.f32 0.0, %v6782
        %v6784 = vpop.f32.mrf.mxu0
        %6785 = vdwg.mxu0
        %v6786 = vadd.f32 %v6703, %v6783
        %s6787 = scalar_lea.vmem %s5, 1024
        %v6788 = vld [vmem:[%s6787] sm:$0xff]
        %v6789 = vld [vmem:[%s6787 + $0x8] sm:$0xff]
        %v6790 = vld [vmem:[%s6787 + $0x10] sm:$0xff]
        %v6791 = vld [vmem:[%s6787 + $0x18] sm:$0xff]
        %v6792 = vld [vmem:[%s6787 + $0x20] sm:$0xff]
        %v6793 = vld [vmem:[%s6787 + $0x28] sm:$0xff]
        %v6794 = vld [vmem:[%s6787 + $0x30] sm:$0xff]
        %v6795 = vld [vmem:[%s6787 + $0x38] sm:$0xff]
        %v6796 = vrot.slane %v6620, 2
        %v6797 = vsel %vm5465, %v6796, 0
        %6799 = vmatprep.subr.mxu0 0.0
        %6800 = vmatpush1.msra.mxu0 0.0
        %6801 = vmatprep.subr.mxu0 0.0
        %6802 = vmatpush1.msra.mxu0 0.0
        %6803 = vmatprep.subr.mxu0 0.0
        %6804 = vmatpush1.msra.mxu0 0.0
        %6805 = vmatprep.subr.mxu0 0.0
        %6806 = vmatpush1.msra.mxu0 0.0
        %6807 = vmatprep.subr.mxu0 0.0
        %6808 = vmatpush1.msra.mxu0 0.0
        %6809 = vmatprep.subr.mxu0 0.0
        %6810 = vmatpush1.msra.mxu0 0.0
        %6811 = vmatprep.subr.mxu0 0.0
        %6812 = vmatpush1.msra.mxu0 0.0
        %6813 = vmatprep.subr.mxu0 0.0
        %6814 = vmatpush1.msra.mxu0 0.0
        %6815 = vmatprep.subr.mxu0 0.0
        %6816 = vmatpush1.msra.mxu0 %v6795
        %6817 = vmatprep.subr.mxu0 0.0
        %6818 = vmatpush1.msra.mxu0 %v6794
        %6819 = vmatprep.subr.mxu0 0.0
        %6820 = vmatpush1.msra.mxu0 %v6793
        %6821 = vmatprep.subr.mxu0 0.0
        %6822 = vmatpush1.msra.mxu0 %v6792
        %6823 = vmatprep.subr.mxu0 0.0
        %6824 = vmatpush1.msra.mxu0 %v6791
        %6825 = vmatprep.subr.mxu0 0.0
        %6826 = vmatpush1.msra.mxu0 %v6790
        %6827 = vmatprep.subr.mxu0 0.0
        %6828 = vmatpush1.msra.mxu0 %v6789
        %6829 = vmatprep.subr.mxu0 0.0
        %6830 = vmatpush1.msra.mxu0 %v6788
        %6831 = vmatprep.subr.mxu0 0.0
        %6832 = vmatpush2.msra.mxu0 0.0
        %6833 = vmatprep.subr.mxu0 0.0
        %6834 = vmatpush2.msra.mxu0 0.0
        %6835 = vmatprep.subr.mxu0 0.0
        %6836 = vmatpush2.msra.mxu0 0.0
        %6837 = vmatprep.subr.mxu0 0.0
        %6838 = vmatpush2.msra.mxu0 0.0
        %6839 = vmatprep.subr.mxu0 0.0
        %6840 = vmatpush2.msra.mxu0 0.0
        %6841 = vmatprep.subr.mxu0 0.0
        %6842 = vmatpush2.msra.mxu0 0.0
        %6843 = vmatprep.subr.mxu0 0.0
        %6844 = vmatpush2.msra.mxu0 0.0
        %6845 = vmatprep.subr.mxu0 0.0
        %6846 = vmatpush2.msra.mxu0 0.0
        %6847 = vmatprep.subr.mxu0 0.0
        %6848 = vmatpush2.msra.mxu0 0.0
        %6849 = vmatprep.subr.mxu0 0.0
        %6850 = vmatpush2.msra.mxu0 0.0
        %6851 = vmatprep.subr.mxu0 0.0
        %6852 = vmatpush2.msra.mxu0 0.0
        %6853 = vmatprep.subr.mxu0 0.0
        %6854 = vmatpush2.msra.mxu0 0.0
        %6855 = vmatprep.subr.mxu0 0.0
        %6856 = vmatpush2.msra.mxu0 0.0
        %6857 = vmatprep.subr.mxu0 0.0
        %6858 = vmatpush2.msra.mxu0 0.0
        %6859 = vmatprep.subr.mxu0 0.0
        %6860 = vmatpush2.msra.mxu0 0.0
        %6861 = vmatprep.subr.mxu0 0.0
        %6862 = vmatpush2.msra.mxu0 0.0
        %6863 = vmatprep.mubr.f32.mxu0 0.0
        %6864 = vmatmul.mubr.f32.gmra.mxu0 %v6797
        %v6865 = vpop.f32.mrf.mxu0
        %v6866 = vadd.f32 0.0, %v6865
        %v6867 = vpop.f32.mrf.mxu0
        %6868 = vdwg.mxu0
        %v6869 = vadd.f32 %v6786, %v6866
        %s6870 = scalar_lea.vmem %s5, 1088
        %v6871 = vld [vmem:[%s6870] sm:$0xff]
        %v6872 = vld [vmem:[%s6870 + $0x8] sm:$0xff]
        %v6873 = vld [vmem:[%s6870 + $0x10] sm:$0xff]
        %v6874 = vld [vmem:[%s6870 + $0x18] sm:$0xff]
        %v6875 = vld [vmem:[%s6870 + $0x20] sm:$0xff]
        %v6876 = vld [vmem:[%s6870 + $0x28] sm:$0xff]
        %v6877 = vld [vmem:[%s6870 + $0x30] sm:$0xff]
        %v6878 = vld [vmem:[%s6870 + $0x38] sm:$0xff]
        %v6879 = vrot.slane %v6620, 3
        %v6880 = vsel %vm5465, %v6879, 0
        %6882 = vmatprep.subr.mxu0 0.0
        %6883 = vmatpush1.msra.mxu0 0.0
        %6884 = vmatprep.subr.mxu0 0.0
        %6885 = vmatpush1.msra.mxu0 0.0
        %6886 = vmatprep.subr.mxu0 0.0
        %6887 = vmatpush1.msra.mxu0 0.0
        %6888 = vmatprep.subr.mxu0 0.0
        %6889 = vmatpush1.msra.mxu0 0.0
        %6890 = vmatprep.subr.mxu0 0.0
        %6891 = vmatpush1.msra.mxu0 0.0
        %6892 = vmatprep.subr.mxu0 0.0
        %6893 = vmatpush1.msra.mxu0 0.0
        %6894 = vmatprep.subr.mxu0 0.0
        %6895 = vmatpush1.msra.mxu0 0.0
        %6896 = vmatprep.subr.mxu0 0.0
        %6897 = vmatpush1.msra.mxu0 0.0
        %6898 = vmatprep.subr.mxu0 0.0
        %6899 = vmatpush1.msra.mxu0 %v6878
        %6900 = vmatprep.subr.mxu0 0.0
        %6901 = vmatpush1.msra.mxu0 %v6877
        %6902 = vmatprep.subr.mxu0 0.0
        %6903 = vmatpush1.msra.mxu0 %v6876
        %6904 = vmatprep.subr.mxu0 0.0
        %6905 = vmatpush1.msra.mxu0 %v6875
        %6906 = vmatprep.subr.mxu0 0.0
        %6907 = vmatpush1.msra.mxu0 %v6874
        %6908 = vmatprep.subr.mxu0 0.0
        %6909 = vmatpush1.msra.mxu0 %v6873
        %6910 = vmatprep.subr.mxu0 0.0
        %6911 = vmatpush1.msra.mxu0 %v6872
        %6912 = vmatprep.subr.mxu0 0.0
        %6913 = vmatpush1.msra.mxu0 %v6871
        %6914 = vmatprep.subr.mxu0 0.0
        %6915 = vmatpush2.msra.mxu0 0.0
        %6916 = vmatprep.subr.mxu0 0.0
        %6917 = vmatpush2.msra.mxu0 0.0
        %6918 = vmatprep.subr.mxu0 0.0
        %6919 = vmatpush2.msra.mxu0 0.0
        %6920 = vmatprep.subr.mxu0 0.0
        %6921 = vmatpush2.msra.mxu0 0.0
        %6922 = vmatprep.subr.mxu0 0.0
        %6923 = vmatpush2.msra.mxu0 0.0
        %6924 = vmatprep.subr.mxu0 0.0
        %6925 = vmatpush2.msra.mxu0 0.0
        %6926 = vmatprep.subr.mxu0 0.0
        %6927 = vmatpush2.msra.mxu0 0.0
        %6928 = vmatprep.subr.mxu0 0.0
        %6929 = vmatpush2.msra.mxu0 0.0
        %6930 = vmatprep.subr.mxu0 0.0
        %6931 = vmatpush2.msra.mxu0 0.0
        %6932 = vmatprep.subr.mxu0 0.0
        %6933 = vmatpush2.msra.mxu0 0.0
        %6934 = vmatprep.subr.mxu0 0.0
        %6935 = vmatpush2.msra.mxu0 0.0
        %6936 = vmatprep.subr.mxu0 0.0
        %6937 = vmatpush2.msra.mxu0 0.0
        %6938 = vmatprep.subr.mxu0 0.0
        %6939 = vmatpush2.msra.mxu0 0.0
        %6940 = vmatprep.subr.mxu0 0.0
        %6941 = vmatpush2.msra.mxu0 0.0
        %6942 = vmatprep.subr.mxu0 0.0
        %6943 = vmatpush2.msra.mxu0 0.0
        %6944 = vmatprep.subr.mxu0 0.0
        %6945 = vmatpush2.msra.mxu0 0.0
        %6946 = vmatprep.mubr.f32.mxu0 0.0
        %6947 = vmatmul.mubr.f32.gmra.mxu0 %v6880
        %v6948 = vpop.f32.mrf.mxu0
        %v6949 = vadd.f32 0.0, %v6948
        %v6950 = vpop.f32.mrf.mxu0
        %6951 = vdwg.mxu0
        %v6952 = vadd.f32 %v6869, %v6949
        %s6953 = scalar_lea.vmem %s5, 1152
        %v6954 = vld [vmem:[%s6953] sm:$0xff]
        %v6955 = vld [vmem:[%s6953 + $0x8] sm:$0xff]
        %v6956 = vld [vmem:[%s6953 + $0x10] sm:$0xff]
        %v6957 = vld [vmem:[%s6953 + $0x18] sm:$0xff]
        %v6958 = vld [vmem:[%s6953 + $0x20] sm:$0xff]
        %v6959 = vld [vmem:[%s6953 + $0x28] sm:$0xff]
        %v6960 = vld [vmem:[%s6953 + $0x30] sm:$0xff]
        %v6961 = vld [vmem:[%s6953 + $0x38] sm:$0xff]
        %v6962 = vrot.slane %v6620, 4
        %v6963 = vsel %vm5465, %v6962, 0
        %6965 = vmatprep.subr.mxu0 0.0
        %6966 = vmatpush1.msra.mxu0 0.0
        %6967 = vmatprep.subr.mxu0 0.0
        %6968 = vmatpush1.msra.mxu0 0.0
        %6969 = vmatprep.subr.mxu0 0.0
        %6970 = vmatpush1.msra.mxu0 0.0
        %6971 = vmatprep.subr.mxu0 0.0
        %6972 = vmatpush1.msra.mxu0 0.0
        %6973 = vmatprep.subr.mxu0 0.0
        %6974 = vmatpush1.msra.mxu0 0.0
        %6975 = vmatprep.subr.mxu0 0.0
        %6976 = vmatpush1.msra.mxu0 0.0
        %6977 = vmatprep.subr.mxu0 0.0
        %6978 = vmatpush1.msra.mxu0 0.0
        %6979 = vmatprep.subr.mxu0 0.0
        %6980 = vmatpush1.msra.mxu0 0.0
        %6981 = vmatprep.subr.mxu0 0.0
        %6982 = vmatpush1.msra.mxu0 %v6961
        %6983 = vmatprep.subr.mxu0 0.0
        %6984 = vmatpush1.msra.mxu0 %v6960
        %6985 = vmatprep.subr.mxu0 0.0
        %6986 = vmatpush1.msra.mxu0 %v6959
        %6987 = vmatprep.subr.mxu0 0.0
        %6988 = vmatpush1.msra.mxu0 %v6958
        %6989 = vmatprep.subr.mxu0 0.0
        %6990 = vmatpush1.msra.mxu0 %v6957
        %6991 = vmatprep.subr.mxu0 0.0
        %6992 = vmatpush1.msra.mxu0 %v6956
        %6993 = vmatprep.subr.mxu0 0.0
        %6994 = vmatpush1.msra.mxu0 %v6955
        %6995 = vmatprep.subr.mxu0 0.0
        %6996 = vmatpush1.msra.mxu0 %v6954
        %6997 = vmatprep.subr.mxu0 0.0
        %6998 = vmatpush2.msra.mxu0 0.0
        %6999 = vmatprep.subr.mxu0 0.0
        %7000 = vmatpush2.msra.mxu0 0.0
        %7001 = vmatprep.subr.mxu0 0.0
        %7002 = vmatpush2.msra.mxu0 0.0
        %7003 = vmatprep.subr.mxu0 0.0
        %7004 = vmatpush2.msra.mxu0 0.0
        %7005 = vmatprep.subr.mxu0 0.0
        %7006 = vmatpush2.msra.mxu0 0.0
        %7007 = vmatprep.subr.mxu0 0.0
        %7008 = vmatpush2.msra.mxu0 0.0
        %7009 = vmatprep.subr.mxu0 0.0
        %7010 = vmatpush2.msra.mxu0 0.0
        %7011 = vmatprep.subr.mxu0 0.0
        %7012 = vmatpush2.msra.mxu0 0.0
        %7013 = vmatprep.subr.mxu0 0.0
        %7014 = vmatpush2.msra.mxu0 0.0
        %7015 = vmatprep.subr.mxu0 0.0
        %7016 = vmatpush2.msra.mxu0 0.0
        %7017 = vmatprep.subr.mxu0 0.0
        %7018 = vmatpush2.msra.mxu0 0.0
        %7019 = vmatprep.subr.mxu0 0.0
        %7020 = vmatpush2.msra.mxu0 0.0
        %7021 = vmatprep.subr.mxu0 0.0
        %7022 = vmatpush2.msra.mxu0 0.0
        %7023 = vmatprep.subr.mxu0 0.0
        %7024 = vmatpush2.msra.mxu0 0.0
        %7025 = vmatprep.subr.mxu0 0.0
        %7026 = vmatpush2.msra.mxu0 0.0
        %7027 = vmatprep.subr.mxu0 0.0
        %7028 = vmatpush2.msra.mxu0 0.0
        %7029 = vmatprep.mubr.f32.mxu0 0.0
        %7030 = vmatmul.mubr.f32.gmra.mxu0 %v6963
        %v7031 = vpop.f32.mrf.mxu0
        %v7032 = vadd.f32 0.0, %v7031
        %v7033 = vpop.f32.mrf.mxu0
        %7034 = vdwg.mxu0
        %v7035 = vadd.f32 %v6952, %v7032
        %s7036 = scalar_lea.vmem %s5, 1216
        %v7037 = vld [vmem:[%s7036] sm:$0xff]
        %v7038 = vld [vmem:[%s7036 + $0x8] sm:$0xff]
        %v7039 = vld [vmem:[%s7036 + $0x10] sm:$0xff]
        %v7040 = vld [vmem:[%s7036 + $0x18] sm:$0xff]
        %v7041 = vld [vmem:[%s7036 + $0x20] sm:$0xff]
        %v7042 = vld [vmem:[%s7036 + $0x28] sm:$0xff]
        %v7043 = vld [vmem:[%s7036 + $0x30] sm:$0xff]
        %v7044 = vld [vmem:[%s7036 + $0x38] sm:$0xff]
        %v7045 = vrot.slane %v6620, 5
        %v7046 = vsel %vm5465, %v7045, 0
        %7048 = vmatprep.subr.mxu0 0.0
        %7049 = vmatpush1.msra.mxu0 0.0
        %7050 = vmatprep.subr.mxu0 0.0
        %7051 = vmatpush1.msra.mxu0 0.0
        %7052 = vmatprep.subr.mxu0 0.0
        %7053 = vmatpush1.msra.mxu0 0.0
        %7054 = vmatprep.subr.mxu0 0.0
        %7055 = vmatpush1.msra.mxu0 0.0
        %7056 = vmatprep.subr.mxu0 0.0
        %7057 = vmatpush1.msra.mxu0 0.0
        %7058 = vmatprep.subr.mxu0 0.0
        %7059 = vmatpush1.msra.mxu0 0.0
        %7060 = vmatprep.subr.mxu0 0.0
        %7061 = vmatpush1.msra.mxu0 0.0
        %7062 = vmatprep.subr.mxu0 0.0
        %7063 = vmatpush1.msra.mxu0 0.0
        %7064 = vmatprep.subr.mxu0 0.0
        %7065 = vmatpush1.msra.mxu0 %v7044
        %7066 = vmatprep.subr.mxu0 0.0
        %7067 = vmatpush1.msra.mxu0 %v7043
        %7068 = vmatprep.subr.mxu0 0.0
        %7069 = vmatpush1.msra.mxu0 %v7042
        %7070 = vmatprep.subr.mxu0 0.0
        %7071 = vmatpush1.msra.mxu0 %v7041
        %7072 = vmatprep.subr.mxu0 0.0
        %7073 = vmatpush1.msra.mxu0 %v7040
        %7074 = vmatprep.subr.mxu0 0.0
        %7075 = vmatpush1.msra.mxu0 %v7039
        %7076 = vmatprep.subr.mxu0 0.0
        %7077 = vmatpush1.msra.mxu0 %v7038
        %7078 = vmatprep.subr.mxu0 0.0
        %7079 = vmatpush1.msra.mxu0 %v7037
        %7080 = vmatprep.subr.mxu0 0.0
        %7081 = vmatpush2.msra.mxu0 0.0
        %7082 = vmatprep.subr.mxu0 0.0
        %7083 = vmatpush2.msra.mxu0 0.0
        %7084 = vmatprep.subr.mxu0 0.0
        %7085 = vmatpush2.msra.mxu0 0.0
        %7086 = vmatprep.subr.mxu0 0.0
        %7087 = vmatpush2.msra.mxu0 0.0
        %7088 = vmatprep.subr.mxu0 0.0
        %7089 = vmatpush2.msra.mxu0 0.0
        %7090 = vmatprep.subr.mxu0 0.0
        %7091 = vmatpush2.msra.mxu0 0.0
        %7092 = vmatprep.subr.mxu0 0.0
        %7093 = vmatpush2.msra.mxu0 0.0
        %7094 = vmatprep.subr.mxu0 0.0
        %7095 = vmatpush2.msra.mxu0 0.0
        %7096 = vmatprep.subr.mxu0 0.0
        %7097 = vmatpush2.msra.mxu0 0.0
        %7098 = vmatprep.subr.mxu0 0.0
        %7099 = vmatpush2.msra.mxu0 0.0
        %7100 = vmatprep.subr.mxu0 0.0
        %7101 = vmatpush2.msra.mxu0 0.0
        %7102 = vmatprep.subr.mxu0 0.0
        %7103 = vmatpush2.msra.mxu0 0.0
        %7104 = vmatprep.subr.mxu0 0.0
        %7105 = vmatpush2.msra.mxu0 0.0
        %7106 = vmatprep.subr.mxu0 0.0
        %7107 = vmatpush2.msra.mxu0 0.0
        %7108 = vmatprep.subr.mxu0 0.0
        %7109 = vmatpush2.msra.mxu0 0.0
        %7110 = vmatprep.subr.mxu0 0.0
        %7111 = vmatpush2.msra.mxu0 0.0
        %7112 = vmatprep.mubr.f32.mxu0 0.0
        %7113 = vmatmul.mubr.f32.gmra.mxu0 %v7046
        %v7114 = vpop.f32.mrf.mxu0
        %v7115 = vadd.f32 0.0, %v7114
        %v7116 = vpop.f32.mrf.mxu0
        %7117 = vdwg.mxu0
        %v7118 = vadd.f32 %v7035, %v7115
        %s7119 = scalar_lea.vmem %s5, 1280
        %v7120 = vld [vmem:[%s7119] sm:$0xff]
        %v7121 = vld [vmem:[%s7119 + $0x8] sm:$0xff]
        %v7122 = vld [vmem:[%s7119 + $0x10] sm:$0xff]
        %v7123 = vld [vmem:[%s7119 + $0x18] sm:$0xff]
        %v7124 = vld [vmem:[%s7119 + $0x20] sm:$0xff]
        %v7125 = vld [vmem:[%s7119 + $0x28] sm:$0xff]
        %v7126 = vld [vmem:[%s7119 + $0x30] sm:$0xff]
        %v7127 = vld [vmem:[%s7119 + $0x38] sm:$0xff]
        %v7128 = vrot.slane %v6620, 6
        %v7129 = vsel %vm5465, %v7128, 0
        %7131 = vmatprep.subr.mxu0 0.0
        %7132 = vmatpush1.msra.mxu0 0.0
        %7133 = vmatprep.subr.mxu0 0.0
        %7134 = vmatpush1.msra.mxu0 0.0
        %7135 = vmatprep.subr.mxu0 0.0
        %7136 = vmatpush1.msra.mxu0 0.0
        %7137 = vmatprep.subr.mxu0 0.0
        %7138 = vmatpush1.msra.mxu0 0.0
        %7139 = vmatprep.subr.mxu0 0.0
        %7140 = vmatpush1.msra.mxu0 0.0
        %7141 = vmatprep.subr.mxu0 0.0
        %7142 = vmatpush1.msra.mxu0 0.0
        %7143 = vmatprep.subr.mxu0 0.0
        %7144 = vmatpush1.msra.mxu0 0.0
        %7145 = vmatprep.subr.mxu0 0.0
        %7146 = vmatpush1.msra.mxu0 0.0
        %7147 = vmatprep.subr.mxu0 0.0
        %7148 = vmatpush1.msra.mxu0 %v7127
        %7149 = vmatprep.subr.mxu0 0.0
        %7150 = vmatpush1.msra.mxu0 %v7126
        %7151 = vmatprep.subr.mxu0 0.0
        %7152 = vmatpush1.msra.mxu0 %v7125
        %7153 = vmatprep.subr.mxu0 0.0
        %7154 = vmatpush1.msra.mxu0 %v7124
        %7155 = vmatprep.subr.mxu0 0.0
        %7156 = vmatpush1.msra.mxu0 %v7123
        %7157 = vmatprep.subr.mxu0 0.0
        %7158 = vmatpush1.msra.mxu0 %v7122
        %7159 = vmatprep.subr.mxu0 0.0
        %7160 = vmatpush1.msra.mxu0 %v7121
        %7161 = vmatprep.subr.mxu0 0.0
        %7162 = vmatpush1.msra.mxu0 %v7120
        %7163 = vmatprep.subr.mxu0 0.0
        %7164 = vmatpush2.msra.mxu0 0.0
        %7165 = vmatprep.subr.mxu0 0.0
        %7166 = vmatpush2.msra.mxu0 0.0
        %7167 = vmatprep.subr.mxu0 0.0
        %7168 = vmatpush2.msra.mxu0 0.0
        %7169 = vmatprep.subr.mxu0 0.0
        %7170 = vmatpush2.msra.mxu0 0.0
        %7171 = vmatprep.subr.mxu0 0.0
        %7172 = vmatpush2.msra.mxu0 0.0
        %7173 = vmatprep.subr.mxu0 0.0
        %7174 = vmatpush2.msra.mxu0 0.0
        %7175 = vmatprep.subr.mxu0 0.0
        %7176 = vmatpush2.msra.mxu0 0.0
        %7177 = vmatprep.subr.mxu0 0.0
        %7178 = vmatpush2.msra.mxu0 0.0
        %7179 = vmatprep.subr.mxu0 0.0
        %7180 = vmatpush2.msra.mxu0 0.0
        %7181 = vmatprep.subr.mxu0 0.0
        %7182 = vmatpush2.msra.mxu0 0.0
        %7183 = vmatprep.subr.mxu0 0.0
        %7184 = vmatpush2.msra.mxu0 0.0
        %7185 = vmatprep.subr.mxu0 0.0
        %7186 = vmatpush2.msra.mxu0 0.0
        %7187 = vmatprep.subr.mxu0 0.0
        %7188 = vmatpush2.msra.mxu0 0.0
        %7189 = vmatprep.subr.mxu0 0.0
        %7190 = vmatpush2.msra.mxu0 0.0
        %7191 = vmatprep.subr.mxu0 0.0
        %7192 = vmatpush2.msra.mxu0 0.0
        %7193 = vmatprep.subr.mxu0 0.0
        %7194 = vmatpush2.msra.mxu0 0.0
        %7195 = vmatprep.mubr.f32.mxu0 0.0
        %7196 = vmatmul.mubr.f32.gmra.mxu0 %v7129
        %v7197 = vpop.f32.mrf.mxu0
        %v7198 = vadd.f32 0.0, %v7197
        %v7199 = vpop.f32.mrf.mxu0
        %7200 = vdwg.mxu0
        %v7201 = vadd.f32 %v7118, %v7198
        %v7202 = vmax.f32 %v5447, %v5448
        %s7203 = scalar_lea.vmem %s5, 1344
        %v7204 = vld [vmem:[%s7203] sm:$0xff]
        %v7205 = vld [vmem:[%s7203 + $0x8] sm:$0xff]
        %v7206 = vld [vmem:[%s7203 + $0x10] sm:$0xff]
        %v7207 = vld [vmem:[%s7203 + $0x18] sm:$0xff]
        %v7208 = vld [vmem:[%s7203 + $0x20] sm:$0xff]
        %v7209 = vld [vmem:[%s7203 + $0x28] sm:$0xff]
        %v7210 = vld [vmem:[%s7203 + $0x30] sm:$0xff]
        %v7211 = vld [vmem:[%s7203 + $0x38] sm:$0xff]
        %v7213 = vsel %vm5465, %v7202, 0
        %7215 = vmatprep.subr.mxu0 0.0
        %7216 = vmatpush1.msra.mxu0 0.0
        %7217 = vmatprep.subr.mxu0 0.0
        %7218 = vmatpush1.msra.mxu0 0.0
        %7219 = vmatprep.subr.mxu0 0.0
        %7220 = vmatpush1.msra.mxu0 0.0
        %7221 = vmatprep.subr.mxu0 0.0
        %7222 = vmatpush1.msra.mxu0 0.0
        %7223 = vmatprep.subr.mxu0 0.0
        %7224 = vmatpush1.msra.mxu0 0.0
        %7225 = vmatprep.subr.mxu0 0.0
        %7226 = vmatpush1.msra.mxu0 0.0
        %7227 = vmatprep.subr.mxu0 0.0
        %7228 = vmatpush1.msra.mxu0 0.0
        %7229 = vmatprep.subr.mxu0 0.0
        %7230 = vmatpush1.msra.mxu0 0.0
        %7231 = vmatprep.subr.mxu0 0.0
        %7232 = vmatpush1.msra.mxu0 %v7211
        %7233 = vmatprep.subr.mxu0 0.0
        %7234 = vmatpush1.msra.mxu0 %v7210
        %7235 = vmatprep.subr.mxu0 0.0
        %7236 = vmatpush1.msra.mxu0 %v7209
        %7237 = vmatprep.subr.mxu0 0.0
        %7238 = vmatpush1.msra.mxu0 %v7208
        %7239 = vmatprep.subr.mxu0 0.0
        %7240 = vmatpush1.msra.mxu0 %v7207
        %7241 = vmatprep.subr.mxu0 0.0
        %7242 = vmatpush1.msra.mxu0 %v7206
        %7243 = vmatprep.subr.mxu0 0.0
        %7244 = vmatpush1.msra.mxu0 %v7205
        %7245 = vmatprep.subr.mxu0 0.0
        %7246 = vmatpush1.msra.mxu0 %v7204
        %7247 = vmatprep.subr.mxu0 0.0
        %7248 = vmatpush2.msra.mxu0 0.0
        %7249 = vmatprep.subr.mxu0 0.0
        %7250 = vmatpush2.msra.mxu0 0.0
        %7251 = vmatprep.subr.mxu0 0.0
        %7252 = vmatpush2.msra.mxu0 0.0
        %7253 = vmatprep.subr.mxu0 0.0
        %7254 = vmatpush2.msra.mxu0 0.0
        %7255 = vmatprep.subr.mxu0 0.0
        %7256 = vmatpush2.msra.mxu0 0.0
        %7257 = vmatprep.subr.mxu0 0.0
        %7258 = vmatpush2.msra.mxu0 0.0
        %7259 = vmatprep.subr.mxu0 0.0
        %7260 = vmatpush2.msra.mxu0 0.0
        %7261 = vmatprep.subr.mxu0 0.0
        %7262 = vmatpush2.msra.mxu0 0.0
        %7263 = vmatprep.subr.mxu0 0.0
        %7264 = vmatpush2.msra.mxu0 0.0
        %7265 = vmatprep.subr.mxu0 0.0
        %7266 = vmatpush2.msra.mxu0 0.0
        %7267 = vmatprep.subr.mxu0 0.0
        %7268 = vmatpush2.msra.mxu0 0.0
        %7269 = vmatprep.subr.mxu0 0.0
        %7270 = vmatpush2.msra.mxu0 0.0
        %7271 = vmatprep.subr.mxu0 0.0
        %7272 = vmatpush2.msra.mxu0 0.0
        %7273 = vmatprep.subr.mxu0 0.0
        %7274 = vmatpush2.msra.mxu0 0.0
        %7275 = vmatprep.subr.mxu0 0.0
        %7276 = vmatpush2.msra.mxu0 0.0
        %7277 = vmatprep.subr.mxu0 0.0
        %7278 = vmatpush2.msra.mxu0 0.0
        %7279 = vmatprep.mubr.f32.mxu0 0.0
        %7280 = vmatmul.mubr.f32.gmra.mxu0 %v7213
        %v7281 = vpop.f32.mrf.mxu0
        %v7282 = vadd.f32 0.0, %v7281
        %v7283 = vpop.f32.mrf.mxu0
        %7284 = vdwg.mxu0
        %v7285 = vadd.f32 %v7201, %v7282
        %s7286 = scalar_lea.vmem %s5, 1408
        %v7287 = vld [vmem:[%s7286] sm:$0xff]
        %v7288 = vld [vmem:[%s7286 + $0x8] sm:$0xff]
        %v7289 = vld [vmem:[%s7286 + $0x10] sm:$0xff]
        %v7290 = vld [vmem:[%s7286 + $0x18] sm:$0xff]
        %v7291 = vld [vmem:[%s7286 + $0x20] sm:$0xff]
        %v7292 = vld [vmem:[%s7286 + $0x28] sm:$0xff]
        %v7293 = vld [vmem:[%s7286 + $0x30] sm:$0xff]
        %v7294 = vld [vmem:[%s7286 + $0x38] sm:$0xff]
        %v7295 = vrot.slane %v7202, 1
        %v7296 = vsel %vm5465, %v7295, 0
        %7298 = vmatprep.subr.mxu0 0.0
        %7299 = vmatpush1.msra.mxu0 0.0
        %7300 = vmatprep.subr.mxu0 0.0
        %7301 = vmatpush1.msra.mxu0 0.0
        %7302 = vmatprep.subr.mxu0 0.0
        %7303 = vmatpush1.msra.mxu0 0.0
        %7304 = vmatprep.subr.mxu0 0.0
        %7305 = vmatpush1.msra.mxu0 0.0
        %7306 = vmatprep.subr.mxu0 0.0
        %7307 = vmatpush1.msra.mxu0 0.0
        %7308 = vmatprep.subr.mxu0 0.0
        %7309 = vmatpush1.msra.mxu0 0.0
        %7310 = vmatprep.subr.mxu0 0.0
        %7311 = vmatpush1.msra.mxu0 0.0
        %7312 = vmatprep.subr.mxu0 0.0
        %7313 = vmatpush1.msra.mxu0 0.0
        %7314 = vmatprep.subr.mxu0 0.0
        %7315 = vmatpush1.msra.mxu0 %v7294
        %7316 = vmatprep.subr.mxu0 0.0
        %7317 = vmatpush1.msra.mxu0 %v7293
        %7318 = vmatprep.subr.mxu0 0.0
        %7319 = vmatpush1.msra.mxu0 %v7292
        %7320 = vmatprep.subr.mxu0 0.0
        %7321 = vmatpush1.msra.mxu0 %v7291
        %7322 = vmatprep.subr.mxu0 0.0
        %7323 = vmatpush1.msra.mxu0 %v7290
        %7324 = vmatprep.subr.mxu0 0.0
        %7325 = vmatpush1.msra.mxu0 %v7289
        %7326 = vmatprep.subr.mxu0 0.0
        %7327 = vmatpush1.msra.mxu0 %v7288
        %7328 = vmatprep.subr.mxu0 0.0
        %7329 = vmatpush1.msra.mxu0 %v7287
        %7330 = vmatprep.subr.mxu0 0.0
        %7331 = vmatpush2.msra.mxu0 0.0
        %7332 = vmatprep.subr.mxu0 0.0
        %7333 = vmatpush2.msra.mxu0 0.0
        %7334 = vmatprep.subr.mxu0 0.0
        %7335 = vmatpush2.msra.mxu0 0.0
        %7336 = vmatprep.subr.mxu0 0.0
        %7337 = vmatpush2.msra.mxu0 0.0
        %7338 = vmatprep.subr.mxu0 0.0
        %7339 = vmatpush2.msra.mxu0 0.0
        %7340 = vmatprep.subr.mxu0 0.0
        %7341 = vmatpush2.msra.mxu0 0.0
        %7342 = vmatprep.subr.mxu0 0.0
        %7343 = vmatpush2.msra.mxu0 0.0
        %7344 = vmatprep.subr.mxu0 0.0
        %7345 = vmatpush2.msra.mxu0 0.0
        %7346 = vmatprep.subr.mxu0 0.0
        %7347 = vmatpush2.msra.mxu0 0.0
        %7348 = vmatprep.subr.mxu0 0.0
        %7349 = vmatpush2.msra.mxu0 0.0
        %7350 = vmatprep.subr.mxu0 0.0
        %7351 = vmatpush2.msra.mxu0 0.0
        %7352 = vmatprep.subr.mxu0 0.0
        %7353 = vmatpush2.msra.mxu0 0.0
        %7354 = vmatprep.subr.mxu0 0.0
        %7355 = vmatpush2.msra.mxu0 0.0
        %7356 = vmatprep.subr.mxu0 0.0
        %7357 = vmatpush2.msra.mxu0 0.0
        %7358 = vmatprep.subr.mxu0 0.0
        %7359 = vmatpush2.msra.mxu0 0.0
        %7360 = vmatprep.subr.mxu0 0.0
        %7361 = vmatpush2.msra.mxu0 0.0
        %7362 = vmatprep.mubr.f32.mxu0 0.0
        %7363 = vmatmul.mubr.f32.gmra.mxu0 %v7296
        %v7364 = vpop.f32.mrf.mxu0
        %v7365 = vadd.f32 0.0, %v7364
        %v7366 = vpop.f32.mrf.mxu0
        %7367 = vdwg.mxu0
        %v7368 = vadd.f32 %v7285, %v7365
        %s7369 = scalar_lea.vmem %s5, 1472
        %v7370 = vld [vmem:[%s7369] sm:$0xff]
        %v7371 = vld [vmem:[%s7369 + $0x8] sm:$0xff]
        %v7372 = vld [vmem:[%s7369 + $0x10] sm:$0xff]
        %v7373 = vld [vmem:[%s7369 + $0x18] sm:$0xff]
        %v7374 = vld [vmem:[%s7369 + $0x20] sm:$0xff]
        %v7375 = vld [vmem:[%s7369 + $0x28] sm:$0xff]
        %v7376 = vld [vmem:[%s7369 + $0x30] sm:$0xff]
        %v7377 = vld [vmem:[%s7369 + $0x38] sm:$0xff]
        %v7378 = vrot.slane %v7202, 2
        %v7379 = vsel %vm5465, %v7378, 0
        %7381 = vmatprep.subr.mxu0 0.0
        %7382 = vmatpush1.msra.mxu0 0.0
        %7383 = vmatprep.subr.mxu0 0.0
        %7384 = vmatpush1.msra.mxu0 0.0
        %7385 = vmatprep.subr.mxu0 0.0
        %7386 = vmatpush1.msra.mxu0 0.0
        %7387 = vmatprep.subr.mxu0 0.0
        %7388 = vmatpush1.msra.mxu0 0.0
        %7389 = vmatprep.subr.mxu0 0.0
        %7390 = vmatpush1.msra.mxu0 0.0
        %7391 = vmatprep.subr.mxu0 0.0
        %7392 = vmatpush1.msra.mxu0 0.0
        %7393 = vmatprep.subr.mxu0 0.0
        %7394 = vmatpush1.msra.mxu0 0.0
        %7395 = vmatprep.subr.mxu0 0.0
        %7396 = vmatpush1.msra.mxu0 0.0
        %7397 = vmatprep.subr.mxu0 0.0
        %7398 = vmatpush1.msra.mxu0 %v7377
        %7399 = vmatprep.subr.mxu0 0.0
        %7400 = vmatpush1.msra.mxu0 %v7376
        %7401 = vmatprep.subr.mxu0 0.0
        %7402 = vmatpush1.msra.mxu0 %v7375
        %7403 = vmatprep.subr.mxu0 0.0
        %7404 = vmatpush1.msra.mxu0 %v7374
        %7405 = vmatprep.subr.mxu0 0.0
        %7406 = vmatpush1.msra.mxu0 %v7373
        %7407 = vmatprep.subr.mxu0 0.0
        %7408 = vmatpush1.msra.mxu0 %v7372
        %7409 = vmatprep.subr.mxu0 0.0
        %7410 = vmatpush1.msra.mxu0 %v7371
        %7411 = vmatprep.subr.mxu0 0.0
        %7412 = vmatpush1.msra.mxu0 %v7370
        %7413 = vmatprep.subr.mxu0 0.0
        %7414 = vmatpush2.msra.mxu0 0.0
        %7415 = vmatprep.subr.mxu0 0.0
        %7416 = vmatpush2.msra.mxu0 0.0
        %7417 = vmatprep.subr.mxu0 0.0
        %7418 = vmatpush2.msra.mxu0 0.0
        %7419 = vmatprep.subr.mxu0 0.0
        %7420 = vmatpush2.msra.mxu0 0.0
        %7421 = vmatprep.subr.mxu0 0.0
        %7422 = vmatpush2.msra.mxu0 0.0
        %7423 = vmatprep.subr.mxu0 0.0
        %7424 = vmatpush2.msra.mxu0 0.0
        %7425 = vmatprep.subr.mxu0 0.0
        %7426 = vmatpush2.msra.mxu0 0.0
        %7427 = vmatprep.subr.mxu0 0.0
        %7428 = vmatpush2.msra.mxu0 0.0
        %7429 = vmatprep.subr.mxu0 0.0
        %7430 = vmatpush2.msra.mxu0 0.0
        %7431 = vmatprep.subr.mxu0 0.0
        %7432 = vmatpush2.msra.mxu0 0.0
        %7433 = vmatprep.subr.mxu0 0.0
        %7434 = vmatpush2.msra.mxu0 0.0
        %7435 = vmatprep.subr.mxu0 0.0
        %7436 = vmatpush2.msra.mxu0 0.0
        %7437 = vmatprep.subr.mxu0 0.0
        %7438 = vmatpush2.msra.mxu0 0.0
        %7439 = vmatprep.subr.mxu0 0.0
        %7440 = vmatpush2.msra.mxu0 0.0
        %7441 = vmatprep.subr.mxu0 0.0
        %7442 = vmatpush2.msra.mxu0 0.0
        %7443 = vmatprep.subr.mxu0 0.0
        %7444 = vmatpush2.msra.mxu0 0.0
        %7445 = vmatprep.mubr.f32.mxu0 0.0
        %7446 = vmatmul.mubr.f32.gmra.mxu0 %v7379
        %v7447 = vpop.f32.mrf.mxu0
        %v7448 = vadd.f32 0.0, %v7447
        %v7449 = vpop.f32.mrf.mxu0
        %7450 = vdwg.mxu0
        %v7451 = vadd.f32 %v7368, %v7448
        %s7452 = scalar_lea.vmem %s5, 1536
        %v7453 = vld [vmem:[%s7452] sm:$0xff]
        %v7454 = vld [vmem:[%s7452 + $0x8] sm:$0xff]
        %v7455 = vld [vmem:[%s7452 + $0x10] sm:$0xff]
        %v7456 = vld [vmem:[%s7452 + $0x18] sm:$0xff]
        %v7457 = vld [vmem:[%s7452 + $0x20] sm:$0xff]
        %v7458 = vld [vmem:[%s7452 + $0x28] sm:$0xff]
        %v7459 = vld [vmem:[%s7452 + $0x30] sm:$0xff]
        %v7460 = vld [vmem:[%s7452 + $0x38] sm:$0xff]
        %v7461 = vrot.slane %v7202, 3
        %v7462 = vsel %vm5465, %v7461, 0
        %7464 = vmatprep.subr.mxu0 0.0
        %7465 = vmatpush1.msra.mxu0 0.0
        %7466 = vmatprep.subr.mxu0 0.0
        %7467 = vmatpush1.msra.mxu0 0.0
        %7468 = vmatprep.subr.mxu0 0.0
        %7469 = vmatpush1.msra.mxu0 0.0
        %7470 = vmatprep.subr.mxu0 0.0
        %7471 = vmatpush1.msra.mxu0 0.0
        %7472 = vmatprep.subr.mxu0 0.0
        %7473 = vmatpush1.msra.mxu0 0.0
        %7474 = vmatprep.subr.mxu0 0.0
        %7475 = vmatpush1.msra.mxu0 0.0
        %7476 = vmatprep.subr.mxu0 0.0
        %7477 = vmatpush1.msra.mxu0 0.0
        %7478 = vmatprep.subr.mxu0 0.0
        %7479 = vmatpush1.msra.mxu0 0.0
        %7480 = vmatprep.subr.mxu0 0.0
        %7481 = vmatpush1.msra.mxu0 %v7460
        %7482 = vmatprep.subr.mxu0 0.0
        %7483 = vmatpush1.msra.mxu0 %v7459
        %7484 = vmatprep.subr.mxu0 0.0
        %7485 = vmatpush1.msra.mxu0 %v7458
        %7486 = vmatprep.subr.mxu0 0.0
        %7487 = vmatpush1.msra.mxu0 %v7457
        %7488 = vmatprep.subr.mxu0 0.0
        %7489 = vmatpush1.msra.mxu0 %v7456
        %7490 = vmatprep.subr.mxu0 0.0
        %7491 = vmatpush1.msra.mxu0 %v7455
        %7492 = vmatprep.subr.mxu0 0.0
        %7493 = vmatpush1.msra.mxu0 %v7454
        %7494 = vmatprep.subr.mxu0 0.0
        %7495 = vmatpush1.msra.mxu0 %v7453
        %7496 = vmatprep.subr.mxu0 0.0
        %7497 = vmatpush2.msra.mxu0 0.0
        %7498 = vmatprep.subr.mxu0 0.0
        %7499 = vmatpush2.msra.mxu0 0.0
        %7500 = vmatprep.subr.mxu0 0.0
        %7501 = vmatpush2.msra.mxu0 0.0
        %7502 = vmatprep.subr.mxu0 0.0
        %7503 = vmatpush2.msra.mxu0 0.0
        %7504 = vmatprep.subr.mxu0 0.0
        %7505 = vmatpush2.msra.mxu0 0.0
        %7506 = vmatprep.subr.mxu0 0.0
        %7507 = vmatpush2.msra.mxu0 0.0
        %7508 = vmatprep.subr.mxu0 0.0
        %7509 = vmatpush2.msra.mxu0 0.0
        %7510 = vmatprep.subr.mxu0 0.0
        %7511 = vmatpush2.msra.mxu0 0.0
        %7512 = vmatprep.subr.mxu0 0.0
        %7513 = vmatpush2.msra.mxu0 0.0
        %7514 = vmatprep.subr.mxu0 0.0
        %7515 = vmatpush2.msra.mxu0 0.0
        %7516 = vmatprep.subr.mxu0 0.0
        %7517 = vmatpush2.msra.mxu0 0.0
        %7518 = vmatprep.subr.mxu0 0.0
        %7519 = vmatpush2.msra.mxu0 0.0
        %7520 = vmatprep.subr.mxu0 0.0
        %7521 = vmatpush2.msra.mxu0 0.0
        %7522 = vmatprep.subr.mxu0 0.0
        %7523 = vmatpush2.msra.mxu0 0.0
        %7524 = vmatprep.subr.mxu0 0.0
        %7525 = vmatpush2.msra.mxu0 0.0
        %7526 = vmatprep.subr.mxu0 0.0
        %7527 = vmatpush2.msra.mxu0 0.0
        %7528 = vmatprep.mubr.f32.mxu0 0.0
        %7529 = vmatmul.mubr.f32.gmra.mxu0 %v7462
        %v7530 = vpop.f32.mrf.mxu0
        %v7531 = vadd.f32 0.0, %v7530
        %v7532 = vpop.f32.mrf.mxu0
        %7533 = vdwg.mxu0
        %v7534 = vadd.f32 %v7451, %v7531
        %s7535 = scalar_lea.vmem %s5, 1600
        %v7536 = vld [vmem:[%s7535] sm:$0xff]
        %v7537 = vld [vmem:[%s7535 + $0x8] sm:$0xff]
        %v7538 = vld [vmem:[%s7535 + $0x10] sm:$0xff]
        %v7539 = vld [vmem:[%s7535 + $0x18] sm:$0xff]
        %v7540 = vld [vmem:[%s7535 + $0x20] sm:$0xff]
        %v7541 = vld [vmem:[%s7535 + $0x28] sm:$0xff]
        %v7542 = vld [vmem:[%s7535 + $0x30] sm:$0xff]
        %v7543 = vld [vmem:[%s7535 + $0x38] sm:$0xff]
        %v7544 = vrot.slane %v7202, 4
        %v7545 = vsel %vm5465, %v7544, 0
        %7547 = vmatprep.subr.mxu0 0.0
        %7548 = vmatpush1.msra.mxu0 0.0
        %7549 = vmatprep.subr.mxu0 0.0
        %7550 = vmatpush1.msra.mxu0 0.0
        %7551 = vmatprep.subr.mxu0 0.0
        %7552 = vmatpush1.msra.mxu0 0.0
        %7553 = vmatprep.subr.mxu0 0.0
        %7554 = vmatpush1.msra.mxu0 0.0
        %7555 = vmatprep.subr.mxu0 0.0
        %7556 = vmatpush1.msra.mxu0 0.0
        %7557 = vmatprep.subr.mxu0 0.0
        %7558 = vmatpush1.msra.mxu0 0.0
        %7559 = vmatprep.subr.mxu0 0.0
        %7560 = vmatpush1.msra.mxu0 0.0
        %7561 = vmatprep.subr.mxu0 0.0
        %7562 = vmatpush1.msra.mxu0 0.0
        %7563 = vmatprep.subr.mxu0 0.0
        %7564 = vmatpush1.msra.mxu0 %v7543
        %7565 = vmatprep.subr.mxu0 0.0
        %7566 = vmatpush1.msra.mxu0 %v7542
        %7567 = vmatprep.subr.mxu0 0.0
        %7568 = vmatpush1.msra.mxu0 %v7541
        %7569 = vmatprep.subr.mxu0 0.0
        %7570 = vmatpush1.msra.mxu0 %v7540
        %7571 = vmatprep.subr.mxu0 0.0
        %7572 = vmatpush1.msra.mxu0 %v7539
        %7573 = vmatprep.subr.mxu0 0.0
        %7574 = vmatpush1.msra.mxu0 %v7538
        %7575 = vmatprep.subr.mxu0 0.0
        %7576 = vmatpush1.msra.mxu0 %v7537
        %7577 = vmatprep.subr.mxu0 0.0
        %7578 = vmatpush1.msra.mxu0 %v7536
        %7579 = vmatprep.subr.mxu0 0.0
        %7580 = vmatpush2.msra.mxu0 0.0
        %7581 = vmatprep.subr.mxu0 0.0
        %7582 = vmatpush2.msra.mxu0 0.0
        %7583 = vmatprep.subr.mxu0 0.0
        %7584 = vmatpush2.msra.mxu0 0.0
        %7585 = vmatprep.subr.mxu0 0.0
        %7586 = vmatpush2.msra.mxu0 0.0
        %7587 = vmatprep.subr.mxu0 0.0
        %7588 = vmatpush2.msra.mxu0 0.0
        %7589 = vmatprep.subr.mxu0 0.0
        %7590 = vmatpush2.msra.mxu0 0.0
        %7591 = vmatprep.subr.mxu0 0.0
        %7592 = vmatpush2.msra.mxu0 0.0
        %7593 = vmatprep.subr.mxu0 0.0
        %7594 = vmatpush2.msra.mxu0 0.0
        %7595 = vmatprep.subr.mxu0 0.0
        %7596 = vmatpush2.msra.mxu0 0.0
        %7597 = vmatprep.subr.mxu0 0.0
        %7598 = vmatpush2.msra.mxu0 0.0
        %7599 = vmatprep.subr.mxu0 0.0
        %7600 = vmatpush2.msra.mxu0 0.0
        %7601 = vmatprep.subr.mxu0 0.0
        %7602 = vmatpush2.msra.mxu0 0.0
        %7603 = vmatprep.subr.mxu0 0.0
        %7604 = vmatpush2.msra.mxu0 0.0
        %7605 = vmatprep.subr.mxu0 0.0
        %7606 = vmatpush2.msra.mxu0 0.0
        %7607 = vmatprep.subr.mxu0 0.0
        %7608 = vmatpush2.msra.mxu0 0.0
        %7609 = vmatprep.subr.mxu0 0.0
        %7610 = vmatpush2.msra.mxu0 0.0
        %7611 = vmatprep.mubr.f32.mxu0 0.0
        %7612 = vmatmul.mubr.f32.gmra.mxu0 %v7545
        %v7613 = vpop.f32.mrf.mxu0
        %v7614 = vadd.f32 0.0, %v7613
        %v7615 = vpop.f32.mrf.mxu0
        %7616 = vdwg.mxu0
        %v7617 = vadd.f32 %v7534, %v7614
        %s7618 = scalar_lea.vmem %s5, 1664
        %v7619 = vld [vmem:[%s7618] sm:$0xff]
        %v7620 = vld [vmem:[%s7618 + $0x8] sm:$0xff]
        %v7621 = vld [vmem:[%s7618 + $0x10] sm:$0xff]
        %v7622 = vld [vmem:[%s7618 + $0x18] sm:$0xff]
        %v7623 = vld [vmem:[%s7618 + $0x20] sm:$0xff]
        %v7624 = vld [vmem:[%s7618 + $0x28] sm:$0xff]
        %v7625 = vld [vmem:[%s7618 + $0x30] sm:$0xff]
        %v7626 = vld [vmem:[%s7618 + $0x38] sm:$0xff]
        %v7627 = vrot.slane %v7202, 5
        %v7628 = vsel %vm5465, %v7627, 0
        %7630 = vmatprep.subr.mxu0 0.0
        %7631 = vmatpush1.msra.mxu0 0.0
        %7632 = vmatprep.subr.mxu0 0.0
        %7633 = vmatpush1.msra.mxu0 0.0
        %7634 = vmatprep.subr.mxu0 0.0
        %7635 = vmatpush1.msra.mxu0 0.0
        %7636 = vmatprep.subr.mxu0 0.0
        %7637 = vmatpush1.msra.mxu0 0.0
        %7638 = vmatprep.subr.mxu0 0.0
        %7639 = vmatpush1.msra.mxu0 0.0
        %7640 = vmatprep.subr.mxu0 0.0
        %7641 = vmatpush1.msra.mxu0 0.0
        %7642 = vmatprep.subr.mxu0 0.0
        %7643 = vmatpush1.msra.mxu0 0.0
        %7644 = vmatprep.subr.mxu0 0.0
        %7645 = vmatpush1.msra.mxu0 0.0
        %7646 = vmatprep.subr.mxu0 0.0
        %7647 = vmatpush1.msra.mxu0 %v7626
        %7648 = vmatprep.subr.mxu0 0.0
        %7649 = vmatpush1.msra.mxu0 %v7625
        %7650 = vmatprep.subr.mxu0 0.0
        %7651 = vmatpush1.msra.mxu0 %v7624
        %7652 = vmatprep.subr.mxu0 0.0
        %7653 = vmatpush1.msra.mxu0 %v7623
        %7654 = vmatprep.subr.mxu0 0.0
        %7655 = vmatpush1.msra.mxu0 %v7622
        %7656 = vmatprep.subr.mxu0 0.0
        %7657 = vmatpush1.msra.mxu0 %v7621
        %7658 = vmatprep.subr.mxu0 0.0
        %7659 = vmatpush1.msra.mxu0 %v7620
        %7660 = vmatprep.subr.mxu0 0.0
        %7661 = vmatpush1.msra.mxu0 %v7619
        %7662 = vmatprep.subr.mxu0 0.0
        %7663 = vmatpush2.msra.mxu0 0.0
        %7664 = vmatprep.subr.mxu0 0.0
        %7665 = vmatpush2.msra.mxu0 0.0
        %7666 = vmatprep.subr.mxu0 0.0
        %7667 = vmatpush2.msra.mxu0 0.0
        %7668 = vmatprep.subr.mxu0 0.0
        %7669 = vmatpush2.msra.mxu0 0.0
        %7670 = vmatprep.subr.mxu0 0.0
        %7671 = vmatpush2.msra.mxu0 0.0
        %7672 = vmatprep.subr.mxu0 0.0
        %7673 = vmatpush2.msra.mxu0 0.0
        %7674 = vmatprep.subr.mxu0 0.0
        %7675 = vmatpush2.msra.mxu0 0.0
        %7676 = vmatprep.subr.mxu0 0.0
        %7677 = vmatpush2.msra.mxu0 0.0
        %7678 = vmatprep.subr.mxu0 0.0
        %7679 = vmatpush2.msra.mxu0 0.0
        %7680 = vmatprep.subr.mxu0 0.0
        %7681 = vmatpush2.msra.mxu0 0.0
        %7682 = vmatprep.subr.mxu0 0.0
        %7683 = vmatpush2.msra.mxu0 0.0
        %7684 = vmatprep.subr.mxu0 0.0
        %7685 = vmatpush2.msra.mxu0 0.0
        %7686 = vmatprep.subr.mxu0 0.0
        %7687 = vmatpush2.msra.mxu0 0.0
        %7688 = vmatprep.subr.mxu0 0.0
        %7689 = vmatpush2.msra.mxu0 0.0
        %7690 = vmatprep.subr.mxu0 0.0
        %7691 = vmatpush2.msra.mxu0 0.0
        %7692 = vmatprep.subr.mxu0 0.0
        %7693 = vmatpush2.msra.mxu0 0.0
        %7694 = vmatprep.mubr.f32.mxu0 0.0
        %7695 = vmatmul.mubr.f32.gmra.mxu0 %v7628
        %v7696 = vpop.f32.mrf.mxu0
        %v7697 = vadd.f32 0.0, %v7696
        %v7698 = vpop.f32.mrf.mxu0
        %7699 = vdwg.mxu0
        %v7700 = vadd.f32 %v7617, %v7697
        %s7701 = scalar_lea.vmem %s5, 1728
        %v7702 = vld [vmem:[%s7701] sm:$0xff]
        %v7703 = vld [vmem:[%s7701 + $0x8] sm:$0xff]
        %v7704 = vld [vmem:[%s7701 + $0x10] sm:$0xff]
        %v7705 = vld [vmem:[%s7701 + $0x18] sm:$0xff]
        %v7706 = vld [vmem:[%s7701 + $0x20] sm:$0xff]
        %v7707 = vld [vmem:[%s7701 + $0x28] sm:$0xff]
        %v7708 = vld [vmem:[%s7701 + $0x30] sm:$0xff]
        %v7709 = vld [vmem:[%s7701 + $0x38] sm:$0xff]
        %v7710 = vrot.slane %v7202, 6
        %v7711 = vsel %vm5465, %v7710, 0
        %7713 = vmatprep.subr.mxu0 0.0
        %7714 = vmatpush1.msra.mxu0 0.0
        %7715 = vmatprep.subr.mxu0 0.0
        %7716 = vmatpush1.msra.mxu0 0.0
        %7717 = vmatprep.subr.mxu0 0.0
        %7718 = vmatpush1.msra.mxu0 0.0
        %7719 = vmatprep.subr.mxu0 0.0
        %7720 = vmatpush1.msra.mxu0 0.0
        %7721 = vmatprep.subr.mxu0 0.0
        %7722 = vmatpush1.msra.mxu0 0.0
        %7723 = vmatprep.subr.mxu0 0.0
        %7724 = vmatpush1.msra.mxu0 0.0
        %7725 = vmatprep.subr.mxu0 0.0
        %7726 = vmatpush1.msra.mxu0 0.0
        %7727 = vmatprep.subr.mxu0 0.0
        %7728 = vmatpush1.msra.mxu0 0.0
        %7729 = vmatprep.subr.mxu0 0.0
        %7730 = vmatpush1.msra.mxu0 %v7709
        %7731 = vmatprep.subr.mxu0 0.0
        %7732 = vmatpush1.msra.mxu0 %v7708
        %7733 = vmatprep.subr.mxu0 0.0
        %7734 = vmatpush1.msra.mxu0 %v7707
        %7735 = vmatprep.subr.mxu0 0.0
        %7736 = vmatpush1.msra.mxu0 %v7706
        %7737 = vmatprep.subr.mxu0 0.0
        %7738 = vmatpush1.msra.mxu0 %v7705
        %7739 = vmatprep.subr.mxu0 0.0
        %7740 = vmatpush1.msra.mxu0 %v7704
        %7741 = vmatprep.subr.mxu0 0.0
        %7742 = vmatpush1.msra.mxu0 %v7703
        %7743 = vmatprep.subr.mxu0 0.0
        %7744 = vmatpush1.msra.mxu0 %v7702
        %7745 = vmatprep.subr.mxu0 0.0
        %7746 = vmatpush2.msra.mxu0 0.0
        %7747 = vmatprep.subr.mxu0 0.0
        %7748 = vmatpush2.msra.mxu0 0.0
        %7749 = vmatprep.subr.mxu0 0.0
        %7750 = vmatpush2.msra.mxu0 0.0
        %7751 = vmatprep.subr.mxu0 0.0
        %7752 = vmatpush2.msra.mxu0 0.0
        %7753 = vmatprep.subr.mxu0 0.0
        %7754 = vmatpush2.msra.mxu0 0.0
        %7755 = vmatprep.subr.mxu0 0.0
        %7756 = vmatpush2.msra.mxu0 0.0
        %7757 = vmatprep.subr.mxu0 0.0
        %7758 = vmatpush2.msra.mxu0 0.0
        %7759 = vmatprep.subr.mxu0 0.0
        %7760 = vmatpush2.msra.mxu0 0.0
        %7761 = vmatprep.subr.mxu0 0.0
        %7762 = vmatpush2.msra.mxu0 0.0
        %7763 = vmatprep.subr.mxu0 0.0
        %7764 = vmatpush2.msra.mxu0 0.0
        %7765 = vmatprep.subr.mxu0 0.0
        %7766 = vmatpush2.msra.mxu0 0.0
        %7767 = vmatprep.subr.mxu0 0.0
        %7768 = vmatpush2.msra.mxu0 0.0
        %7769 = vmatprep.subr.mxu0 0.0
        %7770 = vmatpush2.msra.mxu0 0.0
        %7771 = vmatprep.subr.mxu0 0.0
        %7772 = vmatpush2.msra.mxu0 0.0
        %7773 = vmatprep.subr.mxu0 0.0
        %7774 = vmatpush2.msra.mxu0 0.0
        %7775 = vmatprep.subr.mxu0 0.0
        %7776 = vmatpush2.msra.mxu0 0.0
        %7777 = vmatprep.mubr.f32.mxu0 0.0
        %7778 = vmatmul.mubr.f32.gmra.mxu0 %v7711
        %v7779 = vpop.f32.mrf.mxu0
        %v7780 = vadd.f32 0.0, %v7779
        %v7781 = vpop.f32.mrf.mxu0
        %7782 = vdwg.mxu0
        %v7783 = vadd.f32 %v7700, %v7780
        %v7784 = vmax.f32 %v5449, %v5450
        %s7785 = scalar_lea.vmem %s5, 1792
        %v7786 = vld [vmem:[%s7785] sm:$0xff]
        %v7787 = vld [vmem:[%s7785 + $0x8] sm:$0xff]
        %v7788 = vld [vmem:[%s7785 + $0x10] sm:$0xff]
        %v7789 = vld [vmem:[%s7785 + $0x18] sm:$0xff]
        %v7790 = vld [vmem:[%s7785 + $0x20] sm:$0xff]
        %v7791 = vld [vmem:[%s7785 + $0x28] sm:$0xff]
        %v7792 = vld [vmem:[%s7785 + $0x30] sm:$0xff]
        %v7793 = vld [vmem:[%s7785 + $0x38] sm:$0xff]
        %v7795 = vsel %vm5465, %v7784, 0
        %7797 = vmatprep.subr.mxu0 0.0
        %7798 = vmatpush1.msra.mxu0 0.0
        %7799 = vmatprep.subr.mxu0 0.0
        %7800 = vmatpush1.msra.mxu0 0.0
        %7801 = vmatprep.subr.mxu0 0.0
        %7802 = vmatpush1.msra.mxu0 0.0
        %7803 = vmatprep.subr.mxu0 0.0
        %7804 = vmatpush1.msra.mxu0 0.0
        %7805 = vmatprep.subr.mxu0 0.0
        %7806 = vmatpush1.msra.mxu0 0.0
        %7807 = vmatprep.subr.mxu0 0.0
        %7808 = vmatpush1.msra.mxu0 0.0
        %7809 = vmatprep.subr.mxu0 0.0
        %7810 = vmatpush1.msra.mxu0 0.0
        %7811 = vmatprep.subr.mxu0 0.0
        %7812 = vmatpush1.msra.mxu0 0.0
        %7813 = vmatprep.subr.mxu0 0.0
        %7814 = vmatpush1.msra.mxu0 %v7793
        %7815 = vmatprep.subr.mxu0 0.0
        %7816 = vmatpush1.msra.mxu0 %v7792
        %7817 = vmatprep.subr.mxu0 0.0
        %7818 = vmatpush1.msra.mxu0 %v7791
        %7819 = vmatprep.subr.mxu0 0.0
        %7820 = vmatpush1.msra.mxu0 %v7790
        %7821 = vmatprep.subr.mxu0 0.0
        %7822 = vmatpush1.msra.mxu0 %v7789
        %7823 = vmatprep.subr.mxu0 0.0
        %7824 = vmatpush1.msra.mxu0 %v7788
        %7825 = vmatprep.subr.mxu0 0.0
        %7826 = vmatpush1.msra.mxu0 %v7787
        %7827 = vmatprep.subr.mxu0 0.0
        %7828 = vmatpush1.msra.mxu0 %v7786
        %7829 = vmatprep.subr.mxu0 0.0
        %7830 = vmatpush2.msra.mxu0 0.0
        %7831 = vmatprep.subr.mxu0 0.0
        %7832 = vmatpush2.msra.mxu0 0.0
        %7833 = vmatprep.subr.mxu0 0.0
        %7834 = vmatpush2.msra.mxu0 0.0
        %7835 = vmatprep.subr.mxu0 0.0
        %7836 = vmatpush2.msra.mxu0 0.0
        %7837 = vmatprep.subr.mxu0 0.0
        %7838 = vmatpush2.msra.mxu0 0.0
        %7839 = vmatprep.subr.mxu0 0.0
        %7840 = vmatpush2.msra.mxu0 0.0
        %7841 = vmatprep.subr.mxu0 0.0
        %7842 = vmatpush2.msra.mxu0 0.0
        %7843 = vmatprep.subr.mxu0 0.0
        %7844 = vmatpush2.msra.mxu0 0.0
        %7845 = vmatprep.subr.mxu0 0.0
        %7846 = vmatpush2.msra.mxu0 0.0
        %7847 = vmatprep.subr.mxu0 0.0
        %7848 = vmatpush2.msra.mxu0 0.0
        %7849 = vmatprep.subr.mxu0 0.0
        %7850 = vmatpush2.msra.mxu0 0.0
        %7851 = vmatprep.subr.mxu0 0.0
        %7852 = vmatpush2.msra.mxu0 0.0
        %7853 = vmatprep.subr.mxu0 0.0
        %7854 = vmatpush2.msra.mxu0 0.0
        %7855 = vmatprep.subr.mxu0 0.0
        %7856 = vmatpush2.msra.mxu0 0.0
        %7857 = vmatprep.subr.mxu0 0.0
        %7858 = vmatpush2.msra.mxu0 0.0
        %7859 = vmatprep.subr.mxu0 0.0
        %7860 = vmatpush2.msra.mxu0 0.0
        %7861 = vmatprep.mubr.f32.mxu0 0.0
        %7862 = vmatmul.mubr.f32.gmra.mxu0 %v7795
        %v7863 = vpop.f32.mrf.mxu0
        %v7864 = vadd.f32 0.0, %v7863
        %v7865 = vpop.f32.mrf.mxu0
        %7866 = vdwg.mxu0
        %v7867 = vadd.f32 %v7783, %v7864
        %s7868 = scalar_lea.vmem %s5, 1856
        %v7869 = vld [vmem:[%s7868] sm:$0xff]
        %v7870 = vld [vmem:[%s7868 + $0x8] sm:$0xff]
        %v7871 = vld [vmem:[%s7868 + $0x10] sm:$0xff]
        %v7872 = vld [vmem:[%s7868 + $0x18] sm:$0xff]
        %v7873 = vld [vmem:[%s7868 + $0x20] sm:$0xff]
        %v7874 = vld [vmem:[%s7868 + $0x28] sm:$0xff]
        %v7875 = vld [vmem:[%s7868 + $0x30] sm:$0xff]
        %v7876 = vld [vmem:[%s7868 + $0x38] sm:$0xff]
        %v7877 = vrot.slane %v7784, 1
        %v7878 = vsel %vm5465, %v7877, 0
        %7880 = vmatprep.subr.mxu0 0.0
        %7881 = vmatpush1.msra.mxu0 0.0
        %7882 = vmatprep.subr.mxu0 0.0
        %7883 = vmatpush1.msra.mxu0 0.0
        %7884 = vmatprep.subr.mxu0 0.0
        %7885 = vmatpush1.msra.mxu0 0.0
        %7886 = vmatprep.subr.mxu0 0.0
        %7887 = vmatpush1.msra.mxu0 0.0
        %7888 = vmatprep.subr.mxu0 0.0
        %7889 = vmatpush1.msra.mxu0 0.0
        %7890 = vmatprep.subr.mxu0 0.0
        %7891 = vmatpush1.msra.mxu0 0.0
        %7892 = vmatprep.subr.mxu0 0.0
        %7893 = vmatpush1.msra.mxu0 0.0
        %7894 = vmatprep.subr.mxu0 0.0
        %7895 = vmatpush1.msra.mxu0 0.0
        %7896 = vmatprep.subr.mxu0 0.0
        %7897 = vmatpush1.msra.mxu0 %v7876
        %7898 = vmatprep.subr.mxu0 0.0
        %7899 = vmatpush1.msra.mxu0 %v7875
        %7900 = vmatprep.subr.mxu0 0.0
        %7901 = vmatpush1.msra.mxu0 %v7874
        %7902 = vmatprep.subr.mxu0 0.0
        %7903 = vmatpush1.msra.mxu0 %v7873
        %7904 = vmatprep.subr.mxu0 0.0
        %7905 = vmatpush1.msra.mxu0 %v7872
        %7906 = vmatprep.subr.mxu0 0.0
        %7907 = vmatpush1.msra.mxu0 %v7871
        %7908 = vmatprep.subr.mxu0 0.0
        %7909 = vmatpush1.msra.mxu0 %v7870
        %7910 = vmatprep.subr.mxu0 0.0
        %7911 = vmatpush1.msra.mxu0 %v7869
        %7912 = vmatprep.subr.mxu0 0.0
        %7913 = vmatpush2.msra.mxu0 0.0
        %7914 = vmatprep.subr.mxu0 0.0
        %7915 = vmatpush2.msra.mxu0 0.0
        %7916 = vmatprep.subr.mxu0 0.0
        %7917 = vmatpush2.msra.mxu0 0.0
        %7918 = vmatprep.subr.mxu0 0.0
        %7919 = vmatpush2.msra.mxu0 0.0
        %7920 = vmatprep.subr.mxu0 0.0
        %7921 = vmatpush2.msra.mxu0 0.0
        %7922 = vmatprep.subr.mxu0 0.0
        %7923 = vmatpush2.msra.mxu0 0.0
        %7924 = vmatprep.subr.mxu0 0.0
        %7925 = vmatpush2.msra.mxu0 0.0
        %7926 = vmatprep.subr.mxu0 0.0
        %7927 = vmatpush2.msra.mxu0 0.0
        %7928 = vmatprep.subr.mxu0 0.0
        %7929 = vmatpush2.msra.mxu0 0.0
        %7930 = vmatprep.subr.mxu0 0.0
        %7931 = vmatpush2.msra.mxu0 0.0
        %7932 = vmatprep.subr.mxu0 0.0
        %7933 = vmatpush2.msra.mxu0 0.0
        %7934 = vmatprep.subr.mxu0 0.0
        %7935 = vmatpush2.msra.mxu0 0.0
        %7936 = vmatprep.subr.mxu0 0.0
        %7937 = vmatpush2.msra.mxu0 0.0
        %7938 = vmatprep.subr.mxu0 0.0
        %7939 = vmatpush2.msra.mxu0 0.0
        %7940 = vmatprep.subr.mxu0 0.0
        %7941 = vmatpush2.msra.mxu0 0.0
        %7942 = vmatprep.subr.mxu0 0.0
        %7943 = vmatpush2.msra.mxu0 0.0
        %7944 = vmatprep.mubr.f32.mxu0 0.0
        %7945 = vmatmul.mubr.f32.gmra.mxu0 %v7878
        %v7946 = vpop.f32.mrf.mxu0
        %v7947 = vadd.f32 0.0, %v7946
        %v7948 = vpop.f32.mrf.mxu0
        %7949 = vdwg.mxu0
        %v7950 = vadd.f32 %v7867, %v7947
        %s7951 = scalar_lea.vmem %s5, 1920
        %v7952 = vld [vmem:[%s7951] sm:$0xff]
        %v7953 = vld [vmem:[%s7951 + $0x8] sm:$0xff]
        %v7954 = vld [vmem:[%s7951 + $0x10] sm:$0xff]
        %v7955 = vld [vmem:[%s7951 + $0x18] sm:$0xff]
        %v7956 = vld [vmem:[%s7951 + $0x20] sm:$0xff]
        %v7957 = vld [vmem:[%s7951 + $0x28] sm:$0xff]
        %v7958 = vld [vmem:[%s7951 + $0x30] sm:$0xff]
        %v7959 = vld [vmem:[%s7951 + $0x38] sm:$0xff]
        %v7960 = vrot.slane %v7784, 2
        %v7961 = vsel %vm5465, %v7960, 0
        %7963 = vmatprep.subr.mxu0 0.0
        %7964 = vmatpush1.msra.mxu0 0.0
        %7965 = vmatprep.subr.mxu0 0.0
        %7966 = vmatpush1.msra.mxu0 0.0
        %7967 = vmatprep.subr.mxu0 0.0
        %7968 = vmatpush1.msra.mxu0 0.0
        %7969 = vmatprep.subr.mxu0 0.0
        %7970 = vmatpush1.msra.mxu0 0.0
        %7971 = vmatprep.subr.mxu0 0.0
        %7972 = vmatpush1.msra.mxu0 0.0
        %7973 = vmatprep.subr.mxu0 0.0
        %7974 = vmatpush1.msra.mxu0 0.0
        %7975 = vmatprep.subr.mxu0 0.0
        %7976 = vmatpush1.msra.mxu0 0.0
        %7977 = vmatprep.subr.mxu0 0.0
        %7978 = vmatpush1.msra.mxu0 0.0
        %7979 = vmatprep.subr.mxu0 0.0
        %7980 = vmatpush1.msra.mxu0 %v7959
        %7981 = vmatprep.subr.mxu0 0.0
        %7982 = vmatpush1.msra.mxu0 %v7958
        %7983 = vmatprep.subr.mxu0 0.0
        %7984 = vmatpush1.msra.mxu0 %v7957
        %7985 = vmatprep.subr.mxu0 0.0
        %7986 = vmatpush1.msra.mxu0 %v7956
        %7987 = vmatprep.subr.mxu0 0.0
        %7988 = vmatpush1.msra.mxu0 %v7955
        %7989 = vmatprep.subr.mxu0 0.0
        %7990 = vmatpush1.msra.mxu0 %v7954
        %7991 = vmatprep.subr.mxu0 0.0
        %7992 = vmatpush1.msra.mxu0 %v7953
        %7993 = vmatprep.subr.mxu0 0.0
        %7994 = vmatpush1.msra.mxu0 %v7952
        %7995 = vmatprep.subr.mxu0 0.0
        %7996 = vmatpush2.msra.mxu0 0.0
        %7997 = vmatprep.subr.mxu0 0.0
        %7998 = vmatpush2.msra.mxu0 0.0
        %7999 = vmatprep.subr.mxu0 0.0
        %8000 = vmatpush2.msra.mxu0 0.0
        %8001 = vmatprep.subr.mxu0 0.0
        %8002 = vmatpush2.msra.mxu0 0.0
        %8003 = vmatprep.subr.mxu0 0.0
        %8004 = vmatpush2.msra.mxu0 0.0
        %8005 = vmatprep.subr.mxu0 0.0
        %8006 = vmatpush2.msra.mxu0 0.0
        %8007 = vmatprep.subr.mxu0 0.0
        %8008 = vmatpush2.msra.mxu0 0.0
        %8009 = vmatprep.subr.mxu0 0.0
        %8010 = vmatpush2.msra.mxu0 0.0
        %8011 = vmatprep.subr.mxu0 0.0
        %8012 = vmatpush2.msra.mxu0 0.0
        %8013 = vmatprep.subr.mxu0 0.0
        %8014 = vmatpush2.msra.mxu0 0.0
        %8015 = vmatprep.subr.mxu0 0.0
        %8016 = vmatpush2.msra.mxu0 0.0
        %8017 = vmatprep.subr.mxu0 0.0
        %8018 = vmatpush2.msra.mxu0 0.0
        %8019 = vmatprep.subr.mxu0 0.0
        %8020 = vmatpush2.msra.mxu0 0.0
        %8021 = vmatprep.subr.mxu0 0.0
        %8022 = vmatpush2.msra.mxu0 0.0
        %8023 = vmatprep.subr.mxu0 0.0
        %8024 = vmatpush2.msra.mxu0 0.0
        %8025 = vmatprep.subr.mxu0 0.0
        %8026 = vmatpush2.msra.mxu0 0.0
        %8027 = vmatprep.mubr.f32.mxu0 0.0
        %8028 = vmatmul.mubr.f32.gmra.mxu0 %v7961
        %v8029 = vpop.f32.mrf.mxu0
        %v8030 = vadd.f32 0.0, %v8029
        %v8031 = vpop.f32.mrf.mxu0
        %8032 = vdwg.mxu0
        %v8033 = vadd.f32 %v7950, %v8030
        %s8034 = scalar_lea.vmem %s5, 1984
        %v8035 = vld [vmem:[%s8034] sm:$0xff]
        %v8036 = vld [vmem:[%s8034 + $0x8] sm:$0xff]
        %v8037 = vld [vmem:[%s8034 + $0x10] sm:$0xff]
        %v8038 = vld [vmem:[%s8034 + $0x18] sm:$0xff]
        %v8039 = vld [vmem:[%s8034 + $0x20] sm:$0xff]
        %v8040 = vld [vmem:[%s8034 + $0x28] sm:$0xff]
        %v8041 = vld [vmem:[%s8034 + $0x30] sm:$0xff]
        %v8042 = vld [vmem:[%s8034 + $0x38] sm:$0xff]
        %v8043 = vrot.slane %v7784, 3
        %v8044 = vsel %vm5465, %v8043, 0
        %8046 = vmatprep.subr.mxu0 0.0
        %8047 = vmatpush1.msra.mxu0 0.0
        %8048 = vmatprep.subr.mxu0 0.0
        %8049 = vmatpush1.msra.mxu0 0.0
        %8050 = vmatprep.subr.mxu0 0.0
        %8051 = vmatpush1.msra.mxu0 0.0
        %8052 = vmatprep.subr.mxu0 0.0
        %8053 = vmatpush1.msra.mxu0 0.0
        %8054 = vmatprep.subr.mxu0 0.0
        %8055 = vmatpush1.msra.mxu0 0.0
        %8056 = vmatprep.subr.mxu0 0.0
        %8057 = vmatpush1.msra.mxu0 0.0
        %8058 = vmatprep.subr.mxu0 0.0
        %8059 = vmatpush1.msra.mxu0 0.0
        %8060 = vmatprep.subr.mxu0 0.0
        %8061 = vmatpush1.msra.mxu0 0.0
        %8062 = vmatprep.subr.mxu0 0.0
        %8063 = vmatpush1.msra.mxu0 %v8042
        %8064 = vmatprep.subr.mxu0 0.0
        %8065 = vmatpush1.msra.mxu0 %v8041
        %8066 = vmatprep.subr.mxu0 0.0
        %8067 = vmatpush1.msra.mxu0 %v8040
        %8068 = vmatprep.subr.mxu0 0.0
        %8069 = vmatpush1.msra.mxu0 %v8039
        %8070 = vmatprep.subr.mxu0 0.0
        %8071 = vmatpush1.msra.mxu0 %v8038
        %8072 = vmatprep.subr.mxu0 0.0
        %8073 = vmatpush1.msra.mxu0 %v8037
        %8074 = vmatprep.subr.mxu0 0.0
        %8075 = vmatpush1.msra.mxu0 %v8036
        %8076 = vmatprep.subr.mxu0 0.0
        %8077 = vmatpush1.msra.mxu0 %v8035
        %8078 = vmatprep.subr.mxu0 0.0
        %8079 = vmatpush2.msra.mxu0 0.0
        %8080 = vmatprep.subr.mxu0 0.0
        %8081 = vmatpush2.msra.mxu0 0.0
        %8082 = vmatprep.subr.mxu0 0.0
        %8083 = vmatpush2.msra.mxu0 0.0
        %8084 = vmatprep.subr.mxu0 0.0
        %8085 = vmatpush2.msra.mxu0 0.0
        %8086 = vmatprep.subr.mxu0 0.0
        %8087 = vmatpush2.msra.mxu0 0.0
        %8088 = vmatprep.subr.mxu0 0.0
        %8089 = vmatpush2.msra.mxu0 0.0
        %8090 = vmatprep.subr.mxu0 0.0
        %8091 = vmatpush2.msra.mxu0 0.0
        %8092 = vmatprep.subr.mxu0 0.0
        %8093 = vmatpush2.msra.mxu0 0.0
        %8094 = vmatprep.subr.mxu0 0.0
        %8095 = vmatpush2.msra.mxu0 0.0
        %8096 = vmatprep.subr.mxu0 0.0
        %8097 = vmatpush2.msra.mxu0 0.0
        %8098 = vmatprep.subr.mxu0 0.0
        %8099 = vmatpush2.msra.mxu0 0.0
        %8100 = vmatprep.subr.mxu0 0.0
        %8101 = vmatpush2.msra.mxu0 0.0
        %8102 = vmatprep.subr.mxu0 0.0
        %8103 = vmatpush2.msra.mxu0 0.0
        %8104 = vmatprep.subr.mxu0 0.0
        %8105 = vmatpush2.msra.mxu0 0.0
        %8106 = vmatprep.subr.mxu0 0.0
        %8107 = vmatpush2.msra.mxu0 0.0
        %8108 = vmatprep.subr.mxu0 0.0
        %8109 = vmatpush2.msra.mxu0 0.0
        %8110 = vmatprep.mubr.f32.mxu0 0.0
        %8111 = vmatmul.mubr.f32.gmra.mxu0 %v8044
        %v8112 = vpop.f32.mrf.mxu0
        %v8113 = vadd.f32 0.0, %v8112
        %v8114 = vpop.f32.mrf.mxu0
        %8115 = vdwg.mxu0
        %v8116 = vadd.f32 %v8033, %v8113
        %s8117 = scalar_lea.vmem %s5, 2048
        %v8118 = vld [vmem:[%s8117] sm:$0xff]
        %v8119 = vld [vmem:[%s8117 + $0x8] sm:$0xff]
        %v8120 = vld [vmem:[%s8117 + $0x10] sm:$0xff]
        %v8121 = vld [vmem:[%s8117 + $0x18] sm:$0xff]
        %v8122 = vld [vmem:[%s8117 + $0x20] sm:$0xff]
        %v8123 = vld [vmem:[%s8117 + $0x28] sm:$0xff]
        %v8124 = vld [vmem:[%s8117 + $0x30] sm:$0xff]
        %v8125 = vld [vmem:[%s8117 + $0x38] sm:$0xff]
        %v8126 = vrot.slane %v7784, 4
        %v8127 = vsel %vm5465, %v8126, 0
        %8129 = vmatprep.subr.mxu0 0.0
        %8130 = vmatpush1.msra.mxu0 0.0
        %8131 = vmatprep.subr.mxu0 0.0
        %8132 = vmatpush1.msra.mxu0 0.0
        %8133 = vmatprep.subr.mxu0 0.0
        %8134 = vmatpush1.msra.mxu0 0.0
        %8135 = vmatprep.subr.mxu0 0.0
        %8136 = vmatpush1.msra.mxu0 0.0
        %8137 = vmatprep.subr.mxu0 0.0
        %8138 = vmatpush1.msra.mxu0 0.0
        %8139 = vmatprep.subr.mxu0 0.0
        %8140 = vmatpush1.msra.mxu0 0.0
        %8141 = vmatprep.subr.mxu0 0.0
        %8142 = vmatpush1.msra.mxu0 0.0
        %8143 = vmatprep.subr.mxu0 0.0
        %8144 = vmatpush1.msra.mxu0 0.0
        %8145 = vmatprep.subr.mxu0 0.0
        %8146 = vmatpush1.msra.mxu0 %v8125
        %8147 = vmatprep.subr.mxu0 0.0
        %8148 = vmatpush1.msra.mxu0 %v8124
        %8149 = vmatprep.subr.mxu0 0.0
        %8150 = vmatpush1.msra.mxu0 %v8123
        %8151 = vmatprep.subr.mxu0 0.0
        %8152 = vmatpush1.msra.mxu0 %v8122
        %8153 = vmatprep.subr.mxu0 0.0
        %8154 = vmatpush1.msra.mxu0 %v8121
        %8155 = vmatprep.subr.mxu0 0.0
        %8156 = vmatpush1.msra.mxu0 %v8120
        %8157 = vmatprep.subr.mxu0 0.0
        %8158 = vmatpush1.msra.mxu0 %v8119
        %8159 = vmatprep.subr.mxu0 0.0
        %8160 = vmatpush1.msra.mxu0 %v8118
        %8161 = vmatprep.subr.mxu0 0.0
        %8162 = vmatpush2.msra.mxu0 0.0
        %8163 = vmatprep.subr.mxu0 0.0
        %8164 = vmatpush2.msra.mxu0 0.0
        %8165 = vmatprep.subr.mxu0 0.0
        %8166 = vmatpush2.msra.mxu0 0.0
        %8167 = vmatprep.subr.mxu0 0.0
        %8168 = vmatpush2.msra.mxu0 0.0
        %8169 = vmatprep.subr.mxu0 0.0
        %8170 = vmatpush2.msra.mxu0 0.0
        %8171 = vmatprep.subr.mxu0 0.0
        %8172 = vmatpush2.msra.mxu0 0.0
        %8173 = vmatprep.subr.mxu0 0.0
        %8174 = vmatpush2.msra.mxu0 0.0
        %8175 = vmatprep.subr.mxu0 0.0
        %8176 = vmatpush2.msra.mxu0 0.0
        %8177 = vmatprep.subr.mxu0 0.0
        %8178 = vmatpush2.msra.mxu0 0.0
        %8179 = vmatprep.subr.mxu0 0.0
        %8180 = vmatpush2.msra.mxu0 0.0
        %8181 = vmatprep.subr.mxu0 0.0
        %8182 = vmatpush2.msra.mxu0 0.0
        %8183 = vmatprep.subr.mxu0 0.0
        %8184 = vmatpush2.msra.mxu0 0.0
        %8185 = vmatprep.subr.mxu0 0.0
        %8186 = vmatpush2.msra.mxu0 0.0
        %8187 = vmatprep.subr.mxu0 0.0
        %8188 = vmatpush2.msra.mxu0 0.0
        %8189 = vmatprep.subr.mxu0 0.0
        %8190 = vmatpush2.msra.mxu0 0.0
        %8191 = vmatprep.subr.mxu0 0.0
        %8192 = vmatpush2.msra.mxu0 0.0
        %8193 = vmatprep.mubr.f32.mxu0 0.0
        %8194 = vmatmul.mubr.f32.gmra.mxu0 %v8127
        %v8195 = vpop.f32.mrf.mxu0
        %v8196 = vadd.f32 0.0, %v8195
        %v8197 = vpop.f32.mrf.mxu0
        %8198 = vdwg.mxu0
        %v8199 = vadd.f32 %v8116, %v8196
        %s8200 = scalar_lea.vmem %s5, 2112
        %v8201 = vld [vmem:[%s8200] sm:$0xff]
        %v8202 = vld [vmem:[%s8200 + $0x8] sm:$0xff]
        %v8203 = vld [vmem:[%s8200 + $0x10] sm:$0xff]
        %v8204 = vld [vmem:[%s8200 + $0x18] sm:$0xff]
        %v8205 = vld [vmem:[%s8200 + $0x20] sm:$0xff]
        %v8206 = vld [vmem:[%s8200 + $0x28] sm:$0xff]
        %v8207 = vld [vmem:[%s8200 + $0x30] sm:$0xff]
        %v8208 = vld [vmem:[%s8200 + $0x38] sm:$0xff]
        %v8209 = vrot.slane %v7784, 5
        %v8210 = vsel %vm5465, %v8209, 0
        %8212 = vmatprep.subr.mxu0 0.0
        %8213 = vmatpush1.msra.mxu0 0.0
        %8214 = vmatprep.subr.mxu0 0.0
        %8215 = vmatpush1.msra.mxu0 0.0
        %8216 = vmatprep.subr.mxu0 0.0
        %8217 = vmatpush1.msra.mxu0 0.0
        %8218 = vmatprep.subr.mxu0 0.0
        %8219 = vmatpush1.msra.mxu0 0.0
        %8220 = vmatprep.subr.mxu0 0.0
        %8221 = vmatpush1.msra.mxu0 0.0
        %8222 = vmatprep.subr.mxu0 0.0
        %8223 = vmatpush1.msra.mxu0 0.0
        %8224 = vmatprep.subr.mxu0 0.0
        %8225 = vmatpush1.msra.mxu0 0.0
        %8226 = vmatprep.subr.mxu0 0.0
        %8227 = vmatpush1.msra.mxu0 0.0
        %8228 = vmatprep.subr.mxu0 0.0
        %8229 = vmatpush1.msra.mxu0 %v8208
        %8230 = vmatprep.subr.mxu0 0.0
        %8231 = vmatpush1.msra.mxu0 %v8207
        %8232 = vmatprep.subr.mxu0 0.0
        %8233 = vmatpush1.msra.mxu0 %v8206
        %8234 = vmatprep.subr.mxu0 0.0
        %8235 = vmatpush1.msra.mxu0 %v8205
        %8236 = vmatprep.subr.mxu0 0.0
        %8237 = vmatpush1.msra.mxu0 %v8204
        %8238 = vmatprep.subr.mxu0 0.0
        %8239 = vmatpush1.msra.mxu0 %v8203
        %8240 = vmatprep.subr.mxu0 0.0
        %8241 = vmatpush1.msra.mxu0 %v8202
        %8242 = vmatprep.subr.mxu0 0.0
        %8243 = vmatpush1.msra.mxu0 %v8201
        %8244 = vmatprep.subr.mxu0 0.0
        %8245 = vmatpush2.msra.mxu0 0.0
        %8246 = vmatprep.subr.mxu0 0.0
        %8247 = vmatpush2.msra.mxu0 0.0
        %8248 = vmatprep.subr.mxu0 0.0
        %8249 = vmatpush2.msra.mxu0 0.0
        %8250 = vmatprep.subr.mxu0 0.0
        %8251 = vmatpush2.msra.mxu0 0.0
        %8252 = vmatprep.subr.mxu0 0.0
        %8253 = vmatpush2.msra.mxu0 0.0
        %8254 = vmatprep.subr.mxu0 0.0
        %8255 = vmatpush2.msra.mxu0 0.0
        %8256 = vmatprep.subr.mxu0 0.0
        %8257 = vmatpush2.msra.mxu0 0.0
        %8258 = vmatprep.subr.mxu0 0.0
        %8259 = vmatpush2.msra.mxu0 0.0
        %8260 = vmatprep.subr.mxu0 0.0
        %8261 = vmatpush2.msra.mxu0 0.0
        %8262 = vmatprep.subr.mxu0 0.0
        %8263 = vmatpush2.msra.mxu0 0.0
        %8264 = vmatprep.subr.mxu0 0.0
        %8265 = vmatpush2.msra.mxu0 0.0
        %8266 = vmatprep.subr.mxu0 0.0
        %8267 = vmatpush2.msra.mxu0 0.0
        %8268 = vmatprep.subr.mxu0 0.0
        %8269 = vmatpush2.msra.mxu0 0.0
        %8270 = vmatprep.subr.mxu0 0.0
        %8271 = vmatpush2.msra.mxu0 0.0
        %8272 = vmatprep.subr.mxu0 0.0
        %8273 = vmatpush2.msra.mxu0 0.0
        %8274 = vmatprep.subr.mxu0 0.0
        %8275 = vmatpush2.msra.mxu0 0.0
        %8276 = vmatprep.mubr.f32.mxu0 0.0
        %8277 = vmatmul.mubr.f32.gmra.mxu0 %v8210
        %v8278 = vpop.f32.mrf.mxu0
        %v8279 = vadd.f32 0.0, %v8278
        %v8280 = vpop.f32.mrf.mxu0
        %8281 = vdwg.mxu0
        %v8282 = vadd.f32 %v8199, %v8279
        %s8283 = scalar_lea.vmem %s5, 2176
        %v8284 = vld [vmem:[%s8283] sm:$0xff]
        %v8285 = vld [vmem:[%s8283 + $0x8] sm:$0xff]
        %v8286 = vld [vmem:[%s8283 + $0x10] sm:$0xff]
        %v8287 = vld [vmem:[%s8283 + $0x18] sm:$0xff]
        %v8288 = vld [vmem:[%s8283 + $0x20] sm:$0xff]
        %v8289 = vld [vmem:[%s8283 + $0x28] sm:$0xff]
        %v8290 = vld [vmem:[%s8283 + $0x30] sm:$0xff]
        %v8291 = vld [vmem:[%s8283 + $0x38] sm:$0xff]
        %v8292 = vrot.slane %v7784, 6
        %v8293 = vsel %vm5465, %v8292, 0
        %8295 = vmatprep.subr.mxu0 0.0
        %8296 = vmatpush1.msra.mxu0 0.0
        %8297 = vmatprep.subr.mxu0 0.0
        %8298 = vmatpush1.msra.mxu0 0.0
        %8299 = vmatprep.subr.mxu0 0.0
        %8300 = vmatpush1.msra.mxu0 0.0
        %8301 = vmatprep.subr.mxu0 0.0
        %8302 = vmatpush1.msra.mxu0 0.0
        %8303 = vmatprep.subr.mxu0 0.0
        %8304 = vmatpush1.msra.mxu0 0.0
        %8305 = vmatprep.subr.mxu0 0.0
        %8306 = vmatpush1.msra.mxu0 0.0
        %8307 = vmatprep.subr.mxu0 0.0
        %8308 = vmatpush1.msra.mxu0 0.0
        %8309 = vmatprep.subr.mxu0 0.0
        %8310 = vmatpush1.msra.mxu0 0.0
        %8311 = vmatprep.subr.mxu0 0.0
        %8312 = vmatpush1.msra.mxu0 %v8291
        %8313 = vmatprep.subr.mxu0 0.0
        %8314 = vmatpush1.msra.mxu0 %v8290
        %8315 = vmatprep.subr.mxu0 0.0
        %8316 = vmatpush1.msra.mxu0 %v8289
        %8317 = vmatprep.subr.mxu0 0.0
        %8318 = vmatpush1.msra.mxu0 %v8288
        %8319 = vmatprep.subr.mxu0 0.0
        %8320 = vmatpush1.msra.mxu0 %v8287
        %8321 = vmatprep.subr.mxu0 0.0
        %8322 = vmatpush1.msra.mxu0 %v8286
        %8323 = vmatprep.subr.mxu0 0.0
        %8324 = vmatpush1.msra.mxu0 %v8285
        %8325 = vmatprep.subr.mxu0 0.0
        %8326 = vmatpush1.msra.mxu0 %v8284
        %8327 = vmatprep.subr.mxu0 0.0
        %8328 = vmatpush2.msra.mxu0 0.0
        %8329 = vmatprep.subr.mxu0 0.0
        %8330 = vmatpush2.msra.mxu0 0.0
        %8331 = vmatprep.subr.mxu0 0.0
        %8332 = vmatpush2.msra.mxu0 0.0
        %8333 = vmatprep.subr.mxu0 0.0
        %8334 = vmatpush2.msra.mxu0 0.0
        %8335 = vmatprep.subr.mxu0 0.0
        %8336 = vmatpush2.msra.mxu0 0.0
        %8337 = vmatprep.subr.mxu0 0.0
        %8338 = vmatpush2.msra.mxu0 0.0
        %8339 = vmatprep.subr.mxu0 0.0
        %8340 = vmatpush2.msra.mxu0 0.0
        %8341 = vmatprep.subr.mxu0 0.0
        %8342 = vmatpush2.msra.mxu0 0.0
        %8343 = vmatprep.subr.mxu0 0.0
        %8344 = vmatpush2.msra.mxu0 0.0
        %8345 = vmatprep.subr.mxu0 0.0
        %8346 = vmatpush2.msra.mxu0 0.0
        %8347 = vmatprep.subr.mxu0 0.0
        %8348 = vmatpush2.msra.mxu0 0.0
        %8349 = vmatprep.subr.mxu0 0.0
        %8350 = vmatpush2.msra.mxu0 0.0
        %8351 = vmatprep.subr.mxu0 0.0
        %8352 = vmatpush2.msra.mxu0 0.0
        %8353 = vmatprep.subr.mxu0 0.0
        %8354 = vmatpush2.msra.mxu0 0.0
        %8355 = vmatprep.subr.mxu0 0.0
        %8356 = vmatpush2.msra.mxu0 0.0
        %8357 = vmatprep.subr.mxu0 0.0
        %8358 = vmatpush2.msra.mxu0 0.0
        %8359 = vmatprep.mubr.f32.mxu0 0.0
        %8360 = vmatmul.mubr.f32.gmra.mxu0 %v8293
        %v8361 = vpop.f32.mrf.mxu0
        %v8362 = vadd.f32 0.0, %v8361
        %v8363 = vpop.f32.mrf.mxu0
        %8364 = vdwg.mxu0
        %v8365 = vadd.f32 %v8282, %v8362
        %v8366 = vmax.f32 %v5451, %v5452
        %s8367 = scalar_lea.vmem %s5, 2240
        %v8368 = vld [vmem:[%s8367] sm:$0xff]
        %v8369 = vld [vmem:[%s8367 + $0x8] sm:$0xff]
        %v8370 = vld [vmem:[%s8367 + $0x10] sm:$0xff]
        %v8371 = vld [vmem:[%s8367 + $0x18] sm:$0xff]
        %v8372 = vld [vmem:[%s8367 + $0x20] sm:$0xff]
        %v8373 = vld [vmem:[%s8367 + $0x28] sm:$0xff]
        %v8374 = vld [vmem:[%s8367 + $0x30] sm:$0xff]
        %v8375 = vld [vmem:[%s8367 + $0x38] sm:$0xff]
        %v8377 = vsel %vm5465, %v8366, 0
        %8379 = vmatprep.subr.mxu0 0.0
        %8380 = vmatpush1.msra.mxu0 0.0
        %8381 = vmatprep.subr.mxu0 0.0
        %8382 = vmatpush1.msra.mxu0 0.0
        %8383 = vmatprep.subr.mxu0 0.0
        %8384 = vmatpush1.msra.mxu0 0.0
        %8385 = vmatprep.subr.mxu0 0.0
        %8386 = vmatpush1.msra.mxu0 0.0
        %8387 = vmatprep.subr.mxu0 0.0
        %8388 = vmatpush1.msra.mxu0 0.0
        %8389 = vmatprep.subr.mxu0 0.0
        %8390 = vmatpush1.msra.mxu0 0.0
        %8391 = vmatprep.subr.mxu0 0.0
        %8392 = vmatpush1.msra.mxu0 0.0
        %8393 = vmatprep.subr.mxu0 0.0
        %8394 = vmatpush1.msra.mxu0 0.0
        %8395 = vmatprep.subr.mxu0 0.0
        %8396 = vmatpush1.msra.mxu0 %v8375
        %8397 = vmatprep.subr.mxu0 0.0
        %8398 = vmatpush1.msra.mxu0 %v8374
        %8399 = vmatprep.subr.mxu0 0.0
        %8400 = vmatpush1.msra.mxu0 %v8373
        %8401 = vmatprep.subr.mxu0 0.0
        %8402 = vmatpush1.msra.mxu0 %v8372
        %8403 = vmatprep.subr.mxu0 0.0
        %8404 = vmatpush1.msra.mxu0 %v8371
        %8405 = vmatprep.subr.mxu0 0.0
        %8406 = vmatpush1.msra.mxu0 %v8370
        %8407 = vmatprep.subr.mxu0 0.0
        %8408 = vmatpush1.msra.mxu0 %v8369
        %8409 = vmatprep.subr.mxu0 0.0
        %8410 = vmatpush1.msra.mxu0 %v8368
        %8411 = vmatprep.subr.mxu0 0.0
        %8412 = vmatpush2.msra.mxu0 0.0
        %8413 = vmatprep.subr.mxu0 0.0
        %8414 = vmatpush2.msra.mxu0 0.0
        %8415 = vmatprep.subr.mxu0 0.0
        %8416 = vmatpush2.msra.mxu0 0.0
        %8417 = vmatprep.subr.mxu0 0.0
        %8418 = vmatpush2.msra.mxu0 0.0
        %8419 = vmatprep.subr.mxu0 0.0
        %8420 = vmatpush2.msra.mxu0 0.0
        %8421 = vmatprep.subr.mxu0 0.0
        %8422 = vmatpush2.msra.mxu0 0.0
        %8423 = vmatprep.subr.mxu0 0.0
        %8424 = vmatpush2.msra.mxu0 0.0
        %8425 = vmatprep.subr.mxu0 0.0
        %8426 = vmatpush2.msra.mxu0 0.0
        %8427 = vmatprep.subr.mxu0 0.0
        %8428 = vmatpush2.msra.mxu0 0.0
        %8429 = vmatprep.subr.mxu0 0.0
        %8430 = vmatpush2.msra.mxu0 0.0
        %8431 = vmatprep.subr.mxu0 0.0
        %8432 = vmatpush2.msra.mxu0 0.0
        %8433 = vmatprep.subr.mxu0 0.0
        %8434 = vmatpush2.msra.mxu0 0.0
        %8435 = vmatprep.subr.mxu0 0.0
        %8436 = vmatpush2.msra.mxu0 0.0
        %8437 = vmatprep.subr.mxu0 0.0
        %8438 = vmatpush2.msra.mxu0 0.0
        %8439 = vmatprep.subr.mxu0 0.0
        %8440 = vmatpush2.msra.mxu0 0.0
        %8441 = vmatprep.subr.mxu0 0.0
        %8442 = vmatpush2.msra.mxu0 0.0
        %8443 = vmatprep.mubr.f32.mxu0 0.0
        %8444 = vmatmul.mubr.f32.gmra.mxu0 %v8377
        %v8445 = vpop.f32.mrf.mxu0
        %v8446 = vadd.f32 0.0, %v8445
        %v8447 = vpop.f32.mrf.mxu0
        %8448 = vdwg.mxu0
        %v8449 = vadd.f32 %v8365, %v8446
        %s8450 = scalar_lea.vmem %s5, 2304
        %v8451 = vld [vmem:[%s8450] sm:$0xff]
        %v8452 = vld [vmem:[%s8450 + $0x8] sm:$0xff]
        %v8453 = vld [vmem:[%s8450 + $0x10] sm:$0xff]
        %v8454 = vld [vmem:[%s8450 + $0x18] sm:$0xff]
        %v8455 = vld [vmem:[%s8450 + $0x20] sm:$0xff]
        %v8456 = vld [vmem:[%s8450 + $0x28] sm:$0xff]
        %v8457 = vld [vmem:[%s8450 + $0x30] sm:$0xff]
        %v8458 = vld [vmem:[%s8450 + $0x38] sm:$0xff]
        %v8459 = vrot.slane %v8366, 1
        %v8460 = vsel %vm5465, %v8459, 0
        %8462 = vmatprep.subr.mxu0 0.0
        %8463 = vmatpush1.msra.mxu0 0.0
        %8464 = vmatprep.subr.mxu0 0.0
        %8465 = vmatpush1.msra.mxu0 0.0
        %8466 = vmatprep.subr.mxu0 0.0
        %8467 = vmatpush1.msra.mxu0 0.0
        %8468 = vmatprep.subr.mxu0 0.0
        %8469 = vmatpush1.msra.mxu0 0.0
        %8470 = vmatprep.subr.mxu0 0.0
        %8471 = vmatpush1.msra.mxu0 0.0
        %8472 = vmatprep.subr.mxu0 0.0
        %8473 = vmatpush1.msra.mxu0 0.0
        %8474 = vmatprep.subr.mxu0 0.0
        %8475 = vmatpush1.msra.mxu0 0.0
        %8476 = vmatprep.subr.mxu0 0.0
        %8477 = vmatpush1.msra.mxu0 0.0
        %8478 = vmatprep.subr.mxu0 0.0
        %8479 = vmatpush1.msra.mxu0 %v8458
        %8480 = vmatprep.subr.mxu0 0.0
        %8481 = vmatpush1.msra.mxu0 %v8457
        %8482 = vmatprep.subr.mxu0 0.0
        %8483 = vmatpush1.msra.mxu0 %v8456
        %8484 = vmatprep.subr.mxu0 0.0
        %8485 = vmatpush1.msra.mxu0 %v8455
        %8486 = vmatprep.subr.mxu0 0.0
        %8487 = vmatpush1.msra.mxu0 %v8454
        %8488 = vmatprep.subr.mxu0 0.0
        %8489 = vmatpush1.msra.mxu0 %v8453
        %8490 = vmatprep.subr.mxu0 0.0
        %8491 = vmatpush1.msra.mxu0 %v8452
        %8492 = vmatprep.subr.mxu0 0.0
        %8493 = vmatpush1.msra.mxu0 %v8451
        %8494 = vmatprep.subr.mxu0 0.0
        %8495 = vmatpush2.msra.mxu0 0.0
        %8496 = vmatprep.subr.mxu0 0.0
        %8497 = vmatpush2.msra.mxu0 0.0
        %8498 = vmatprep.subr.mxu0 0.0
        %8499 = vmatpush2.msra.mxu0 0.0
        %8500 = vmatprep.subr.mxu0 0.0
        %8501 = vmatpush2.msra.mxu0 0.0
        %8502 = vmatprep.subr.mxu0 0.0
        %8503 = vmatpush2.msra.mxu0 0.0
        %8504 = vmatprep.subr.mxu0 0.0
        %8505 = vmatpush2.msra.mxu0 0.0
        %8506 = vmatprep.subr.mxu0 0.0
        %8507 = vmatpush2.msra.mxu0 0.0
        %8508 = vmatprep.subr.mxu0 0.0
        %8509 = vmatpush2.msra.mxu0 0.0
        %8510 = vmatprep.subr.mxu0 0.0
        %8511 = vmatpush2.msra.mxu0 0.0
        %8512 = vmatprep.subr.mxu0 0.0
        %8513 = vmatpush2.msra.mxu0 0.0
        %8514 = vmatprep.subr.mxu0 0.0
        %8515 = vmatpush2.msra.mxu0 0.0
        %8516 = vmatprep.subr.mxu0 0.0
        %8517 = vmatpush2.msra.mxu0 0.0
        %8518 = vmatprep.subr.mxu0 0.0
        %8519 = vmatpush2.msra.mxu0 0.0
        %8520 = vmatprep.subr.mxu0 0.0
        %8521 = vmatpush2.msra.mxu0 0.0
        %8522 = vmatprep.subr.mxu0 0.0
        %8523 = vmatpush2.msra.mxu0 0.0
        %8524 = vmatprep.subr.mxu0 0.0
        %8525 = vmatpush2.msra.mxu0 0.0
        %8526 = vmatprep.mubr.f32.mxu0 0.0
        %8527 = vmatmul.mubr.f32.gmra.mxu0 %v8460
        %v8528 = vpop.f32.mrf.mxu0
        %v8529 = vadd.f32 0.0, %v8528
        %v8530 = vpop.f32.mrf.mxu0
        %8531 = vdwg.mxu0
        %v8532 = vadd.f32 %v8449, %v8529
        %s8533 = scalar_lea.vmem %s5, 2368
        %v8534 = vld [vmem:[%s8533] sm:$0xff]
        %v8535 = vld [vmem:[%s8533 + $0x8] sm:$0xff]
        %v8536 = vld [vmem:[%s8533 + $0x10] sm:$0xff]
        %v8537 = vld [vmem:[%s8533 + $0x18] sm:$0xff]
        %v8538 = vld [vmem:[%s8533 + $0x20] sm:$0xff]
        %v8539 = vld [vmem:[%s8533 + $0x28] sm:$0xff]
        %v8540 = vld [vmem:[%s8533 + $0x30] sm:$0xff]
        %v8541 = vld [vmem:[%s8533 + $0x38] sm:$0xff]
        %v8542 = vrot.slane %v8366, 2
        %v8543 = vsel %vm5465, %v8542, 0
        %8545 = vmatprep.subr.mxu0 0.0
        %8546 = vmatpush1.msra.mxu0 0.0
        %8547 = vmatprep.subr.mxu0 0.0
        %8548 = vmatpush1.msra.mxu0 0.0
        %8549 = vmatprep.subr.mxu0 0.0
        %8550 = vmatpush1.msra.mxu0 0.0
        %8551 = vmatprep.subr.mxu0 0.0
        %8552 = vmatpush1.msra.mxu0 0.0
        %8553 = vmatprep.subr.mxu0 0.0
        %8554 = vmatpush1.msra.mxu0 0.0
        %8555 = vmatprep.subr.mxu0 0.0
        %8556 = vmatpush1.msra.mxu0 0.0
        %8557 = vmatprep.subr.mxu0 0.0
        %8558 = vmatpush1.msra.mxu0 0.0
        %8559 = vmatprep.subr.mxu0 0.0
        %8560 = vmatpush1.msra.mxu0 0.0
        %8561 = vmatprep.subr.mxu0 0.0
        %8562 = vmatpush1.msra.mxu0 %v8541
        %8563 = vmatprep.subr.mxu0 0.0
        %8564 = vmatpush1.msra.mxu0 %v8540
        %8565 = vmatprep.subr.mxu0 0.0
        %8566 = vmatpush1.msra.mxu0 %v8539
        %8567 = vmatprep.subr.mxu0 0.0
        %8568 = vmatpush1.msra.mxu0 %v8538
        %8569 = vmatprep.subr.mxu0 0.0
        %8570 = vmatpush1.msra.mxu0 %v8537
        %8571 = vmatprep.subr.mxu0 0.0
        %8572 = vmatpush1.msra.mxu0 %v8536
        %8573 = vmatprep.subr.mxu0 0.0
        %8574 = vmatpush1.msra.mxu0 %v8535
        %8575 = vmatprep.subr.mxu0 0.0
        %8576 = vmatpush1.msra.mxu0 %v8534
        %8577 = vmatprep.subr.mxu0 0.0
        %8578 = vmatpush2.msra.mxu0 0.0
        %8579 = vmatprep.subr.mxu0 0.0
        %8580 = vmatpush2.msra.mxu0 0.0
        %8581 = vmatprep.subr.mxu0 0.0
        %8582 = vmatpush2.msra.mxu0 0.0
        %8583 = vmatprep.subr.mxu0 0.0
        %8584 = vmatpush2.msra.mxu0 0.0
        %8585 = vmatprep.subr.mxu0 0.0
        %8586 = vmatpush2.msra.mxu0 0.0
        %8587 = vmatprep.subr.mxu0 0.0
        %8588 = vmatpush2.msra.mxu0 0.0
        %8589 = vmatprep.subr.mxu0 0.0
        %8590 = vmatpush2.msra.mxu0 0.0
        %8591 = vmatprep.subr.mxu0 0.0
        %8592 = vmatpush2.msra.mxu0 0.0
        %8593 = vmatprep.subr.mxu0 0.0
        %8594 = vmatpush2.msra.mxu0 0.0
        %8595 = vmatprep.subr.mxu0 0.0
        %8596 = vmatpush2.msra.mxu0 0.0
        %8597 = vmatprep.subr.mxu0 0.0
        %8598 = vmatpush2.msra.mxu0 0.0
        %8599 = vmatprep.subr.mxu0 0.0
        %8600 = vmatpush2.msra.mxu0 0.0
        %8601 = vmatprep.subr.mxu0 0.0
        %8602 = vmatpush2.msra.mxu0 0.0
        %8603 = vmatprep.subr.mxu0 0.0
        %8604 = vmatpush2.msra.mxu0 0.0
        %8605 = vmatprep.subr.mxu0 0.0
        %8606 = vmatpush2.msra.mxu0 0.0
        %8607 = vmatprep.subr.mxu0 0.0
        %8608 = vmatpush2.msra.mxu0 0.0
        %8609 = vmatprep.mubr.f32.mxu0 0.0
        %8610 = vmatmul.mubr.f32.gmra.mxu0 %v8543
        %v8611 = vpop.f32.mrf.mxu0
        %v8612 = vadd.f32 0.0, %v8611
        %v8613 = vpop.f32.mrf.mxu0
        %8614 = vdwg.mxu0
        %v8615 = vadd.f32 %v8532, %v8612
        %s8616 = scalar_lea.vmem %s5, 2432
        %v8617 = vld [vmem:[%s8616] sm:$0xff]
        %v8618 = vld [vmem:[%s8616 + $0x8] sm:$0xff]
        %v8619 = vld [vmem:[%s8616 + $0x10] sm:$0xff]
        %v8620 = vld [vmem:[%s8616 + $0x18] sm:$0xff]
        %v8621 = vld [vmem:[%s8616 + $0x20] sm:$0xff]
        %v8622 = vld [vmem:[%s8616 + $0x28] sm:$0xff]
        %v8623 = vld [vmem:[%s8616 + $0x30] sm:$0xff]
        %v8624 = vld [vmem:[%s8616 + $0x38] sm:$0xff]
        %v8625 = vrot.slane %v8366, 3
        %v8626 = vsel %vm5465, %v8625, 0
        %8628 = vmatprep.subr.mxu0 0.0
        %8629 = vmatpush1.msra.mxu0 0.0
        %8630 = vmatprep.subr.mxu0 0.0
        %8631 = vmatpush1.msra.mxu0 0.0
        %8632 = vmatprep.subr.mxu0 0.0
        %8633 = vmatpush1.msra.mxu0 0.0
        %8634 = vmatprep.subr.mxu0 0.0
        %8635 = vmatpush1.msra.mxu0 0.0
        %8636 = vmatprep.subr.mxu0 0.0
        %8637 = vmatpush1.msra.mxu0 0.0
        %8638 = vmatprep.subr.mxu0 0.0
        %8639 = vmatpush1.msra.mxu0 0.0
        %8640 = vmatprep.subr.mxu0 0.0
        %8641 = vmatpush1.msra.mxu0 0.0
        %8642 = vmatprep.subr.mxu0 0.0
        %8643 = vmatpush1.msra.mxu0 0.0
        %8644 = vmatprep.subr.mxu0 0.0
        %8645 = vmatpush1.msra.mxu0 %v8624
        %8646 = vmatprep.subr.mxu0 0.0
        %8647 = vmatpush1.msra.mxu0 %v8623
        %8648 = vmatprep.subr.mxu0 0.0
        %8649 = vmatpush1.msra.mxu0 %v8622
        %8650 = vmatprep.subr.mxu0 0.0
        %8651 = vmatpush1.msra.mxu0 %v8621
        %8652 = vmatprep.subr.mxu0 0.0
        %8653 = vmatpush1.msra.mxu0 %v8620
        %8654 = vmatprep.subr.mxu0 0.0
        %8655 = vmatpush1.msra.mxu0 %v8619
        %8656 = vmatprep.subr.mxu0 0.0
        %8657 = vmatpush1.msra.mxu0 %v8618
        %8658 = vmatprep.subr.mxu0 0.0
        %8659 = vmatpush1.msra.mxu0 %v8617
        %8660 = vmatprep.subr.mxu0 0.0
        %8661 = vmatpush2.msra.mxu0 0.0
        %8662 = vmatprep.subr.mxu0 0.0
        %8663 = vmatpush2.msra.mxu0 0.0
        %8664 = vmatprep.subr.mxu0 0.0
        %8665 = vmatpush2.msra.mxu0 0.0
        %8666 = vmatprep.subr.mxu0 0.0
        %8667 = vmatpush2.msra.mxu0 0.0
        %8668 = vmatprep.subr.mxu0 0.0
        %8669 = vmatpush2.msra.mxu0 0.0
        %8670 = vmatprep.subr.mxu0 0.0
        %8671 = vmatpush2.msra.mxu0 0.0
        %8672 = vmatprep.subr.mxu0 0.0
        %8673 = vmatpush2.msra.mxu0 0.0
        %8674 = vmatprep.subr.mxu0 0.0
        %8675 = vmatpush2.msra.mxu0 0.0
        %8676 = vmatprep.subr.mxu0 0.0
        %8677 = vmatpush2.msra.mxu0 0.0
        %8678 = vmatprep.subr.mxu0 0.0
        %8679 = vmatpush2.msra.mxu0 0.0
        %8680 = vmatprep.subr.mxu0 0.0
        %8681 = vmatpush2.msra.mxu0 0.0
        %8682 = vmatprep.subr.mxu0 0.0
        %8683 = vmatpush2.msra.mxu0 0.0
        %8684 = vmatprep.subr.mxu0 0.0
        %8685 = vmatpush2.msra.mxu0 0.0
        %8686 = vmatprep.subr.mxu0 0.0
        %8687 = vmatpush2.msra.mxu0 0.0
        %8688 = vmatprep.subr.mxu0 0.0
        %8689 = vmatpush2.msra.mxu0 0.0
        %8690 = vmatprep.subr.mxu0 0.0
        %8691 = vmatpush2.msra.mxu0 0.0
        %8692 = vmatprep.mubr.f32.mxu0 0.0
        %8693 = vmatmul.mubr.f32.gmra.mxu0 %v8626
        %v8694 = vpop.f32.mrf.mxu0
        %v8695 = vadd.f32 0.0, %v8694
        %v8696 = vpop.f32.mrf.mxu0
        %8697 = vdwg.mxu0
        %v8698 = vadd.f32 %v8615, %v8695
        %s8699 = scalar_lea.vmem %s5, 2496
        %v8700 = vld [vmem:[%s8699] sm:$0xff]
        %v8701 = vld [vmem:[%s8699 + $0x8] sm:$0xff]
        %v8702 = vld [vmem:[%s8699 + $0x10] sm:$0xff]
        %v8703 = vld [vmem:[%s8699 + $0x18] sm:$0xff]
        %v8704 = vld [vmem:[%s8699 + $0x20] sm:$0xff]
        %v8705 = vld [vmem:[%s8699 + $0x28] sm:$0xff]
        %v8706 = vld [vmem:[%s8699 + $0x30] sm:$0xff]
        %v8707 = vld [vmem:[%s8699 + $0x38] sm:$0xff]
        %v8708 = vrot.slane %v8366, 4
        %v8709 = vsel %vm5465, %v8708, 0
        %8711 = vmatprep.subr.mxu0 0.0
        %8712 = vmatpush1.msra.mxu0 0.0
        %8713 = vmatprep.subr.mxu0 0.0
        %8714 = vmatpush1.msra.mxu0 0.0
        %8715 = vmatprep.subr.mxu0 0.0
        %8716 = vmatpush1.msra.mxu0 0.0
        %8717 = vmatprep.subr.mxu0 0.0
        %8718 = vmatpush1.msra.mxu0 0.0
        %8719 = vmatprep.subr.mxu0 0.0
        %8720 = vmatpush1.msra.mxu0 0.0
        %8721 = vmatprep.subr.mxu0 0.0
        %8722 = vmatpush1.msra.mxu0 0.0
        %8723 = vmatprep.subr.mxu0 0.0
        %8724 = vmatpush1.msra.mxu0 0.0
        %8725 = vmatprep.subr.mxu0 0.0
        %8726 = vmatpush1.msra.mxu0 0.0
        %8727 = vmatprep.subr.mxu0 0.0
        %8728 = vmatpush1.msra.mxu0 %v8707
        %8729 = vmatprep.subr.mxu0 0.0
        %8730 = vmatpush1.msra.mxu0 %v8706
        %8731 = vmatprep.subr.mxu0 0.0
        %8732 = vmatpush1.msra.mxu0 %v8705
        %8733 = vmatprep.subr.mxu0 0.0
        %8734 = vmatpush1.msra.mxu0 %v8704
        %8735 = vmatprep.subr.mxu0 0.0
        %8736 = vmatpush1.msra.mxu0 %v8703
        %8737 = vmatprep.subr.mxu0 0.0
        %8738 = vmatpush1.msra.mxu0 %v8702
        %8739 = vmatprep.subr.mxu0 0.0
        %8740 = vmatpush1.msra.mxu0 %v8701
        %8741 = vmatprep.subr.mxu0 0.0
        %8742 = vmatpush1.msra.mxu0 %v8700
        %8743 = vmatprep.subr.mxu0 0.0
        %8744 = vmatpush2.msra.mxu0 0.0
        %8745 = vmatprep.subr.mxu0 0.0
        %8746 = vmatpush2.msra.mxu0 0.0
        %8747 = vmatprep.subr.mxu0 0.0
        %8748 = vmatpush2.msra.mxu0 0.0
        %8749 = vmatprep.subr.mxu0 0.0
        %8750 = vmatpush2.msra.mxu0 0.0
        %8751 = vmatprep.subr.mxu0 0.0
        %8752 = vmatpush2.msra.mxu0 0.0
        %8753 = vmatprep.subr.mxu0 0.0
        %8754 = vmatpush2.msra.mxu0 0.0
        %8755 = vmatprep.subr.mxu0 0.0
        %8756 = vmatpush2.msra.mxu0 0.0
        %8757 = vmatprep.subr.mxu0 0.0
        %8758 = vmatpush2.msra.mxu0 0.0
        %8759 = vmatprep.subr.mxu0 0.0
        %8760 = vmatpush2.msra.mxu0 0.0
        %8761 = vmatprep.subr.mxu0 0.0
        %8762 = vmatpush2.msra.mxu0 0.0
        %8763 = vmatprep.subr.mxu0 0.0
        %8764 = vmatpush2.msra.mxu0 0.0
        %8765 = vmatprep.subr.mxu0 0.0
        %8766 = vmatpush2.msra.mxu0 0.0
        %8767 = vmatprep.subr.mxu0 0.0
        %8768 = vmatpush2.msra.mxu0 0.0
        %8769 = vmatprep.subr.mxu0 0.0
        %8770 = vmatpush2.msra.mxu0 0.0
        %8771 = vmatprep.subr.mxu0 0.0
        %8772 = vmatpush2.msra.mxu0 0.0
        %8773 = vmatprep.subr.mxu0 0.0
        %8774 = vmatpush2.msra.mxu0 0.0
        %8775 = vmatprep.mubr.f32.mxu0 0.0
        %8776 = vmatmul.mubr.f32.gmra.mxu0 %v8709
        %v8777 = vpop.f32.mrf.mxu0
        %v8778 = vadd.f32 0.0, %v8777
        %v8779 = vpop.f32.mrf.mxu0
        %8780 = vdwg.mxu0
        %v8781 = vadd.f32 %v8698, %v8778
        %s8782 = scalar_lea.vmem %s5, 2560
        %v8783 = vld [vmem:[%s8782] sm:$0xff]
        %v8784 = vld [vmem:[%s8782 + $0x8] sm:$0xff]
        %v8785 = vld [vmem:[%s8782 + $0x10] sm:$0xff]
        %v8786 = vld [vmem:[%s8782 + $0x18] sm:$0xff]
        %v8787 = vld [vmem:[%s8782 + $0x20] sm:$0xff]
        %v8788 = vld [vmem:[%s8782 + $0x28] sm:$0xff]
        %v8789 = vld [vmem:[%s8782 + $0x30] sm:$0xff]
        %v8790 = vld [vmem:[%s8782 + $0x38] sm:$0xff]
        %v8791 = vrot.slane %v8366, 5
        %v8792 = vsel %vm5465, %v8791, 0
        %8794 = vmatprep.subr.mxu0 0.0
        %8795 = vmatpush1.msra.mxu0 0.0
        %8796 = vmatprep.subr.mxu0 0.0
        %8797 = vmatpush1.msra.mxu0 0.0
        %8798 = vmatprep.subr.mxu0 0.0
        %8799 = vmatpush1.msra.mxu0 0.0
        %8800 = vmatprep.subr.mxu0 0.0
        %8801 = vmatpush1.msra.mxu0 0.0
        %8802 = vmatprep.subr.mxu0 0.0
        %8803 = vmatpush1.msra.mxu0 0.0
        %8804 = vmatprep.subr.mxu0 0.0
        %8805 = vmatpush1.msra.mxu0 0.0
        %8806 = vmatprep.subr.mxu0 0.0
        %8807 = vmatpush1.msra.mxu0 0.0
        %8808 = vmatprep.subr.mxu0 0.0
        %8809 = vmatpush1.msra.mxu0 0.0
        %8810 = vmatprep.subr.mxu0 0.0
        %8811 = vmatpush1.msra.mxu0 %v8790
        %8812 = vmatprep.subr.mxu0 0.0
        %8813 = vmatpush1.msra.mxu0 %v8789
        %8814 = vmatprep.subr.mxu0 0.0
        %8815 = vmatpush1.msra.mxu0 %v8788
        %8816 = vmatprep.subr.mxu0 0.0
        %8817 = vmatpush1.msra.mxu0 %v8787
        %8818 = vmatprep.subr.mxu0 0.0
        %8819 = vmatpush1.msra.mxu0 %v8786
        %8820 = vmatprep.subr.mxu0 0.0
        %8821 = vmatpush1.msra.mxu0 %v8785
        %8822 = vmatprep.subr.mxu0 0.0
        %8823 = vmatpush1.msra.mxu0 %v8784
        %8824 = vmatprep.subr.mxu0 0.0
        %8825 = vmatpush1.msra.mxu0 %v8783
        %8826 = vmatprep.subr.mxu0 0.0
        %8827 = vmatpush2.msra.mxu0 0.0
        %8828 = vmatprep.subr.mxu0 0.0
        %8829 = vmatpush2.msra.mxu0 0.0
        %8830 = vmatprep.subr.mxu0 0.0
        %8831 = vmatpush2.msra.mxu0 0.0
        %8832 = vmatprep.subr.mxu0 0.0
        %8833 = vmatpush2.msra.mxu0 0.0
        %8834 = vmatprep.subr.mxu0 0.0
        %8835 = vmatpush2.msra.mxu0 0.0
        %8836 = vmatprep.subr.mxu0 0.0
        %8837 = vmatpush2.msra.mxu0 0.0
        %8838 = vmatprep.subr.mxu0 0.0
        %8839 = vmatpush2.msra.mxu0 0.0
        %8840 = vmatprep.subr.mxu0 0.0
        %8841 = vmatpush2.msra.mxu0 0.0
        %8842 = vmatprep.subr.mxu0 0.0
        %8843 = vmatpush2.msra.mxu0 0.0
        %8844 = vmatprep.subr.mxu0 0.0
        %8845 = vmatpush2.msra.mxu0 0.0
        %8846 = vmatprep.subr.mxu0 0.0
        %8847 = vmatpush2.msra.mxu0 0.0
        %8848 = vmatprep.subr.mxu0 0.0
        %8849 = vmatpush2.msra.mxu0 0.0
        %8850 = vmatprep.subr.mxu0 0.0
        %8851 = vmatpush2.msra.mxu0 0.0
        %8852 = vmatprep.subr.mxu0 0.0
        %8853 = vmatpush2.msra.mxu0 0.0
        %8854 = vmatprep.subr.mxu0 0.0
        %8855 = vmatpush2.msra.mxu0 0.0
        %8856 = vmatprep.subr.mxu0 0.0
        %8857 = vmatpush2.msra.mxu0 0.0
        %8858 = vmatprep.mubr.f32.mxu0 0.0
        %8859 = vmatmul.mubr.f32.gmra.mxu0 %v8792
        %v8860 = vpop.f32.mrf.mxu0
        %v8861 = vadd.f32 0.0, %v8860
        %v8862 = vpop.f32.mrf.mxu0
        %8863 = vdwg.mxu0
        %v8864 = vadd.f32 %v8781, %v8861
        %s8865 = scalar_lea.vmem %s5, 2624
        %v8866 = vld [vmem:[%s8865] sm:$0xff]
        %v8867 = vld [vmem:[%s8865 + $0x8] sm:$0xff]
        %v8868 = vld [vmem:[%s8865 + $0x10] sm:$0xff]
        %v8869 = vld [vmem:[%s8865 + $0x18] sm:$0xff]
        %v8870 = vld [vmem:[%s8865 + $0x20] sm:$0xff]
        %v8871 = vld [vmem:[%s8865 + $0x28] sm:$0xff]
        %v8872 = vld [vmem:[%s8865 + $0x30] sm:$0xff]
        %v8873 = vld [vmem:[%s8865 + $0x38] sm:$0xff]
        %v8874 = vrot.slane %v8366, 6
        %v8875 = vsel %vm5465, %v8874, 0
        %8877 = vmatprep.subr.mxu0 0.0
        %8878 = vmatpush1.msra.mxu0 0.0
        %8879 = vmatprep.subr.mxu0 0.0
        %8880 = vmatpush1.msra.mxu0 0.0
        %8881 = vmatprep.subr.mxu0 0.0
        %8882 = vmatpush1.msra.mxu0 0.0
        %8883 = vmatprep.subr.mxu0 0.0
        %8884 = vmatpush1.msra.mxu0 0.0
        %8885 = vmatprep.subr.mxu0 0.0
        %8886 = vmatpush1.msra.mxu0 0.0
        %8887 = vmatprep.subr.mxu0 0.0
        %8888 = vmatpush1.msra.mxu0 0.0
        %8889 = vmatprep.subr.mxu0 0.0
        %8890 = vmatpush1.msra.mxu0 0.0
        %8891 = vmatprep.subr.mxu0 0.0
        %8892 = vmatpush1.msra.mxu0 0.0
        %8893 = vmatprep.subr.mxu0 0.0
        %8894 = vmatpush1.msra.mxu0 %v8873
        %8895 = vmatprep.subr.mxu0 0.0
        %8896 = vmatpush1.msra.mxu0 %v8872
        %8897 = vmatprep.subr.mxu0 0.0
        %8898 = vmatpush1.msra.mxu0 %v8871
        %8899 = vmatprep.subr.mxu0 0.0
        %8900 = vmatpush1.msra.mxu0 %v8870
        %8901 = vmatprep.subr.mxu0 0.0
        %8902 = vmatpush1.msra.mxu0 %v8869
        %8903 = vmatprep.subr.mxu0 0.0
        %8904 = vmatpush1.msra.mxu0 %v8868
        %8905 = vmatprep.subr.mxu0 0.0
        %8906 = vmatpush1.msra.mxu0 %v8867
        %8907 = vmatprep.subr.mxu0 0.0
        %8908 = vmatpush1.msra.mxu0 %v8866
        %8909 = vmatprep.subr.mxu0 0.0
        %8910 = vmatpush2.msra.mxu0 0.0
        %8911 = vmatprep.subr.mxu0 0.0
        %8912 = vmatpush2.msra.mxu0 0.0
        %8913 = vmatprep.subr.mxu0 0.0
        %8914 = vmatpush2.msra.mxu0 0.0
        %8915 = vmatprep.subr.mxu0 0.0
        %8916 = vmatpush2.msra.mxu0 0.0
        %8917 = vmatprep.subr.mxu0 0.0
        %8918 = vmatpush2.msra.mxu0 0.0
        %8919 = vmatprep.subr.mxu0 0.0
        %8920 = vmatpush2.msra.mxu0 0.0
        %8921 = vmatprep.subr.mxu0 0.0
        %8922 = vmatpush2.msra.mxu0 0.0
        %8923 = vmatprep.subr.mxu0 0.0
        %8924 = vmatpush2.msra.mxu0 0.0
        %8925 = vmatprep.subr.mxu0 0.0
        %8926 = vmatpush2.msra.mxu0 0.0
        %8927 = vmatprep.subr.mxu0 0.0
        %8928 = vmatpush2.msra.mxu0 0.0
        %8929 = vmatprep.subr.mxu0 0.0
        %8930 = vmatpush2.msra.mxu0 0.0
        %8931 = vmatprep.subr.mxu0 0.0
        %8932 = vmatpush2.msra.mxu0 0.0
        %8933 = vmatprep.subr.mxu0 0.0
        %8934 = vmatpush2.msra.mxu0 0.0
        %8935 = vmatprep.subr.mxu0 0.0
        %8936 = vmatpush2.msra.mxu0 0.0
        %8937 = vmatprep.subr.mxu0 0.0
        %8938 = vmatpush2.msra.mxu0 0.0
        %8939 = vmatprep.subr.mxu0 0.0
        %8940 = vmatpush2.msra.mxu0 0.0
        %8941 = vmatprep.mubr.f32.mxu0 0.0
        %8942 = vmatmul.mubr.f32.gmra.mxu0 %v8875
        %v8943 = vpop.f32.mrf.mxu0
        %v8944 = vadd.f32 0.0, %v8943
        %v8945 = vpop.f32.mrf.mxu0
        %8946 = vdwg.mxu0
        %v8947 = vadd.f32 %v8864, %v8944
        %v8948 = vmax.f32 %v5453, %v5454
        %s8949 = scalar_lea.vmem %s5, 2688
        %v8950 = vld [vmem:[%s8949] sm:$0xff]
        %v8951 = vld [vmem:[%s8949 + $0x8] sm:$0xff]
        %v8952 = vld [vmem:[%s8949 + $0x10] sm:$0xff]
        %v8953 = vld [vmem:[%s8949 + $0x18] sm:$0xff]
        %v8954 = vld [vmem:[%s8949 + $0x20] sm:$0xff]
        %v8955 = vld [vmem:[%s8949 + $0x28] sm:$0xff]
        %v8956 = vld [vmem:[%s8949 + $0x30] sm:$0xff]
        %v8957 = vld [vmem:[%s8949 + $0x38] sm:$0xff]
        %v8959 = vsel %vm5465, %v8948, 0
        %8961 = vmatprep.subr.mxu0 0.0
        %8962 = vmatpush1.msra.mxu0 0.0
        %8963 = vmatprep.subr.mxu0 0.0
        %8964 = vmatpush1.msra.mxu0 0.0
        %8965 = vmatprep.subr.mxu0 0.0
        %8966 = vmatpush1.msra.mxu0 0.0
        %8967 = vmatprep.subr.mxu0 0.0
        %8968 = vmatpush1.msra.mxu0 0.0
        %8969 = vmatprep.subr.mxu0 0.0
        %8970 = vmatpush1.msra.mxu0 0.0
        %8971 = vmatprep.subr.mxu0 0.0
        %8972 = vmatpush1.msra.mxu0 0.0
        %8973 = vmatprep.subr.mxu0 0.0
        %8974 = vmatpush1.msra.mxu0 0.0
        %8975 = vmatprep.subr.mxu0 0.0
        %8976 = vmatpush1.msra.mxu0 0.0
        %8977 = vmatprep.subr.mxu0 0.0
        %8978 = vmatpush1.msra.mxu0 %v8957
        %8979 = vmatprep.subr.mxu0 0.0
        %8980 = vmatpush1.msra.mxu0 %v8956
        %8981 = vmatprep.subr.mxu0 0.0
        %8982 = vmatpush1.msra.mxu0 %v8955
        %8983 = vmatprep.subr.mxu0 0.0
        %8984 = vmatpush1.msra.mxu0 %v8954
        %8985 = vmatprep.subr.mxu0 0.0
        %8986 = vmatpush1.msra.mxu0 %v8953
        %8987 = vmatprep.subr.mxu0 0.0
        %8988 = vmatpush1.msra.mxu0 %v8952
        %8989 = vmatprep.subr.mxu0 0.0
        %8990 = vmatpush1.msra.mxu0 %v8951
        %8991 = vmatprep.subr.mxu0 0.0
        %8992 = vmatpush1.msra.mxu0 %v8950
        %8993 = vmatprep.subr.mxu0 0.0
        %8994 = vmatpush2.msra.mxu0 0.0
        %8995 = vmatprep.subr.mxu0 0.0
        %8996 = vmatpush2.msra.mxu0 0.0
        %8997 = vmatprep.subr.mxu0 0.0
        %8998 = vmatpush2.msra.mxu0 0.0
        %8999 = vmatprep.subr.mxu0 0.0
        %9000 = vmatpush2.msra.mxu0 0.0
        %9001 = vmatprep.subr.mxu0 0.0
        %9002 = vmatpush2.msra.mxu0 0.0
        %9003 = vmatprep.subr.mxu0 0.0
        %9004 = vmatpush2.msra.mxu0 0.0
        %9005 = vmatprep.subr.mxu0 0.0
        %9006 = vmatpush2.msra.mxu0 0.0
        %9007 = vmatprep.subr.mxu0 0.0
        %9008 = vmatpush2.msra.mxu0 0.0
        %9009 = vmatprep.subr.mxu0 0.0
        %9010 = vmatpush2.msra.mxu0 0.0
        %9011 = vmatprep.subr.mxu0 0.0
        %9012 = vmatpush2.msra.mxu0 0.0
        %9013 = vmatprep.subr.mxu0 0.0
        %9014 = vmatpush2.msra.mxu0 0.0
        %9015 = vmatprep.subr.mxu0 0.0
        %9016 = vmatpush2.msra.mxu0 0.0
        %9017 = vmatprep.subr.mxu0 0.0
        %9018 = vmatpush2.msra.mxu0 0.0
        %9019 = vmatprep.subr.mxu0 0.0
        %9020 = vmatpush2.msra.mxu0 0.0
        %9021 = vmatprep.subr.mxu0 0.0
        %9022 = vmatpush2.msra.mxu0 0.0
        %9023 = vmatprep.subr.mxu0 0.0
        %9024 = vmatpush2.msra.mxu0 0.0
        %9025 = vmatprep.mubr.f32.mxu0 0.0
        %9026 = vmatmul.mubr.f32.gmra.mxu0 %v8959
        %v9027 = vpop.f32.mrf.mxu0
        %v9028 = vadd.f32 0.0, %v9027
        %v9029 = vpop.f32.mrf.mxu0
        %9030 = vdwg.mxu0
        %v9031 = vadd.f32 %v8947, %v9028
        %s9032 = scalar_lea.vmem %s5, 2752
        %v9033 = vld [vmem:[%s9032] sm:$0xff]
        %v9034 = vld [vmem:[%s9032 + $0x8] sm:$0xff]
        %v9035 = vld [vmem:[%s9032 + $0x10] sm:$0xff]
        %v9036 = vld [vmem:[%s9032 + $0x18] sm:$0xff]
        %v9037 = vld [vmem:[%s9032 + $0x20] sm:$0xff]
        %v9038 = vld [vmem:[%s9032 + $0x28] sm:$0xff]
        %v9039 = vld [vmem:[%s9032 + $0x30] sm:$0xff]
        %v9040 = vld [vmem:[%s9032 + $0x38] sm:$0xff]
        %v9041 = vrot.slane %v8948, 1
        %v9042 = vsel %vm5465, %v9041, 0
        %9044 = vmatprep.subr.mxu0 0.0
        %9045 = vmatpush1.msra.mxu0 0.0
        %9046 = vmatprep.subr.mxu0 0.0
        %9047 = vmatpush1.msra.mxu0 0.0
        %9048 = vmatprep.subr.mxu0 0.0
        %9049 = vmatpush1.msra.mxu0 0.0
        %9050 = vmatprep.subr.mxu0 0.0
        %9051 = vmatpush1.msra.mxu0 0.0
        %9052 = vmatprep.subr.mxu0 0.0
        %9053 = vmatpush1.msra.mxu0 0.0
        %9054 = vmatprep.subr.mxu0 0.0
        %9055 = vmatpush1.msra.mxu0 0.0
        %9056 = vmatprep.subr.mxu0 0.0
        %9057 = vmatpush1.msra.mxu0 0.0
        %9058 = vmatprep.subr.mxu0 0.0
        %9059 = vmatpush1.msra.mxu0 0.0
        %9060 = vmatprep.subr.mxu0 0.0
        %9061 = vmatpush1.msra.mxu0 %v9040
        %9062 = vmatprep.subr.mxu0 0.0
        %9063 = vmatpush1.msra.mxu0 %v9039
        %9064 = vmatprep.subr.mxu0 0.0
        %9065 = vmatpush1.msra.mxu0 %v9038
        %9066 = vmatprep.subr.mxu0 0.0
        %9067 = vmatpush1.msra.mxu0 %v9037
        %9068 = vmatprep.subr.mxu0 0.0
        %9069 = vmatpush1.msra.mxu0 %v9036
        %9070 = vmatprep.subr.mxu0 0.0
        %9071 = vmatpush1.msra.mxu0 %v9035
        %9072 = vmatprep.subr.mxu0 0.0
        %9073 = vmatpush1.msra.mxu0 %v9034
        %9074 = vmatprep.subr.mxu0 0.0
        %9075 = vmatpush1.msra.mxu0 %v9033
        %9076 = vmatprep.subr.mxu0 0.0
        %9077 = vmatpush2.msra.mxu0 0.0
        %9078 = vmatprep.subr.mxu0 0.0
        %9079 = vmatpush2.msra.mxu0 0.0
        %9080 = vmatprep.subr.mxu0 0.0
        %9081 = vmatpush2.msra.mxu0 0.0
        %9082 = vmatprep.subr.mxu0 0.0
        %9083 = vmatpush2.msra.mxu0 0.0
        %9084 = vmatprep.subr.mxu0 0.0
        %9085 = vmatpush2.msra.mxu0 0.0
        %9086 = vmatprep.subr.mxu0 0.0
        %9087 = vmatpush2.msra.mxu0 0.0
        %9088 = vmatprep.subr.mxu0 0.0
        %9089 = vmatpush2.msra.mxu0 0.0
        %9090 = vmatprep.subr.mxu0 0.0
        %9091 = vmatpush2.msra.mxu0 0.0
        %9092 = vmatprep.subr.mxu0 0.0
        %9093 = vmatpush2.msra.mxu0 0.0
        %9094 = vmatprep.subr.mxu0 0.0
        %9095 = vmatpush2.msra.mxu0 0.0
        %9096 = vmatprep.subr.mxu0 0.0
        %9097 = vmatpush2.msra.mxu0 0.0
        %9098 = vmatprep.subr.mxu0 0.0
        %9099 = vmatpush2.msra.mxu0 0.0
        %9100 = vmatprep.subr.mxu0 0.0
        %9101 = vmatpush2.msra.mxu0 0.0
        %9102 = vmatprep.subr.mxu0 0.0
        %9103 = vmatpush2.msra.mxu0 0.0
        %9104 = vmatprep.subr.mxu0 0.0
        %9105 = vmatpush2.msra.mxu0 0.0
        %9106 = vmatprep.subr.mxu0 0.0
        %9107 = vmatpush2.msra.mxu0 0.0
        %9108 = vmatprep.mubr.f32.mxu0 0.0
        %9109 = vmatmul.mubr.f32.gmra.mxu0 %v9042
        %v9110 = vpop.f32.mrf.mxu0
        %v9111 = vadd.f32 0.0, %v9110
        %v9112 = vpop.f32.mrf.mxu0
        %9113 = vdwg.mxu0
        %v9114 = vadd.f32 %v9031, %v9111
        %s9115 = scalar_lea.vmem %s5, 2816
        %v9116 = vld [vmem:[%s9115] sm:$0xff]
        %v9117 = vld [vmem:[%s9115 + $0x8] sm:$0xff]
        %v9118 = vld [vmem:[%s9115 + $0x10] sm:$0xff]
        %v9119 = vld [vmem:[%s9115 + $0x18] sm:$0xff]
        %v9120 = vld [vmem:[%s9115 + $0x20] sm:$0xff]
        %v9121 = vld [vmem:[%s9115 + $0x28] sm:$0xff]
        %v9122 = vld [vmem:[%s9115 + $0x30] sm:$0xff]
        %v9123 = vld [vmem:[%s9115 + $0x38] sm:$0xff]
        %v9124 = vrot.slane %v8948, 2
        %v9125 = vsel %vm5465, %v9124, 0
        %9127 = vmatprep.subr.mxu0 0.0
        %9128 = vmatpush1.msra.mxu0 0.0
        %9129 = vmatprep.subr.mxu0 0.0
        %9130 = vmatpush1.msra.mxu0 0.0
        %9131 = vmatprep.subr.mxu0 0.0
        %9132 = vmatpush1.msra.mxu0 0.0
        %9133 = vmatprep.subr.mxu0 0.0
        %9134 = vmatpush1.msra.mxu0 0.0
        %9135 = vmatprep.subr.mxu0 0.0
        %9136 = vmatpush1.msra.mxu0 0.0
        %9137 = vmatprep.subr.mxu0 0.0
        %9138 = vmatpush1.msra.mxu0 0.0
        %9139 = vmatprep.subr.mxu0 0.0
        %9140 = vmatpush1.msra.mxu0 0.0
        %9141 = vmatprep.subr.mxu0 0.0
        %9142 = vmatpush1.msra.mxu0 0.0
        %9143 = vmatprep.subr.mxu0 0.0
        %9144 = vmatpush1.msra.mxu0 %v9123
        %9145 = vmatprep.subr.mxu0 0.0
        %9146 = vmatpush1.msra.mxu0 %v9122
        %9147 = vmatprep.subr.mxu0 0.0
        %9148 = vmatpush1.msra.mxu0 %v9121
        %9149 = vmatprep.subr.mxu0 0.0
        %9150 = vmatpush1.msra.mxu0 %v9120
        %9151 = vmatprep.subr.mxu0 0.0
        %9152 = vmatpush1.msra.mxu0 %v9119
        %9153 = vmatprep.subr.mxu0 0.0
        %9154 = vmatpush1.msra.mxu0 %v9118
        %9155 = vmatprep.subr.mxu0 0.0
        %9156 = vmatpush1.msra.mxu0 %v9117
        %9157 = vmatprep.subr.mxu0 0.0
        %9158 = vmatpush1.msra.mxu0 %v9116
        %9159 = vmatprep.subr.mxu0 0.0
        %9160 = vmatpush2.msra.mxu0 0.0
        %9161 = vmatprep.subr.mxu0 0.0
        %9162 = vmatpush2.msra.mxu0 0.0
        %9163 = vmatprep.subr.mxu0 0.0
        %9164 = vmatpush2.msra.mxu0 0.0
        %9165 = vmatprep.subr.mxu0 0.0
        %9166 = vmatpush2.msra.mxu0 0.0
        %9167 = vmatprep.subr.mxu0 0.0
        %9168 = vmatpush2.msra.mxu0 0.0
        %9169 = vmatprep.subr.mxu0 0.0
        %9170 = vmatpush2.msra.mxu0 0.0
        %9171 = vmatprep.subr.mxu0 0.0
        %9172 = vmatpush2.msra.mxu0 0.0
        %9173 = vmatprep.subr.mxu0 0.0
        %9174 = vmatpush2.msra.mxu0 0.0
        %9175 = vmatprep.subr.mxu0 0.0
        %9176 = vmatpush2.msra.mxu0 0.0
        %9177 = vmatprep.subr.mxu0 0.0
        %9178 = vmatpush2.msra.mxu0 0.0
        %9179 = vmatprep.subr.mxu0 0.0
        %9180 = vmatpush2.msra.mxu0 0.0
        %9181 = vmatprep.subr.mxu0 0.0
        %9182 = vmatpush2.msra.mxu0 0.0
        %9183 = vmatprep.subr.mxu0 0.0
        %9184 = vmatpush2.msra.mxu0 0.0
        %9185 = vmatprep.subr.mxu0 0.0
        %9186 = vmatpush2.msra.mxu0 0.0
        %9187 = vmatprep.subr.mxu0 0.0
        %9188 = vmatpush2.msra.mxu0 0.0
        %9189 = vmatprep.subr.mxu0 0.0
        %9190 = vmatpush2.msra.mxu0 0.0
        %9191 = vmatprep.mubr.f32.mxu0 0.0
        %9192 = vmatmul.mubr.f32.gmra.mxu0 %v9125
        %v9193 = vpop.f32.mrf.mxu0
        %v9194 = vadd.f32 0.0, %v9193
        %v9195 = vpop.f32.mrf.mxu0
        %9196 = vdwg.mxu0
        %v9197 = vadd.f32 %v9114, %v9194
        %s9198 = scalar_lea.vmem %s5, 2880
        %v9199 = vld [vmem:[%s9198] sm:$0xff]
        %v9200 = vld [vmem:[%s9198 + $0x8] sm:$0xff]
        %v9201 = vld [vmem:[%s9198 + $0x10] sm:$0xff]
        %v9202 = vld [vmem:[%s9198 + $0x18] sm:$0xff]
        %v9203 = vld [vmem:[%s9198 + $0x20] sm:$0xff]
        %v9204 = vld [vmem:[%s9198 + $0x28] sm:$0xff]
        %v9205 = vld [vmem:[%s9198 + $0x30] sm:$0xff]
        %v9206 = vld [vmem:[%s9198 + $0x38] sm:$0xff]
        %v9207 = vrot.slane %v8948, 3
        %v9208 = vsel %vm5465, %v9207, 0
        %9210 = vmatprep.subr.mxu0 0.0
        %9211 = vmatpush1.msra.mxu0 0.0
        %9212 = vmatprep.subr.mxu0 0.0
        %9213 = vmatpush1.msra.mxu0 0.0
        %9214 = vmatprep.subr.mxu0 0.0
        %9215 = vmatpush1.msra.mxu0 0.0
        %9216 = vmatprep.subr.mxu0 0.0
        %9217 = vmatpush1.msra.mxu0 0.0
        %9218 = vmatprep.subr.mxu0 0.0
        %9219 = vmatpush1.msra.mxu0 0.0
        %9220 = vmatprep.subr.mxu0 0.0
        %9221 = vmatpush1.msra.mxu0 0.0
        %9222 = vmatprep.subr.mxu0 0.0
        %9223 = vmatpush1.msra.mxu0 0.0
        %9224 = vmatprep.subr.mxu0 0.0
        %9225 = vmatpush1.msra.mxu0 0.0
        %9226 = vmatprep.subr.mxu0 0.0
        %9227 = vmatpush1.msra.mxu0 %v9206
        %9228 = vmatprep.subr.mxu0 0.0
        %9229 = vmatpush1.msra.mxu0 %v9205
        %9230 = vmatprep.subr.mxu0 0.0
        %9231 = vmatpush1.msra.mxu0 %v9204
        %9232 = vmatprep.subr.mxu0 0.0
        %9233 = vmatpush1.msra.mxu0 %v9203
        %9234 = vmatprep.subr.mxu0 0.0
        %9235 = vmatpush1.msra.mxu0 %v9202
        %9236 = vmatprep.subr.mxu0 0.0
        %9237 = vmatpush1.msra.mxu0 %v9201
        %9238 = vmatprep.subr.mxu0 0.0
        %9239 = vmatpush1.msra.mxu0 %v9200
        %9240 = vmatprep.subr.mxu0 0.0
        %9241 = vmatpush1.msra.mxu0 %v9199
        %9242 = vmatprep.subr.mxu0 0.0
        %9243 = vmatpush2.msra.mxu0 0.0
        %9244 = vmatprep.subr.mxu0 0.0
        %9245 = vmatpush2.msra.mxu0 0.0
        %9246 = vmatprep.subr.mxu0 0.0
        %9247 = vmatpush2.msra.mxu0 0.0
        %9248 = vmatprep.subr.mxu0 0.0
        %9249 = vmatpush2.msra.mxu0 0.0
        %9250 = vmatprep.subr.mxu0 0.0
        %9251 = vmatpush2.msra.mxu0 0.0
        %9252 = vmatprep.subr.mxu0 0.0
        %9253 = vmatpush2.msra.mxu0 0.0
        %9254 = vmatprep.subr.mxu0 0.0
        %9255 = vmatpush2.msra.mxu0 0.0
        %9256 = vmatprep.subr.mxu0 0.0
        %9257 = vmatpush2.msra.mxu0 0.0
        %9258 = vmatprep.subr.mxu0 0.0
        %9259 = vmatpush2.msra.mxu0 0.0
        %9260 = vmatprep.subr.mxu0 0.0
        %9261 = vmatpush2.msra.mxu0 0.0
        %9262 = vmatprep.subr.mxu0 0.0
        %9263 = vmatpush2.msra.mxu0 0.0
        %9264 = vmatprep.subr.mxu0 0.0
        %9265 = vmatpush2.msra.mxu0 0.0
        %9266 = vmatprep.subr.mxu0 0.0
        %9267 = vmatpush2.msra.mxu0 0.0
        %9268 = vmatprep.subr.mxu0 0.0
        %9269 = vmatpush2.msra.mxu0 0.0
        %9270 = vmatprep.subr.mxu0 0.0
        %9271 = vmatpush2.msra.mxu0 0.0
        %9272 = vmatprep.subr.mxu0 0.0
        %9273 = vmatpush2.msra.mxu0 0.0
        %9274 = vmatprep.mubr.f32.mxu0 0.0
        %9275 = vmatmul.mubr.f32.gmra.mxu0 %v9208
        %v9276 = vpop.f32.mrf.mxu0
        %v9277 = vadd.f32 0.0, %v9276
        %v9278 = vpop.f32.mrf.mxu0
        %9279 = vdwg.mxu0
        %v9280 = vadd.f32 %v9197, %v9277
        %s9281 = scalar_lea.vmem %s5, 2944
        %v9282 = vld [vmem:[%s9281] sm:$0xff]
        %v9283 = vld [vmem:[%s9281 + $0x8] sm:$0xff]
        %v9284 = vld [vmem:[%s9281 + $0x10] sm:$0xff]
        %v9285 = vld [vmem:[%s9281 + $0x18] sm:$0xff]
        %v9286 = vld [vmem:[%s9281 + $0x20] sm:$0xff]
        %v9287 = vld [vmem:[%s9281 + $0x28] sm:$0xff]
        %v9288 = vld [vmem:[%s9281 + $0x30] sm:$0xff]
        %v9289 = vld [vmem:[%s9281 + $0x38] sm:$0xff]
        %v9290 = vrot.slane %v8948, 4
        %v9291 = vsel %vm5465, %v9290, 0
        %9293 = vmatprep.subr.mxu0 0.0
        %9294 = vmatpush1.msra.mxu0 0.0
        %9295 = vmatprep.subr.mxu0 0.0
        %9296 = vmatpush1.msra.mxu0 0.0
        %9297 = vmatprep.subr.mxu0 0.0
        %9298 = vmatpush1.msra.mxu0 0.0
        %9299 = vmatprep.subr.mxu0 0.0
        %9300 = vmatpush1.msra.mxu0 0.0
        %9301 = vmatprep.subr.mxu0 0.0
        %9302 = vmatpush1.msra.mxu0 0.0
        %9303 = vmatprep.subr.mxu0 0.0
        %9304 = vmatpush1.msra.mxu0 0.0
        %9305 = vmatprep.subr.mxu0 0.0
        %9306 = vmatpush1.msra.mxu0 0.0
        %9307 = vmatprep.subr.mxu0 0.0
        %9308 = vmatpush1.msra.mxu0 0.0
        %9309 = vmatprep.subr.mxu0 0.0
        %9310 = vmatpush1.msra.mxu0 %v9289
        %9311 = vmatprep.subr.mxu0 0.0
        %9312 = vmatpush1.msra.mxu0 %v9288
        %9313 = vmatprep.subr.mxu0 0.0
        %9314 = vmatpush1.msra.mxu0 %v9287
        %9315 = vmatprep.subr.mxu0 0.0
        %9316 = vmatpush1.msra.mxu0 %v9286
        %9317 = vmatprep.subr.mxu0 0.0
        %9318 = vmatpush1.msra.mxu0 %v9285
        %9319 = vmatprep.subr.mxu0 0.0
        %9320 = vmatpush1.msra.mxu0 %v9284
        %9321 = vmatprep.subr.mxu0 0.0
        %9322 = vmatpush1.msra.mxu0 %v9283
        %9323 = vmatprep.subr.mxu0 0.0
        %9324 = vmatpush1.msra.mxu0 %v9282
        %9325 = vmatprep.subr.mxu0 0.0
        %9326 = vmatpush2.msra.mxu0 0.0
        %9327 = vmatprep.subr.mxu0 0.0
        %9328 = vmatpush2.msra.mxu0 0.0
        %9329 = vmatprep.subr.mxu0 0.0
        %9330 = vmatpush2.msra.mxu0 0.0
        %9331 = vmatprep.subr.mxu0 0.0
        %9332 = vmatpush2.msra.mxu0 0.0
        %9333 = vmatprep.subr.mxu0 0.0
        %9334 = vmatpush2.msra.mxu0 0.0
        %9335 = vmatprep.subr.mxu0 0.0
        %9336 = vmatpush2.msra.mxu0 0.0
        %9337 = vmatprep.subr.mxu0 0.0
        %9338 = vmatpush2.msra.mxu0 0.0
        %9339 = vmatprep.subr.mxu0 0.0
        %9340 = vmatpush2.msra.mxu0 0.0
        %9341 = vmatprep.subr.mxu0 0.0
        %9342 = vmatpush2.msra.mxu0 0.0
        %9343 = vmatprep.subr.mxu0 0.0
        %9344 = vmatpush2.msra.mxu0 0.0
        %9345 = vmatprep.subr.mxu0 0.0
        %9346 = vmatpush2.msra.mxu0 0.0
        %9347 = vmatprep.subr.mxu0 0.0
        %9348 = vmatpush2.msra.mxu0 0.0
        %9349 = vmatprep.subr.mxu0 0.0
        %9350 = vmatpush2.msra.mxu0 0.0
        %9351 = vmatprep.subr.mxu0 0.0
        %9352 = vmatpush2.msra.mxu0 0.0
        %9353 = vmatprep.subr.mxu0 0.0
        %9354 = vmatpush2.msra.mxu0 0.0
        %9355 = vmatprep.subr.mxu0 0.0
        %9356 = vmatpush2.msra.mxu0 0.0
        %9357 = vmatprep.mubr.f32.mxu0 0.0
        %9358 = vmatmul.mubr.f32.gmra.mxu0 %v9291
        %v9359 = vpop.f32.mrf.mxu0
        %v9360 = vadd.f32 0.0, %v9359
        %v9361 = vpop.f32.mrf.mxu0
        %9362 = vdwg.mxu0
        %v9363 = vadd.f32 %v9280, %v9360
        %s9364 = scalar_lea.vmem %s5, 3008
        %v9365 = vld [vmem:[%s9364] sm:$0xff]
        %v9366 = vld [vmem:[%s9364 + $0x8] sm:$0xff]
        %v9367 = vld [vmem:[%s9364 + $0x10] sm:$0xff]
        %v9368 = vld [vmem:[%s9364 + $0x18] sm:$0xff]
        %v9369 = vld [vmem:[%s9364 + $0x20] sm:$0xff]
        %v9370 = vld [vmem:[%s9364 + $0x28] sm:$0xff]
        %v9371 = vld [vmem:[%s9364 + $0x30] sm:$0xff]
        %v9372 = vld [vmem:[%s9364 + $0x38] sm:$0xff]
        %v9373 = vrot.slane %v8948, 5
        %v9374 = vsel %vm5465, %v9373, 0
        %9376 = vmatprep.subr.mxu0 0.0
        %9377 = vmatpush1.msra.mxu0 0.0
        %9378 = vmatprep.subr.mxu0 0.0
        %9379 = vmatpush1.msra.mxu0 0.0
        %9380 = vmatprep.subr.mxu0 0.0
        %9381 = vmatpush1.msra.mxu0 0.0
        %9382 = vmatprep.subr.mxu0 0.0
        %9383 = vmatpush1.msra.mxu0 0.0
        %9384 = vmatprep.subr.mxu0 0.0
        %9385 = vmatpush1.msra.mxu0 0.0
        %9386 = vmatprep.subr.mxu0 0.0
        %9387 = vmatpush1.msra.mxu0 0.0
        %9388 = vmatprep.subr.mxu0 0.0
        %9389 = vmatpush1.msra.mxu0 0.0
        %9390 = vmatprep.subr.mxu0 0.0
        %9391 = vmatpush1.msra.mxu0 0.0
        %9392 = vmatprep.subr.mxu0 0.0
        %9393 = vmatpush1.msra.mxu0 %v9372
        %9394 = vmatprep.subr.mxu0 0.0
        %9395 = vmatpush1.msra.mxu0 %v9371
        %9396 = vmatprep.subr.mxu0 0.0
        %9397 = vmatpush1.msra.mxu0 %v9370
        %9398 = vmatprep.subr.mxu0 0.0
        %9399 = vmatpush1.msra.mxu0 %v9369
        %9400 = vmatprep.subr.mxu0 0.0
        %9401 = vmatpush1.msra.mxu0 %v9368
        %9402 = vmatprep.subr.mxu0 0.0
        %9403 = vmatpush1.msra.mxu0 %v9367
        %9404 = vmatprep.subr.mxu0 0.0
        %9405 = vmatpush1.msra.mxu0 %v9366
        %9406 = vmatprep.subr.mxu0 0.0
        %9407 = vmatpush1.msra.mxu0 %v9365
        %9408 = vmatprep.subr.mxu0 0.0
        %9409 = vmatpush2.msra.mxu0 0.0
        %9410 = vmatprep.subr.mxu0 0.0
        %9411 = vmatpush2.msra.mxu0 0.0
        %9412 = vmatprep.subr.mxu0 0.0
        %9413 = vmatpush2.msra.mxu0 0.0
        %9414 = vmatprep.subr.mxu0 0.0
        %9415 = vmatpush2.msra.mxu0 0.0
        %9416 = vmatprep.subr.mxu0 0.0
        %9417 = vmatpush2.msra.mxu0 0.0
        %9418 = vmatprep.subr.mxu0 0.0
        %9419 = vmatpush2.msra.mxu0 0.0
        %9420 = vmatprep.subr.mxu0 0.0
        %9421 = vmatpush2.msra.mxu0 0.0
        %9422 = vmatprep.subr.mxu0 0.0
        %9423 = vmatpush2.msra.mxu0 0.0
        %9424 = vmatprep.subr.mxu0 0.0
        %9425 = vmatpush2.msra.mxu0 0.0
        %9426 = vmatprep.subr.mxu0 0.0
        %9427 = vmatpush2.msra.mxu0 0.0
        %9428 = vmatprep.subr.mxu0 0.0
        %9429 = vmatpush2.msra.mxu0 0.0
        %9430 = vmatprep.subr.mxu0 0.0
        %9431 = vmatpush2.msra.mxu0 0.0
        %9432 = vmatprep.subr.mxu0 0.0
        %9433 = vmatpush2.msra.mxu0 0.0
        %9434 = vmatprep.subr.mxu0 0.0
        %9435 = vmatpush2.msra.mxu0 0.0
        %9436 = vmatprep.subr.mxu0 0.0
        %9437 = vmatpush2.msra.mxu0 0.0
        %9438 = vmatprep.subr.mxu0 0.0
        %9439 = vmatpush2.msra.mxu0 0.0
        %9440 = vmatprep.mubr.f32.mxu0 0.0
        %9441 = vmatmul.mubr.f32.gmra.mxu0 %v9374
        %v9442 = vpop.f32.mrf.mxu0
        %v9443 = vadd.f32 0.0, %v9442
        %v9444 = vpop.f32.mrf.mxu0
        %9445 = vdwg.mxu0
        %v9446 = vadd.f32 %v9363, %v9443
        %s9447 = scalar_lea.vmem %s5, 3072
        %v9448 = vld [vmem:[%s9447] sm:$0xff]
        %v9449 = vld [vmem:[%s9447 + $0x8] sm:$0xff]
        %v9450 = vld [vmem:[%s9447 + $0x10] sm:$0xff]
        %v9451 = vld [vmem:[%s9447 + $0x18] sm:$0xff]
        %v9452 = vld [vmem:[%s9447 + $0x20] sm:$0xff]
        %v9453 = vld [vmem:[%s9447 + $0x28] sm:$0xff]
        %v9454 = vld [vmem:[%s9447 + $0x30] sm:$0xff]
        %v9455 = vld [vmem:[%s9447 + $0x38] sm:$0xff]
        %v9456 = vrot.slane %v8948, 6
        %v9457 = vsel %vm5465, %v9456, 0
        %9459 = vmatprep.subr.mxu0 0.0
        %9460 = vmatpush1.msra.mxu0 0.0
        %9461 = vmatprep.subr.mxu0 0.0
        %9462 = vmatpush1.msra.mxu0 0.0
        %9463 = vmatprep.subr.mxu0 0.0
        %9464 = vmatpush1.msra.mxu0 0.0
        %9465 = vmatprep.subr.mxu0 0.0
        %9466 = vmatpush1.msra.mxu0 0.0
        %9467 = vmatprep.subr.mxu0 0.0
        %9468 = vmatpush1.msra.mxu0 0.0
        %9469 = vmatprep.subr.mxu0 0.0
        %9470 = vmatpush1.msra.mxu0 0.0
        %9471 = vmatprep.subr.mxu0 0.0
        %9472 = vmatpush1.msra.mxu0 0.0
        %9473 = vmatprep.subr.mxu0 0.0
        %9474 = vmatpush1.msra.mxu0 0.0
        %9475 = vmatprep.subr.mxu0 0.0
        %9476 = vmatpush1.msra.mxu0 %v9455
        %9477 = vmatprep.subr.mxu0 0.0
        %9478 = vmatpush1.msra.mxu0 %v9454
        %9479 = vmatprep.subr.mxu0 0.0
        %9480 = vmatpush1.msra.mxu0 %v9453
        %9481 = vmatprep.subr.mxu0 0.0
        %9482 = vmatpush1.msra.mxu0 %v9452
        %9483 = vmatprep.subr.mxu0 0.0
        %9484 = vmatpush1.msra.mxu0 %v9451
        %9485 = vmatprep.subr.mxu0 0.0
        %9486 = vmatpush1.msra.mxu0 %v9450
        %9487 = vmatprep.subr.mxu0 0.0
        %9488 = vmatpush1.msra.mxu0 %v9449
        %9489 = vmatprep.subr.mxu0 0.0
        %9490 = vmatpush1.msra.mxu0 %v9448
        %9491 = vmatprep.subr.mxu0 0.0
        %9492 = vmatpush2.msra.mxu0 0.0
        %9493 = vmatprep.subr.mxu0 0.0
        %9494 = vmatpush2.msra.mxu0 0.0
        %9495 = vmatprep.subr.mxu0 0.0
        %9496 = vmatpush2.msra.mxu0 0.0
        %9497 = vmatprep.subr.mxu0 0.0
        %9498 = vmatpush2.msra.mxu0 0.0
        %9499 = vmatprep.subr.mxu0 0.0
        %9500 = vmatpush2.msra.mxu0 0.0
        %9501 = vmatprep.subr.mxu0 0.0
        %9502 = vmatpush2.msra.mxu0 0.0
        %9503 = vmatprep.subr.mxu0 0.0
        %9504 = vmatpush2.msra.mxu0 0.0
        %9505 = vmatprep.subr.mxu0 0.0
        %9506 = vmatpush2.msra.mxu0 0.0
        %9507 = vmatprep.subr.mxu0 0.0
        %9508 = vmatpush2.msra.mxu0 0.0
        %9509 = vmatprep.subr.mxu0 0.0
        %9510 = vmatpush2.msra.mxu0 0.0
        %9511 = vmatprep.subr.mxu0 0.0
        %9512 = vmatpush2.msra.mxu0 0.0
        %9513 = vmatprep.subr.mxu0 0.0
        %9514 = vmatpush2.msra.mxu0 0.0
        %9515 = vmatprep.subr.mxu0 0.0
        %9516 = vmatpush2.msra.mxu0 0.0
        %9517 = vmatprep.subr.mxu0 0.0
        %9518 = vmatpush2.msra.mxu0 0.0
        %9519 = vmatprep.subr.mxu0 0.0
        %9520 = vmatpush2.msra.mxu0 0.0
        %9521 = vmatprep.subr.mxu0 0.0
        %9522 = vmatpush2.msra.mxu0 0.0
        %9523 = vmatprep.mubr.f32.mxu0 0.0
        %9524 = vmatmul.mubr.f32.gmra.mxu0 %v9457
        %v9525 = vpop.f32.mrf.mxu0
        %v9526 = vadd.f32 0.0, %v9525
        %v9527 = vpop.f32.mrf.mxu0
        %9528 = vdwg.mxu0
        %v9529 = vadd.f32 %v9446, %v9526
        %v9530 = vmax.f32 %v9529, 0.0
        %v9531 = vld [vmem:[%s7] sm:$0xff]
        %v9532 = vld [vmem:[%s7 + $0x8] sm:$0xff]
        %v9533 = vld [vmem:[%s7 + $0x10] sm:$0xff]
        %v9534 = vld [vmem:[%s7 + $0x18] sm:$0xff]
        %v9535 = vld [vmem:[%s7 + $0x20] sm:$0xff]
        %v9536 = vld [vmem:[%s7 + $0x28] sm:$0xff]
        %v9537 = vld [vmem:[%s7 + $0x30] sm:$0xff]
        %v9538 = vld [vmem:[%s7 + $0x38] sm:$0xff]
        %v9539 = vld [vmem:[%s7 + $0x40] sm:$0xff]
        %v9540 = vld [vmem:[%s7 + $0x48] sm:$0xff]
        %v9541 = vld [vmem:[%s7 + $0x50] sm:$0xff]
        %v9542 = vld [vmem:[%s7 + $0x58] sm:$0xff]
        %v9543 = vld [vmem:[%s7 + $0x60] sm:$0xff]
        %v9544 = vld [vmem:[%s7 + $0x68] sm:$0xff]
        %v9545 = vld [vmem:[%s7 + $0x70] sm:$0xff]
        %v9546 = vld [vmem:[%s7 + $0x78] sm:$0xff]
        %v9547 = vld [vmem:[%s8] sm:$0x1]
        %9548 = vmatprep.subr.mxu0 0.0
        %9549 = vmatpush1.msra.mxu0 %v9546
        %9550 = vmatprep.subr.mxu0 0.0
        %9551 = vmatpush1.msra.mxu0 %v9545
        %9552 = vmatprep.subr.mxu0 0.0
        %9553 = vmatpush1.msra.mxu0 %v9544
        %9554 = vmatprep.subr.mxu0 0.0
        %9555 = vmatpush1.msra.mxu0 %v9543
        %9556 = vmatprep.subr.mxu0 0.0
        %9557 = vmatpush1.msra.mxu0 %v9542
        %9558 = vmatprep.subr.mxu0 0.0
        %9559 = vmatpush1.msra.mxu0 %v9541
        %9560 = vmatprep.subr.mxu0 0.0
        %9561 = vmatpush1.msra.mxu0 %v9540
        %9562 = vmatprep.subr.mxu0 0.0
        %9563 = vmatpush1.msra.mxu0 %v9539
        %9564 = vmatprep.subr.mxu0 0.0
        %9565 = vmatpush1.msra.mxu0 %v9538
        %9566 = vmatprep.subr.mxu0 0.0
        %9567 = vmatpush1.msra.mxu0 %v9537
        %9568 = vmatprep.subr.mxu0 0.0
        %9569 = vmatpush1.msra.mxu0 %v9536
        %9570 = vmatprep.subr.mxu0 0.0
        %9571 = vmatpush1.msra.mxu0 %v9535
        %9572 = vmatprep.subr.mxu0 0.0
        %9573 = vmatpush1.msra.mxu0 %v9534
        %9574 = vmatprep.subr.mxu0 0.0
        %9575 = vmatpush1.msra.mxu0 %v9533
        %9576 = vmatprep.subr.mxu0 0.0
        %9577 = vmatpush1.msra.mxu0 %v9532
        %9578 = vmatprep.subr.mxu0 0.0
        %9579 = vmatpush1.msra.mxu0 %v9531
        %9580 = vmatprep.subr.mxu0 0.0
        %9581 = vmatpush2.msra.mxu0 0.0
        %9582 = vmatprep.subr.mxu0 0.0
        %9583 = vmatpush2.msra.mxu0 0.0
        %9584 = vmatprep.subr.mxu0 0.0
        %9585 = vmatpush2.msra.mxu0 0.0
        %9586 = vmatprep.subr.mxu0 0.0
        %9587 = vmatpush2.msra.mxu0 0.0
        %9588 = vmatprep.subr.mxu0 0.0
        %9589 = vmatpush2.msra.mxu0 0.0
        %9590 = vmatprep.subr.mxu0 0.0
        %9591 = vmatpush2.msra.mxu0 0.0
        %9592 = vmatprep.subr.mxu0 0.0
        %9593 = vmatpush2.msra.mxu0 0.0
        %9594 = vmatprep.subr.mxu0 0.0
        %9595 = vmatpush2.msra.mxu0 0.0
        %9596 = vmatprep.subr.mxu0 0.0
        %9597 = vmatpush2.msra.mxu0 0.0
        %9598 = vmatprep.subr.mxu0 0.0
        %9599 = vmatpush2.msra.mxu0 0.0
        %9600 = vmatprep.subr.mxu0 0.0
        %9601 = vmatpush2.msra.mxu0 0.0
        %9602 = vmatprep.subr.mxu0 0.0
        %9603 = vmatpush2.msra.mxu0 0.0
        %9604 = vmatprep.subr.mxu0 0.0
        %9605 = vmatpush2.msra.mxu0 0.0
        %9606 = vmatprep.subr.mxu0 0.0
        %9607 = vmatpush2.msra.mxu0 0.0
        %9608 = vmatprep.subr.mxu0 0.0
        %9609 = vmatpush2.msra.mxu0 0.0
        %9610 = vmatprep.subr.mxu0 0.0
        %9611 = vmatpush2.msra.mxu0 0.0
        %9612 = vmatprep.mubr.f32.mxu0 0.0
        %9613 = vmatmul.mubr.f32.gmra.mxu0 %v9530
        %v9614 = vpop.f32.mrf.mxu0
        %v9615 = vadd.f32 %v9547, %v9614
        %v9616 = vpop.f32.mrf.mxu0
        %9617 = vdwg.mxu0
        %vm9618 = vcmask 73728
        %9619 = vst.msk [vmem:[%s324] sm:$0x1] %vm9618, %v9615
        %s9620 = sand.u32 %s225, 1
        %s9621 = scalar_lea.sflag [#allocation5], %s9620
        %s9622 = sand.u32 %s225, 1
        %s9623 = scalar_lea.vmem [#allocation4], %s9622
        // Predicated region
        $region57: #{digit_classifier_forward.1} parent=55 // pred_check
          %p9624 = pneg %p235
        $region58: #{digit_classifier_forward.1} parent=55 // pred_check_branch
          %9626 = sbr.rel (%p9624) target = $region60
        $region59: #{digit_classifier_forward.1} parent=55 // pred_region
          %s9628 = ssub.s32 16, 16
          %9629 = vsyncadd %s9621, %s9628
          %s9630 = smul.addr %s23, 16
          %s9631 = scalar_lea.hbm %s9, %s9630
          %s9633 = sshll.u32 %s9623, 4
          %s9634 = int_to_ptr.vmem [resolvable:$true] %s9633
          %9636 = dma.vmem_to_hbm [thread:$0]  %s9634, 16, %s9631, %s9621
        $region60: #{digit_classifier_forward.1} parent=55 // pred_fallthru
          _
      $region56: #{digit_classifier_forward.1} parent=5 // pred_fallthru
        _
      %p9637 = scmp.le.s32.totalorder 2, %s18
      // Predicated region
      $region61: #{digit_classifier_forward.1} parent=5 // pred_check
        %p9638 = pneg %p9637
      $region62: #{digit_classifier_forward.1} parent=5 // pred_check_branch
        %9640 = sbr.rel (%p9638) target = $region64
      $region63: #{digit_classifier_forward.1} parent=5 // pred_region
        %s9641 = ssub.s32 %s18, 2
        // Predicated region
        $region65: #{digit_classifier_forward.1} parent=63 // pred_check
          %p9642 = pneg %p241
        $region66: #{digit_classifier_forward.1} parent=63 // pred_check_branch
          %9644 = sbr.rel (%p9642) target = $region68
        $region67: #{digit_classifier_forward.1} parent=63 // pred_region
          %s9645 = sand.u32 %s226, 1
          %s9646 = scalar_lea.sflag [#allocation5], %s9645
          %s9647 = sand.u32 %s226, 1
          %s9648 = scalar_lea.vmem [#allocation4], %s9647
          %9649 = dma.done %s9646, 16
        $region68: #{digit_classifier_forward.1} parent=63 // pred_fallthru
          _
      $region64: #{digit_classifier_forward.1} parent=5 // pred_fallthru
        _
    $region6: #{digit_classifier_forward.1} parent=1 // loop_footer
      %s22 = sadd.s32 1, %s18
    $region7: #{digit_classifier_forward.1} parent=1 // loop_footer_branch
      %17 = sbr.rel target = $region3
    $region8: #{digit_classifier_forward.1} parent=1 // loop_exit
      _
    %9650 = vsyncpa [#allocation5], 1
    %s9651 = scalar_lea.sflag [#allocation5], 1
    %9652 = vsyncpa %s9651, 1

</llo_original>
